<compile_context>
chip_gen: v7x
topology: tpu7x:2x2x1
jax: 0.10.0
libtpu: 0.0.40
codegen_flags: <defaults>
</compile_context>

<pallas_src>
import jax
import jax.numpy as jnp
from jax.experimental import pallas as pl
from jax.experimental.pallas import tpu as pltpu

# Static sizes implied by the module (fc1 expects 64*34 = 128*17 = 2176 features)
L_IN = 82                    # input length that makes the flatten size match
K1, C1 = 7, 256              # conv1
L1 = L_IN - K1 + 1           # 76
L1PAD = 80                   # conv1 rows padded to a multiple of 8 per sample
L1P = L1 // 2                # 38   (MaxPool1d(2)) valid rows
L1P_PAD = L1PAD // 2         # 40   per-sample stride after pool1
K2, C2 = 5, 128              # conv2
L2 = L1P - K2 + 1            # 34   valid conv2 rows per sample
L2P = L2 // 2                # 17   valid rows after pool2
L2P_PAD = L1P_PAD // 2       # 20   per-sample stride after pool2
F_IN = C2 * L2P              # 2176 == 64*34
F_HID = 256
F_OUT = 4
EPS = 1e-5
GUARD = 8                    # zero guard rows so conv2 taps never read OOB


def _elu(x):
    return jnp.where(x > 0, x, jnp.exp(x) - 1.0)


def cnn2_kernel(p_ref, w1_ref, sh1_ref, w2_ref, sh2_ref,
                fc1w_ref, fc1b_ref, fc2w_ref, fc2b_ref,
                out_ref, hp_scr, q_scr):
    bb = out_ref.shape[0]          # samples in this block (static)
    r1 = bb * L1PAD                # conv1 rows   (80*B)
    r1p = bb * L1P_PAD             # pool1 rows   (40*B)
    r2p = bb * L2P_PAD             # pool2 rows   (20*B)

    # ---- layer1: Conv1d(1,256,7) as one batched im2col matmul (BN folded) + ELU ----
    h1 = jnp.dot(p_ref[...], w1_ref[...],
                 preferred_element_type=jnp.float32)            # (r1, C1) f32
    h1 = _elu(h1 + sh1_ref[...])
    # ---- pool1: pairs never straddle samples (per-sample stride 80 is even) ----
    h1p = jnp.max(h1.reshape(r1p, 2, C1), axis=1)               # (r1p, C1)
    hp_scr[pl.ds(0, r1p), :] = h1p.astype(jnp.bfloat16)
    hp_scr[pl.ds(r1p, GUARD), :] = jnp.zeros((GUARD, C1), jnp.bfloat16)

    # ---- layer2: Conv1d(256,128,5) as 5 tap matmuls on shifted row windows ----
    acc = jnp.zeros((r1p, C2), jnp.float32)
    for k in range(K2):
        acc = acc + jnp.dot(hp_scr[pl.ds(k, r1p), :], w2_ref[k],
                            preferred_element_type=jnp.float32)  # (r1p, C2)
    h2 = _elu(acc + sh2_ref[...])
    # ---- pool2 ----
    q = jnp.max(h2.reshape(r2p, 2, C2), axis=1)                  # (r2p, C2)
    q_scr[...] = q

    # ---- fc1: rows of sample b for tap t sit at q_scr[L2P_PAD*b + t] ----
    f1 = jnp.zeros((bb, F_HID), jnp.float32)
    for t in range(L2P):
        rows = q_scr[pl.ds(t, bb, stride=L2P_PAD), :].astype(jnp.bfloat16)  # (bb, C2)
        f1 = f1 + jnp.dot(rows, fc1w_ref[t],
                          preferred_element_type=jnp.float32)
    # NOTE: original torch forward does `x = nn.ELU()` (assigns a module, would
    # crash at fc2); interpreted as applying the ELU activation as intended.
    f1 = _elu(f1 + fc1b_ref[...])
    # ---- fc2 ----
    out = jnp.dot(f1.astype(jnp.bfloat16), fc2w_ref[...],
                  preferred_element_type=jnp.float32)
    out_ref[...] = out + fc2b_ref[...]


def cnn2_forward(x, packed, block_b=64):
    """x: (N, 1, L_IN) float32 in torch NCW layout."""
    n = x.shape[0]
    xs = x[:, 0, :]                                              # (N, 82)
    # im2col via 7 static shifted slices (no gather), padded to 80 rows/sample
    patches = jnp.stack([xs[:, k:k + L1] for k in range(K1)], axis=-1)   # (N, 76, 7)
    patches = jnp.pad(patches, ((0, 0), (0, L1PAD - L1), (0, 0)))        # (N, 80, 7)

    bb = min(block_b, n)
    if n > bb:
        bb = max(8, (bb // 8) * 8)                               # keep blocks 8-aligned
    n_pad = ((n + bb - 1) // bb) * bb
    if n_pad != n:
        patches = jnp.pad(patches, ((0, n_pad - n), (0, 0), (0, 0)))
    patches = patches.astype(jnp.bfloat16).reshape(n_pad * L1PAD, K1)

    (w1, sh1, w2, sh2, fc1w, fc1b, fc2w, fc2b) = packed
    out = pl.pallas_call(
        cnn2_kernel,
        out_shape=jax.ShapeDtypeStruct((n_pad, F_OUT), jnp.float32),
        grid_spec=pltpu.PrefetchScalarGridSpec(
            num_scalar_prefetch=0,
            grid=(n_pad // bb,),
            in_specs=[
                pl.BlockSpec((bb * L1PAD, K1), lambda i: (i, 0)),   # im2col rows
                pl.BlockSpec((K1, C1), lambda i: (0, 0)),           # w1 (BN folded)
                pl.BlockSpec((1, C1), lambda i: (0, 0)),            # shift1
                pl.BlockSpec((K2, C1, C2), lambda i: (0, 0, 0)),    # w2 (BN folded)
                pl.BlockSpec((1, C2), lambda i: (0, 0)),            # shift2
                pl.BlockSpec((L2P, C2, F_HID), lambda i: (0, 0, 0)),  # fc1 w
                pl.BlockSpec((1, F_HID), lambda i: (0, 0)),         # fc1 b
                pl.BlockSpec((F_HID, F_OUT), lambda i: (0, 0)),     # fc2 w
                pl.BlockSpec((1, F_OUT), lambda i: (0, 0)),         # fc2 b
            ],
            out_specs=pl.BlockSpec((bb, F_OUT), lambda i: (i, 0)),
            scratch_shapes=[
                pltpu.VMEM((bb * L1P_PAD + GUARD, C1), jnp.bfloat16),  # pooled-1 + guard
                pltpu.VMEM((bb * L2P_PAD, C2), jnp.float32),           # pooled-2
            ],
        ),
        compiler_params=pltpu.CompilerParams(
            dimension_semantics=("parallel",),
            vmem_limit_bytes=48 * 1024 * 1024,
        ),
    )(patches, w1, sh1, w2, sh2, fc1w, fc1b, fc2w, fc2b)
    return out[:n]


def init_params(key):
    """Deterministic, torch-shaped parameters (uniform fan-in init)."""
    ks = jax.random.split(key, 16)

    def u(k, shape, fan_in):
        b = 1.0 / float(fan_in) ** 0.5
        return jax.random.uniform(k, shape, jnp.float32, -b, b)

    p = {
        "conv1_w": u(ks[0], (C1, 1, K1), 1 * K1),
        "conv1_b": u(ks[1], (C1,), 1 * K1),
        "bn1_g": 1.0 + 0.1 * jax.random.normal(ks[2], (C1,), jnp.float32),
        "bn1_b": 0.1 * jax.random.normal(ks[3], (C1,), jnp.float32),
        "bn1_m": 0.1 * jax.random.normal(ks[4], (C1,), jnp.float32),
        "bn1_v": 1.0 + 0.5 * jax.random.uniform(ks[5], (C1,), jnp.float32),
        "conv2_w": u(ks[6], (C2, C1, K2), C1 * K2),
        "conv2_b": u(ks[7], (C2,), C1 * K2),
        "bn2_g": 1.0 + 0.1 * jax.random.normal(ks[8], (C2,), jnp.float32),
        "bn2_b": 0.1 * jax.random.normal(ks[9], (C2,), jnp.float32),
        "bn2_m": 0.1 * jax.random.normal(ks[10], (C2,), jnp.float32),
        "bn2_v": 1.0 + 0.5 * jax.random.uniform(ks[11], (C2,), jnp.float32),
        "fc1_w": u(ks[12], (F_HID, F_IN), F_IN),
        "fc1_b": u(ks[13], (F_HID,), F_IN),
        "fc2_w": u(ks[14], (F_OUT, F_HID), F_HID),
        "fc2_b": u(ks[15], (F_OUT,), F_HID),
    }
    return p


def pack_params(p):
    """Torch-layout params -> kernel layout: BN (eval mode) folded into conv
    weights/bias, matmul operands cast to bf16, fc1 weight pre-permuted to honour
    the torch (N, C, L) flatten order."""
    # TODO(synk): training-mode BatchNorm (per-batch statistics) not implemented;
    # eval-mode running-stat normalization folded into the conv weights instead.
    s1 = p["bn1_g"] / jnp.sqrt(p["bn1_v"] + EPS)                        # (C1,)
    w1 = (jnp.transpose(p["conv1_w"][:, 0, :], (1, 0)) * s1[None, :]
          ).astype(jnp.bfloat16)                                        # (K1, C1)
    sh1 = (p["conv1_b"] * s1 + p["bn1_b"] - p["bn1_m"] * s1).reshape(1, C1)

    s2 = p["bn2_g"] / jnp.sqrt(p["bn2_v"] + EPS)                        # (C2,)
    w2 = (jnp.transpose(p["conv2_w"], (2, 1, 0)) * s2[None, None, :]
          ).astype(jnp.bfloat16)                                        # (K2, C1, C2)
    sh2 = (p["conv2_b"] * s2 + p["bn2_b"] - p["bn2_m"] * s2).reshape(1, C2)

    # torch flatten order: feature index = c * L2P + t  (from (N, C, L) view)
    fc1w = jnp.transpose(p["fc1_w"].reshape(F_HID, C2, L2P), (2, 1, 0)
                         ).astype(jnp.bfloat16)                          # (L2P, C2, F_HID)
    fc1b = p["fc1_b"].reshape(1, F_HID)
    fc2w = jnp.transpose(p["fc2_w"], (1, 0)).astype(jnp.bfloat16)        # (F_HID, F_OUT)
    fc2b = p["fc2_b"].reshape(1, F_OUT)
    return (w1, sh1, w2, sh2, fc1w, fc1b, fc2w, fc2b)


def reference_forward(x, p):
    """Plain-JAX f32 reference mirroring the (intended) torch forward."""
    n = x.shape[0]
    xs = x[:, 0, :]
    idx = jnp.arange(L1)[:, None] + jnp.arange(K1)[None, :]
    pat = xs[:, idx]                                                # (N, L1, K1)
    h = jnp.einsum("nlk,ck->nlc", pat, p["conv1_w"][:, 0, :]) + p["conv1_b"]
    h = (h - p["bn1_m"]) / jnp.sqrt(p["bn1_v"] + EPS) * p["bn1_g"] + p["bn1_b"]
    h = jnp.where(h > 0, h, jnp.exp(h) - 1.0)
    h = h.reshape(n, L1P, 2, C1).max(axis=2)                        # (N, L1P, C1)
    pat2 = jnp.stack([h[:, k:k + L2, :] for k in range(K2)], axis=2)  # (N,L2,K2,C1)
    h = jnp.einsum("nlkc,ock->nlo", pat2, p["conv2_w"]) + p["conv2_b"]
    h = (h - p["bn2_m"]) / jnp.sqrt(p["bn2_v"] + EPS) * p["bn2_g"] + p["bn2_b"]
    h = jnp.where(h > 0, h, jnp.exp(h) - 1.0)
    h = h.reshape(n, L2P, 2, C2).max(axis=2)                        # (N, L2P, C2)
    flat = jnp.transpose(h, (0, 2, 1)).reshape(n, F_IN)             # torch view order
    f = flat @ p["fc1_w"].T + p["fc1_b"]
    f = jnp.where(f > 0, f, jnp.exp(f) - 1.0)
    return f @ p["fc2_w"].T + p["fc2_b"]


if __name__ == "__main__":
    key = jax.random.PRNGKey(0)
    kx, kp = jax.random.split(key)
    x = jax.random.normal(kx, (2, 1, L_IN), jnp.float32)            # (N, C=1, L)
    params = init_params(kp)
    packed = pack_params(params)

    out = cnn2_forward(x, packed)
    out = jax.block_until_ready(out)
    assert out.shape == (2, F_OUT) and out.dtype == jnp.float32

    ref = reference_forward(x, params)
    if not jnp.allclose(out, ref, rtol=2e-2, atol=2e-2):
        raise AssertionError(
            f"mismatch vs reference, max abs diff = {float(jnp.max(jnp.abs(out - ref)))}")
    print("KERNEL_OK")
</pallas_src>

<mosaic_0001>
module attributes {stable_mosaic.version = 11 : i64} {
  func.func @cnn2_kernel(%arg0: i32, %arg1: memref<160x7xbf16, #tpu.memory_space<vmem>>, %arg2: memref<7x256xbf16, #tpu.memory_space<vmem>>, %arg3: memref<1x256xf32, #tpu.memory_space<vmem>>, %arg4: memref<5x256x128xbf16, #tpu.memory_space<vmem>>, %arg5: memref<1x128xf32, #tpu.memory_space<vmem>>, %arg6: memref<17x128x256xbf16, #tpu.memory_space<vmem>>, %arg7: memref<1x256xf32, #tpu.memory_space<vmem>>, %arg8: memref<256x4xbf16, #tpu.memory_space<vmem>>, %arg9: memref<1x4xf32, #tpu.memory_space<vmem>>, %arg10: memref<2x4xf32, #tpu.memory_space<vmem>>, %arg11: memref<88x256xbf16, #tpu.memory_space<vmem>>, %arg12: memref<40x128xf32, #tpu.memory_space<vmem>>) attributes {dimension_semantics = [#tpu.dimension_semantics<parallel>], iteration_bounds = array<i64: 1>, scalar_prefetch = 0 : i64, scratch_operands = 2 : i64, tpu.core_type = #tpu.core_type<tc>, window_params = [{transform_indices = @transform_0, window_bounds = array<i64: 160, 7>}, {pipeline_mode = #tpu.pipeline_mode<synchronous>, transform_indices = @transform_1, window_bounds = array<i64: 7, 256>}, {pipeline_mode = #tpu.pipeline_mode<synchronous>, transform_indices = @transform_2, window_bounds = array<i64: 1, 256>}, {pipeline_mode = #tpu.pipeline_mode<synchronous>, transform_indices = @transform_3, window_bounds = array<i64: 5, 256, 128>}, {pipeline_mode = #tpu.pipeline_mode<synchronous>, transform_indices = @transform_4, window_bounds = array<i64: 1, 128>}, {pipeline_mode = #tpu.pipeline_mode<synchronous>, transform_indices = @transform_5, window_bounds = array<i64: 17, 128, 256>}, {pipeline_mode = #tpu.pipeline_mode<synchronous>, transform_indices = @transform_6, window_bounds = array<i64: 1, 256>}, {pipeline_mode = #tpu.pipeline_mode<synchronous>, transform_indices = @transform_7, window_bounds = array<i64: 256, 4>}, {pipeline_mode = #tpu.pipeline_mode<synchronous>, transform_indices = @transform_8, window_bounds = array<i64: 1, 4>}, {transform_indices = @transform_9, window_bounds = array<i64: 2, 4>}]} {
    %c0 = arith.constant 0 : index
    %c0_0 = arith.constant 0 : index
    %0 = vector.load %arg1[%c0, %c0_0] : memref<160x7xbf16, #tpu.memory_space<vmem>>, vector<160x7xbf16>
    %c0_1 = arith.constant 0 : index
    %c0_2 = arith.constant 0 : index
    %1 = vector.load %arg2[%c0_1, %c0_2] : memref<7x256xbf16, #tpu.memory_space<vmem>>, vector<7x256xbf16>
    %cst = arith.constant dense<0.000000e+00> : vector<160x256xf32>
    %2 = tpu.matmul %0, %1, %cst {dimension_numbers = #tpu.dot_dimension_numbers<[1], [0], [0], [1], [0, 0, 1, 1], [], []>} : vector<160x7xbf16>, vector<7x256xbf16>, vector<160x256xf32> -> vector<160x256xf32>
    %c0_3 = arith.constant 0 : index
    %c0_4 = arith.constant 0 : index
    %3 = vector.load %arg3[%c0_3, %c0_4] : memref<1x256xf32, #tpu.memory_space<vmem>>, vector<1x256xf32>
    %4 = vector.broadcast %3 : vector<1x256xf32> to vector<160x256xf32>
    %5 = arith.addf %2, %4 : vector<160x256xf32>
    %cst_5 = arith.constant 0.000000e+00 : f32
    %6 = vector.broadcast %cst_5 : f32 to vector<160x256xf32>
    %7 = arith.cmpf ogt, %5, %6 : vector<160x256xf32>
    %8 = math.exp %5 : vector<160x256xf32>
    %cst_6 = arith.constant 1.000000e+00 : f32
    %9 = vector.broadcast %cst_6 : f32 to vector<160x256xf32>
    %10 = arith.subf %8, %9 : vector<160x256xf32>
    %11 = arith.select %7, %5, %10 : vector<160x256xi1>, vector<160x256xf32>
    %12 = vector.shape_cast %11 : vector<160x256xf32> to vector<80x2x256xf32>
    %cst_7 = arith.constant dense<0xFF800000> : vector<80x256xf32>
    %13 = vector.multi_reduction <maximumf>, %12, %cst_7 [1] : vector<80x2x256xf32> to vector<80x256xf32>
    %14 = arith.truncf %13 : vector<80x256xf32> to vector<80x256xbf16>
    %c0_8 = arith.constant 0 : index
    %c0_9 = arith.constant 0 : index
    %15 = vector.load %arg11[%c0_8, %c0_9] : memref<88x256xbf16, #tpu.memory_space<vmem>>, vector<80x256xbf16>
    tpu.vector_store %arg11[%c0_8, %c0_9], %14 {strides = array<i32>} : memref<88x256xbf16, #tpu.memory_space<vmem>>, vector<80x256xbf16>,
    %cst_10 = arith.constant 0.000000e+00 : bf16
    %16 = vector.broadcast %cst_10 : bf16 to vector<8x256xbf16>
    %c80 = arith.constant 80 : index
    %c0_11 = arith.constant 0 : index
    %17 = vector.load %arg11[%c80, %c0_11] : memref<88x256xbf16, #tpu.memory_space<vmem>>, vector<8x256xbf16>
    tpu.vector_store %arg11[%c80, %c0_11], %16 {strides = array<i32>} : memref<88x256xbf16, #tpu.memory_space<vmem>>, vector<8x256xbf16>,
    %cst_12 = arith.constant 0.000000e+00 : f32
    %18 = vector.broadcast %cst_12 : f32 to vector<80x128xf32>
    %c0_13 = arith.constant 0 : index
    %c0_14 = arith.constant 0 : index
    %19 = vector.load %arg11[%c0_13, %c0_14] : memref<88x256xbf16, #tpu.memory_space<vmem>>, vector<80x256xbf16>
    %c0_15 = arith.constant 0 : index
    %c0_16 = arith.constant 0 : index
    %c0_17 = arith.constant 0 : index
    %20 = vector.load %arg4[%c0_15, %c0_16, %c0_17] : memref<5x256x128xbf16, #tpu.memory_space<vmem>>, vector<1x256x128xbf16>
    %21 = vector.shape_cast %20 : vector<1x256x128xbf16> to vector<256x128xbf16>
    %cst_18 = arith.constant dense<0.000000e+00> : vector<80x128xf32>
    %22 = tpu.matmul %19, %21, %cst_18 {dimension_numbers = #tpu.dot_dimension_numbers<[1], [0], [0], [1], [0, 0, 1, 1], [], []>} : vector<80x256xbf16>, vector<256x128xbf16>, vector<80x128xf32> -> vector<80x128xf32>
    %23 = arith.addf %18, %22 : vector<80x128xf32>
    %c1 = arith.constant 1 : index
    %c0_19 = arith.constant 0 : index
    %24 = vector.load %arg11[%c1, %c0_19] : memref<88x256xbf16, #tpu.memory_space<vmem>>, vector<80x256xbf16>
    %c1_20 = arith.constant 1 : index
    %c0_21 = arith.constant 0 : index
    %c0_22 = arith.constant 0 : index
    %25 = vector.load %arg4[%c1_20, %c0_21, %c0_22] : memref<5x256x128xbf16, #tpu.memory_space<vmem>>, vector<1x256x128xbf16>
    %26 = vector.shape_cast %25 : vector<1x256x128xbf16> to vector<256x128xbf16>
    %cst_23 = arith.constant dense<0.000000e+00> : vector<80x128xf32>
    %27 = tpu.matmul %24, %26, %cst_23 {dimension_numbers = #tpu.dot_dimension_numbers<[1], [0], [0], [1], [0, 0, 1, 1], [], []>} : vector<80x256xbf16>, vector<256x128xbf16>, vector<80x128xf32> -> vector<80x128xf32>
    %28 = arith.addf %23, %27 : vector<80x128xf32>
    %c2 = arith.constant 2 : index
    %c0_24 = arith.constant 0 : index
    %29 = vector.load %arg11[%c2, %c0_24] : memref<88x256xbf16, #tpu.memory_space<vmem>>, vector<80x256xbf16>
    %c2_25 = arith.constant 2 : index
    %c0_26 = arith.constant 0 : index
    %c0_27 = arith.constant 0 : index
    %30 = vector.load %arg4[%c2_25, %c0_26, %c0_27] : memref<5x256x128xbf16, #tpu.memory_space<vmem>>, vector<1x256x128xbf16>
    %31 = vector.shape_cast %30 : vector<1x256x128xbf16> to vector<256x128xbf16>
    %cst_28 = arith.constant dense<0.000000e+00> : vector<80x128xf32>
    %32 = tpu.matmul %29, %31, %cst_28 {dimension_numbers = #tpu.dot_dimension_numbers<[1], [0], [0], [1], [0, 0, 1, 1], [], []>} : vector<80x256xbf16>, vector<256x128xbf16>, vector<80x128xf32> -> vector<80x128xf32>
    %33 = arith.addf %28, %32 : vector<80x128xf32>
    %c3 = arith.constant 3 : index
    %c0_29 = arith.constant 0 : index
    %34 = vector.load %arg11[%c3, %c0_29] : memref<88x256xbf16, #tpu.memory_space<vmem>>, vector<80x256xbf16>
    %c3_30 = arith.constant 3 : index
    %c0_31 = arith.constant 0 : index
    %c0_32 = arith.constant 0 : index
    %35 = vector.load %arg4[%c3_30, %c0_31, %c0_32] : memref<5x256x128xbf16, #tpu.memory_space<vmem>>, vector<1x256x128xbf16>
    %36 = vector.shape_cast %35 : vector<1x256x128xbf16> to vector<256x128xbf16>
    %cst_33 = arith.constant dense<0.000000e+00> : vector<80x128xf32>
    %37 = tpu.matmul %34, %36, %cst_33 {dimension_numbers = #tpu.dot_dimension_numbers<[1], [0], [0], [1], [0, 0, 1, 1], [], []>} : vector<80x256xbf16>, vector<256x128xbf16>, vector<80x128xf32> -> vector<80x128xf32>
    %38 = arith.addf %33, %37 : vector<80x128xf32>
    %c4 = arith.constant 4 : index
    %c0_34 = arith.constant 0 : index
    %39 = vector.load %arg11[%c4, %c0_34] : memref<88x256xbf16, #tpu.memory_space<vmem>>, vector<80x256xbf16>
    %c4_35 = arith.constant 4 : index
    %c0_36 = arith.constant 0 : index
    %c0_37 = arith.constant 0 : index
    %40 = vector.load %arg4[%c4_35, %c0_36, %c0_37] : memref<5x256x128xbf16, #tpu.memory_space<vmem>>, vector<1x256x128xbf16>
    %41 = vector.shape_cast %40 : vector<1x256x128xbf16> to vector<256x128xbf16>
    %cst_38 = arith.constant dense<0.000000e+00> : vector<80x128xf32>
    %42 = tpu.matmul %39, %41, %cst_38 {dimension_numbers = #tpu.dot_dimension_numbers<[1], [0], [0], [1], [0, 0, 1, 1], [], []>} : vector<80x256xbf16>, vector<256x128xbf16>, vector<80x128xf32> -> vector<80x128xf32>
    %43 = arith.addf %38, %42 : vector<80x128xf32>
    %c0_39 = arith.constant 0 : index
    %c0_40 = arith.constant 0 : index
    %44 = vector.load %arg5[%c0_39, %c0_40] : memref<1x128xf32, #tpu.memory_space<vmem>>, vector<1x128xf32>
    %45 = vector.broadcast %44 : vector<1x128xf32> to vector<80x128xf32>
    %46 = arith.addf %43, %45 : vector<80x128xf32>
    %cst_41 = arith.constant 0.000000e+00 : f32
    %47 = vector.broadcast %cst_41 : f32 to vector<80x128xf32>
    %48 = arith.cmpf ogt, %46, %47 : vector<80x128xf32>
    %49 = math.exp %46 : vector<80x128xf32>
    %cst_42 = arith.constant 1.000000e+00 : f32
    %50 = vector.broadcast %cst_42 : f32 to vector<80x128xf32>
    %51 = arith.subf %49, %50 : vector<80x128xf32>
    %52 = arith.select %48, %46, %51 : vector<80x128xi1>, vector<80x128xf32>
    %53 = vector.shape_cast %52 : vector<80x128xf32> to vector<40x2x128xf32>
    %cst_43 = arith.constant dense<0xFF800000> : vector<40x128xf32>
    %54 = vector.multi_reduction <maximumf>, %53, %cst_43 [1] : vector<40x2x128xf32> to vector<40x128xf32>
    %c0_44 = arith.constant 0 : index
    %c0_45 = arith.constant 0 : index
    %55 = vector.load %arg12[%c0_44, %c0_45] : memref<40x128xf32, #tpu.memory_space<vmem>>, vector<40x128xf32>
    tpu.vector_store %arg12[%c0_44, %c0_45], %54 {strides = array<i32>} : memref<40x128xf32, #tpu.memory_space<vmem>>, vector<40x128xf32>,
    %cst_46 = arith.constant 0.000000e+00 : f32
    %56 = vector.broadcast %cst_46 : f32 to vector<2x256xf32>
    %c0_47 = arith.constant 0 : index
    %c0_48 = arith.constant 0 : index
    %57 = tpu.strided_load %arg12[%c0_47, %c0_48] {strides = array<i32: 20, 1>} : memref<40x128xf32, #tpu.memory_space<vmem>>, vector<2x128xf32>
    %58 = arith.truncf %57 : vector<2x128xf32> to vector<2x128xbf16>
    %c0_49 = arith.constant 0 : index
    %c0_50 = arith.constant 0 : index
    %c0_51 = arith.constant 0 : index
    %59 = vector.load %arg6[%c0_49, %c0_50, %c0_51] : memref<17x128x256xbf16, #tpu.memory_space<vmem>>, vector<1x128x256xbf16>
    %60 = vector.shape_cast %59 : vector<1x128x256xbf16> to vector<128x256xbf16>
    %cst_52 = arith.constant dense<0.000000e+00> : vector<2x256xf32>
    %61 = tpu.matmul %58, %60, %cst_52 {dimension_numbers = #tpu.dot_dimension_numbers<[1], [0], [0], [1], [0, 0, 1, 1], [], []>} : vector<2x128xbf16>, vector<128x256xbf16>, vector<2x256xf32> -> vector<2x256xf32>
    %62 = arith.addf %56, %61 : vector<2x256xf32>
    %c1_53 = arith.constant 1 : index
    %c0_54 = arith.constant 0 : index
    %63 = tpu.strided_load %arg12[%c1_53, %c0_54] {strides = array<i32: 20, 1>} : memref<40x128xf32, #tpu.memory_space<vmem>>, vector<2x128xf32>
    %64 = arith.truncf %63 : vector<2x128xf32> to vector<2x128xbf16>
    %c1_55 = arith.constant 1 : index
    %c0_56 = arith.constant 0 : index
    %c0_57 = arith.constant 0 : index
    %65 = vector.load %arg6[%c1_55, %c0_56, %c0_57] : memref<17x128x256xbf16, #tpu.memory_space<vmem>>, vector<1x128x256xbf16>
    %66 = vector.shape_cast %65 : vector<1x128x256xbf16> to vector<128x256xbf16>
    %cst_58 = arith.constant dense<0.000000e+00> : vector<2x256xf32>
    %67 = tpu.matmul %64, %66, %cst_58 {dimension_numbers = #tpu.dot_dimension_numbers<[1], [0], [0], [1], [0, 0, 1, 1], [], []>} : vector<2x128xbf16>, vector<128x256xbf16>, vector<2x256xf32> -> vector<2x256xf32>
    %68 = arith.addf %62, %67 : vector<2x256xf32>
    %c2_59 = arith.constant 2 : index
    %c0_60 = arith.constant 0 : index
    %69 = tpu.strided_load %arg12[%c2_59, %c0_60] {strides = array<i32: 20, 1>} : memref<40x128xf32, #tpu.memory_space<vmem>>, vector<2x128xf32>
    %70 = arith.truncf %69 : vector<2x128xf32> to vector<2x128xbf16>
    %c2_61 = arith.constant 2 : index
    %c0_62 = arith.constant 0 : index
    %c0_63 = arith.constant 0 : index
    %71 = vector.load %arg6[%c2_61, %c0_62, %c0_63] : memref<17x128x256xbf16, #tpu.memory_space<vmem>>, vector<1x128x256xbf16>
    %72 = vector.shape_cast %71 : vector<1x128x256xbf16> to vector<128x256xbf16>
    %cst_64 = arith.constant dense<0.000000e+00> : vector<2x256xf32>
    %73 = tpu.matmul %70, %72, %cst_64 {dimension_numbers = #tpu.dot_dimension_numbers<[1], [0], [0], [1], [0, 0, 1, 1], [], []>} : vector<2x128xbf16>, vector<128x256xbf16>, vector<2x256xf32> -> vector<2x256xf32>
    %74 = arith.addf %68, %73 : vector<2x256xf32>
    %c3_65 = arith.constant 3 : index
    %c0_66 = arith.constant 0 : index
    %75 = tpu.strided_load %arg12[%c3_65, %c0_66] {strides = array<i32: 20, 1>} : memref<40x128xf32, #tpu.memory_space<vmem>>, vector<2x128xf32>
    %76 = arith.truncf %75 : vector<2x128xf32> to vector<2x128xbf16>
    %c3_67 = arith.constant 3 : index
    %c0_68 = arith.constant 0 : index
    %c0_69 = arith.constant 0 : index
    %77 = vector.load %arg6[%c3_67, %c0_68, %c0_69] : memref<17x128x256xbf16, #tpu.memory_space<vmem>>, vector<1x128x256xbf16>
    %78 = vector.shape_cast %77 : vector<1x128x256xbf16> to vector<128x256xbf16>
    %cst_70 = arith.constant dense<0.000000e+00> : vector<2x256xf32>
    %79 = tpu.matmul %76, %78, %cst_70 {dimension_numbers = #tpu.dot_dimension_numbers<[1], [0], [0], [1], [0, 0, 1, 1], [], []>} : vector<2x128xbf16>, vector<128x256xbf16>, vector<2x256xf32> -> vector<2x256xf32>
    %80 = arith.addf %74, %79 : vector<2x256xf32>
    %c4_71 = arith.constant 4 : index
    %c0_72 = arith.constant 0 : index
    %81 = tpu.strided_load %arg12[%c4_71, %c0_72] {strides = array<i32: 20, 1>} : memref<40x128xf32, #tpu.memory_space<vmem>>, vector<2x128xf32>
    %82 = arith.truncf %81 : vector<2x128xf32> to vector<2x128xbf16>
    %c4_73 = arith.constant 4 : index
    %c0_74 = arith.constant 0 : index
    %c0_75 = arith.constant 0 : index
    %83 = vector.load %arg6[%c4_73, %c0_74, %c0_75] : memref<17x128x256xbf16, #tpu.memory_space<vmem>>, vector<1x128x256xbf16>
    %84 = vector.shape_cast %83 : vector<1x128x256xbf16> to vector<128x256xbf16>
    %cst_76 = arith.constant dense<0.000000e+00> : vector<2x256xf32>
    %85 = tpu.matmul %82, %84, %cst_76 {dimension_numbers = #tpu.dot_dimension_numbers<[1], [0], [0], [1], [0, 0, 1, 1], [], []>} : vector<2x128xbf16>, vector<128x256xbf16>, vector<2x256xf32> -> vector<2x256xf32>
    %86 = arith.addf %80, %85 : vector<2x256xf32>
    %c5 = arith.constant 5 : index
    %c0_77 = arith.constant 0 : index
    %87 = tpu.strided_load %arg12[%c5, %c0_77] {strides = array<i32: 20, 1>} : memref<40x128xf32, #tpu.memory_space<vmem>>, vector<2x128xf32>
    %88 = arith.truncf %87 : vector<2x128xf32> to vector<2x128xbf16>
    %c5_78 = arith.constant 5 : index
    %c0_79 = arith.constant 0 : index
    %c0_80 = arith.constant 0 : index
    %89 = vector.load %arg6[%c5_78, %c0_79, %c0_80] : memref<17x128x256xbf16, #tpu.memory_space<vmem>>, vector<1x128x256xbf16>
    %90 = vector.shape_cast %89 : vector<1x128x256xbf16> to vector<128x256xbf16>
    %cst_81 = arith.constant dense<0.000000e+00> : vector<2x256xf32>
    %91 = tpu.matmul %88, %90, %cst_81 {dimension_numbers = #tpu.dot_dimension_numbers<[1], [0], [0], [1], [0, 0, 1, 1], [], []>} : vector<2x128xbf16>, vector<128x256xbf16>, vector<2x256xf32> -> vector<2x256xf32>
    %92 = arith.addf %86, %91 : vector<2x256xf32>
    %c6 = arith.constant 6 : index
    %c0_82 = arith.constant 0 : index
    %93 = tpu.strided_load %arg12[%c6, %c0_82] {strides = array<i32: 20, 1>} : memref<40x128xf32, #tpu.memory_space<vmem>>, vector<2x128xf32>
    %94 = arith.truncf %93 : vector<2x128xf32> to vector<2x128xbf16>
    %c6_83 = arith.constant 6 : index
    %c0_84 = arith.constant 0 : index
    %c0_85 = arith.constant 0 : index
    %95 = vector.load %arg6[%c6_83, %c0_84, %c0_85] : memref<17x128x256xbf16, #tpu.memory_space<vmem>>, vector<1x128x256xbf16>
    %96 = vector.shape_cast %95 : vector<1x128x256xbf16> to vector<128x256xbf16>
    %cst_86 = arith.constant dense<0.000000e+00> : vector<2x256xf32>
    %97 = tpu.matmul %94, %96, %cst_86 {dimension_numbers = #tpu.dot_dimension_numbers<[1], [0], [0], [1], [0, 0, 1, 1], [], []>} : vector<2x128xbf16>, vector<128x256xbf16>, vector<2x256xf32> -> vector<2x256xf32>
    %98 = arith.addf %92, %97 : vector<2x256xf32>
    %c7 = arith.constant 7 : index
    %c0_87 = arith.constant 0 : index
    %99 = tpu.strided_load %arg12[%c7, %c0_87] {strides = array<i32: 20, 1>} : memref<40x128xf32, #tpu.memory_space<vmem>>, vector<2x128xf32>
    %100 = arith.truncf %99 : vector<2x128xf32> to vector<2x128xbf16>
    %c7_88 = arith.constant 7 : index
    %c0_89 = arith.constant 0 : index
    %c0_90 = arith.constant 0 : index
    %101 = vector.load %arg6[%c7_88, %c0_89, %c0_90] : memref<17x128x256xbf16, #tpu.memory_space<vmem>>, vector<1x128x256xbf16>
    %102 = vector.shape_cast %101 : vector<1x128x256xbf16> to vector<128x256xbf16>
    %cst_91 = arith.constant dense<0.000000e+00> : vector<2x256xf32>
    %103 = tpu.matmul %100, %102, %cst_91 {dimension_numbers = #tpu.dot_dimension_numbers<[1], [0], [0], [1], [0, 0, 1, 1], [], []>} : vector<2x128xbf16>, vector<128x256xbf16>, vector<2x256xf32> -> vector<2x256xf32>
    %104 = arith.addf %98, %103 : vector<2x256xf32>
    %c8 = arith.constant 8 : index
    %c0_92 = arith.constant 0 : index
    %105 = tpu.strided_load %arg12[%c8, %c0_92] {strides = array<i32: 20, 1>} : memref<40x128xf32, #tpu.memory_space<vmem>>, vector<2x128xf32>
    %106 = arith.truncf %105 : vector<2x128xf32> to vector<2x128xbf16>
    %c8_93 = arith.constant 8 : index
    %c0_94 = arith.constant 0 : index
    %c0_95 = arith.constant 0 : index
    %107 = vector.load %arg6[%c8_93, %c0_94, %c0_95] : memref<17x128x256xbf16, #tpu.memory_space<vmem>>, vector<1x128x256xbf16>
    %108 = vector.shape_cast %107 : vector<1x128x256xbf16> to vector<128x256xbf16>
    %cst_96 = arith.constant dense<0.000000e+00> : vector<2x256xf32>
    %109 = tpu.matmul %106, %108, %cst_96 {dimension_numbers = #tpu.dot_dimension_numbers<[1], [0], [0], [1], [0, 0, 1, 1], [], []>} : vector<2x128xbf16>, vector<128x256xbf16>, vector<2x256xf32> -> vector<2x256xf32>
    %110 = arith.addf %104, %109 : vector<2x256xf32>
    %c9 = arith.constant 9 : index
    %c0_97 = arith.constant 0 : index
    %111 = tpu.strided_load %arg12[%c9, %c0_97] {strides = array<i32: 20, 1>} : memref<40x128xf32, #tpu.memory_space<vmem>>, vector<2x128xf32>
    %112 = arith.truncf %111 : vector<2x128xf32> to vector<2x128xbf16>
    %c9_98 = arith.constant 9 : index
    %c0_99 = arith.constant 0 : index
    %c0_100 = arith.constant 0 : index
    %113 = vector.load %arg6[%c9_98, %c0_99, %c0_100] : memref<17x128x256xbf16, #tpu.memory_space<vmem>>, vector<1x128x256xbf16>
    %114 = vector.shape_cast %113 : vector<1x128x256xbf16> to vector<128x256xbf16>
    %cst_101 = arith.constant dense<0.000000e+00> : vector<2x256xf32>
    %115 = tpu.matmul %112, %114, %cst_101 {dimension_numbers = #tpu.dot_dimension_numbers<[1], [0], [0], [1], [0, 0, 1, 1], [], []>} : vector<2x128xbf16>, vector<128x256xbf16>, vector<2x256xf32> -> vector<2x256xf32>
    %116 = arith.addf %110, %115 : vector<2x256xf32>
    %c10 = arith.constant 10 : index
    %c0_102 = arith.constant 0 : index
    %117 = tpu.strided_load %arg12[%c10, %c0_102] {strides = array<i32: 20, 1>} : memref<40x128xf32, #tpu.memory_space<vmem>>, vector<2x128xf32>
    %118 = arith.truncf %117 : vector<2x128xf32> to vector<2x128xbf16>
    %c10_103 = arith.constant 10 : index
    %c0_104 = arith.constant 0 : index
    %c0_105 = arith.constant 0 : index
    %119 = vector.load %arg6[%c10_103, %c0_104, %c0_105] : memref<17x128x256xbf16, #tpu.memory_space<vmem>>, vector<1x128x256xbf16>
    %120 = vector.shape_cast %119 : vector<1x128x256xbf16> to vector<128x256xbf16>
    %cst_106 = arith.constant dense<0.000000e+00> : vector<2x256xf32>
    %121 = tpu.matmul %118, %120, %cst_106 {dimension_numbers = #tpu.dot_dimension_numbers<[1], [0], [0], [1], [0, 0, 1, 1], [], []>} : vector<2x128xbf16>, vector<128x256xbf16>, vector<2x256xf32> -> vector<2x256xf32>
    %122 = arith.addf %116, %121 : vector<2x256xf32>
    %c11 = arith.constant 11 : index
    %c0_107 = arith.constant 0 : index
    %123 = tpu.strided_load %arg12[%c11, %c0_107] {strides = array<i32: 20, 1>} : memref<40x128xf32, #tpu.memory_space<vmem>>, vector<2x128xf32>
    %124 = arith.truncf %123 : vector<2x128xf32> to vector<2x128xbf16>
    %c11_108 = arith.constant 11 : index
    %c0_109 = arith.constant 0 : index
    %c0_110 = arith.constant 0 : index
    %125 = vector.load %arg6[%c11_108, %c0_109, %c0_110] : memref<17x128x256xbf16, #tpu.memory_space<vmem>>, vector<1x128x256xbf16>
    %126 = vector.shape_cast %125 : vector<1x128x256xbf16> to vector<128x256xbf16>
    %cst_111 = arith.constant dense<0.000000e+00> : vector<2x256xf32>
    %127 = tpu.matmul %124, %126, %cst_111 {dimension_numbers = #tpu.dot_dimension_numbers<[1], [0], [0], [1], [0, 0, 1, 1], [], []>} : vector<2x128xbf16>, vector<128x256xbf16>, vector<2x256xf32> -> vector<2x256xf32>
    %128 = arith.addf %122, %127 : vector<2x256xf32>
    %c12 = arith.constant 12 : index
    %c0_112 = arith.constant 0 : index
    %129 = tpu.strided_load %arg12[%c12, %c0_112] {strides = array<i32: 20, 1>} : memref<40x128xf32, #tpu.memory_space<vmem>>, vector<2x128xf32>
    %130 = arith.truncf %129 : vector<2x128xf32> to vector<2x128xbf16>
    %c12_113 = arith.constant 12 : index
    %c0_114 = arith.constant 0 : index
    %c0_115 = arith.constant 0 : index
    %131 = vector.load %arg6[%c12_113, %c0_114, %c0_115] : memref<17x128x256xbf16, #tpu.memory_space<vmem>>, vector<1x128x256xbf16>
    %132 = vector.shape_cast %131 : vector<1x128x256xbf16> to vector<128x256xbf16>
    %cst_116 = arith.constant dense<0.000000e+00> : vector<2x256xf32>
    %133 = tpu.matmul %130, %132, %cst_116 {dimension_numbers = #tpu.dot_dimension_numbers<[1], [0], [0], [1], [0, 0, 1, 1], [], []>} : vector<2x128xbf16>, vector<128x256xbf16>, vector<2x256xf32> -> vector<2x256xf32>
    %134 = arith.addf %128, %133 : vector<2x256xf32>
    %c13 = arith.constant 13 : index
    %c0_117 = arith.constant 0 : index
    %135 = tpu.strided_load %arg12[%c13, %c0_117] {strides = array<i32: 20, 1>} : memref<40x128xf32, #tpu.memory_space<vmem>>, vector<2x128xf32>
    %136 = arith.truncf %135 : vector<2x128xf32> to vector<2x128xbf16>
    %c13_118 = arith.constant 13 : index
    %c0_119 = arith.constant 0 : index
    %c0_120 = arith.constant 0 : index
    %137 = vector.load %arg6[%c13_118, %c0_119, %c0_120] : memref<17x128x256xbf16, #tpu.memory_space<vmem>>, vector<1x128x256xbf16>
    %138 = vector.shape_cast %137 : vector<1x128x256xbf16> to vector<128x256xbf16>
    %cst_121 = arith.constant dense<0.000000e+00> : vector<2x256xf32>
    %139 = tpu.matmul %136, %138, %cst_121 {dimension_numbers = #tpu.dot_dimension_numbers<[1], [0], [0], [1], [0, 0, 1, 1], [], []>} : vector<2x128xbf16>, vector<128x256xbf16>, vector<2x256xf32> -> vector<2x256xf32>
    %140 = arith.addf %134, %139 : vector<2x256xf32>
    %c14 = arith.constant 14 : index
    %c0_122 = arith.constant 0 : index
    %141 = tpu.strided_load %arg12[%c14, %c0_122] {strides = array<i32: 20, 1>} : memref<40x128xf32, #tpu.memory_space<vmem>>, vector<2x128xf32>
    %142 = arith.truncf %141 : vector<2x128xf32> to vector<2x128xbf16>
    %c14_123 = arith.constant 14 : index
    %c0_124 = arith.constant 0 : index
    %c0_125 = arith.constant 0 : index
    %143 = vector.load %arg6[%c14_123, %c0_124, %c0_125] : memref<17x128x256xbf16, #tpu.memory_space<vmem>>, vector<1x128x256xbf16>
    %144 = vector.shape_cast %143 : vector<1x128x256xbf16> to vector<128x256xbf16>
    %cst_126 = arith.constant dense<0.000000e+00> : vector<2x256xf32>
    %145 = tpu.matmul %142, %144, %cst_126 {dimension_numbers = #tpu.dot_dimension_numbers<[1], [0], [0], [1], [0, 0, 1, 1], [], []>} : vector<2x128xbf16>, vector<128x256xbf16>, vector<2x256xf32> -> vector<2x256xf32>
    %146 = arith.addf %140, %145 : vector<2x256xf32>
    %c15 = arith.constant 15 : index
    %c0_127 = arith.constant 0 : index
    %147 = tpu.strided_load %arg12[%c15, %c0_127] {strides = array<i32: 20, 1>} : memref<40x128xf32, #tpu.memory_space<vmem>>, vector<2x128xf32>
    %148 = arith.truncf %147 : vector<2x128xf32> to vector<2x128xbf16>
    %c15_128 = arith.constant 15 : index
    %c0_129 = arith.constant 0 : index
    %c0_130 = arith.constant 0 : index
    %149 = vector.load %arg6[%c15_128, %c0_129, %c0_130] : memref<17x128x256xbf16, #tpu.memory_space<vmem>>, vector<1x128x256xbf16>
    %150 = vector.shape_cast %149 : vector<1x128x256xbf16> to vector<128x256xbf16>
    %cst_131 = arith.constant dense<0.000000e+00> : vector<2x256xf32>
    %151 = tpu.matmul %148, %150, %cst_131 {dimension_numbers = #tpu.dot_dimension_numbers<[1], [0], [0], [1], [0, 0, 1, 1], [], []>} : vector<2x128xbf16>, vector<128x256xbf16>, vector<2x256xf32> -> vector<2x256xf32>
    %152 = arith.addf %146, %151 : vector<2x256xf32>
    %c16 = arith.constant 16 : index
    %c0_132 = arith.constant 0 : index
    %153 = tpu.strided_load %arg12[%c16, %c0_132] {strides = array<i32: 20, 1>} : memref<40x128xf32, #tpu.memory_space<vmem>>, vector<2x128xf32>
    %154 = arith.truncf %153 : vector<2x128xf32> to vector<2x128xbf16>
    %c16_133 = arith.constant 16 : index
    %c0_134 = arith.constant 0 : index
    %c0_135 = arith.constant 0 : index
    %155 = vector.load %arg6[%c16_133, %c0_134, %c0_135] : memref<17x128x256xbf16, #tpu.memory_space<vmem>>, vector<1x128x256xbf16>
    %156 = vector.shape_cast %155 : vector<1x128x256xbf16> to vector<128x256xbf16>
    %cst_136 = arith.constant dense<0.000000e+00> : vector<2x256xf32>
    %157 = tpu.matmul %154, %156, %cst_136 {dimension_numbers = #tpu.dot_dimension_numbers<[1], [0], [0], [1], [0, 0, 1, 1], [], []>} : vector<2x128xbf16>, vector<128x256xbf16>, vector<2x256xf32> -> vector<2x256xf32>
    %158 = arith.addf %152, %157 : vector<2x256xf32>
    %c0_137 = arith.constant 0 : index
    %c0_138 = arith.constant 0 : index
    %159 = vector.load %arg7[%c0_137, %c0_138] : memref<1x256xf32, #tpu.memory_space<vmem>>, vector<1x256xf32>
    %160 = vector.broadcast %159 : vector<1x256xf32> to vector<2x256xf32>
    %161 = arith.addf %158, %160 : vector<2x256xf32>
    %cst_139 = arith.constant 0.000000e+00 : f32
    %162 = vector.broadcast %cst_139 : f32 to vector<2x256xf32>
    %163 = arith.cmpf ogt, %161, %162 : vector<2x256xf32>
    %164 = math.exp %161 : vector<2x256xf32>
    %cst_140 = arith.constant 1.000000e+00 : f32
    %165 = vector.broadcast %cst_140 : f32 to vector<2x256xf32>
    %166 = arith.subf %164, %165 : vector<2x256xf32>
    %167 = arith.select %163, %161, %166 : vector<2x256xi1>, vector<2x256xf32>
    %168 = arith.truncf %167 : vector<2x256xf32> to vector<2x256xbf16>
    %c0_141 = arith.constant 0 : index
    %c0_142 = arith.constant 0 : index
    %169 = vector.load %arg8[%c0_141, %c0_142] : memref<256x4xbf16, #tpu.memory_space<vmem>>, vector<256x4xbf16>
    %cst_143 = arith.constant dense<0.000000e+00> : vector<2x4xf32>
    %170 = tpu.matmul %168, %169, %cst_143 {dimension_numbers = #tpu.dot_dimension_numbers<[1], [0], [0], [1], [0, 0, 1, 1], [], []>} : vector<2x256xbf16>, vector<256x4xbf16>, vector<2x4xf32> -> vector<2x4xf32>
    %c0_144 = arith.constant 0 : index
    %c0_145 = arith.constant 0 : index
    %171 = vector.load %arg9[%c0_144, %c0_145] : memref<1x4xf32, #tpu.memory_space<vmem>>, vector<1x4xf32>
    %172 = vector.broadcast %171 : vector<1x4xf32> to vector<2x4xf32>
    %173 = arith.addf %170, %172 : vector<2x4xf32>
    %c0_146 = arith.constant 0 : index
    %c0_147 = arith.constant 0 : index
    %174 = vector.load %arg10[%c0_146, %c0_147] : memref<2x4xf32, #tpu.memory_space<vmem>>, vector<2x4xf32>
    tpu.vector_store %arg10[%c0_146, %c0_147], %173 {strides = array<i32>} : memref<2x4xf32, #tpu.memory_space<vmem>>, vector<2x4xf32>,
    return
  }
  func.func @transform_0(%arg0: i32) -> (i32, i32) {
    %c0_i32 = arith.constant 0 : i32
    %c0_i32_0 = arith.constant 0 : i32
    return %arg0, %c0_i32 : i32, i32
  }
  func.func @transform_1(%arg0: i32) -> (i32, i32) {
    %c0_i32 = arith.constant 0 : i32
    %c0_i32_0 = arith.constant 0 : i32
    %c0_i32_1 = arith.constant 0 : i32
    return %c0_i32, %c0_i32_0 : i32, i32
  }
  func.func @transform_2(%arg0: i32) -> (i32, i32) {
    %c0_i32 = arith.constant 0 : i32
    %c0_i32_0 = arith.constant 0 : i32
    %c0_i32_1 = arith.constant 0 : i32
    return %c0_i32, %c0_i32_0 : i32, i32
  }
  func.func @transform_3(%arg0: i32) -> (i32, i32, i32) {
    %c0_i32 = arith.constant 0 : i32
    %c0_i32_0 = arith.constant 0 : i32
    %c0_i32_1 = arith.constant 0 : i32
    %c0_i32_2 = arith.constant 0 : i32
    return %c0_i32, %c0_i32_0, %c0_i32_1 : i32, i32, i32
  }
  func.func @transform_4(%arg0: i32) -> (i32, i32) {
    %c0_i32 = arith.constant 0 : i32
    %c0_i32_0 = arith.constant 0 : i32
    %c0_i32_1 = arith.constant 0 : i32
    return %c0_i32, %c0_i32_0 : i32, i32
  }
  func.func @transform_5(%arg0: i32) -> (i32, i32, i32) {
    %c0_i32 = arith.constant 0 : i32
    %c0_i32_0 = arith.constant 0 : i32
    %c0_i32_1 = arith.constant 0 : i32
    %c0_i32_2 = arith.constant 0 : i32
    return %c0_i32, %c0_i32_0, %c0_i32_1 : i32, i32, i32
  }
  func.func @transform_6(%arg0: i32) -> (i32, i32) {
    %c0_i32 = arith.constant 0 : i32
    %c0_i32_0 = arith.constant 0 : i32
    %c0_i32_1 = arith.constant 0 : i32
    return %c0_i32, %c0_i32_0 : i32, i32
  }
  func.func @transform_7(%arg0: i32) -> (i32, i32) {
    %c0_i32 = arith.constant 0 : i32
    %c0_i32_0 = arith.constant 0 : i32
    %c0_i32_1 = arith.constant 0 : i32
    return %c0_i32, %c0_i32_0 : i32, i32
  }
  func.func @transform_8(%arg0: i32) -> (i32, i32) {
    %c0_i32 = arith.constant 0 : i32
    %c0_i32_0 = arith.constant 0 : i32
    %c0_i32_1 = arith.constant 0 : i32
    return %c0_i32, %c0_i32_0 : i32, i32
  }
  func.func @transform_9(%arg0: i32) -> (i32, i32) {
    %c0_i32 = arith.constant 0 : i32
    %c0_i32_0 = arith.constant 0 : i32
    return %arg0, %c0_i32 : i32, i32
  }
}

</mosaic_0001>

<llo_original>
// kernel: tpu_custom_call.1
$region0: #{tpu_custom_call.1}
  #allocation0 [shape = 'u32[]', space=smem, size = 0x4, offset = 0x4, fixed_abs, tag = 'smem constant byte address 0x4 - core index']
  #allocation1 [shape = 'u32[144,128]{1,0:T(1,128)}', space=vmem, size = 0x12000, scoped, tag = 'internal scratch']
  #allocation2 [shape = 'bf16[88,256]{1,0:T(8,128)(2,1)}', space=vmem, size = 0xb000, scoped, tag = 'scratch operand']
  #allocation3 [shape = 'f32[40,128]{1,0:T(8,128)}', space=vmem, size = 0x5000, scoped, tag = 'scratch operand']
  %s0 = inlined_call_operand.vmem [shape: bf16[160,7], index: 0, kind: input, shape index: {}]
  %s1 = inlined_call_operand.hbm [shape: bf16[7,256], index: 1, kind: input, shape index: {}]
  %s2 = inlined_call_operand.hbm [shape: f32[1,256], index: 2, kind: input, shape index: {}]
  %s3 = inlined_call_operand.hbm [shape: bf16[5,256,128], index: 3, kind: input, shape index: {}]
  %s4 = inlined_call_operand.hbm [shape: f32[1,128], index: 4, kind: input, shape index: {}]
  %s5 = inlined_call_operand.hbm [shape: bf16[17,128,256], index: 5, kind: input, shape index: {}]
  %s6 = inlined_call_operand.hbm [shape: f32[1,256], index: 6, kind: input, shape index: {}]
  %s7 = inlined_call_operand.vmem [shape: bf16[256,4], index: 7, kind: input, shape index: {}]
  %s8 = inlined_call_operand.hbm [shape: f32[1,4], index: 8, kind: input, shape index: {}]
  %s9 = inlined_call_operand.hbm [shape: f32[2,4], index: 9, kind: output, shape index: {}]
  %s10 = sld [smem:[#allocation0]]
  $region74: #{tpu_custom_call.1} parent=0
    _
  %s12 = ssub.s32 1, %s10
  %s13 = scalar_select 0, %s12, %s10
  $region1: #{tpu_custom_call.1} parent=0
    #allocation4 [shape = 'u8[4096]{0}', space=vmem, size = 0x1000, scoped, tag = 'input window, operand 1, single buffered']
    #allocation5 [shape = 's32[1]{0}', space=sflag, size = 0x4, scoped, tag = 'scoped memory for tpu_custom_call.1']
    #allocation6 [shape = 's32[1]{0}', space=sflag, size = 0x4, scoped, tag = 'scoped memory for tpu_custom_call.1']
    #allocation7 [shape = 'u8[1024]{0}', space=vmem, size = 0x400, scoped, tag = 'input window, operand 2, single buffered']
    #allocation8 [shape = 's32[1]{0}', space=sflag, size = 0x4, scoped, tag = 'scoped memory for tpu_custom_call.1']
    #allocation9 [shape = 'u8[327680]{0}', space=vmem, size = 0x50000, scoped, tag = 'input window, operand 3, single buffered']
    #allocation10 [shape = 'u8[512]{0}', space=vmem, size = 0x400, scoped, tag = 'input window, operand 4, single buffered']
    #allocation11 [shape = 's32[1]{0}', space=sflag, size = 0x4, scoped, tag = 'scoped memory for tpu_custom_call.1']
    #allocation12 [shape = 'u8[1114112]{0}', space=vmem, size = 0x110000, scoped, tag = 'input window, operand 5, single buffered']
    #allocation13 [shape = 'u8[1024]{0}', space=vmem, size = 0x400, scoped, tag = 'input window, operand 6, single buffered']
    #allocation14 [shape = 's32[1]{0}', space=sflag, size = 0x4, scoped, tag = 'scoped memory for tpu_custom_call.1']
    #allocation15 [shape = 'u8[512]{0}', space=vmem, size = 0x400, scoped, tag = 'input window, operand 8, single buffered']
    #allocation16 [shape = 'u8[1024]{0}', space=vmem, size = 0x400, scoped, tag = 'output window, operand 0, single buffered']
    %14 = vsyncpa [#allocation5], 0
    %15 = vsyncpa [#allocation8], 0
    %16 = vsyncpa [#allocation11], 0
    %17 = vsyncpa [#allocation14], 0
    %18 = vsyncpa [#allocation6], 0
    // Predicated region
    $region2: #{tpu_custom_call.1} parent=1 // pred_check
      _
    $region3: #{tpu_custom_call.1} parent=1 // pred_check_branch
      %20 = sbr.rel (0) target = $region5
    $region4: #{tpu_custom_call.1} parent=1 // pred_region
      _
    $region5: #{tpu_custom_call.1} parent=1 // pred_fallthru
      _
    // Predicated region
    $region6: #{tpu_custom_call.1} parent=1 // pred_check
      _
    $region7: #{tpu_custom_call.1} parent=1 // pred_check_branch
      %22 = sbr.rel (0) target = $region9
    $region8: #{tpu_custom_call.1} parent=1 // pred_region
      %s24 = ssub.s32 128, 128
      %25 = vsyncadd [#allocation5], %s24
      %s27 = sshll.u32 [#allocation4], 4
      %s28 = int_to_ptr.vmem [resolvable:$true] %s27
      %30 = dma.hbm_to_vmem [thread:$0]  %s1, 128, %s28, [#allocation5]
    $region9: #{tpu_custom_call.1} parent=1 // pred_fallthru
      _
    // Predicated region
    $region10: #{tpu_custom_call.1} parent=1 // pred_check
      _
    $region11: #{tpu_custom_call.1} parent=1 // pred_check_branch
      %32 = sbr.rel (0) target = $region13
    $region12: #{tpu_custom_call.1} parent=1 // pred_region
      %s34 = ssub.s32 32, 32
      %35 = vsyncadd [#allocation8], %s34
      %s37 = sshll.u32 [#allocation7], 4
      %s38 = int_to_ptr.vmem [resolvable:$true] %s37
      %40 = dma.hbm_to_vmem [thread:$0]  %s2, 32, %s38, [#allocation8]
    $region13: #{tpu_custom_call.1} parent=1 // pred_fallthru
      _
    // Predicated region
    $region14: #{tpu_custom_call.1} parent=1 // pred_check
      _
    $region15: #{tpu_custom_call.1} parent=1 // pred_check_branch
      %42 = sbr.rel (0) target = $region17
    $region16: #{tpu_custom_call.1} parent=1 // pred_region
      %s44 = ssub.s32 10240, 10240
      %45 = vsyncadd [#allocation8], %s44
      %s46 = sshll.u32 [#allocation9], 4
      %s47 = int_to_ptr.vmem [resolvable:$true] %s46
      %52 = dma.hbm_to_vmem [thread:$0]  %s3, 10240, %s47, [#allocation8], 64, 64, 4
    $region17: #{tpu_custom_call.1} parent=1 // pred_fallthru
      _
    // Predicated region
    $region18: #{tpu_custom_call.1} parent=1 // pred_check
      _
    $region19: #{tpu_custom_call.1} parent=1 // pred_check_branch
      %54 = sbr.rel (0) target = $region21
    $region20: #{tpu_custom_call.1} parent=1 // pred_region
      %s56 = ssub.s32 16, 16
      %57 = vsyncadd [#allocation11], %s56
      %s59 = sshll.u32 [#allocation10], 4
      %s60 = int_to_ptr.vmem [resolvable:$true] %s59
      %62 = dma.hbm_to_vmem [thread:$0]  %s4, 16, %s60, [#allocation11]
    $region21: #{tpu_custom_call.1} parent=1 // pred_fallthru
      _
    // Predicated region
    $region22: #{tpu_custom_call.1} parent=1 // pred_check
      _
    $region23: #{tpu_custom_call.1} parent=1 // pred_check_branch
      %64 = sbr.rel (0) target = $region25
    $region24: #{tpu_custom_call.1} parent=1 // pred_region
      %s66 = ssub.s32 34816, 34816
      %67 = vsyncadd [#allocation11], %s66
      %s68 = sshll.u32 [#allocation12], 4
      %s69 = int_to_ptr.vmem [resolvable:$true] %s68
      %74 = dma.hbm_to_vmem [thread:$0]  %s5, 34816, %s69, [#allocation11], 128, 128, 8
    $region25: #{tpu_custom_call.1} parent=1 // pred_fallthru
      _
    // Predicated region
    $region26: #{tpu_custom_call.1} parent=1 // pred_check
      _
    $region27: #{tpu_custom_call.1} parent=1 // pred_check_branch
      %76 = sbr.rel (0) target = $region29
    $region28: #{tpu_custom_call.1} parent=1 // pred_region
      %s78 = ssub.s32 32, 32
      %79 = vsyncadd [#allocation14], %s78
      %s81 = sshll.u32 [#allocation13], 4
      %s82 = int_to_ptr.vmem [resolvable:$true] %s81
      %84 = dma.hbm_to_vmem [thread:$0]  %s6, 32, %s82, [#allocation14]
    $region29: #{tpu_custom_call.1} parent=1 // pred_fallthru
      _
    // Predicated region
    $region30: #{tpu_custom_call.1} parent=1 // pred_check
      _
    $region31: #{tpu_custom_call.1} parent=1 // pred_check_branch
      %86 = sbr.rel (0) target = $region33
    $region32: #{tpu_custom_call.1} parent=1 // pred_region
      _
    $region33: #{tpu_custom_call.1} parent=1 // pred_fallthru
      _
    // Predicated region
    $region34: #{tpu_custom_call.1} parent=1 // pred_check
      _
    $region35: #{tpu_custom_call.1} parent=1 // pred_check_branch
      %88 = sbr.rel (0) target = $region37
    $region36: #{tpu_custom_call.1} parent=1 // pred_region
      %s90 = ssub.s32 16, 16
      %91 = vsyncadd [#allocation14], %s90
      %s93 = sshll.u32 [#allocation15], 4
      %s94 = int_to_ptr.vmem [resolvable:$true] %s93
      %96 = dma.hbm_to_vmem [thread:$0]  %s8, 16, %s94, [#allocation14]
    $region37: #{tpu_custom_call.1} parent=1 // pred_fallthru
      _
    // Predicated region
    $region38: #{tpu_custom_call.1} parent=1 // pred_check
      _
    $region39: #{tpu_custom_call.1} parent=1 // pred_check_branch
      %98 = sbr.rel (0) target = $region41
    $region40: #{tpu_custom_call.1} parent=1 // pred_region
      %99 = dma.done [#allocation5], 128
    $region41: #{tpu_custom_call.1} parent=1 // pred_fallthru
      _
    // Predicated region
    $region42: #{tpu_custom_call.1} parent=1 // pred_check
      _
    $region43: #{tpu_custom_call.1} parent=1 // pred_check_branch
      %101 = sbr.rel (0) target = $region45
    $region44: #{tpu_custom_call.1} parent=1 // pred_region
      %102 = dma.done [#allocation8], 32
    $region45: #{tpu_custom_call.1} parent=1 // pred_fallthru
      _
    // Predicated region
    $region46: #{tpu_custom_call.1} parent=1 // pred_check
      _
    $region47: #{tpu_custom_call.1} parent=1 // pred_check_branch
      %104 = sbr.rel (0) target = $region49
    $region48: #{tpu_custom_call.1} parent=1 // pred_region
      %105 = dma.done [#allocation8], 10240
    $region49: #{tpu_custom_call.1} parent=1 // pred_fallthru
      _
    // Predicated region
    $region50: #{tpu_custom_call.1} parent=1 // pred_check
      _
    $region51: #{tpu_custom_call.1} parent=1 // pred_check_branch
      %107 = sbr.rel (0) target = $region53
    $region52: #{tpu_custom_call.1} parent=1 // pred_region
      %108 = dma.done [#allocation11], 16
    $region53: #{tpu_custom_call.1} parent=1 // pred_fallthru
      _
    // Predicated region
    $region54: #{tpu_custom_call.1} parent=1 // pred_check
      _
    $region55: #{tpu_custom_call.1} parent=1 // pred_check_branch
      %110 = sbr.rel (0) target = $region57
    $region56: #{tpu_custom_call.1} parent=1 // pred_region
      %111 = dma.done [#allocation11], 34816
    $region57: #{tpu_custom_call.1} parent=1 // pred_fallthru
      _
    // Predicated region
    $region58: #{tpu_custom_call.1} parent=1 // pred_check
      _
    $region59: #{tpu_custom_call.1} parent=1 // pred_check_branch
      %113 = sbr.rel (0) target = $region61
    $region60: #{tpu_custom_call.1} parent=1 // pred_region
      %114 = dma.done [#allocation14], 32
    $region61: #{tpu_custom_call.1} parent=1 // pred_fallthru
      _
    // Predicated region
    $region62: #{tpu_custom_call.1} parent=1 // pred_check
      _
    $region63: #{tpu_custom_call.1} parent=1 // pred_check_branch
      %116 = sbr.rel (0) target = $region65
    $region64: #{tpu_custom_call.1} parent=1 // pred_region
      %117 = dma.done [#allocation14], 16
    $region65: #{tpu_custom_call.1} parent=1 // pred_fallthru
      _
    %v119 = vld [vmem:[%s0] sm:$0xf]
    %v120 = vld [vmem:[%s0 + $0x4] sm:$0xf]
    %v121 = vld [vmem:[%s0 + $0x8] sm:$0xf]
    %v122 = vld [vmem:[%s0 + $0xc] sm:$0xf]
    %v123 = vld [vmem:[%s0 + $0x10] sm:$0xf]
    %v124 = vld [vmem:[%s0 + $0x14] sm:$0xf]
    %v125 = vld [vmem:[%s0 + $0x18] sm:$0xf]
    %v126 = vld [vmem:[%s0 + $0x1c] sm:$0xf]
    %v127 = vld [vmem:[%s0 + $0x20] sm:$0xf]
    %v128 = vld [vmem:[%s0 + $0x24] sm:$0xf]
    %v129 = vld [vmem:[%s0 + $0x28] sm:$0xf]
    %v130 = vld [vmem:[%s0 + $0x2c] sm:$0xf]
    %v131 = vld [vmem:[%s0 + $0x30] sm:$0xf]
    %v132 = vld [vmem:[%s0 + $0x34] sm:$0xf]
    %v133 = vld [vmem:[%s0 + $0x38] sm:$0xf]
    %v134 = vld [vmem:[%s0 + $0x3c] sm:$0xf]
    %v135 = vld [vmem:[%s0 + $0x40] sm:$0xf]
    %v136 = vld [vmem:[%s0 + $0x44] sm:$0xf]
    %v137 = vld [vmem:[%s0 + $0x48] sm:$0xf]
    %v138 = vld [vmem:[%s0 + $0x4c] sm:$0xf]
    %v139 = vld [vmem:[#allocation4] sm:$0xff]
    %v140 = vld [vmem:[#allocation7] sm:$0x3]
    %v142 = vlaneseq
    %v143 = vshrl.u32 %v142, 7
    %v144 = vsub.s32 0, %v143
    %v145 = vrot.slane %v140, %v144
    %v146 = vlaneseq
    %v147 = vshrl.u32 %v146, 7
    %v148 = vsub.s32 1, %v147
    %v149 = vrot.slane %v140, %v148
    %v172 = vunpack.c.l.b16 %v119
    %v173 = vunpack.c.l.b16 %v120
    %v174 = vunpack.c.l.b16 %v121
    %v175 = vunpack.c.l.b16 %v122
    %v176 = vunpack.c.l.b16 %v123
    %v177 = vunpack.c.l.b16 %v124
    %v178 = vunpack.c.l.b16 %v125
    %v179 = vunpack.c.l.b16 %v126
    %v180 = vunpack.c.l.b16 %v127
    %v181 = vunpack.c.l.b16 %v128
    %v182 = vunpack.c.l.b16 %v129
    %v183 = vunpack.c.l.b16 %v130
    %v184 = vunpack.c.l.b16 %v131
    %v185 = vunpack.c.l.b16 %v132
    %v186 = vunpack.c.l.b16 %v133
    %v187 = vunpack.c.l.b16 %v134
    %v188 = vunpack.c.l.b16 %v135
    %v189 = vunpack.c.l.b16 %v136
    %v190 = vunpack.c.l.b16 %v137
    %v191 = vunpack.c.l.b16 %v138
    %v192 = vpack.c.b16 %v173, %v172
    %v193 = vpack.c.b16 %v175, %v174
    %v194 = vpack.c.b16 %v177, %v176
    %v195 = vpack.c.b16 %v179, %v178
    %v196 = vpack.c.b16 %v181, %v180
    %v197 = vpack.c.b16 %v183, %v182
    %v198 = vpack.c.b16 %v185, %v184
    %v199 = vpack.c.b16 %v187, %v186
    %v200 = vpack.c.b16 %v189, %v188
    %v201 = vpack.c.b16 %v191, %v190
    %v203 = vunpack.c.l.b16 %v139
    %v204 = vunpack.c.h.b16 %v139
    %v205 = vpack.c.b16 %v203, %v203
    %v206 = vpack.c.b16 %v204, %v204
    %vm207 = vcmask 56320
    %v209 = vsel %vm207, %v192, 0
    %v212 = vsel %vm207, %v193, 0
    %v215 = vsel %vm207, %v194, 0
    %v218 = vsel %vm207, %v195, 0
    %v221 = vsel %vm207, %v196, 0
    %v224 = vsel %vm207, %v197, 0
    %v227 = vsel %vm207, %v198, 0
    %v230 = vsel %vm207, %v199, 0
    %v233 = vsel %vm207, %v200, 0
    %v236 = vsel %vm207, %v201, 0
    %vm238 = vcmask 1042432
    %vm239 = vcmask 1043456
    %v240 = vsel %vm238, 4294967295, 65535
    %v241 = vsel %vm239, %v240, 0
    %v243 = vand.u32 %v205, %v241
    %v246 = vand.u32 %v206, %v241
    %248 = vmatprep.subr.bf16.mxu0 %v246
    %249 = vmatpush1.bf16.msra.mxu0 %v243
    %250 = vmatprep.subr.bf16.mxu0 0
    %251 = vmatpush1.bf16.msra.mxu0 0
    %252 = vmatprep.subr.bf16.mxu0 0
    %253 = vmatpush1.bf16.msra.mxu0 0
    %254 = vmatprep.subr.bf16.mxu0 0
    %255 = vmatpush1.bf16.msra.mxu0 0
    %256 = vmatprep.subr.bf16.mxu0 0
    %257 = vmatpush1.bf16.msra.mxu0 0
    %258 = vmatprep.subr.bf16.mxu0 0
    %259 = vmatpush1.bf16.msra.mxu0 0
    %260 = vmatprep.subr.bf16.mxu0 0
    %261 = vmatpush1.bf16.msra.mxu0 0
    %262 = vmatprep.subr.bf16.mxu0 0
    %263 = vmatpush1.bf16.msra.mxu0 0
    %264 = vmatprep.subr.bf16.mxu0 0
    %265 = vmatpush1.bf16.msra.mxu0 0
    %266 = vmatprep.subr.bf16.mxu0 0
    %267 = vmatpush1.bf16.msra.mxu0 0
    %268 = vmatprep.subr.bf16.mxu0 0
    %269 = vmatpush1.bf16.msra.mxu0 0
    %270 = vmatprep.subr.bf16.mxu0 0
    %271 = vmatpush1.bf16.msra.mxu0 0
    %272 = vmatprep.subr.bf16.mxu0 0
    %273 = vmatpush1.bf16.msra.mxu0 0
    %274 = vmatprep.subr.bf16.mxu0 0
    %275 = vmatpush1.bf16.msra.mxu0 0
    %276 = vmatprep.subr.bf16.mxu0 0
    %277 = vmatpush1.bf16.msra.mxu0 0
    %278 = vmatprep.subr.bf16.mxu0 0
    %279 = vmatpush1.bf16.msra.mxu0 0
    %280 = vmatprep.mubr.bf16.mxu0 0
    %281 = vmatmul.mubr.bf16.gmra.mrb[0].mxu0 %v209
    %v282 = vpop.f32.mrb[0].mxu0
    %v283 = vadd.f32 %v145, %v282
    %v284 = vpop.f32.mrb[0].mxu0
    %v285 = vadd.f32 %v149, %v284
    %v286 = vpop.f32.mrb[0].mxu0
    %v287 = vadd.f32 %v145, %v286
    %v288 = vpop.f32.mrb[0].mxu0
    %v289 = vadd.f32 %v149, %v288
    %290 = vmatprep.mubr.bf16.mxu0 0
    %291 = vmatmul.mubr.bf16.gmra.mrb[0].mxu0 %v212
    %v292 = vpop.f32.mrb[0].mxu0
    %v293 = vadd.f32 %v145, %v292
    %v294 = vpop.f32.mrb[0].mxu0
    %v295 = vadd.f32 %v149, %v294
    %v296 = vpop.f32.mrb[0].mxu0
    %v297 = vadd.f32 %v145, %v296
    %v298 = vpop.f32.mrb[0].mxu0
    %v299 = vadd.f32 %v149, %v298
    %300 = vmatprep.mubr.bf16.mxu0 0
    %301 = vmatmul.mubr.bf16.gmra.mrb[0].mxu0 %v215
    %v302 = vpop.f32.mrb[0].mxu0
    %v303 = vadd.f32 %v145, %v302
    %v304 = vpop.f32.mrb[0].mxu0
    %v305 = vadd.f32 %v149, %v304
    %v306 = vpop.f32.mrb[0].mxu0
    %v307 = vadd.f32 %v145, %v306
    %v308 = vpop.f32.mrb[0].mxu0
    %v309 = vadd.f32 %v149, %v308
    %310 = vmatprep.mubr.bf16.mxu0 0
    %311 = vmatmul.mubr.bf16.gmra.mrb[0].mxu0 %v218
    %v312 = vpop.f32.mrb[0].mxu0
    %v313 = vadd.f32 %v145, %v312
    %v314 = vpop.f32.mrb[0].mxu0
    %v315 = vadd.f32 %v149, %v314
    %v316 = vpop.f32.mrb[0].mxu0
    %v317 = vadd.f32 %v145, %v316
    %v318 = vpop.f32.mrb[0].mxu0
    %v319 = vadd.f32 %v149, %v318
    %320 = vmatprep.mubr.bf16.mxu0 0
    %321 = vmatmul.mubr.bf16.gmra.mrb[0].mxu0 %v221
    %v322 = vpop.f32.mrb[0].mxu0
    %v323 = vadd.f32 %v145, %v322
    %v324 = vpop.f32.mrb[0].mxu0
    %v325 = vadd.f32 %v149, %v324
    %v326 = vpop.f32.mrb[0].mxu0
    %v327 = vadd.f32 %v145, %v326
    %v328 = vpop.f32.mrb[0].mxu0
    %v329 = vadd.f32 %v149, %v328
    %330 = vmatprep.mubr.bf16.mxu0 0
    %331 = vmatmul.mubr.bf16.gmra.mrb[0].mxu0 %v224
    %v332 = vpop.f32.mrb[0].mxu0
    %v333 = vadd.f32 %v145, %v332
    %v334 = vpop.f32.mrb[0].mxu0
    %v335 = vadd.f32 %v149, %v334
    %v336 = vpop.f32.mrb[0].mxu0
    %v337 = vadd.f32 %v145, %v336
    %v338 = vpop.f32.mrb[0].mxu0
    %v339 = vadd.f32 %v149, %v338
    %340 = vmatprep.mubr.bf16.mxu0 0
    %341 = vmatmul.mubr.bf16.gmra.mrb[0].mxu0 %v227
    %v342 = vpop.f32.mrb[0].mxu0
    %v343 = vadd.f32 %v145, %v342
    %v344 = vpop.f32.mrb[0].mxu0
    %v345 = vadd.f32 %v149, %v344
    %v346 = vpop.f32.mrb[0].mxu0
    %v347 = vadd.f32 %v145, %v346
    %v348 = vpop.f32.mrb[0].mxu0
    %v349 = vadd.f32 %v149, %v348
    %350 = vmatprep.mubr.bf16.mxu0 0
    %351 = vmatmul.mubr.bf16.gmra.mrb[0].mxu0 %v230
    %v352 = vpop.f32.mrb[0].mxu0
    %v353 = vadd.f32 %v145, %v352
    %v354 = vpop.f32.mrb[0].mxu0
    %v355 = vadd.f32 %v149, %v354
    %v356 = vpop.f32.mrb[0].mxu0
    %v357 = vadd.f32 %v145, %v356
    %v358 = vpop.f32.mrb[0].mxu0
    %v359 = vadd.f32 %v149, %v358
    %360 = vmatprep.mubr.bf16.mxu0 0
    %361 = vmatmul.mubr.bf16.gmra.mrb[0].mxu0 %v233
    %v362 = vpop.f32.mrb[0].mxu0
    %v363 = vadd.f32 %v145, %v362
    %v364 = vpop.f32.mrb[0].mxu0
    %v365 = vadd.f32 %v149, %v364
    %v366 = vpop.f32.mrb[0].mxu0
    %v367 = vadd.f32 %v145, %v366
    %v368 = vpop.f32.mrb[0].mxu0
    %v369 = vadd.f32 %v149, %v368
    %370 = vmatprep.mubr.bf16.mxu0 0
    %371 = vmatmul.mubr.bf16.gmra.mrb[0].mxu0 %v236
    %v372 = vpop.f32.mrb[0].mxu0
    %v373 = vadd.f32 %v145, %v372
    %v374 = vpop.f32.mrb[0].mxu0
    %v375 = vadd.f32 %v149, %v374
    %v376 = vpop.f32.mrb[0].mxu0
    %v377 = vadd.f32 %v145, %v376
    %v378 = vpop.f32.mrb[0].mxu0
    %v379 = vadd.f32 %v149, %v378
    %380 = vdwg.mxu0
    %vm381 = vcmp.gt.f32.partialorder %v283, 0.0
    %vm382 = vcmp.gt.f32.partialorder %v285, 0.0
    %vm383 = vcmp.gt.f32.partialorder %v287, 0.0
    %vm384 = vcmp.gt.f32.partialorder %v289, 0.0
    %vm385 = vcmp.gt.f32.partialorder %v293, 0.0
    %vm386 = vcmp.gt.f32.partialorder %v295, 0.0
    %vm387 = vcmp.gt.f32.partialorder %v297, 0.0
    %vm388 = vcmp.gt.f32.partialorder %v299, 0.0
    %vm389 = vcmp.gt.f32.partialorder %v303, 0.0
    %vm390 = vcmp.gt.f32.partialorder %v305, 0.0
    %vm391 = vcmp.gt.f32.partialorder %v307, 0.0
    %vm392 = vcmp.gt.f32.partialorder %v309, 0.0
    %vm393 = vcmp.gt.f32.partialorder %v313, 0.0
    %vm394 = vcmp.gt.f32.partialorder %v315, 0.0
    %vm395 = vcmp.gt.f32.partialorder %v317, 0.0
    %vm396 = vcmp.gt.f32.partialorder %v319, 0.0
    %vm397 = vcmp.gt.f32.partialorder %v323, 0.0
    %vm398 = vcmp.gt.f32.partialorder %v325, 0.0
    %vm399 = vcmp.gt.f32.partialorder %v327, 0.0
    %vm400 = vcmp.gt.f32.partialorder %v329, 0.0
    %vm401 = vcmp.gt.f32.partialorder %v333, 0.0
    %vm402 = vcmp.gt.f32.partialorder %v335, 0.0
    %vm403 = vcmp.gt.f32.partialorder %v337, 0.0
    %vm404 = vcmp.gt.f32.partialorder %v339, 0.0
    %vm405 = vcmp.gt.f32.partialorder %v343, 0.0
    %vm406 = vcmp.gt.f32.partialorder %v345, 0.0
    %vm407 = vcmp.gt.f32.partialorder %v347, 0.0
    %vm408 = vcmp.gt.f32.partialorder %v349, 0.0
    %vm409 = vcmp.gt.f32.partialorder %v353, 0.0
    %vm410 = vcmp.gt.f32.partialorder %v355, 0.0
    %vm411 = vcmp.gt.f32.partialorder %v357, 0.0
    %vm412 = vcmp.gt.f32.partialorder %v359, 0.0
    %vm413 = vcmp.gt.f32.partialorder %v363, 0.0
    %vm414 = vcmp.gt.f32.partialorder %v365, 0.0
    %vm415 = vcmp.gt.f32.partialorder %v367, 0.0
    %vm416 = vcmp.gt.f32.partialorder %v369, 0.0
    %vm417 = vcmp.gt.f32.partialorder %v373, 0.0
    %vm418 = vcmp.gt.f32.partialorder %v375, 0.0
    %vm419 = vcmp.gt.f32.partialorder %v377, 0.0
    %vm420 = vcmp.gt.f32.partialorder %v379, 0.0
    %v421 = vmul.f32 %v283, 1.442695
    %v422 = vpow.pop %v421
    %v423 = vmul.f32 %v285, 1.442695
    %v424 = vpow.pop %v423
    %v425 = vmul.f32 %v287, 1.442695
    %v426 = vpow.pop %v425
    %v427 = vmul.f32 %v289, 1.442695
    %v428 = vpow.pop %v427
    %v429 = vmul.f32 %v293, 1.442695
    %v430 = vpow.pop %v429
    %v431 = vmul.f32 %v295, 1.442695
    %v432 = vpow.pop %v431
    %v433 = vmul.f32 %v297, 1.442695
    %v434 = vpow.pop %v433
    %v435 = vmul.f32 %v299, 1.442695
    %v436 = vpow.pop %v435
    %v437 = vmul.f32 %v303, 1.442695
    %v438 = vpow.pop %v437
    %v439 = vmul.f32 %v305, 1.442695
    %v440 = vpow.pop %v439
    %v441 = vmul.f32 %v307, 1.442695
    %v442 = vpow.pop %v441
    %v443 = vmul.f32 %v309, 1.442695
    %v444 = vpow.pop %v443
    %v445 = vmul.f32 %v313, 1.442695
    %v446 = vpow.pop %v445
    %v447 = vmul.f32 %v315, 1.442695
    %v448 = vpow.pop %v447
    %v449 = vmul.f32 %v317, 1.442695
    %v450 = vpow.pop %v449
    %v451 = vmul.f32 %v319, 1.442695
    %v452 = vpow.pop %v451
    %v453 = vmul.f32 %v323, 1.442695
    %v454 = vpow.pop %v453
    %v455 = vmul.f32 %v325, 1.442695
    %v456 = vpow.pop %v455
    %v457 = vmul.f32 %v327, 1.442695
    %v458 = vpow.pop %v457
    %v459 = vmul.f32 %v329, 1.442695
    %v460 = vpow.pop %v459
    %v461 = vmul.f32 %v333, 1.442695
    %v462 = vpow.pop %v461
    %v463 = vmul.f32 %v335, 1.442695
    %v464 = vpow.pop %v463
    %v465 = vmul.f32 %v337, 1.442695
    %v466 = vpow.pop %v465
    %v467 = vmul.f32 %v339, 1.442695
    %v468 = vpow.pop %v467
    %v469 = vmul.f32 %v343, 1.442695
    %v470 = vpow.pop %v469
    %v471 = vmul.f32 %v345, 1.442695
    %v472 = vpow.pop %v471
    %v473 = vmul.f32 %v347, 1.442695
    %v474 = vpow.pop %v473
    %v475 = vmul.f32 %v349, 1.442695
    %v476 = vpow.pop %v475
    %v477 = vmul.f32 %v353, 1.442695
    %v478 = vpow.pop %v477
    %v479 = vmul.f32 %v355, 1.442695
    %v480 = vpow.pop %v479
    %v481 = vmul.f32 %v357, 1.442695
    %v482 = vpow.pop %v481
    %v483 = vmul.f32 %v359, 1.442695
    %v484 = vpow.pop %v483
    %v485 = vmul.f32 %v363, 1.442695
    %v486 = vpow.pop %v485
    %v487 = vmul.f32 %v365, 1.442695
    %v488 = vpow.pop %v487
    %v489 = vmul.f32 %v367, 1.442695
    %v490 = vpow.pop %v489
    %v491 = vmul.f32 %v369, 1.442695
    %v492 = vpow.pop %v491
    %v493 = vmul.f32 %v373, 1.442695
    %v494 = vpow.pop %v493
    %v495 = vmul.f32 %v375, 1.442695
    %v496 = vpow.pop %v495
    %v497 = vmul.f32 %v377, 1.442695
    %v498 = vpow.pop %v497
    %v499 = vmul.f32 %v379, 1.442695
    %v500 = vpow.pop %v499
    %v501 = vsub.f32 %v422, 1.0
    %v502 = vsub.f32 %v424, 1.0
    %v503 = vsub.f32 %v426, 1.0
    %v504 = vsub.f32 %v428, 1.0
    %v505 = vsub.f32 %v430, 1.0
    %v506 = vsub.f32 %v432, 1.0
    %v507 = vsub.f32 %v434, 1.0
    %v508 = vsub.f32 %v436, 1.0
    %v509 = vsub.f32 %v438, 1.0
    %v510 = vsub.f32 %v440, 1.0
    %v511 = vsub.f32 %v442, 1.0
    %v512 = vsub.f32 %v444, 1.0
    %v513 = vsub.f32 %v446, 1.0
    %v514 = vsub.f32 %v448, 1.0
    %v515 = vsub.f32 %v450, 1.0
    %v516 = vsub.f32 %v452, 1.0
    %v517 = vsub.f32 %v454, 1.0
    %v518 = vsub.f32 %v456, 1.0
    %v519 = vsub.f32 %v458, 1.0
    %v520 = vsub.f32 %v460, 1.0
    %v521 = vsub.f32 %v462, 1.0
    %v522 = vsub.f32 %v464, 1.0
    %v523 = vsub.f32 %v466, 1.0
    %v524 = vsub.f32 %v468, 1.0
    %v525 = vsub.f32 %v470, 1.0
    %v526 = vsub.f32 %v472, 1.0
    %v527 = vsub.f32 %v474, 1.0
    %v528 = vsub.f32 %v476, 1.0
    %v529 = vsub.f32 %v478, 1.0
    %v530 = vsub.f32 %v480, 1.0
    %v531 = vsub.f32 %v482, 1.0
    %v532 = vsub.f32 %v484, 1.0
    %v533 = vsub.f32 %v486, 1.0
    %v534 = vsub.f32 %v488, 1.0
    %v535 = vsub.f32 %v490, 1.0
    %v536 = vsub.f32 %v492, 1.0
    %v537 = vsub.f32 %v494, 1.0
    %v538 = vsub.f32 %v496, 1.0
    %v539 = vsub.f32 %v498, 1.0
    %v540 = vsub.f32 %v500, 1.0
    %v541 = vsel %vm381, %v283, %v501
    %v542 = vsel %vm382, %v285, %v502
    %v543 = vsel %vm383, %v287, %v503
    %v544 = vsel %vm384, %v289, %v504
    %v545 = vsel %vm385, %v293, %v505
    %v546 = vsel %vm386, %v295, %v506
    %v547 = vsel %vm387, %v297, %v507
    %v548 = vsel %vm388, %v299, %v508
    %v549 = vsel %vm389, %v303, %v509
    %v550 = vsel %vm390, %v305, %v510
    %v551 = vsel %vm391, %v307, %v511
    %v552 = vsel %vm392, %v309, %v512
    %v553 = vsel %vm393, %v313, %v513
    %v554 = vsel %vm394, %v315, %v514
    %v555 = vsel %vm395, %v317, %v515
    %v556 = vsel %vm396, %v319, %v516
    %v557 = vsel %vm397, %v323, %v517
    %v558 = vsel %vm398, %v325, %v518
    %v559 = vsel %vm399, %v327, %v519
    %v560 = vsel %vm400, %v329, %v520
    %v561 = vsel %vm401, %v333, %v521
    %v562 = vsel %vm402, %v335, %v522
    %v563 = vsel %vm403, %v337, %v523
    %v564 = vsel %vm404, %v339, %v524
    %v565 = vsel %vm405, %v343, %v525
    %v566 = vsel %vm406, %v345, %v526
    %v567 = vsel %vm407, %v347, %v527
    %v568 = vsel %vm408, %v349, %v528
    %v569 = vsel %vm409, %v353, %v529
    %v570 = vsel %vm410, %v355, %v530
    %v571 = vsel %vm411, %v357, %v531
    %v572 = vsel %vm412, %v359, %v532
    %v573 = vsel %vm413, %v363, %v533
    %v574 = vsel %vm414, %v365, %v534
    %v575 = vsel %vm415, %v367, %v535
    %v576 = vsel %vm416, %v369, %v536
    %v577 = vsel %vm417, %v373, %v537
    %v578 = vsel %vm418, %v375, %v538
    %v579 = vsel %vm419, %v377, %v539
    %v580 = vsel %vm420, %v379, %v540
    %v621 = vcombine.low %v541, %v542
    %v622 = vcombine.high %v541, %v542
    %v624 = vunpack.c.l.s4 1983009808
    %v625 = vunpack.c.0.s8 %v624
    %v626 = vlaneseq
    %v627 = vshrl.u32 %v626, 7
    %v628 = vsub.s32 %v625, %v627
    %v629 = vrot.slane %v621, %v628
    %v631 = vunpack.c.l.s4 1983009808
    %v632 = vunpack.c.0.s8 %v631
    %v633 = vlaneseq
    %v634 = vshrl.u32 %v633, 7
    %v635 = vsub.s32 %v632, %v634
    %v636 = vrot.slane %v622, %v635
    %v637 = vcombine.high %v629, %v629
    %v638 = vcombine.high %v636, %v636
    %v639 = vcombine.low %v543, %v544
    %v640 = vcombine.high %v543, %v544
    %v642 = vunpack.c.l.s4 1983009808
    %v643 = vunpack.c.0.s8 %v642
    %v644 = vlaneseq
    %v645 = vshrl.u32 %v644, 7
    %v646 = vsub.s32 %v643, %v645
    %v647 = vrot.slane %v639, %v646
    %v649 = vunpack.c.l.s4 1983009808
    %v650 = vunpack.c.0.s8 %v649
    %v651 = vlaneseq
    %v652 = vshrl.u32 %v651, 7
    %v653 = vsub.s32 %v650, %v652
    %v654 = vrot.slane %v640, %v653
    %v655 = vcombine.high %v647, %v647
    %v656 = vcombine.high %v654, %v654
    %v657 = vcombine.low %v545, %v546
    %v658 = vcombine.high %v545, %v546
    %v660 = vunpack.c.l.s4 1983009808
    %v661 = vunpack.c.0.s8 %v660
    %v662 = vlaneseq
    %v663 = vshrl.u32 %v662, 7
    %v664 = vsub.s32 %v661, %v663
    %v665 = vrot.slane %v657, %v664
    %v667 = vunpack.c.l.s4 1983009808
    %v668 = vunpack.c.0.s8 %v667
    %v669 = vlaneseq
    %v670 = vshrl.u32 %v669, 7
    %v671 = vsub.s32 %v668, %v670
    %v672 = vrot.slane %v658, %v671
    %v673 = vcombine.high %v665, %v665
    %v674 = vcombine.high %v672, %v672
    %v675 = vcombine.low %v547, %v548
    %v676 = vcombine.high %v547, %v548
    %v678 = vunpack.c.l.s4 1983009808
    %v679 = vunpack.c.0.s8 %v678
    %v680 = vlaneseq
    %v681 = vshrl.u32 %v680, 7
    %v682 = vsub.s32 %v679, %v681
    %v683 = vrot.slane %v675, %v682
    %v685 = vunpack.c.l.s4 1983009808
    %v686 = vunpack.c.0.s8 %v685
    %v687 = vlaneseq
    %v688 = vshrl.u32 %v687, 7
    %v689 = vsub.s32 %v686, %v688
    %v690 = vrot.slane %v676, %v689
    %v691 = vcombine.high %v683, %v683
    %v692 = vcombine.high %v690, %v690
    %v693 = vcombine.low %v549, %v550
    %v694 = vcombine.high %v549, %v550
    %v696 = vunpack.c.l.s4 1983009808
    %v697 = vunpack.c.0.s8 %v696
    %v698 = vlaneseq
    %v699 = vshrl.u32 %v698, 7
    %v700 = vsub.s32 %v697, %v699
    %v701 = vrot.slane %v693, %v700
    %v703 = vunpack.c.l.s4 1983009808
    %v704 = vunpack.c.0.s8 %v703
    %v705 = vlaneseq
    %v706 = vshrl.u32 %v705, 7
    %v707 = vsub.s32 %v704, %v706
    %v708 = vrot.slane %v694, %v707
    %v709 = vcombine.high %v701, %v701
    %v710 = vcombine.high %v708, %v708
    %v711 = vcombine.low %v551, %v552
    %v712 = vcombine.high %v551, %v552
    %v714 = vunpack.c.l.s4 1983009808
    %v715 = vunpack.c.0.s8 %v714
    %v716 = vlaneseq
    %v717 = vshrl.u32 %v716, 7
    %v718 = vsub.s32 %v715, %v717
    %v719 = vrot.slane %v711, %v718
    %v721 = vunpack.c.l.s4 1983009808
    %v722 = vunpack.c.0.s8 %v721
    %v723 = vlaneseq
    %v724 = vshrl.u32 %v723, 7
    %v725 = vsub.s32 %v722, %v724
    %v726 = vrot.slane %v712, %v725
    %v727 = vcombine.high %v719, %v719
    %v728 = vcombine.high %v726, %v726
    %v729 = vcombine.low %v553, %v554
    %v730 = vcombine.high %v553, %v554
    %v732 = vunpack.c.l.s4 1983009808
    %v733 = vunpack.c.0.s8 %v732
    %v734 = vlaneseq
    %v735 = vshrl.u32 %v734, 7
    %v736 = vsub.s32 %v733, %v735
    %v737 = vrot.slane %v729, %v736
    %v739 = vunpack.c.l.s4 1983009808
    %v740 = vunpack.c.0.s8 %v739
    %v741 = vlaneseq
    %v742 = vshrl.u32 %v741, 7
    %v743 = vsub.s32 %v740, %v742
    %v744 = vrot.slane %v730, %v743
    %v745 = vcombine.high %v737, %v737
    %v746 = vcombine.high %v744, %v744
    %v747 = vcombine.low %v555, %v556
    %v748 = vcombine.high %v555, %v556
    %v750 = vunpack.c.l.s4 1983009808
    %v751 = vunpack.c.0.s8 %v750
    %v752 = vlaneseq
    %v753 = vshrl.u32 %v752, 7
    %v754 = vsub.s32 %v751, %v753
    %v755 = vrot.slane %v747, %v754
    %v757 = vunpack.c.l.s4 1983009808
    %v758 = vunpack.c.0.s8 %v757
    %v759 = vlaneseq
    %v760 = vshrl.u32 %v759, 7
    %v761 = vsub.s32 %v758, %v760
    %v762 = vrot.slane %v748, %v761
    %v763 = vcombine.high %v755, %v755
    %v764 = vcombine.high %v762, %v762
    %v765 = vcombine.low %v557, %v558
    %v766 = vcombine.high %v557, %v558
    %v768 = vunpack.c.l.s4 1983009808
    %v769 = vunpack.c.0.s8 %v768
    %v770 = vlaneseq
    %v771 = vshrl.u32 %v770, 7
    %v772 = vsub.s32 %v769, %v771
    %v773 = vrot.slane %v765, %v772
    %v775 = vunpack.c.l.s4 1983009808
    %v776 = vunpack.c.0.s8 %v775
    %v777 = vlaneseq
    %v778 = vshrl.u32 %v777, 7
    %v779 = vsub.s32 %v776, %v778
    %v780 = vrot.slane %v766, %v779
    %v781 = vcombine.high %v773, %v773
    %v782 = vcombine.high %v780, %v780
    %v783 = vcombine.low %v559, %v560
    %v784 = vcombine.high %v559, %v560
    %v786 = vunpack.c.l.s4 1983009808
    %v787 = vunpack.c.0.s8 %v786
    %v788 = vlaneseq
    %v789 = vshrl.u32 %v788, 7
    %v790 = vsub.s32 %v787, %v789
    %v791 = vrot.slane %v783, %v790
    %v793 = vunpack.c.l.s4 1983009808
    %v794 = vunpack.c.0.s8 %v793
    %v795 = vlaneseq
    %v796 = vshrl.u32 %v795, 7
    %v797 = vsub.s32 %v794, %v796
    %v798 = vrot.slane %v784, %v797
    %v799 = vcombine.high %v791, %v791
    %v800 = vcombine.high %v798, %v798
    %v801 = vcombine.low %v561, %v562
    %v802 = vcombine.high %v561, %v562
    %v804 = vunpack.c.l.s4 1983009808
    %v805 = vunpack.c.0.s8 %v804
    %v806 = vlaneseq
    %v807 = vshrl.u32 %v806, 7
    %v808 = vsub.s32 %v805, %v807
    %v809 = vrot.slane %v801, %v808
    %v811 = vunpack.c.l.s4 1983009808
    %v812 = vunpack.c.0.s8 %v811
    %v813 = vlaneseq
    %v814 = vshrl.u32 %v813, 7
    %v815 = vsub.s32 %v812, %v814
    %v816 = vrot.slane %v802, %v815
    %v817 = vcombine.high %v809, %v809
    %v818 = vcombine.high %v816, %v816
    %v819 = vcombine.low %v563, %v564
    %v820 = vcombine.high %v563, %v564
    %v822 = vunpack.c.l.s4 1983009808
    %v823 = vunpack.c.0.s8 %v822
    %v824 = vlaneseq
    %v825 = vshrl.u32 %v824, 7
    %v826 = vsub.s32 %v823, %v825
    %v827 = vrot.slane %v819, %v826
    %v829 = vunpack.c.l.s4 1983009808
    %v830 = vunpack.c.0.s8 %v829
    %v831 = vlaneseq
    %v832 = vshrl.u32 %v831, 7
    %v833 = vsub.s32 %v830, %v832
    %v834 = vrot.slane %v820, %v833
    %v835 = vcombine.high %v827, %v827
    %v836 = vcombine.high %v834, %v834
    %v837 = vcombine.low %v565, %v566
    %v838 = vcombine.high %v565, %v566
    %v840 = vunpack.c.l.s4 1983009808
    %v841 = vunpack.c.0.s8 %v840
    %v842 = vlaneseq
    %v843 = vshrl.u32 %v842, 7
    %v844 = vsub.s32 %v841, %v843
    %v845 = vrot.slane %v837, %v844
    %v847 = vunpack.c.l.s4 1983009808
    %v848 = vunpack.c.0.s8 %v847
    %v849 = vlaneseq
    %v850 = vshrl.u32 %v849, 7
    %v851 = vsub.s32 %v848, %v850
    %v852 = vrot.slane %v838, %v851
    %v853 = vcombine.high %v845, %v845
    %v854 = vcombine.high %v852, %v852
    %v855 = vcombine.low %v567, %v568
    %v856 = vcombine.high %v567, %v568
    %v858 = vunpack.c.l.s4 1983009808
    %v859 = vunpack.c.0.s8 %v858
    %v860 = vlaneseq
    %v861 = vshrl.u32 %v860, 7
    %v862 = vsub.s32 %v859, %v861
    %v863 = vrot.slane %v855, %v862
    %v865 = vunpack.c.l.s4 1983009808
    %v866 = vunpack.c.0.s8 %v865
    %v867 = vlaneseq
    %v868 = vshrl.u32 %v867, 7
    %v869 = vsub.s32 %v866, %v868
    %v870 = vrot.slane %v856, %v869
    %v871 = vcombine.high %v863, %v863
    %v872 = vcombine.high %v870, %v870
    %v873 = vcombine.low %v569, %v570
    %v874 = vcombine.high %v569, %v570
    %v876 = vunpack.c.l.s4 1983009808
    %v877 = vunpack.c.0.s8 %v876
    %v878 = vlaneseq
    %v879 = vshrl.u32 %v878, 7
    %v880 = vsub.s32 %v877, %v879
    %v881 = vrot.slane %v873, %v880
    %v883 = vunpack.c.l.s4 1983009808
    %v884 = vunpack.c.0.s8 %v883
    %v885 = vlaneseq
    %v886 = vshrl.u32 %v885, 7
    %v887 = vsub.s32 %v884, %v886
    %v888 = vrot.slane %v874, %v887
    %v889 = vcombine.high %v881, %v881
    %v890 = vcombine.high %v888, %v888
    %v891 = vcombine.low %v571, %v572
    %v892 = vcombine.high %v571, %v572
    %v894 = vunpack.c.l.s4 1983009808
    %v895 = vunpack.c.0.s8 %v894
    %v896 = vlaneseq
    %v897 = vshrl.u32 %v896, 7
    %v898 = vsub.s32 %v895, %v897
    %v899 = vrot.slane %v891, %v898
    %v901 = vunpack.c.l.s4 1983009808
    %v902 = vunpack.c.0.s8 %v901
    %v903 = vlaneseq
    %v904 = vshrl.u32 %v903, 7
    %v905 = vsub.s32 %v902, %v904
    %v906 = vrot.slane %v892, %v905
    %v907 = vcombine.high %v899, %v899
    %v908 = vcombine.high %v906, %v906
    %v909 = vcombine.low %v573, %v574
    %v910 = vcombine.high %v573, %v574
    %v912 = vunpack.c.l.s4 1983009808
    %v913 = vunpack.c.0.s8 %v912
    %v914 = vlaneseq
    %v915 = vshrl.u32 %v914, 7
    %v916 = vsub.s32 %v913, %v915
    %v917 = vrot.slane %v909, %v916
    %v919 = vunpack.c.l.s4 1983009808
    %v920 = vunpack.c.0.s8 %v919
    %v921 = vlaneseq
    %v922 = vshrl.u32 %v921, 7
    %v923 = vsub.s32 %v920, %v922
    %v924 = vrot.slane %v910, %v923
    %v925 = vcombine.high %v917, %v917
    %v926 = vcombine.high %v924, %v924
    %v927 = vcombine.low %v575, %v576
    %v928 = vcombine.high %v575, %v576
    %v930 = vunpack.c.l.s4 1983009808
    %v931 = vunpack.c.0.s8 %v930
    %v932 = vlaneseq
    %v933 = vshrl.u32 %v932, 7
    %v934 = vsub.s32 %v931, %v933
    %v935 = vrot.slane %v927, %v934
    %v937 = vunpack.c.l.s4 1983009808
    %v938 = vunpack.c.0.s8 %v937
    %v939 = vlaneseq
    %v940 = vshrl.u32 %v939, 7
    %v941 = vsub.s32 %v938, %v940
    %v942 = vrot.slane %v928, %v941
    %v943 = vcombine.high %v935, %v935
    %v944 = vcombine.high %v942, %v942
    %v945 = vcombine.low %v577, %v578
    %v946 = vcombine.high %v577, %v578
    %v948 = vunpack.c.l.s4 1983009808
    %v949 = vunpack.c.0.s8 %v948
    %v950 = vlaneseq
    %v951 = vshrl.u32 %v950, 7
    %v952 = vsub.s32 %v949, %v951
    %v953 = vrot.slane %v945, %v952
    %v955 = vunpack.c.l.s4 1983009808
    %v956 = vunpack.c.0.s8 %v955
    %v957 = vlaneseq
    %v958 = vshrl.u32 %v957, 7
    %v959 = vsub.s32 %v956, %v958
    %v960 = vrot.slane %v946, %v959
    %v961 = vcombine.high %v953, %v953
    %v962 = vcombine.high %v960, %v960
    %v963 = vcombine.low %v579, %v580
    %v964 = vcombine.high %v579, %v580
    %v966 = vunpack.c.l.s4 1983009808
    %v967 = vunpack.c.0.s8 %v966
    %v968 = vlaneseq
    %v969 = vshrl.u32 %v968, 7
    %v970 = vsub.s32 %v967, %v969
    %v971 = vrot.slane %v963, %v970
    %v973 = vunpack.c.l.s4 1983009808
    %v974 = vunpack.c.0.s8 %v973
    %v975 = vlaneseq
    %v976 = vshrl.u32 %v975, 7
    %v977 = vsub.s32 %v974, %v976
    %v978 = vrot.slane %v964, %v977
    %v979 = vcombine.high %v971, %v971
    %v980 = vcombine.high %v978, %v978
    %v982 = vunpack.c.l.s4 1983009808
    %v983 = vunpack.c.0.s8 %v982
    %v984 = vlaneseq
    %v985 = vshrl.u32 %v984, 7
    %v986 = vsub.s32 %v983, %v985
    %v987 = vrot.slane %v629, %v986
    %v988 = vcombine.high %v987, %v987
    %v990 = vunpack.c.l.s4 1983009808
    %v991 = vunpack.c.0.s8 %v990
    %v992 = vlaneseq
    %v993 = vshrl.u32 %v992, 7
    %v994 = vsub.s32 %v991, %v993
    %v995 = vrot.slane %v637, %v994
    %v996 = vcombine.high %v995, %v995
    %v998 = vunpack.c.l.s4 1983009808
    %v999 = vunpack.c.0.s8 %v998
    %v1000 = vlaneseq
    %v1001 = vshrl.u32 %v1000, 7
    %v1002 = vsub.s32 %v999, %v1001
    %v1003 = vrot.slane %v636, %v1002
    %v1004 = vcombine.high %v1003, %v1003
    %v1006 = vunpack.c.l.s4 1983009808
    %v1007 = vunpack.c.0.s8 %v1006
    %v1008 = vlaneseq
    %v1009 = vshrl.u32 %v1008, 7
    %v1010 = vsub.s32 %v1007, %v1009
    %v1011 = vrot.slane %v638, %v1010
    %v1012 = vcombine.high %v1011, %v1011
    %v1014 = vunpack.c.l.s4 1983009808
    %v1015 = vunpack.c.0.s8 %v1014
    %v1016 = vlaneseq
    %v1017 = vshrl.u32 %v1016, 7
    %v1018 = vsub.s32 %v1015, %v1017
    %v1019 = vrot.slane %v647, %v1018
    %v1020 = vcombine.high %v1019, %v1019
    %v1022 = vunpack.c.l.s4 1983009808
    %v1023 = vunpack.c.0.s8 %v1022
    %v1024 = vlaneseq
    %v1025 = vshrl.u32 %v1024, 7
    %v1026 = vsub.s32 %v1023, %v1025
    %v1027 = vrot.slane %v655, %v1026
    %v1028 = vcombine.high %v1027, %v1027
    %v1030 = vunpack.c.l.s4 1983009808
    %v1031 = vunpack.c.0.s8 %v1030
    %v1032 = vlaneseq
    %v1033 = vshrl.u32 %v1032, 7
    %v1034 = vsub.s32 %v1031, %v1033
    %v1035 = vrot.slane %v654, %v1034
    %v1036 = vcombine.high %v1035, %v1035
    %v1038 = vunpack.c.l.s4 1983009808
    %v1039 = vunpack.c.0.s8 %v1038
    %v1040 = vlaneseq
    %v1041 = vshrl.u32 %v1040, 7
    %v1042 = vsub.s32 %v1039, %v1041
    %v1043 = vrot.slane %v656, %v1042
    %v1044 = vcombine.high %v1043, %v1043
    %v1046 = vunpack.c.l.s4 1983009808
    %v1047 = vunpack.c.0.s8 %v1046
    %v1048 = vlaneseq
    %v1049 = vshrl.u32 %v1048, 7
    %v1050 = vsub.s32 %v1047, %v1049
    %v1051 = vrot.slane %v665, %v1050
    %v1052 = vcombine.high %v1051, %v1051
    %v1054 = vunpack.c.l.s4 1983009808
    %v1055 = vunpack.c.0.s8 %v1054
    %v1056 = vlaneseq
    %v1057 = vshrl.u32 %v1056, 7
    %v1058 = vsub.s32 %v1055, %v1057
    %v1059 = vrot.slane %v673, %v1058
    %v1060 = vcombine.high %v1059, %v1059
    %v1062 = vunpack.c.l.s4 1983009808
    %v1063 = vunpack.c.0.s8 %v1062
    %v1064 = vlaneseq
    %v1065 = vshrl.u32 %v1064, 7
    %v1066 = vsub.s32 %v1063, %v1065
    %v1067 = vrot.slane %v672, %v1066
    %v1068 = vcombine.high %v1067, %v1067
    %v1070 = vunpack.c.l.s4 1983009808
    %v1071 = vunpack.c.0.s8 %v1070
    %v1072 = vlaneseq
    %v1073 = vshrl.u32 %v1072, 7
    %v1074 = vsub.s32 %v1071, %v1073
    %v1075 = vrot.slane %v674, %v1074
    %v1076 = vcombine.high %v1075, %v1075
    %v1078 = vunpack.c.l.s4 1983009808
    %v1079 = vunpack.c.0.s8 %v1078
    %v1080 = vlaneseq
    %v1081 = vshrl.u32 %v1080, 7
    %v1082 = vsub.s32 %v1079, %v1081
    %v1083 = vrot.slane %v683, %v1082
    %v1084 = vcombine.high %v1083, %v1083
    %v1086 = vunpack.c.l.s4 1983009808
    %v1087 = vunpack.c.0.s8 %v1086
    %v1088 = vlaneseq
    %v1089 = vshrl.u32 %v1088, 7
    %v1090 = vsub.s32 %v1087, %v1089
    %v1091 = vrot.slane %v691, %v1090
    %v1092 = vcombine.high %v1091, %v1091
    %v1094 = vunpack.c.l.s4 1983009808
    %v1095 = vunpack.c.0.s8 %v1094
    %v1096 = vlaneseq
    %v1097 = vshrl.u32 %v1096, 7
    %v1098 = vsub.s32 %v1095, %v1097
    %v1099 = vrot.slane %v690, %v1098
    %v1100 = vcombine.high %v1099, %v1099
    %v1102 = vunpack.c.l.s4 1983009808
    %v1103 = vunpack.c.0.s8 %v1102
    %v1104 = vlaneseq
    %v1105 = vshrl.u32 %v1104, 7
    %v1106 = vsub.s32 %v1103, %v1105
    %v1107 = vrot.slane %v692, %v1106
    %v1108 = vcombine.high %v1107, %v1107
    %v1110 = vunpack.c.l.s4 1983009808
    %v1111 = vunpack.c.0.s8 %v1110
    %v1112 = vlaneseq
    %v1113 = vshrl.u32 %v1112, 7
    %v1114 = vsub.s32 %v1111, %v1113
    %v1115 = vrot.slane %v701, %v1114
    %v1116 = vcombine.high %v1115, %v1115
    %v1118 = vunpack.c.l.s4 1983009808
    %v1119 = vunpack.c.0.s8 %v1118
    %v1120 = vlaneseq
    %v1121 = vshrl.u32 %v1120, 7
    %v1122 = vsub.s32 %v1119, %v1121
    %v1123 = vrot.slane %v709, %v1122
    %v1124 = vcombine.high %v1123, %v1123
    %v1126 = vunpack.c.l.s4 1983009808
    %v1127 = vunpack.c.0.s8 %v1126
    %v1128 = vlaneseq
    %v1129 = vshrl.u32 %v1128, 7
    %v1130 = vsub.s32 %v1127, %v1129
    %v1131 = vrot.slane %v708, %v1130
    %v1132 = vcombine.high %v1131, %v1131
    %v1134 = vunpack.c.l.s4 1983009808
    %v1135 = vunpack.c.0.s8 %v1134
    %v1136 = vlaneseq
    %v1137 = vshrl.u32 %v1136, 7
    %v1138 = vsub.s32 %v1135, %v1137
    %v1139 = vrot.slane %v710, %v1138
    %v1140 = vcombine.high %v1139, %v1139
    %v1142 = vunpack.c.l.s4 1983009808
    %v1143 = vunpack.c.0.s8 %v1142
    %v1144 = vlaneseq
    %v1145 = vshrl.u32 %v1144, 7
    %v1146 = vsub.s32 %v1143, %v1145
    %v1147 = vrot.slane %v719, %v1146
    %v1148 = vcombine.high %v1147, %v1147
    %v1150 = vunpack.c.l.s4 1983009808
    %v1151 = vunpack.c.0.s8 %v1150
    %v1152 = vlaneseq
    %v1153 = vshrl.u32 %v1152, 7
    %v1154 = vsub.s32 %v1151, %v1153
    %v1155 = vrot.slane %v727, %v1154
    %v1156 = vcombine.high %v1155, %v1155
    %v1158 = vunpack.c.l.s4 1983009808
    %v1159 = vunpack.c.0.s8 %v1158
    %v1160 = vlaneseq
    %v1161 = vshrl.u32 %v1160, 7
    %v1162 = vsub.s32 %v1159, %v1161
    %v1163 = vrot.slane %v726, %v1162
    %v1164 = vcombine.high %v1163, %v1163
    %v1166 = vunpack.c.l.s4 1983009808
    %v1167 = vunpack.c.0.s8 %v1166
    %v1168 = vlaneseq
    %v1169 = vshrl.u32 %v1168, 7
    %v1170 = vsub.s32 %v1167, %v1169
    %v1171 = vrot.slane %v728, %v1170
    %v1172 = vcombine.high %v1171, %v1171
    %v1174 = vunpack.c.l.s4 1983009808
    %v1175 = vunpack.c.0.s8 %v1174
    %v1176 = vlaneseq
    %v1177 = vshrl.u32 %v1176, 7
    %v1178 = vsub.s32 %v1175, %v1177
    %v1179 = vrot.slane %v737, %v1178
    %v1180 = vcombine.high %v1179, %v1179
    %v1182 = vunpack.c.l.s4 1983009808
    %v1183 = vunpack.c.0.s8 %v1182
    %v1184 = vlaneseq
    %v1185 = vshrl.u32 %v1184, 7
    %v1186 = vsub.s32 %v1183, %v1185
    %v1187 = vrot.slane %v745, %v1186
    %v1188 = vcombine.high %v1187, %v1187
    %v1190 = vunpack.c.l.s4 1983009808
    %v1191 = vunpack.c.0.s8 %v1190
    %v1192 = vlaneseq
    %v1193 = vshrl.u32 %v1192, 7
    %v1194 = vsub.s32 %v1191, %v1193
    %v1195 = vrot.slane %v744, %v1194
    %v1196 = vcombine.high %v1195, %v1195
    %v1198 = vunpack.c.l.s4 1983009808
    %v1199 = vunpack.c.0.s8 %v1198
    %v1200 = vlaneseq
    %v1201 = vshrl.u32 %v1200, 7
    %v1202 = vsub.s32 %v1199, %v1201
    %v1203 = vrot.slane %v746, %v1202
    %v1204 = vcombine.high %v1203, %v1203
    %v1206 = vunpack.c.l.s4 1983009808
    %v1207 = vunpack.c.0.s8 %v1206
    %v1208 = vlaneseq
    %v1209 = vshrl.u32 %v1208, 7
    %v1210 = vsub.s32 %v1207, %v1209
    %v1211 = vrot.slane %v755, %v1210
    %v1212 = vcombine.high %v1211, %v1211
    %v1214 = vunpack.c.l.s4 1983009808
    %v1215 = vunpack.c.0.s8 %v1214
    %v1216 = vlaneseq
    %v1217 = vshrl.u32 %v1216, 7
    %v1218 = vsub.s32 %v1215, %v1217
    %v1219 = vrot.slane %v763, %v1218
    %v1220 = vcombine.high %v1219, %v1219
    %v1222 = vunpack.c.l.s4 1983009808
    %v1223 = vunpack.c.0.s8 %v1222
    %v1224 = vlaneseq
    %v1225 = vshrl.u32 %v1224, 7
    %v1226 = vsub.s32 %v1223, %v1225
    %v1227 = vrot.slane %v762, %v1226
    %v1228 = vcombine.high %v1227, %v1227
    %v1230 = vunpack.c.l.s4 1983009808
    %v1231 = vunpack.c.0.s8 %v1230
    %v1232 = vlaneseq
    %v1233 = vshrl.u32 %v1232, 7
    %v1234 = vsub.s32 %v1231, %v1233
    %v1235 = vrot.slane %v764, %v1234
    %v1236 = vcombine.high %v1235, %v1235
    %v1238 = vunpack.c.l.s4 1983009808
    %v1239 = vunpack.c.0.s8 %v1238
    %v1240 = vlaneseq
    %v1241 = vshrl.u32 %v1240, 7
    %v1242 = vsub.s32 %v1239, %v1241
    %v1243 = vrot.slane %v773, %v1242
    %v1244 = vcombine.high %v1243, %v1243
    %v1246 = vunpack.c.l.s4 1983009808
    %v1247 = vunpack.c.0.s8 %v1246
    %v1248 = vlaneseq
    %v1249 = vshrl.u32 %v1248, 7
    %v1250 = vsub.s32 %v1247, %v1249
    %v1251 = vrot.slane %v781, %v1250
    %v1252 = vcombine.high %v1251, %v1251
    %v1254 = vunpack.c.l.s4 1983009808
    %v1255 = vunpack.c.0.s8 %v1254
    %v1256 = vlaneseq
    %v1257 = vshrl.u32 %v1256, 7
    %v1258 = vsub.s32 %v1255, %v1257
    %v1259 = vrot.slane %v780, %v1258
    %v1260 = vcombine.high %v1259, %v1259
    %v1262 = vunpack.c.l.s4 1983009808
    %v1263 = vunpack.c.0.s8 %v1262
    %v1264 = vlaneseq
    %v1265 = vshrl.u32 %v1264, 7
    %v1266 = vsub.s32 %v1263, %v1265
    %v1267 = vrot.slane %v782, %v1266
    %v1268 = vcombine.high %v1267, %v1267
    %v1270 = vunpack.c.l.s4 1983009808
    %v1271 = vunpack.c.0.s8 %v1270
    %v1272 = vlaneseq
    %v1273 = vshrl.u32 %v1272, 7
    %v1274 = vsub.s32 %v1271, %v1273
    %v1275 = vrot.slane %v791, %v1274
    %v1276 = vcombine.high %v1275, %v1275
    %v1278 = vunpack.c.l.s4 1983009808
    %v1279 = vunpack.c.0.s8 %v1278
    %v1280 = vlaneseq
    %v1281 = vshrl.u32 %v1280, 7
    %v1282 = vsub.s32 %v1279, %v1281
    %v1283 = vrot.slane %v799, %v1282
    %v1284 = vcombine.high %v1283, %v1283
    %v1286 = vunpack.c.l.s4 1983009808
    %v1287 = vunpack.c.0.s8 %v1286
    %v1288 = vlaneseq
    %v1289 = vshrl.u32 %v1288, 7
    %v1290 = vsub.s32 %v1287, %v1289
    %v1291 = vrot.slane %v798, %v1290
    %v1292 = vcombine.high %v1291, %v1291
    %v1294 = vunpack.c.l.s4 1983009808
    %v1295 = vunpack.c.0.s8 %v1294
    %v1296 = vlaneseq
    %v1297 = vshrl.u32 %v1296, 7
    %v1298 = vsub.s32 %v1295, %v1297
    %v1299 = vrot.slane %v800, %v1298
    %v1300 = vcombine.high %v1299, %v1299
    %v1302 = vunpack.c.l.s4 1983009808
    %v1303 = vunpack.c.0.s8 %v1302
    %v1304 = vlaneseq
    %v1305 = vshrl.u32 %v1304, 7
    %v1306 = vsub.s32 %v1303, %v1305
    %v1307 = vrot.slane %v809, %v1306
    %v1308 = vcombine.high %v1307, %v1307
    %v1310 = vunpack.c.l.s4 1983009808
    %v1311 = vunpack.c.0.s8 %v1310
    %v1312 = vlaneseq
    %v1313 = vshrl.u32 %v1312, 7
    %v1314 = vsub.s32 %v1311, %v1313
    %v1315 = vrot.slane %v817, %v1314
    %v1316 = vcombine.high %v1315, %v1315
    %v1318 = vunpack.c.l.s4 1983009808
    %v1319 = vunpack.c.0.s8 %v1318
    %v1320 = vlaneseq
    %v1321 = vshrl.u32 %v1320, 7
    %v1322 = vsub.s32 %v1319, %v1321
    %v1323 = vrot.slane %v816, %v1322
    %v1324 = vcombine.high %v1323, %v1323
    %v1326 = vunpack.c.l.s4 1983009808
    %v1327 = vunpack.c.0.s8 %v1326
    %v1328 = vlaneseq
    %v1329 = vshrl.u32 %v1328, 7
    %v1330 = vsub.s32 %v1327, %v1329
    %v1331 = vrot.slane %v818, %v1330
    %v1332 = vcombine.high %v1331, %v1331
    %v1334 = vunpack.c.l.s4 1983009808
    %v1335 = vunpack.c.0.s8 %v1334
    %v1336 = vlaneseq
    %v1337 = vshrl.u32 %v1336, 7
    %v1338 = vsub.s32 %v1335, %v1337
    %v1339 = vrot.slane %v827, %v1338
    %v1340 = vcombine.high %v1339, %v1339
    %v1342 = vunpack.c.l.s4 1983009808
    %v1343 = vunpack.c.0.s8 %v1342
    %v1344 = vlaneseq
    %v1345 = vshrl.u32 %v1344, 7
    %v1346 = vsub.s32 %v1343, %v1345
    %v1347 = vrot.slane %v835, %v1346
    %v1348 = vcombine.high %v1347, %v1347
    %v1350 = vunpack.c.l.s4 1983009808
    %v1351 = vunpack.c.0.s8 %v1350
    %v1352 = vlaneseq
    %v1353 = vshrl.u32 %v1352, 7
    %v1354 = vsub.s32 %v1351, %v1353
    %v1355 = vrot.slane %v834, %v1354
    %v1356 = vcombine.high %v1355, %v1355
    %v1358 = vunpack.c.l.s4 1983009808
    %v1359 = vunpack.c.0.s8 %v1358
    %v1360 = vlaneseq
    %v1361 = vshrl.u32 %v1360, 7
    %v1362 = vsub.s32 %v1359, %v1361
    %v1363 = vrot.slane %v836, %v1362
    %v1364 = vcombine.high %v1363, %v1363
    %v1366 = vunpack.c.l.s4 1983009808
    %v1367 = vunpack.c.0.s8 %v1366
    %v1368 = vlaneseq
    %v1369 = vshrl.u32 %v1368, 7
    %v1370 = vsub.s32 %v1367, %v1369
    %v1371 = vrot.slane %v845, %v1370
    %v1372 = vcombine.high %v1371, %v1371
    %v1374 = vunpack.c.l.s4 1983009808
    %v1375 = vunpack.c.0.s8 %v1374
    %v1376 = vlaneseq
    %v1377 = vshrl.u32 %v1376, 7
    %v1378 = vsub.s32 %v1375, %v1377
    %v1379 = vrot.slane %v853, %v1378
    %v1380 = vcombine.high %v1379, %v1379
    %v1382 = vunpack.c.l.s4 1983009808
    %v1383 = vunpack.c.0.s8 %v1382
    %v1384 = vlaneseq
    %v1385 = vshrl.u32 %v1384, 7
    %v1386 = vsub.s32 %v1383, %v1385
    %v1387 = vrot.slane %v852, %v1386
    %v1388 = vcombine.high %v1387, %v1387
    %v1390 = vunpack.c.l.s4 1983009808
    %v1391 = vunpack.c.0.s8 %v1390
    %v1392 = vlaneseq
    %v1393 = vshrl.u32 %v1392, 7
    %v1394 = vsub.s32 %v1391, %v1393
    %v1395 = vrot.slane %v854, %v1394
    %v1396 = vcombine.high %v1395, %v1395
    %v1398 = vunpack.c.l.s4 1983009808
    %v1399 = vunpack.c.0.s8 %v1398
    %v1400 = vlaneseq
    %v1401 = vshrl.u32 %v1400, 7
    %v1402 = vsub.s32 %v1399, %v1401
    %v1403 = vrot.slane %v863, %v1402
    %v1404 = vcombine.high %v1403, %v1403
    %v1406 = vunpack.c.l.s4 1983009808
    %v1407 = vunpack.c.0.s8 %v1406
    %v1408 = vlaneseq
    %v1409 = vshrl.u32 %v1408, 7
    %v1410 = vsub.s32 %v1407, %v1409
    %v1411 = vrot.slane %v871, %v1410
    %v1412 = vcombine.high %v1411, %v1411
    %v1414 = vunpack.c.l.s4 1983009808
    %v1415 = vunpack.c.0.s8 %v1414
    %v1416 = vlaneseq
    %v1417 = vshrl.u32 %v1416, 7
    %v1418 = vsub.s32 %v1415, %v1417
    %v1419 = vrot.slane %v870, %v1418
    %v1420 = vcombine.high %v1419, %v1419
    %v1422 = vunpack.c.l.s4 1983009808
    %v1423 = vunpack.c.0.s8 %v1422
    %v1424 = vlaneseq
    %v1425 = vshrl.u32 %v1424, 7
    %v1426 = vsub.s32 %v1423, %v1425
    %v1427 = vrot.slane %v872, %v1426
    %v1428 = vcombine.high %v1427, %v1427
    %v1430 = vunpack.c.l.s4 1983009808
    %v1431 = vunpack.c.0.s8 %v1430
    %v1432 = vlaneseq
    %v1433 = vshrl.u32 %v1432, 7
    %v1434 = vsub.s32 %v1431, %v1433
    %v1435 = vrot.slane %v881, %v1434
    %v1436 = vcombine.high %v1435, %v1435
    %v1438 = vunpack.c.l.s4 1983009808
    %v1439 = vunpack.c.0.s8 %v1438
    %v1440 = vlaneseq
    %v1441 = vshrl.u32 %v1440, 7
    %v1442 = vsub.s32 %v1439, %v1441
    %v1443 = vrot.slane %v889, %v1442
    %v1444 = vcombine.high %v1443, %v1443
    %v1446 = vunpack.c.l.s4 1983009808
    %v1447 = vunpack.c.0.s8 %v1446
    %v1448 = vlaneseq
    %v1449 = vshrl.u32 %v1448, 7
    %v1450 = vsub.s32 %v1447, %v1449
    %v1451 = vrot.slane %v888, %v1450
    %v1452 = vcombine.high %v1451, %v1451
    %v1454 = vunpack.c.l.s4 1983009808
    %v1455 = vunpack.c.0.s8 %v1454
    %v1456 = vlaneseq
    %v1457 = vshrl.u32 %v1456, 7
    %v1458 = vsub.s32 %v1455, %v1457
    %v1459 = vrot.slane %v890, %v1458
    %v1460 = vcombine.high %v1459, %v1459
    %v1462 = vunpack.c.l.s4 1983009808
    %v1463 = vunpack.c.0.s8 %v1462
    %v1464 = vlaneseq
    %v1465 = vshrl.u32 %v1464, 7
    %v1466 = vsub.s32 %v1463, %v1465
    %v1467 = vrot.slane %v899, %v1466
    %v1468 = vcombine.high %v1467, %v1467
    %v1470 = vunpack.c.l.s4 1983009808
    %v1471 = vunpack.c.0.s8 %v1470
    %v1472 = vlaneseq
    %v1473 = vshrl.u32 %v1472, 7
    %v1474 = vsub.s32 %v1471, %v1473
    %v1475 = vrot.slane %v907, %v1474
    %v1476 = vcombine.high %v1475, %v1475
    %v1478 = vunpack.c.l.s4 1983009808
    %v1479 = vunpack.c.0.s8 %v1478
    %v1480 = vlaneseq
    %v1481 = vshrl.u32 %v1480, 7
    %v1482 = vsub.s32 %v1479, %v1481
    %v1483 = vrot.slane %v906, %v1482
    %v1484 = vcombine.high %v1483, %v1483
    %v1486 = vunpack.c.l.s4 1983009808
    %v1487 = vunpack.c.0.s8 %v1486
    %v1488 = vlaneseq
    %v1489 = vshrl.u32 %v1488, 7
    %v1490 = vsub.s32 %v1487, %v1489
    %v1491 = vrot.slane %v908, %v1490
    %v1492 = vcombine.high %v1491, %v1491
    %v1494 = vunpack.c.l.s4 1983009808
    %v1495 = vunpack.c.0.s8 %v1494
    %v1496 = vlaneseq
    %v1497 = vshrl.u32 %v1496, 7
    %v1498 = vsub.s32 %v1495, %v1497
    %v1499 = vrot.slane %v917, %v1498
    %v1500 = vcombine.high %v1499, %v1499
    %v1502 = vunpack.c.l.s4 1983009808
    %v1503 = vunpack.c.0.s8 %v1502
    %v1504 = vlaneseq
    %v1505 = vshrl.u32 %v1504, 7
    %v1506 = vsub.s32 %v1503, %v1505
    %v1507 = vrot.slane %v925, %v1506
    %v1508 = vcombine.high %v1507, %v1507
    %v1510 = vunpack.c.l.s4 1983009808
    %v1511 = vunpack.c.0.s8 %v1510
    %v1512 = vlaneseq
    %v1513 = vshrl.u32 %v1512, 7
    %v1514 = vsub.s32 %v1511, %v1513
    %v1515 = vrot.slane %v924, %v1514
    %v1516 = vcombine.high %v1515, %v1515
    %v1518 = vunpack.c.l.s4 1983009808
    %v1519 = vunpack.c.0.s8 %v1518
    %v1520 = vlaneseq
    %v1521 = vshrl.u32 %v1520, 7
    %v1522 = vsub.s32 %v1519, %v1521
    %v1523 = vrot.slane %v926, %v1522
    %v1524 = vcombine.high %v1523, %v1523
    %v1526 = vunpack.c.l.s4 1983009808
    %v1527 = vunpack.c.0.s8 %v1526
    %v1528 = vlaneseq
    %v1529 = vshrl.u32 %v1528, 7
    %v1530 = vsub.s32 %v1527, %v1529
    %v1531 = vrot.slane %v935, %v1530
    %v1532 = vcombine.high %v1531, %v1531
    %v1534 = vunpack.c.l.s4 1983009808
    %v1535 = vunpack.c.0.s8 %v1534
    %v1536 = vlaneseq
    %v1537 = vshrl.u32 %v1536, 7
    %v1538 = vsub.s32 %v1535, %v1537
    %v1539 = vrot.slane %v943, %v1538
    %v1540 = vcombine.high %v1539, %v1539
    %v1542 = vunpack.c.l.s4 1983009808
    %v1543 = vunpack.c.0.s8 %v1542
    %v1544 = vlaneseq
    %v1545 = vshrl.u32 %v1544, 7
    %v1546 = vsub.s32 %v1543, %v1545
    %v1547 = vrot.slane %v942, %v1546
    %v1548 = vcombine.high %v1547, %v1547
    %v1550 = vunpack.c.l.s4 1983009808
    %v1551 = vunpack.c.0.s8 %v1550
    %v1552 = vlaneseq
    %v1553 = vshrl.u32 %v1552, 7
    %v1554 = vsub.s32 %v1551, %v1553
    %v1555 = vrot.slane %v944, %v1554
    %v1556 = vcombine.high %v1555, %v1555
    %v1558 = vunpack.c.l.s4 1983009808
    %v1559 = vunpack.c.0.s8 %v1558
    %v1560 = vlaneseq
    %v1561 = vshrl.u32 %v1560, 7
    %v1562 = vsub.s32 %v1559, %v1561
    %v1563 = vrot.slane %v953, %v1562
    %v1564 = vcombine.high %v1563, %v1563
    %v1566 = vunpack.c.l.s4 1983009808
    %v1567 = vunpack.c.0.s8 %v1566
    %v1568 = vlaneseq
    %v1569 = vshrl.u32 %v1568, 7
    %v1570 = vsub.s32 %v1567, %v1569
    %v1571 = vrot.slane %v961, %v1570
    %v1572 = vcombine.high %v1571, %v1571
    %v1574 = vunpack.c.l.s4 1983009808
    %v1575 = vunpack.c.0.s8 %v1574
    %v1576 = vlaneseq
    %v1577 = vshrl.u32 %v1576, 7
    %v1578 = vsub.s32 %v1575, %v1577
    %v1579 = vrot.slane %v960, %v1578
    %v1580 = vcombine.high %v1579, %v1579
    %v1582 = vunpack.c.l.s4 1983009808
    %v1583 = vunpack.c.0.s8 %v1582
    %v1584 = vlaneseq
    %v1585 = vshrl.u32 %v1584, 7
    %v1586 = vsub.s32 %v1583, %v1585
    %v1587 = vrot.slane %v962, %v1586
    %v1588 = vcombine.high %v1587, %v1587
    %v1590 = vunpack.c.l.s4 1983009808
    %v1591 = vunpack.c.0.s8 %v1590
    %v1592 = vlaneseq
    %v1593 = vshrl.u32 %v1592, 7
    %v1594 = vsub.s32 %v1591, %v1593
    %v1595 = vrot.slane %v971, %v1594
    %v1596 = vcombine.high %v1595, %v1595
    %v1598 = vunpack.c.l.s4 1983009808
    %v1599 = vunpack.c.0.s8 %v1598
    %v1600 = vlaneseq
    %v1601 = vshrl.u32 %v1600, 7
    %v1602 = vsub.s32 %v1599, %v1601
    %v1603 = vrot.slane %v979, %v1602
    %v1604 = vcombine.high %v1603, %v1603
    %v1606 = vunpack.c.l.s4 1983009808
    %v1607 = vunpack.c.0.s8 %v1606
    %v1608 = vlaneseq
    %v1609 = vshrl.u32 %v1608, 7
    %v1610 = vsub.s32 %v1607, %v1609
    %v1611 = vrot.slane %v978, %v1610
    %v1612 = vcombine.high %v1611, %v1611
    %v1614 = vunpack.c.l.s4 1983009808
    %v1615 = vunpack.c.0.s8 %v1614
    %v1616 = vlaneseq
    %v1617 = vshrl.u32 %v1616, 7
    %v1618 = vsub.s32 %v1615, %v1617
    %v1619 = vrot.slane %v980, %v1618
    %v1620 = vcombine.high %v1619, %v1619
    %vm1781 = vcmask 1041408
    %v1782 = vsel %vm1781, %v987, -inf
    %v1783 = vrot.slane %v1782, 4
    %v1784 = vmax.f32 %v1782, %v1783
    %v1785 = vrot.slane %v1784, 2
    %v1786 = vmax.f32 %v1784, %v1785
    %v1787 = vrot.slane %v1786, 1
    %v1788 = vmax.f32 %v1786, %v1787
    %v1789 = vsel %vm1781, %v988, -inf
    %v1790 = vrot.slane %v1789, 4
    %v1791 = vmax.f32 %v1789, %v1790
    %v1792 = vrot.slane %v1791, 2
    %v1793 = vmax.f32 %v1791, %v1792
    %v1794 = vrot.slane %v1793, 1
    %v1795 = vmax.f32 %v1793, %v1794
    %v1796 = vsel %vm1781, %v995, -inf
    %v1797 = vrot.slane %v1796, 4
    %v1798 = vmax.f32 %v1796, %v1797
    %v1799 = vrot.slane %v1798, 2
    %v1800 = vmax.f32 %v1798, %v1799
    %v1801 = vrot.slane %v1800, 1
    %v1802 = vmax.f32 %v1800, %v1801
    %v1803 = vsel %vm1781, %v996, -inf
    %v1804 = vrot.slane %v1803, 4
    %v1805 = vmax.f32 %v1803, %v1804
    %v1806 = vrot.slane %v1805, 2
    %v1807 = vmax.f32 %v1805, %v1806
    %v1808 = vrot.slane %v1807, 1
    %v1809 = vmax.f32 %v1807, %v1808
    %v1810 = vsel %vm1781, %v1003, -inf
    %v1811 = vrot.slane %v1810, 4
    %v1812 = vmax.f32 %v1810, %v1811
    %v1813 = vrot.slane %v1812, 2
    %v1814 = vmax.f32 %v1812, %v1813
    %v1815 = vrot.slane %v1814, 1
    %v1816 = vmax.f32 %v1814, %v1815
    %v1817 = vsel %vm1781, %v1004, -inf
    %v1818 = vrot.slane %v1817, 4
    %v1819 = vmax.f32 %v1817, %v1818
    %v1820 = vrot.slane %v1819, 2
    %v1821 = vmax.f32 %v1819, %v1820
    %v1822 = vrot.slane %v1821, 1
    %v1823 = vmax.f32 %v1821, %v1822
    %v1824 = vsel %vm1781, %v1011, -inf
    %v1825 = vrot.slane %v1824, 4
    %v1826 = vmax.f32 %v1824, %v1825
    %v1827 = vrot.slane %v1826, 2
    %v1828 = vmax.f32 %v1826, %v1827
    %v1829 = vrot.slane %v1828, 1
    %v1830 = vmax.f32 %v1828, %v1829
    %v1831 = vsel %vm1781, %v1012, -inf
    %v1832 = vrot.slane %v1831, 4
    %v1833 = vmax.f32 %v1831, %v1832
    %v1834 = vrot.slane %v1833, 2
    %v1835 = vmax.f32 %v1833, %v1834
    %v1836 = vrot.slane %v1835, 1
    %v1837 = vmax.f32 %v1835, %v1836
    %v1838 = vsel %vm1781, %v1019, -inf
    %v1839 = vrot.slane %v1838, 4
    %v1840 = vmax.f32 %v1838, %v1839
    %v1841 = vrot.slane %v1840, 2
    %v1842 = vmax.f32 %v1840, %v1841
    %v1843 = vrot.slane %v1842, 1
    %v1844 = vmax.f32 %v1842, %v1843
    %v1845 = vsel %vm1781, %v1020, -inf
    %v1846 = vrot.slane %v1845, 4
    %v1847 = vmax.f32 %v1845, %v1846
    %v1848 = vrot.slane %v1847, 2
    %v1849 = vmax.f32 %v1847, %v1848
    %v1850 = vrot.slane %v1849, 1
    %v1851 = vmax.f32 %v1849, %v1850
    %v1852 = vsel %vm1781, %v1027, -inf
    %v1853 = vrot.slane %v1852, 4
    %v1854 = vmax.f32 %v1852, %v1853
    %v1855 = vrot.slane %v1854, 2
    %v1856 = vmax.f32 %v1854, %v1855
    %v1857 = vrot.slane %v1856, 1
    %v1858 = vmax.f32 %v1856, %v1857
    %v1859 = vsel %vm1781, %v1028, -inf
    %v1860 = vrot.slane %v1859, 4
    %v1861 = vmax.f32 %v1859, %v1860
    %v1862 = vrot.slane %v1861, 2
    %v1863 = vmax.f32 %v1861, %v1862
    %v1864 = vrot.slane %v1863, 1
    %v1865 = vmax.f32 %v1863, %v1864
    %v1866 = vsel %vm1781, %v1035, -inf
    %v1867 = vrot.slane %v1866, 4
    %v1868 = vmax.f32 %v1866, %v1867
    %v1869 = vrot.slane %v1868, 2
    %v1870 = vmax.f32 %v1868, %v1869
    %v1871 = vrot.slane %v1870, 1
    %v1872 = vmax.f32 %v1870, %v1871
    %v1873 = vsel %vm1781, %v1036, -inf
    %v1874 = vrot.slane %v1873, 4
    %v1875 = vmax.f32 %v1873, %v1874
    %v1876 = vrot.slane %v1875, 2
    %v1877 = vmax.f32 %v1875, %v1876
    %v1878 = vrot.slane %v1877, 1
    %v1879 = vmax.f32 %v1877, %v1878
    %v1880 = vsel %vm1781, %v1043, -inf
    %v1881 = vrot.slane %v1880, 4
    %v1882 = vmax.f32 %v1880, %v1881
    %v1883 = vrot.slane %v1882, 2
    %v1884 = vmax.f32 %v1882, %v1883
    %v1885 = vrot.slane %v1884, 1
    %v1886 = vmax.f32 %v1884, %v1885
    %v1887 = vsel %vm1781, %v1044, -inf
    %v1888 = vrot.slane %v1887, 4
    %v1889 = vmax.f32 %v1887, %v1888
    %v1890 = vrot.slane %v1889, 2
    %v1891 = vmax.f32 %v1889, %v1890
    %v1892 = vrot.slane %v1891, 1
    %v1893 = vmax.f32 %v1891, %v1892
    %v1894 = vsel %vm1781, %v1051, -inf
    %v1895 = vrot.slane %v1894, 4
    %v1896 = vmax.f32 %v1894, %v1895
    %v1897 = vrot.slane %v1896, 2
    %v1898 = vmax.f32 %v1896, %v1897
    %v1899 = vrot.slane %v1898, 1
    %v1900 = vmax.f32 %v1898, %v1899
    %v1901 = vsel %vm1781, %v1052, -inf
    %v1902 = vrot.slane %v1901, 4
    %v1903 = vmax.f32 %v1901, %v1902
    %v1904 = vrot.slane %v1903, 2
    %v1905 = vmax.f32 %v1903, %v1904
    %v1906 = vrot.slane %v1905, 1
    %v1907 = vmax.f32 %v1905, %v1906
    %v1908 = vsel %vm1781, %v1059, -inf
    %v1909 = vrot.slane %v1908, 4
    %v1910 = vmax.f32 %v1908, %v1909
    %v1911 = vrot.slane %v1910, 2
    %v1912 = vmax.f32 %v1910, %v1911
    %v1913 = vrot.slane %v1912, 1
    %v1914 = vmax.f32 %v1912, %v1913
    %v1915 = vsel %vm1781, %v1060, -inf
    %v1916 = vrot.slane %v1915, 4
    %v1917 = vmax.f32 %v1915, %v1916
    %v1918 = vrot.slane %v1917, 2
    %v1919 = vmax.f32 %v1917, %v1918
    %v1920 = vrot.slane %v1919, 1
    %v1921 = vmax.f32 %v1919, %v1920
    %v1922 = vsel %vm1781, %v1067, -inf
    %v1923 = vrot.slane %v1922, 4
    %v1924 = vmax.f32 %v1922, %v1923
    %v1925 = vrot.slane %v1924, 2
    %v1926 = vmax.f32 %v1924, %v1925
    %v1927 = vrot.slane %v1926, 1
    %v1928 = vmax.f32 %v1926, %v1927
    %v1929 = vsel %vm1781, %v1068, -inf
    %v1930 = vrot.slane %v1929, 4
    %v1931 = vmax.f32 %v1929, %v1930
    %v1932 = vrot.slane %v1931, 2
    %v1933 = vmax.f32 %v1931, %v1932
    %v1934 = vrot.slane %v1933, 1
    %v1935 = vmax.f32 %v1933, %v1934
    %v1936 = vsel %vm1781, %v1075, -inf
    %v1937 = vrot.slane %v1936, 4
    %v1938 = vmax.f32 %v1936, %v1937
    %v1939 = vrot.slane %v1938, 2
    %v1940 = vmax.f32 %v1938, %v1939
    %v1941 = vrot.slane %v1940, 1
    %v1942 = vmax.f32 %v1940, %v1941
    %v1943 = vsel %vm1781, %v1076, -inf
    %v1944 = vrot.slane %v1943, 4
    %v1945 = vmax.f32 %v1943, %v1944
    %v1946 = vrot.slane %v1945, 2
    %v1947 = vmax.f32 %v1945, %v1946
    %v1948 = vrot.slane %v1947, 1
    %v1949 = vmax.f32 %v1947, %v1948
    %v1950 = vsel %vm1781, %v1083, -inf
    %v1951 = vrot.slane %v1950, 4
    %v1952 = vmax.f32 %v1950, %v1951
    %v1953 = vrot.slane %v1952, 2
    %v1954 = vmax.f32 %v1952, %v1953
    %v1955 = vrot.slane %v1954, 1
    %v1956 = vmax.f32 %v1954, %v1955
    %v1957 = vsel %vm1781, %v1084, -inf
    %v1958 = vrot.slane %v1957, 4
    %v1959 = vmax.f32 %v1957, %v1958
    %v1960 = vrot.slane %v1959, 2
    %v1961 = vmax.f32 %v1959, %v1960
    %v1962 = vrot.slane %v1961, 1
    %v1963 = vmax.f32 %v1961, %v1962
    %v1964 = vsel %vm1781, %v1091, -inf
    %v1965 = vrot.slane %v1964, 4
    %v1966 = vmax.f32 %v1964, %v1965
    %v1967 = vrot.slane %v1966, 2
    %v1968 = vmax.f32 %v1966, %v1967
    %v1969 = vrot.slane %v1968, 1
    %v1970 = vmax.f32 %v1968, %v1969
    %v1971 = vsel %vm1781, %v1092, -inf
    %v1972 = vrot.slane %v1971, 4
    %v1973 = vmax.f32 %v1971, %v1972
    %v1974 = vrot.slane %v1973, 2
    %v1975 = vmax.f32 %v1973, %v1974
    %v1976 = vrot.slane %v1975, 1
    %v1977 = vmax.f32 %v1975, %v1976
    %v1978 = vsel %vm1781, %v1099, -inf
    %v1979 = vrot.slane %v1978, 4
    %v1980 = vmax.f32 %v1978, %v1979
    %v1981 = vrot.slane %v1980, 2
    %v1982 = vmax.f32 %v1980, %v1981
    %v1983 = vrot.slane %v1982, 1
    %v1984 = vmax.f32 %v1982, %v1983
    %v1985 = vsel %vm1781, %v1100, -inf
    %v1986 = vrot.slane %v1985, 4
    %v1987 = vmax.f32 %v1985, %v1986
    %v1988 = vrot.slane %v1987, 2
    %v1989 = vmax.f32 %v1987, %v1988
    %v1990 = vrot.slane %v1989, 1
    %v1991 = vmax.f32 %v1989, %v1990
    %v1992 = vsel %vm1781, %v1107, -inf
    %v1993 = vrot.slane %v1992, 4
    %v1994 = vmax.f32 %v1992, %v1993
    %v1995 = vrot.slane %v1994, 2
    %v1996 = vmax.f32 %v1994, %v1995
    %v1997 = vrot.slane %v1996, 1
    %v1998 = vmax.f32 %v1996, %v1997
    %v1999 = vsel %vm1781, %v1108, -inf
    %v2000 = vrot.slane %v1999, 4
    %v2001 = vmax.f32 %v1999, %v2000
    %v2002 = vrot.slane %v2001, 2
    %v2003 = vmax.f32 %v2001, %v2002
    %v2004 = vrot.slane %v2003, 1
    %v2005 = vmax.f32 %v2003, %v2004
    %v2006 = vsel %vm1781, %v1115, -inf
    %v2007 = vrot.slane %v2006, 4
    %v2008 = vmax.f32 %v2006, %v2007
    %v2009 = vrot.slane %v2008, 2
    %v2010 = vmax.f32 %v2008, %v2009
    %v2011 = vrot.slane %v2010, 1
    %v2012 = vmax.f32 %v2010, %v2011
    %v2013 = vsel %vm1781, %v1116, -inf
    %v2014 = vrot.slane %v2013, 4
    %v2015 = vmax.f32 %v2013, %v2014
    %v2016 = vrot.slane %v2015, 2
    %v2017 = vmax.f32 %v2015, %v2016
    %v2018 = vrot.slane %v2017, 1
    %v2019 = vmax.f32 %v2017, %v2018
    %v2020 = vsel %vm1781, %v1123, -inf
    %v2021 = vrot.slane %v2020, 4
    %v2022 = vmax.f32 %v2020, %v2021
    %v2023 = vrot.slane %v2022, 2
    %v2024 = vmax.f32 %v2022, %v2023
    %v2025 = vrot.slane %v2024, 1
    %v2026 = vmax.f32 %v2024, %v2025
    %v2027 = vsel %vm1781, %v1124, -inf
    %v2028 = vrot.slane %v2027, 4
    %v2029 = vmax.f32 %v2027, %v2028
    %v2030 = vrot.slane %v2029, 2
    %v2031 = vmax.f32 %v2029, %v2030
    %v2032 = vrot.slane %v2031, 1
    %v2033 = vmax.f32 %v2031, %v2032
    %v2034 = vsel %vm1781, %v1131, -inf
    %v2035 = vrot.slane %v2034, 4
    %v2036 = vmax.f32 %v2034, %v2035
    %v2037 = vrot.slane %v2036, 2
    %v2038 = vmax.f32 %v2036, %v2037
    %v2039 = vrot.slane %v2038, 1
    %v2040 = vmax.f32 %v2038, %v2039
    %v2041 = vsel %vm1781, %v1132, -inf
    %v2042 = vrot.slane %v2041, 4
    %v2043 = vmax.f32 %v2041, %v2042
    %v2044 = vrot.slane %v2043, 2
    %v2045 = vmax.f32 %v2043, %v2044
    %v2046 = vrot.slane %v2045, 1
    %v2047 = vmax.f32 %v2045, %v2046
    %v2048 = vsel %vm1781, %v1139, -inf
    %v2049 = vrot.slane %v2048, 4
    %v2050 = vmax.f32 %v2048, %v2049
    %v2051 = vrot.slane %v2050, 2
    %v2052 = vmax.f32 %v2050, %v2051
    %v2053 = vrot.slane %v2052, 1
    %v2054 = vmax.f32 %v2052, %v2053
    %v2055 = vsel %vm1781, %v1140, -inf
    %v2056 = vrot.slane %v2055, 4
    %v2057 = vmax.f32 %v2055, %v2056
    %v2058 = vrot.slane %v2057, 2
    %v2059 = vmax.f32 %v2057, %v2058
    %v2060 = vrot.slane %v2059, 1
    %v2061 = vmax.f32 %v2059, %v2060
    %v2062 = vsel %vm1781, %v1147, -inf
    %v2063 = vrot.slane %v2062, 4
    %v2064 = vmax.f32 %v2062, %v2063
    %v2065 = vrot.slane %v2064, 2
    %v2066 = vmax.f32 %v2064, %v2065
    %v2067 = vrot.slane %v2066, 1
    %v2068 = vmax.f32 %v2066, %v2067
    %v2069 = vsel %vm1781, %v1148, -inf
    %v2070 = vrot.slane %v2069, 4
    %v2071 = vmax.f32 %v2069, %v2070
    %v2072 = vrot.slane %v2071, 2
    %v2073 = vmax.f32 %v2071, %v2072
    %v2074 = vrot.slane %v2073, 1
    %v2075 = vmax.f32 %v2073, %v2074
    %v2076 = vsel %vm1781, %v1155, -inf
    %v2077 = vrot.slane %v2076, 4
    %v2078 = vmax.f32 %v2076, %v2077
    %v2079 = vrot.slane %v2078, 2
    %v2080 = vmax.f32 %v2078, %v2079
    %v2081 = vrot.slane %v2080, 1
    %v2082 = vmax.f32 %v2080, %v2081
    %v2083 = vsel %vm1781, %v1156, -inf
    %v2084 = vrot.slane %v2083, 4
    %v2085 = vmax.f32 %v2083, %v2084
    %v2086 = vrot.slane %v2085, 2
    %v2087 = vmax.f32 %v2085, %v2086
    %v2088 = vrot.slane %v2087, 1
    %v2089 = vmax.f32 %v2087, %v2088
    %v2090 = vsel %vm1781, %v1163, -inf
    %v2091 = vrot.slane %v2090, 4
    %v2092 = vmax.f32 %v2090, %v2091
    %v2093 = vrot.slane %v2092, 2
    %v2094 = vmax.f32 %v2092, %v2093
    %v2095 = vrot.slane %v2094, 1
    %v2096 = vmax.f32 %v2094, %v2095
    %v2097 = vsel %vm1781, %v1164, -inf
    %v2098 = vrot.slane %v2097, 4
    %v2099 = vmax.f32 %v2097, %v2098
    %v2100 = vrot.slane %v2099, 2
    %v2101 = vmax.f32 %v2099, %v2100
    %v2102 = vrot.slane %v2101, 1
    %v2103 = vmax.f32 %v2101, %v2102
    %v2104 = vsel %vm1781, %v1171, -inf
    %v2105 = vrot.slane %v2104, 4
    %v2106 = vmax.f32 %v2104, %v2105
    %v2107 = vrot.slane %v2106, 2
    %v2108 = vmax.f32 %v2106, %v2107
    %v2109 = vrot.slane %v2108, 1
    %v2110 = vmax.f32 %v2108, %v2109
    %v2111 = vsel %vm1781, %v1172, -inf
    %v2112 = vrot.slane %v2111, 4
    %v2113 = vmax.f32 %v2111, %v2112
    %v2114 = vrot.slane %v2113, 2
    %v2115 = vmax.f32 %v2113, %v2114
    %v2116 = vrot.slane %v2115, 1
    %v2117 = vmax.f32 %v2115, %v2116
    %v2118 = vsel %vm1781, %v1179, -inf
    %v2119 = vrot.slane %v2118, 4
    %v2120 = vmax.f32 %v2118, %v2119
    %v2121 = vrot.slane %v2120, 2
    %v2122 = vmax.f32 %v2120, %v2121
    %v2123 = vrot.slane %v2122, 1
    %v2124 = vmax.f32 %v2122, %v2123
    %v2125 = vsel %vm1781, %v1180, -inf
    %v2126 = vrot.slane %v2125, 4
    %v2127 = vmax.f32 %v2125, %v2126
    %v2128 = vrot.slane %v2127, 2
    %v2129 = vmax.f32 %v2127, %v2128
    %v2130 = vrot.slane %v2129, 1
    %v2131 = vmax.f32 %v2129, %v2130
    %v2132 = vsel %vm1781, %v1187, -inf
    %v2133 = vrot.slane %v2132, 4
    %v2134 = vmax.f32 %v2132, %v2133
    %v2135 = vrot.slane %v2134, 2
    %v2136 = vmax.f32 %v2134, %v2135
    %v2137 = vrot.slane %v2136, 1
    %v2138 = vmax.f32 %v2136, %v2137
    %v2139 = vsel %vm1781, %v1188, -inf
    %v2140 = vrot.slane %v2139, 4
    %v2141 = vmax.f32 %v2139, %v2140
    %v2142 = vrot.slane %v2141, 2
    %v2143 = vmax.f32 %v2141, %v2142
    %v2144 = vrot.slane %v2143, 1
    %v2145 = vmax.f32 %v2143, %v2144
    %v2146 = vsel %vm1781, %v1195, -inf
    %v2147 = vrot.slane %v2146, 4
    %v2148 = vmax.f32 %v2146, %v2147
    %v2149 = vrot.slane %v2148, 2
    %v2150 = vmax.f32 %v2148, %v2149
    %v2151 = vrot.slane %v2150, 1
    %v2152 = vmax.f32 %v2150, %v2151
    %v2153 = vsel %vm1781, %v1196, -inf
    %v2154 = vrot.slane %v2153, 4
    %v2155 = vmax.f32 %v2153, %v2154
    %v2156 = vrot.slane %v2155, 2
    %v2157 = vmax.f32 %v2155, %v2156
    %v2158 = vrot.slane %v2157, 1
    %v2159 = vmax.f32 %v2157, %v2158
    %v2160 = vsel %vm1781, %v1203, -inf
    %v2161 = vrot.slane %v2160, 4
    %v2162 = vmax.f32 %v2160, %v2161
    %v2163 = vrot.slane %v2162, 2
    %v2164 = vmax.f32 %v2162, %v2163
    %v2165 = vrot.slane %v2164, 1
    %v2166 = vmax.f32 %v2164, %v2165
    %v2167 = vsel %vm1781, %v1204, -inf
    %v2168 = vrot.slane %v2167, 4
    %v2169 = vmax.f32 %v2167, %v2168
    %v2170 = vrot.slane %v2169, 2
    %v2171 = vmax.f32 %v2169, %v2170
    %v2172 = vrot.slane %v2171, 1
    %v2173 = vmax.f32 %v2171, %v2172
    %v2174 = vsel %vm1781, %v1211, -inf
    %v2175 = vrot.slane %v2174, 4
    %v2176 = vmax.f32 %v2174, %v2175
    %v2177 = vrot.slane %v2176, 2
    %v2178 = vmax.f32 %v2176, %v2177
    %v2179 = vrot.slane %v2178, 1
    %v2180 = vmax.f32 %v2178, %v2179
    %v2181 = vsel %vm1781, %v1212, -inf
    %v2182 = vrot.slane %v2181, 4
    %v2183 = vmax.f32 %v2181, %v2182
    %v2184 = vrot.slane %v2183, 2
    %v2185 = vmax.f32 %v2183, %v2184
    %v2186 = vrot.slane %v2185, 1
    %v2187 = vmax.f32 %v2185, %v2186
    %v2188 = vsel %vm1781, %v1219, -inf
    %v2189 = vrot.slane %v2188, 4
    %v2190 = vmax.f32 %v2188, %v2189
    %v2191 = vrot.slane %v2190, 2
    %v2192 = vmax.f32 %v2190, %v2191
    %v2193 = vrot.slane %v2192, 1
    %v2194 = vmax.f32 %v2192, %v2193
    %v2195 = vsel %vm1781, %v1220, -inf
    %v2196 = vrot.slane %v2195, 4
    %v2197 = vmax.f32 %v2195, %v2196
    %v2198 = vrot.slane %v2197, 2
    %v2199 = vmax.f32 %v2197, %v2198
    %v2200 = vrot.slane %v2199, 1
    %v2201 = vmax.f32 %v2199, %v2200
    %v2202 = vsel %vm1781, %v1227, -inf
    %v2203 = vrot.slane %v2202, 4
    %v2204 = vmax.f32 %v2202, %v2203
    %v2205 = vrot.slane %v2204, 2
    %v2206 = vmax.f32 %v2204, %v2205
    %v2207 = vrot.slane %v2206, 1
    %v2208 = vmax.f32 %v2206, %v2207
    %v2209 = vsel %vm1781, %v1228, -inf
    %v2210 = vrot.slane %v2209, 4
    %v2211 = vmax.f32 %v2209, %v2210
    %v2212 = vrot.slane %v2211, 2
    %v2213 = vmax.f32 %v2211, %v2212
    %v2214 = vrot.slane %v2213, 1
    %v2215 = vmax.f32 %v2213, %v2214
    %v2216 = vsel %vm1781, %v1235, -inf
    %v2217 = vrot.slane %v2216, 4
    %v2218 = vmax.f32 %v2216, %v2217
    %v2219 = vrot.slane %v2218, 2
    %v2220 = vmax.f32 %v2218, %v2219
    %v2221 = vrot.slane %v2220, 1
    %v2222 = vmax.f32 %v2220, %v2221
    %v2223 = vsel %vm1781, %v1236, -inf
    %v2224 = vrot.slane %v2223, 4
    %v2225 = vmax.f32 %v2223, %v2224
    %v2226 = vrot.slane %v2225, 2
    %v2227 = vmax.f32 %v2225, %v2226
    %v2228 = vrot.slane %v2227, 1
    %v2229 = vmax.f32 %v2227, %v2228
    %v2230 = vsel %vm1781, %v1243, -inf
    %v2231 = vrot.slane %v2230, 4
    %v2232 = vmax.f32 %v2230, %v2231
    %v2233 = vrot.slane %v2232, 2
    %v2234 = vmax.f32 %v2232, %v2233
    %v2235 = vrot.slane %v2234, 1
    %v2236 = vmax.f32 %v2234, %v2235
    %v2237 = vsel %vm1781, %v1244, -inf
    %v2238 = vrot.slane %v2237, 4
    %v2239 = vmax.f32 %v2237, %v2238
    %v2240 = vrot.slane %v2239, 2
    %v2241 = vmax.f32 %v2239, %v2240
    %v2242 = vrot.slane %v2241, 1
    %v2243 = vmax.f32 %v2241, %v2242
    %v2244 = vsel %vm1781, %v1251, -inf
    %v2245 = vrot.slane %v2244, 4
    %v2246 = vmax.f32 %v2244, %v2245
    %v2247 = vrot.slane %v2246, 2
    %v2248 = vmax.f32 %v2246, %v2247
    %v2249 = vrot.slane %v2248, 1
    %v2250 = vmax.f32 %v2248, %v2249
    %v2251 = vsel %vm1781, %v1252, -inf
    %v2252 = vrot.slane %v2251, 4
    %v2253 = vmax.f32 %v2251, %v2252
    %v2254 = vrot.slane %v2253, 2
    %v2255 = vmax.f32 %v2253, %v2254
    %v2256 = vrot.slane %v2255, 1
    %v2257 = vmax.f32 %v2255, %v2256
    %v2258 = vsel %vm1781, %v1259, -inf
    %v2259 = vrot.slane %v2258, 4
    %v2260 = vmax.f32 %v2258, %v2259
    %v2261 = vrot.slane %v2260, 2
    %v2262 = vmax.f32 %v2260, %v2261
    %v2263 = vrot.slane %v2262, 1
    %v2264 = vmax.f32 %v2262, %v2263
    %v2265 = vsel %vm1781, %v1260, -inf
    %v2266 = vrot.slane %v2265, 4
    %v2267 = vmax.f32 %v2265, %v2266
    %v2268 = vrot.slane %v2267, 2
    %v2269 = vmax.f32 %v2267, %v2268
    %v2270 = vrot.slane %v2269, 1
    %v2271 = vmax.f32 %v2269, %v2270
    %v2272 = vsel %vm1781, %v1267, -inf
    %v2273 = vrot.slane %v2272, 4
    %v2274 = vmax.f32 %v2272, %v2273
    %v2275 = vrot.slane %v2274, 2
    %v2276 = vmax.f32 %v2274, %v2275
    %v2277 = vrot.slane %v2276, 1
    %v2278 = vmax.f32 %v2276, %v2277
    %v2279 = vsel %vm1781, %v1268, -inf
    %v2280 = vrot.slane %v2279, 4
    %v2281 = vmax.f32 %v2279, %v2280
    %v2282 = vrot.slane %v2281, 2
    %v2283 = vmax.f32 %v2281, %v2282
    %v2284 = vrot.slane %v2283, 1
    %v2285 = vmax.f32 %v2283, %v2284
    %v2286 = vsel %vm1781, %v1275, -inf
    %v2287 = vrot.slane %v2286, 4
    %v2288 = vmax.f32 %v2286, %v2287
    %v2289 = vrot.slane %v2288, 2
    %v2290 = vmax.f32 %v2288, %v2289
    %v2291 = vrot.slane %v2290, 1
    %v2292 = vmax.f32 %v2290, %v2291
    %v2293 = vsel %vm1781, %v1276, -inf
    %v2294 = vrot.slane %v2293, 4
    %v2295 = vmax.f32 %v2293, %v2294
    %v2296 = vrot.slane %v2295, 2
    %v2297 = vmax.f32 %v2295, %v2296
    %v2298 = vrot.slane %v2297, 1
    %v2299 = vmax.f32 %v2297, %v2298
    %v2300 = vsel %vm1781, %v1283, -inf
    %v2301 = vrot.slane %v2300, 4
    %v2302 = vmax.f32 %v2300, %v2301
    %v2303 = vrot.slane %v2302, 2
    %v2304 = vmax.f32 %v2302, %v2303
    %v2305 = vrot.slane %v2304, 1
    %v2306 = vmax.f32 %v2304, %v2305
    %v2307 = vsel %vm1781, %v1284, -inf
    %v2308 = vrot.slane %v2307, 4
    %v2309 = vmax.f32 %v2307, %v2308
    %v2310 = vrot.slane %v2309, 2
    %v2311 = vmax.f32 %v2309, %v2310
    %v2312 = vrot.slane %v2311, 1
    %v2313 = vmax.f32 %v2311, %v2312
    %v2314 = vsel %vm1781, %v1291, -inf
    %v2315 = vrot.slane %v2314, 4
    %v2316 = vmax.f32 %v2314, %v2315
    %v2317 = vrot.slane %v2316, 2
    %v2318 = vmax.f32 %v2316, %v2317
    %v2319 = vrot.slane %v2318, 1
    %v2320 = vmax.f32 %v2318, %v2319
    %v2321 = vsel %vm1781, %v1292, -inf
    %v2322 = vrot.slane %v2321, 4
    %v2323 = vmax.f32 %v2321, %v2322
    %v2324 = vrot.slane %v2323, 2
    %v2325 = vmax.f32 %v2323, %v2324
    %v2326 = vrot.slane %v2325, 1
    %v2327 = vmax.f32 %v2325, %v2326
    %v2328 = vsel %vm1781, %v1299, -inf
    %v2329 = vrot.slane %v2328, 4
    %v2330 = vmax.f32 %v2328, %v2329
    %v2331 = vrot.slane %v2330, 2
    %v2332 = vmax.f32 %v2330, %v2331
    %v2333 = vrot.slane %v2332, 1
    %v2334 = vmax.f32 %v2332, %v2333
    %v2335 = vsel %vm1781, %v1300, -inf
    %v2336 = vrot.slane %v2335, 4
    %v2337 = vmax.f32 %v2335, %v2336
    %v2338 = vrot.slane %v2337, 2
    %v2339 = vmax.f32 %v2337, %v2338
    %v2340 = vrot.slane %v2339, 1
    %v2341 = vmax.f32 %v2339, %v2340
    %v2342 = vsel %vm1781, %v1307, -inf
    %v2343 = vrot.slane %v2342, 4
    %v2344 = vmax.f32 %v2342, %v2343
    %v2345 = vrot.slane %v2344, 2
    %v2346 = vmax.f32 %v2344, %v2345
    %v2347 = vrot.slane %v2346, 1
    %v2348 = vmax.f32 %v2346, %v2347
    %v2349 = vsel %vm1781, %v1308, -inf
    %v2350 = vrot.slane %v2349, 4
    %v2351 = vmax.f32 %v2349, %v2350
    %v2352 = vrot.slane %v2351, 2
    %v2353 = vmax.f32 %v2351, %v2352
    %v2354 = vrot.slane %v2353, 1
    %v2355 = vmax.f32 %v2353, %v2354
    %v2356 = vsel %vm1781, %v1315, -inf
    %v2357 = vrot.slane %v2356, 4
    %v2358 = vmax.f32 %v2356, %v2357
    %v2359 = vrot.slane %v2358, 2
    %v2360 = vmax.f32 %v2358, %v2359
    %v2361 = vrot.slane %v2360, 1
    %v2362 = vmax.f32 %v2360, %v2361
    %v2363 = vsel %vm1781, %v1316, -inf
    %v2364 = vrot.slane %v2363, 4
    %v2365 = vmax.f32 %v2363, %v2364
    %v2366 = vrot.slane %v2365, 2
    %v2367 = vmax.f32 %v2365, %v2366
    %v2368 = vrot.slane %v2367, 1
    %v2369 = vmax.f32 %v2367, %v2368
    %v2370 = vsel %vm1781, %v1323, -inf
    %v2371 = vrot.slane %v2370, 4
    %v2372 = vmax.f32 %v2370, %v2371
    %v2373 = vrot.slane %v2372, 2
    %v2374 = vmax.f32 %v2372, %v2373
    %v2375 = vrot.slane %v2374, 1
    %v2376 = vmax.f32 %v2374, %v2375
    %v2377 = vsel %vm1781, %v1324, -inf
    %v2378 = vrot.slane %v2377, 4
    %v2379 = vmax.f32 %v2377, %v2378
    %v2380 = vrot.slane %v2379, 2
    %v2381 = vmax.f32 %v2379, %v2380
    %v2382 = vrot.slane %v2381, 1
    %v2383 = vmax.f32 %v2381, %v2382
    %v2384 = vsel %vm1781, %v1331, -inf
    %v2385 = vrot.slane %v2384, 4
    %v2386 = vmax.f32 %v2384, %v2385
    %v2387 = vrot.slane %v2386, 2
    %v2388 = vmax.f32 %v2386, %v2387
    %v2389 = vrot.slane %v2388, 1
    %v2390 = vmax.f32 %v2388, %v2389
    %v2391 = vsel %vm1781, %v1332, -inf
    %v2392 = vrot.slane %v2391, 4
    %v2393 = vmax.f32 %v2391, %v2392
    %v2394 = vrot.slane %v2393, 2
    %v2395 = vmax.f32 %v2393, %v2394
    %v2396 = vrot.slane %v2395, 1
    %v2397 = vmax.f32 %v2395, %v2396
    %v2398 = vsel %vm1781, %v1339, -inf
    %v2399 = vrot.slane %v2398, 4
    %v2400 = vmax.f32 %v2398, %v2399
    %v2401 = vrot.slane %v2400, 2
    %v2402 = vmax.f32 %v2400, %v2401
    %v2403 = vrot.slane %v2402, 1
    %v2404 = vmax.f32 %v2402, %v2403
    %v2405 = vsel %vm1781, %v1340, -inf
    %v2406 = vrot.slane %v2405, 4
    %v2407 = vmax.f32 %v2405, %v2406
    %v2408 = vrot.slane %v2407, 2
    %v2409 = vmax.f32 %v2407, %v2408
    %v2410 = vrot.slane %v2409, 1
    %v2411 = vmax.f32 %v2409, %v2410
    %v2412 = vsel %vm1781, %v1347, -inf
    %v2413 = vrot.slane %v2412, 4
    %v2414 = vmax.f32 %v2412, %v2413
    %v2415 = vrot.slane %v2414, 2
    %v2416 = vmax.f32 %v2414, %v2415
    %v2417 = vrot.slane %v2416, 1
    %v2418 = vmax.f32 %v2416, %v2417
    %v2419 = vsel %vm1781, %v1348, -inf
    %v2420 = vrot.slane %v2419, 4
    %v2421 = vmax.f32 %v2419, %v2420
    %v2422 = vrot.slane %v2421, 2
    %v2423 = vmax.f32 %v2421, %v2422
    %v2424 = vrot.slane %v2423, 1
    %v2425 = vmax.f32 %v2423, %v2424
    %v2426 = vsel %vm1781, %v1355, -inf
    %v2427 = vrot.slane %v2426, 4
    %v2428 = vmax.f32 %v2426, %v2427
    %v2429 = vrot.slane %v2428, 2
    %v2430 = vmax.f32 %v2428, %v2429
    %v2431 = vrot.slane %v2430, 1
    %v2432 = vmax.f32 %v2430, %v2431
    %v2433 = vsel %vm1781, %v1356, -inf
    %v2434 = vrot.slane %v2433, 4
    %v2435 = vmax.f32 %v2433, %v2434
    %v2436 = vrot.slane %v2435, 2
    %v2437 = vmax.f32 %v2435, %v2436
    %v2438 = vrot.slane %v2437, 1
    %v2439 = vmax.f32 %v2437, %v2438
    %v2440 = vsel %vm1781, %v1363, -inf
    %v2441 = vrot.slane %v2440, 4
    %v2442 = vmax.f32 %v2440, %v2441
    %v2443 = vrot.slane %v2442, 2
    %v2444 = vmax.f32 %v2442, %v2443
    %v2445 = vrot.slane %v2444, 1
    %v2446 = vmax.f32 %v2444, %v2445
    %v2447 = vsel %vm1781, %v1364, -inf
    %v2448 = vrot.slane %v2447, 4
    %v2449 = vmax.f32 %v2447, %v2448
    %v2450 = vrot.slane %v2449, 2
    %v2451 = vmax.f32 %v2449, %v2450
    %v2452 = vrot.slane %v2451, 1
    %v2453 = vmax.f32 %v2451, %v2452
    %v2454 = vsel %vm1781, %v1371, -inf
    %v2455 = vrot.slane %v2454, 4
    %v2456 = vmax.f32 %v2454, %v2455
    %v2457 = vrot.slane %v2456, 2
    %v2458 = vmax.f32 %v2456, %v2457
    %v2459 = vrot.slane %v2458, 1
    %v2460 = vmax.f32 %v2458, %v2459
    %v2461 = vsel %vm1781, %v1372, -inf
    %v2462 = vrot.slane %v2461, 4
    %v2463 = vmax.f32 %v2461, %v2462
    %v2464 = vrot.slane %v2463, 2
    %v2465 = vmax.f32 %v2463, %v2464
    %v2466 = vrot.slane %v2465, 1
    %v2467 = vmax.f32 %v2465, %v2466
    %v2468 = vsel %vm1781, %v1379, -inf
    %v2469 = vrot.slane %v2468, 4
    %v2470 = vmax.f32 %v2468, %v2469
    %v2471 = vrot.slane %v2470, 2
    %v2472 = vmax.f32 %v2470, %v2471
    %v2473 = vrot.slane %v2472, 1
    %v2474 = vmax.f32 %v2472, %v2473
    %v2475 = vsel %vm1781, %v1380, -inf
    %v2476 = vrot.slane %v2475, 4
    %v2477 = vmax.f32 %v2475, %v2476
    %v2478 = vrot.slane %v2477, 2
    %v2479 = vmax.f32 %v2477, %v2478
    %v2480 = vrot.slane %v2479, 1
    %v2481 = vmax.f32 %v2479, %v2480
    %v2482 = vsel %vm1781, %v1387, -inf
    %v2483 = vrot.slane %v2482, 4
    %v2484 = vmax.f32 %v2482, %v2483
    %v2485 = vrot.slane %v2484, 2
    %v2486 = vmax.f32 %v2484, %v2485
    %v2487 = vrot.slane %v2486, 1
    %v2488 = vmax.f32 %v2486, %v2487
    %v2489 = vsel %vm1781, %v1388, -inf
    %v2490 = vrot.slane %v2489, 4
    %v2491 = vmax.f32 %v2489, %v2490
    %v2492 = vrot.slane %v2491, 2
    %v2493 = vmax.f32 %v2491, %v2492
    %v2494 = vrot.slane %v2493, 1
    %v2495 = vmax.f32 %v2493, %v2494
    %v2496 = vsel %vm1781, %v1395, -inf
    %v2497 = vrot.slane %v2496, 4
    %v2498 = vmax.f32 %v2496, %v2497
    %v2499 = vrot.slane %v2498, 2
    %v2500 = vmax.f32 %v2498, %v2499
    %v2501 = vrot.slane %v2500, 1
    %v2502 = vmax.f32 %v2500, %v2501
    %v2503 = vsel %vm1781, %v1396, -inf
    %v2504 = vrot.slane %v2503, 4
    %v2505 = vmax.f32 %v2503, %v2504
    %v2506 = vrot.slane %v2505, 2
    %v2507 = vmax.f32 %v2505, %v2506
    %v2508 = vrot.slane %v2507, 1
    %v2509 = vmax.f32 %v2507, %v2508
    %v2510 = vsel %vm1781, %v1403, -inf
    %v2511 = vrot.slane %v2510, 4
    %v2512 = vmax.f32 %v2510, %v2511
    %v2513 = vrot.slane %v2512, 2
    %v2514 = vmax.f32 %v2512, %v2513
    %v2515 = vrot.slane %v2514, 1
    %v2516 = vmax.f32 %v2514, %v2515
    %v2517 = vsel %vm1781, %v1404, -inf
    %v2518 = vrot.slane %v2517, 4
    %v2519 = vmax.f32 %v2517, %v2518
    %v2520 = vrot.slane %v2519, 2
    %v2521 = vmax.f32 %v2519, %v2520
    %v2522 = vrot.slane %v2521, 1
    %v2523 = vmax.f32 %v2521, %v2522
    %v2524 = vsel %vm1781, %v1411, -inf
    %v2525 = vrot.slane %v2524, 4
    %v2526 = vmax.f32 %v2524, %v2525
    %v2527 = vrot.slane %v2526, 2
    %v2528 = vmax.f32 %v2526, %v2527
    %v2529 = vrot.slane %v2528, 1
    %v2530 = vmax.f32 %v2528, %v2529
    %v2531 = vsel %vm1781, %v1412, -inf
    %v2532 = vrot.slane %v2531, 4
    %v2533 = vmax.f32 %v2531, %v2532
    %v2534 = vrot.slane %v2533, 2
    %v2535 = vmax.f32 %v2533, %v2534
    %v2536 = vrot.slane %v2535, 1
    %v2537 = vmax.f32 %v2535, %v2536
    %v2538 = vsel %vm1781, %v1419, -inf
    %v2539 = vrot.slane %v2538, 4
    %v2540 = vmax.f32 %v2538, %v2539
    %v2541 = vrot.slane %v2540, 2
    %v2542 = vmax.f32 %v2540, %v2541
    %v2543 = vrot.slane %v2542, 1
    %v2544 = vmax.f32 %v2542, %v2543
    %v2545 = vsel %vm1781, %v1420, -inf
    %v2546 = vrot.slane %v2545, 4
    %v2547 = vmax.f32 %v2545, %v2546
    %v2548 = vrot.slane %v2547, 2
    %v2549 = vmax.f32 %v2547, %v2548
    %v2550 = vrot.slane %v2549, 1
    %v2551 = vmax.f32 %v2549, %v2550
    %v2552 = vsel %vm1781, %v1427, -inf
    %v2553 = vrot.slane %v2552, 4
    %v2554 = vmax.f32 %v2552, %v2553
    %v2555 = vrot.slane %v2554, 2
    %v2556 = vmax.f32 %v2554, %v2555
    %v2557 = vrot.slane %v2556, 1
    %v2558 = vmax.f32 %v2556, %v2557
    %v2559 = vsel %vm1781, %v1428, -inf
    %v2560 = vrot.slane %v2559, 4
    %v2561 = vmax.f32 %v2559, %v2560
    %v2562 = vrot.slane %v2561, 2
    %v2563 = vmax.f32 %v2561, %v2562
    %v2564 = vrot.slane %v2563, 1
    %v2565 = vmax.f32 %v2563, %v2564
    %v2566 = vsel %vm1781, %v1435, -inf
    %v2567 = vrot.slane %v2566, 4
    %v2568 = vmax.f32 %v2566, %v2567
    %v2569 = vrot.slane %v2568, 2
    %v2570 = vmax.f32 %v2568, %v2569
    %v2571 = vrot.slane %v2570, 1
    %v2572 = vmax.f32 %v2570, %v2571
    %v2573 = vsel %vm1781, %v1436, -inf
    %v2574 = vrot.slane %v2573, 4
    %v2575 = vmax.f32 %v2573, %v2574
    %v2576 = vrot.slane %v2575, 2
    %v2577 = vmax.f32 %v2575, %v2576
    %v2578 = vrot.slane %v2577, 1
    %v2579 = vmax.f32 %v2577, %v2578
    %v2580 = vsel %vm1781, %v1443, -inf
    %v2581 = vrot.slane %v2580, 4
    %v2582 = vmax.f32 %v2580, %v2581
    %v2583 = vrot.slane %v2582, 2
    %v2584 = vmax.f32 %v2582, %v2583
    %v2585 = vrot.slane %v2584, 1
    %v2586 = vmax.f32 %v2584, %v2585
    %v2587 = vsel %vm1781, %v1444, -inf
    %v2588 = vrot.slane %v2587, 4
    %v2589 = vmax.f32 %v2587, %v2588
    %v2590 = vrot.slane %v2589, 2
    %v2591 = vmax.f32 %v2589, %v2590
    %v2592 = vrot.slane %v2591, 1
    %v2593 = vmax.f32 %v2591, %v2592
    %v2594 = vsel %vm1781, %v1451, -inf
    %v2595 = vrot.slane %v2594, 4
    %v2596 = vmax.f32 %v2594, %v2595
    %v2597 = vrot.slane %v2596, 2
    %v2598 = vmax.f32 %v2596, %v2597
    %v2599 = vrot.slane %v2598, 1
    %v2600 = vmax.f32 %v2598, %v2599
    %v2601 = vsel %vm1781, %v1452, -inf
    %v2602 = vrot.slane %v2601, 4
    %v2603 = vmax.f32 %v2601, %v2602
    %v2604 = vrot.slane %v2603, 2
    %v2605 = vmax.f32 %v2603, %v2604
    %v2606 = vrot.slane %v2605, 1
    %v2607 = vmax.f32 %v2605, %v2606
    %v2608 = vsel %vm1781, %v1459, -inf
    %v2609 = vrot.slane %v2608, 4
    %v2610 = vmax.f32 %v2608, %v2609
    %v2611 = vrot.slane %v2610, 2
    %v2612 = vmax.f32 %v2610, %v2611
    %v2613 = vrot.slane %v2612, 1
    %v2614 = vmax.f32 %v2612, %v2613
    %v2615 = vsel %vm1781, %v1460, -inf
    %v2616 = vrot.slane %v2615, 4
    %v2617 = vmax.f32 %v2615, %v2616
    %v2618 = vrot.slane %v2617, 2
    %v2619 = vmax.f32 %v2617, %v2618
    %v2620 = vrot.slane %v2619, 1
    %v2621 = vmax.f32 %v2619, %v2620
    %v2622 = vsel %vm1781, %v1467, -inf
    %v2623 = vrot.slane %v2622, 4
    %v2624 = vmax.f32 %v2622, %v2623
    %v2625 = vrot.slane %v2624, 2
    %v2626 = vmax.f32 %v2624, %v2625
    %v2627 = vrot.slane %v2626, 1
    %v2628 = vmax.f32 %v2626, %v2627
    %v2629 = vsel %vm1781, %v1468, -inf
    %v2630 = vrot.slane %v2629, 4
    %v2631 = vmax.f32 %v2629, %v2630
    %v2632 = vrot.slane %v2631, 2
    %v2633 = vmax.f32 %v2631, %v2632
    %v2634 = vrot.slane %v2633, 1
    %v2635 = vmax.f32 %v2633, %v2634
    %v2636 = vsel %vm1781, %v1475, -inf
    %v2637 = vrot.slane %v2636, 4
    %v2638 = vmax.f32 %v2636, %v2637
    %v2639 = vrot.slane %v2638, 2
    %v2640 = vmax.f32 %v2638, %v2639
    %v2641 = vrot.slane %v2640, 1
    %v2642 = vmax.f32 %v2640, %v2641
    %v2643 = vsel %vm1781, %v1476, -inf
    %v2644 = vrot.slane %v2643, 4
    %v2645 = vmax.f32 %v2643, %v2644
    %v2646 = vrot.slane %v2645, 2
    %v2647 = vmax.f32 %v2645, %v2646
    %v2648 = vrot.slane %v2647, 1
    %v2649 = vmax.f32 %v2647, %v2648
    %v2650 = vsel %vm1781, %v1483, -inf
    %v2651 = vrot.slane %v2650, 4
    %v2652 = vmax.f32 %v2650, %v2651
    %v2653 = vrot.slane %v2652, 2
    %v2654 = vmax.f32 %v2652, %v2653
    %v2655 = vrot.slane %v2654, 1
    %v2656 = vmax.f32 %v2654, %v2655
    %v2657 = vsel %vm1781, %v1484, -inf
    %v2658 = vrot.slane %v2657, 4
    %v2659 = vmax.f32 %v2657, %v2658
    %v2660 = vrot.slane %v2659, 2
    %v2661 = vmax.f32 %v2659, %v2660
    %v2662 = vrot.slane %v2661, 1
    %v2663 = vmax.f32 %v2661, %v2662
    %v2664 = vsel %vm1781, %v1491, -inf
    %v2665 = vrot.slane %v2664, 4
    %v2666 = vmax.f32 %v2664, %v2665
    %v2667 = vrot.slane %v2666, 2
    %v2668 = vmax.f32 %v2666, %v2667
    %v2669 = vrot.slane %v2668, 1
    %v2670 = vmax.f32 %v2668, %v2669
    %v2671 = vsel %vm1781, %v1492, -inf
    %v2672 = vrot.slane %v2671, 4
    %v2673 = vmax.f32 %v2671, %v2672
    %v2674 = vrot.slane %v2673, 2
    %v2675 = vmax.f32 %v2673, %v2674
    %v2676 = vrot.slane %v2675, 1
    %v2677 = vmax.f32 %v2675, %v2676
    %v2678 = vsel %vm1781, %v1499, -inf
    %v2679 = vrot.slane %v2678, 4
    %v2680 = vmax.f32 %v2678, %v2679
    %v2681 = vrot.slane %v2680, 2
    %v2682 = vmax.f32 %v2680, %v2681
    %v2683 = vrot.slane %v2682, 1
    %v2684 = vmax.f32 %v2682, %v2683
    %v2685 = vsel %vm1781, %v1500, -inf
    %v2686 = vrot.slane %v2685, 4
    %v2687 = vmax.f32 %v2685, %v2686
    %v2688 = vrot.slane %v2687, 2
    %v2689 = vmax.f32 %v2687, %v2688
    %v2690 = vrot.slane %v2689, 1
    %v2691 = vmax.f32 %v2689, %v2690
    %v2692 = vsel %vm1781, %v1507, -inf
    %v2693 = vrot.slane %v2692, 4
    %v2694 = vmax.f32 %v2692, %v2693
    %v2695 = vrot.slane %v2694, 2
    %v2696 = vmax.f32 %v2694, %v2695
    %v2697 = vrot.slane %v2696, 1
    %v2698 = vmax.f32 %v2696, %v2697
    %v2699 = vsel %vm1781, %v1508, -inf
    %v2700 = vrot.slane %v2699, 4
    %v2701 = vmax.f32 %v2699, %v2700
    %v2702 = vrot.slane %v2701, 2
    %v2703 = vmax.f32 %v2701, %v2702
    %v2704 = vrot.slane %v2703, 1
    %v2705 = vmax.f32 %v2703, %v2704
    %v2706 = vsel %vm1781, %v1515, -inf
    %v2707 = vrot.slane %v2706, 4
    %v2708 = vmax.f32 %v2706, %v2707
    %v2709 = vrot.slane %v2708, 2
    %v2710 = vmax.f32 %v2708, %v2709
    %v2711 = vrot.slane %v2710, 1
    %v2712 = vmax.f32 %v2710, %v2711
    %v2713 = vsel %vm1781, %v1516, -inf
    %v2714 = vrot.slane %v2713, 4
    %v2715 = vmax.f32 %v2713, %v2714
    %v2716 = vrot.slane %v2715, 2
    %v2717 = vmax.f32 %v2715, %v2716
    %v2718 = vrot.slane %v2717, 1
    %v2719 = vmax.f32 %v2717, %v2718
    %v2720 = vsel %vm1781, %v1523, -inf
    %v2721 = vrot.slane %v2720, 4
    %v2722 = vmax.f32 %v2720, %v2721
    %v2723 = vrot.slane %v2722, 2
    %v2724 = vmax.f32 %v2722, %v2723
    %v2725 = vrot.slane %v2724, 1
    %v2726 = vmax.f32 %v2724, %v2725
    %v2727 = vsel %vm1781, %v1524, -inf
    %v2728 = vrot.slane %v2727, 4
    %v2729 = vmax.f32 %v2727, %v2728
    %v2730 = vrot.slane %v2729, 2
    %v2731 = vmax.f32 %v2729, %v2730
    %v2732 = vrot.slane %v2731, 1
    %v2733 = vmax.f32 %v2731, %v2732
    %v2734 = vsel %vm1781, %v1531, -inf
    %v2735 = vrot.slane %v2734, 4
    %v2736 = vmax.f32 %v2734, %v2735
    %v2737 = vrot.slane %v2736, 2
    %v2738 = vmax.f32 %v2736, %v2737
    %v2739 = vrot.slane %v2738, 1
    %v2740 = vmax.f32 %v2738, %v2739
    %v2741 = vsel %vm1781, %v1532, -inf
    %v2742 = vrot.slane %v2741, 4
    %v2743 = vmax.f32 %v2741, %v2742
    %v2744 = vrot.slane %v2743, 2
    %v2745 = vmax.f32 %v2743, %v2744
    %v2746 = vrot.slane %v2745, 1
    %v2747 = vmax.f32 %v2745, %v2746
    %v2748 = vsel %vm1781, %v1539, -inf
    %v2749 = vrot.slane %v2748, 4
    %v2750 = vmax.f32 %v2748, %v2749
    %v2751 = vrot.slane %v2750, 2
    %v2752 = vmax.f32 %v2750, %v2751
    %v2753 = vrot.slane %v2752, 1
    %v2754 = vmax.f32 %v2752, %v2753
    %v2755 = vsel %vm1781, %v1540, -inf
    %v2756 = vrot.slane %v2755, 4
    %v2757 = vmax.f32 %v2755, %v2756
    %v2758 = vrot.slane %v2757, 2
    %v2759 = vmax.f32 %v2757, %v2758
    %v2760 = vrot.slane %v2759, 1
    %v2761 = vmax.f32 %v2759, %v2760
    %v2762 = vsel %vm1781, %v1547, -inf
    %v2763 = vrot.slane %v2762, 4
    %v2764 = vmax.f32 %v2762, %v2763
    %v2765 = vrot.slane %v2764, 2
    %v2766 = vmax.f32 %v2764, %v2765
    %v2767 = vrot.slane %v2766, 1
    %v2768 = vmax.f32 %v2766, %v2767
    %v2769 = vsel %vm1781, %v1548, -inf
    %v2770 = vrot.slane %v2769, 4
    %v2771 = vmax.f32 %v2769, %v2770
    %v2772 = vrot.slane %v2771, 2
    %v2773 = vmax.f32 %v2771, %v2772
    %v2774 = vrot.slane %v2773, 1
    %v2775 = vmax.f32 %v2773, %v2774
    %v2776 = vsel %vm1781, %v1555, -inf
    %v2777 = vrot.slane %v2776, 4
    %v2778 = vmax.f32 %v2776, %v2777
    %v2779 = vrot.slane %v2778, 2
    %v2780 = vmax.f32 %v2778, %v2779
    %v2781 = vrot.slane %v2780, 1
    %v2782 = vmax.f32 %v2780, %v2781
    %v2783 = vsel %vm1781, %v1556, -inf
    %v2784 = vrot.slane %v2783, 4
    %v2785 = vmax.f32 %v2783, %v2784
    %v2786 = vrot.slane %v2785, 2
    %v2787 = vmax.f32 %v2785, %v2786
    %v2788 = vrot.slane %v2787, 1
    %v2789 = vmax.f32 %v2787, %v2788
    %v2790 = vsel %vm1781, %v1563, -inf
    %v2791 = vrot.slane %v2790, 4
    %v2792 = vmax.f32 %v2790, %v2791
    %v2793 = vrot.slane %v2792, 2
    %v2794 = vmax.f32 %v2792, %v2793
    %v2795 = vrot.slane %v2794, 1
    %v2796 = vmax.f32 %v2794, %v2795
    %v2797 = vsel %vm1781, %v1564, -inf
    %v2798 = vrot.slane %v2797, 4
    %v2799 = vmax.f32 %v2797, %v2798
    %v2800 = vrot.slane %v2799, 2
    %v2801 = vmax.f32 %v2799, %v2800
    %v2802 = vrot.slane %v2801, 1
    %v2803 = vmax.f32 %v2801, %v2802
    %v2804 = vsel %vm1781, %v1571, -inf
    %v2805 = vrot.slane %v2804, 4
    %v2806 = vmax.f32 %v2804, %v2805
    %v2807 = vrot.slane %v2806, 2
    %v2808 = vmax.f32 %v2806, %v2807
    %v2809 = vrot.slane %v2808, 1
    %v2810 = vmax.f32 %v2808, %v2809
    %v2811 = vsel %vm1781, %v1572, -inf
    %v2812 = vrot.slane %v2811, 4
    %v2813 = vmax.f32 %v2811, %v2812
    %v2814 = vrot.slane %v2813, 2
    %v2815 = vmax.f32 %v2813, %v2814
    %v2816 = vrot.slane %v2815, 1
    %v2817 = vmax.f32 %v2815, %v2816
    %v2818 = vsel %vm1781, %v1579, -inf
    %v2819 = vrot.slane %v2818, 4
    %v2820 = vmax.f32 %v2818, %v2819
    %v2821 = vrot.slane %v2820, 2
    %v2822 = vmax.f32 %v2820, %v2821
    %v2823 = vrot.slane %v2822, 1
    %v2824 = vmax.f32 %v2822, %v2823
    %v2825 = vsel %vm1781, %v1580, -inf
    %v2826 = vrot.slane %v2825, 4
    %v2827 = vmax.f32 %v2825, %v2826
    %v2828 = vrot.slane %v2827, 2
    %v2829 = vmax.f32 %v2827, %v2828
    %v2830 = vrot.slane %v2829, 1
    %v2831 = vmax.f32 %v2829, %v2830
    %v2832 = vsel %vm1781, %v1587, -inf
    %v2833 = vrot.slane %v2832, 4
    %v2834 = vmax.f32 %v2832, %v2833
    %v2835 = vrot.slane %v2834, 2
    %v2836 = vmax.f32 %v2834, %v2835
    %v2837 = vrot.slane %v2836, 1
    %v2838 = vmax.f32 %v2836, %v2837
    %v2839 = vsel %vm1781, %v1588, -inf
    %v2840 = vrot.slane %v2839, 4
    %v2841 = vmax.f32 %v2839, %v2840
    %v2842 = vrot.slane %v2841, 2
    %v2843 = vmax.f32 %v2841, %v2842
    %v2844 = vrot.slane %v2843, 1
    %v2845 = vmax.f32 %v2843, %v2844
    %v2846 = vsel %vm1781, %v1595, -inf
    %v2847 = vrot.slane %v2846, 4
    %v2848 = vmax.f32 %v2846, %v2847
    %v2849 = vrot.slane %v2848, 2
    %v2850 = vmax.f32 %v2848, %v2849
    %v2851 = vrot.slane %v2850, 1
    %v2852 = vmax.f32 %v2850, %v2851
    %v2853 = vsel %vm1781, %v1596, -inf
    %v2854 = vrot.slane %v2853, 4
    %v2855 = vmax.f32 %v2853, %v2854
    %v2856 = vrot.slane %v2855, 2
    %v2857 = vmax.f32 %v2855, %v2856
    %v2858 = vrot.slane %v2857, 1
    %v2859 = vmax.f32 %v2857, %v2858
    %v2860 = vsel %vm1781, %v1603, -inf
    %v2861 = vrot.slane %v2860, 4
    %v2862 = vmax.f32 %v2860, %v2861
    %v2863 = vrot.slane %v2862, 2
    %v2864 = vmax.f32 %v2862, %v2863
    %v2865 = vrot.slane %v2864, 1
    %v2866 = vmax.f32 %v2864, %v2865
    %v2867 = vsel %vm1781, %v1604, -inf
    %v2868 = vrot.slane %v2867, 4
    %v2869 = vmax.f32 %v2867, %v2868
    %v2870 = vrot.slane %v2869, 2
    %v2871 = vmax.f32 %v2869, %v2870
    %v2872 = vrot.slane %v2871, 1
    %v2873 = vmax.f32 %v2871, %v2872
    %v2874 = vsel %vm1781, %v1611, -inf
    %v2875 = vrot.slane %v2874, 4
    %v2876 = vmax.f32 %v2874, %v2875
    %v2877 = vrot.slane %v2876, 2
    %v2878 = vmax.f32 %v2876, %v2877
    %v2879 = vrot.slane %v2878, 1
    %v2880 = vmax.f32 %v2878, %v2879
    %v2881 = vsel %vm1781, %v1612, -inf
    %v2882 = vrot.slane %v2881, 4
    %v2883 = vmax.f32 %v2881, %v2882
    %v2884 = vrot.slane %v2883, 2
    %v2885 = vmax.f32 %v2883, %v2884
    %v2886 = vrot.slane %v2885, 1
    %v2887 = vmax.f32 %v2885, %v2886
    %v2888 = vsel %vm1781, %v1619, -inf
    %v2889 = vrot.slane %v2888, 4
    %v2890 = vmax.f32 %v2888, %v2889
    %v2891 = vrot.slane %v2890, 2
    %v2892 = vmax.f32 %v2890, %v2891
    %v2893 = vrot.slane %v2892, 1
    %v2894 = vmax.f32 %v2892, %v2893
    %v2895 = vsel %vm1781, %v1620, -inf
    %v2896 = vrot.slane %v2895, 4
    %v2897 = vmax.f32 %v2895, %v2896
    %v2898 = vrot.slane %v2897, 2
    %v2899 = vmax.f32 %v2897, %v2898
    %v2900 = vrot.slane %v2899, 1
    %v2901 = vmax.f32 %v2899, %v2900
    %v2902 = vpack.c.bf16 %v1788, %v1788
    %v2903 = vpack.c.bf16 %v1795, %v1795
    %v2904 = vpack.c.bf16 %v1802, %v1802
    %v2905 = vpack.c.bf16 %v1809, %v1809
    %v2906 = vpack.c.bf16 %v1816, %v1816
    %v2907 = vpack.c.bf16 %v1823, %v1823
    %v2908 = vpack.c.bf16 %v1830, %v1830
    %v2909 = vpack.c.bf16 %v1837, %v1837
    %v2910 = vpack.c.bf16 %v1844, %v1844
    %v2911 = vpack.c.bf16 %v1851, %v1851
    %v2912 = vpack.c.bf16 %v1858, %v1858
    %v2913 = vpack.c.bf16 %v1865, %v1865
    %v2914 = vpack.c.bf16 %v1872, %v1872
    %v2915 = vpack.c.bf16 %v1879, %v1879
    %v2916 = vpack.c.bf16 %v1886, %v1886
    %v2917 = vpack.c.bf16 %v1893, %v1893
    %v2918 = vpack.c.bf16 %v1900, %v1900
    %v2919 = vpack.c.bf16 %v1907, %v1907
    %v2920 = vpack.c.bf16 %v1914, %v1914
    %v2921 = vpack.c.bf16 %v1921, %v1921
    %v2922 = vpack.c.bf16 %v1928, %v1928
    %v2923 = vpack.c.bf16 %v1935, %v1935
    %v2924 = vpack.c.bf16 %v1942, %v1942
    %v2925 = vpack.c.bf16 %v1949, %v1949
    %v2926 = vpack.c.bf16 %v1956, %v1956
    %v2927 = vpack.c.bf16 %v1963, %v1963
    %v2928 = vpack.c.bf16 %v1970, %v1970
    %v2929 = vpack.c.bf16 %v1977, %v1977
    %v2930 = vpack.c.bf16 %v1984, %v1984
    %v2931 = vpack.c.bf16 %v1991, %v1991
    %v2932 = vpack.c.bf16 %v1998, %v1998
    %v2933 = vpack.c.bf16 %v2005, %v2005
    %v2934 = vpack.c.bf16 %v2012, %v2012
    %v2935 = vpack.c.bf16 %v2019, %v2019
    %v2936 = vpack.c.bf16 %v2026, %v2026
    %v2937 = vpack.c.bf16 %v2033, %v2033
    %v2938 = vpack.c.bf16 %v2040, %v2040
    %v2939 = vpack.c.bf16 %v2047, %v2047
    %v2940 = vpack.c.bf16 %v2054, %v2054
    %v2941 = vpack.c.bf16 %v2061, %v2061
    %v2942 = vpack.c.bf16 %v2068, %v2068
    %v2943 = vpack.c.bf16 %v2075, %v2075
    %v2944 = vpack.c.bf16 %v2082, %v2082
    %v2945 = vpack.c.bf16 %v2089, %v2089
    %v2946 = vpack.c.bf16 %v2096, %v2096
    %v2947 = vpack.c.bf16 %v2103, %v2103
    %v2948 = vpack.c.bf16 %v2110, %v2110
    %v2949 = vpack.c.bf16 %v2117, %v2117
    %v2950 = vpack.c.bf16 %v2124, %v2124
    %v2951 = vpack.c.bf16 %v2131, %v2131
    %v2952 = vpack.c.bf16 %v2138, %v2138
    %v2953 = vpack.c.bf16 %v2145, %v2145
    %v2954 = vpack.c.bf16 %v2152, %v2152
    %v2955 = vpack.c.bf16 %v2159, %v2159
    %v2956 = vpack.c.bf16 %v2166, %v2166
    %v2957 = vpack.c.bf16 %v2173, %v2173
    %v2958 = vpack.c.bf16 %v2180, %v2180
    %v2959 = vpack.c.bf16 %v2187, %v2187
    %v2960 = vpack.c.bf16 %v2194, %v2194
    %v2961 = vpack.c.bf16 %v2201, %v2201
    %v2962 = vpack.c.bf16 %v2208, %v2208
    %v2963 = vpack.c.bf16 %v2215, %v2215
    %v2964 = vpack.c.bf16 %v2222, %v2222
    %v2965 = vpack.c.bf16 %v2229, %v2229
    %v2966 = vpack.c.bf16 %v2236, %v2236
    %v2967 = vpack.c.bf16 %v2243, %v2243
    %v2968 = vpack.c.bf16 %v2250, %v2250
    %v2969 = vpack.c.bf16 %v2257, %v2257
    %v2970 = vpack.c.bf16 %v2264, %v2264
    %v2971 = vpack.c.bf16 %v2271, %v2271
    %v2972 = vpack.c.bf16 %v2278, %v2278
    %v2973 = vpack.c.bf16 %v2285, %v2285
    %v2974 = vpack.c.bf16 %v2292, %v2292
    %v2975 = vpack.c.bf16 %v2299, %v2299
    %v2976 = vpack.c.bf16 %v2306, %v2306
    %v2977 = vpack.c.bf16 %v2313, %v2313
    %v2978 = vpack.c.bf16 %v2320, %v2320
    %v2979 = vpack.c.bf16 %v2327, %v2327
    %v2980 = vpack.c.bf16 %v2334, %v2334
    %v2981 = vpack.c.bf16 %v2341, %v2341
    %v2982 = vpack.c.bf16 %v2348, %v2348
    %v2983 = vpack.c.bf16 %v2355, %v2355
    %v2984 = vpack.c.bf16 %v2362, %v2362
    %v2985 = vpack.c.bf16 %v2369, %v2369
    %v2986 = vpack.c.bf16 %v2376, %v2376
    %v2987 = vpack.c.bf16 %v2383, %v2383
    %v2988 = vpack.c.bf16 %v2390, %v2390
    %v2989 = vpack.c.bf16 %v2397, %v2397
    %v2990 = vpack.c.bf16 %v2404, %v2404
    %v2991 = vpack.c.bf16 %v2411, %v2411
    %v2992 = vpack.c.bf16 %v2418, %v2418
    %v2993 = vpack.c.bf16 %v2425, %v2425
    %v2994 = vpack.c.bf16 %v2432, %v2432
    %v2995 = vpack.c.bf16 %v2439, %v2439
    %v2996 = vpack.c.bf16 %v2446, %v2446
    %v2997 = vpack.c.bf16 %v2453, %v2453
    %v2998 = vpack.c.bf16 %v2460, %v2460
    %v2999 = vpack.c.bf16 %v2467, %v2467
    %v3000 = vpack.c.bf16 %v2474, %v2474
    %v3001 = vpack.c.bf16 %v2481, %v2481
    %v3002 = vpack.c.bf16 %v2488, %v2488
    %v3003 = vpack.c.bf16 %v2495, %v2495
    %v3004 = vpack.c.bf16 %v2502, %v2502
    %v3005 = vpack.c.bf16 %v2509, %v2509
    %v3006 = vpack.c.bf16 %v2516, %v2516
    %v3007 = vpack.c.bf16 %v2523, %v2523
    %v3008 = vpack.c.bf16 %v2530, %v2530
    %v3009 = vpack.c.bf16 %v2537, %v2537
    %v3010 = vpack.c.bf16 %v2544, %v2544
    %v3011 = vpack.c.bf16 %v2551, %v2551
    %v3012 = vpack.c.bf16 %v2558, %v2558
    %v3013 = vpack.c.bf16 %v2565, %v2565
    %v3014 = vpack.c.bf16 %v2572, %v2572
    %v3015 = vpack.c.bf16 %v2579, %v2579
    %v3016 = vpack.c.bf16 %v2586, %v2586
    %v3017 = vpack.c.bf16 %v2593, %v2593
    %v3018 = vpack.c.bf16 %v2600, %v2600
    %v3019 = vpack.c.bf16 %v2607, %v2607
    %v3020 = vpack.c.bf16 %v2614, %v2614
    %v3021 = vpack.c.bf16 %v2621, %v2621
    %v3022 = vpack.c.bf16 %v2628, %v2628
    %v3023 = vpack.c.bf16 %v2635, %v2635
    %v3024 = vpack.c.bf16 %v2642, %v2642
    %v3025 = vpack.c.bf16 %v2649, %v2649
    %v3026 = vpack.c.bf16 %v2656, %v2656
    %v3027 = vpack.c.bf16 %v2663, %v2663
    %v3028 = vpack.c.bf16 %v2670, %v2670
    %v3029 = vpack.c.bf16 %v2677, %v2677
    %v3030 = vpack.c.bf16 %v2684, %v2684
    %v3031 = vpack.c.bf16 %v2691, %v2691
    %v3032 = vpack.c.bf16 %v2698, %v2698
    %v3033 = vpack.c.bf16 %v2705, %v2705
    %v3034 = vpack.c.bf16 %v2712, %v2712
    %v3035 = vpack.c.bf16 %v2719, %v2719
    %v3036 = vpack.c.bf16 %v2726, %v2726
    %v3037 = vpack.c.bf16 %v2733, %v2733
    %v3038 = vpack.c.bf16 %v2740, %v2740
    %v3039 = vpack.c.bf16 %v2747, %v2747
    %v3040 = vpack.c.bf16 %v2754, %v2754
    %v3041 = vpack.c.bf16 %v2761, %v2761
    %v3042 = vpack.c.bf16 %v2768, %v2768
    %v3043 = vpack.c.bf16 %v2775, %v2775
    %v3044 = vpack.c.bf16 %v2782, %v2782
    %v3045 = vpack.c.bf16 %v2789, %v2789
    %v3046 = vpack.c.bf16 %v2796, %v2796
    %v3047 = vpack.c.bf16 %v2803, %v2803
    %v3048 = vpack.c.bf16 %v2810, %v2810
    %v3049 = vpack.c.bf16 %v2817, %v2817
    %v3050 = vpack.c.bf16 %v2824, %v2824
    %v3051 = vpack.c.bf16 %v2831, %v2831
    %v3052 = vpack.c.bf16 %v2838, %v2838
    %v3053 = vpack.c.bf16 %v2845, %v2845
    %v3054 = vpack.c.bf16 %v2852, %v2852
    %v3055 = vpack.c.bf16 %v2859, %v2859
    %v3056 = vpack.c.bf16 %v2866, %v2866
    %v3057 = vpack.c.bf16 %v2873, %v2873
    %v3058 = vpack.c.bf16 %v2880, %v2880
    %v3059 = vpack.c.bf16 %v2887, %v2887
    %v3060 = vpack.c.bf16 %v2894, %v2894
    %v3061 = vpack.c.bf16 %v2901, %v2901
    %v3222 = vunpack.c.l.b16 %v2902
    %v3223 = vunpack.c.l.b16 %v2903
    %v3224 = vunpack.c.l.b16 %v2904
    %v3225 = vunpack.c.l.b16 %v2905
    %v3226 = vunpack.c.l.b16 %v2906
    %v3227 = vunpack.c.l.b16 %v2907
    %v3228 = vunpack.c.l.b16 %v2908
    %v3229 = vunpack.c.l.b16 %v2909
    %v3230 = vunpack.c.l.b16 %v2910
    %v3231 = vunpack.c.l.b16 %v2911
    %v3232 = vunpack.c.l.b16 %v2912
    %v3233 = vunpack.c.l.b16 %v2913
    %v3234 = vunpack.c.l.b16 %v2914
    %v3235 = vunpack.c.l.b16 %v2915
    %v3236 = vunpack.c.l.b16 %v2916
    %v3237 = vunpack.c.l.b16 %v2917
    %v3238 = vunpack.c.l.b16 %v2918
    %v3239 = vunpack.c.l.b16 %v2919
    %v3240 = vunpack.c.l.b16 %v2920
    %v3241 = vunpack.c.l.b16 %v2921
    %v3242 = vunpack.c.l.b16 %v2922
    %v3243 = vunpack.c.l.b16 %v2923
    %v3244 = vunpack.c.l.b16 %v2924
    %v3245 = vunpack.c.l.b16 %v2925
    %v3246 = vunpack.c.l.b16 %v2926
    %v3247 = vunpack.c.l.b16 %v2927
    %v3248 = vunpack.c.l.b16 %v2928
    %v3249 = vunpack.c.l.b16 %v2929
    %v3250 = vunpack.c.l.b16 %v2930
    %v3251 = vunpack.c.l.b16 %v2931
    %v3252 = vunpack.c.l.b16 %v2932
    %v3253 = vunpack.c.l.b16 %v2933
    %v3254 = vunpack.c.l.b16 %v2934
    %v3255 = vunpack.c.l.b16 %v2935
    %v3256 = vunpack.c.l.b16 %v2936
    %v3257 = vunpack.c.l.b16 %v2937
    %v3258 = vunpack.c.l.b16 %v2938
    %v3259 = vunpack.c.l.b16 %v2939
    %v3260 = vunpack.c.l.b16 %v2940
    %v3261 = vunpack.c.l.b16 %v2941
    %v3262 = vunpack.c.l.b16 %v2942
    %v3263 = vunpack.c.l.b16 %v2943
    %v3264 = vunpack.c.l.b16 %v2944
    %v3265 = vunpack.c.l.b16 %v2945
    %v3266 = vunpack.c.l.b16 %v2946
    %v3267 = vunpack.c.l.b16 %v2947
    %v3268 = vunpack.c.l.b16 %v2948
    %v3269 = vunpack.c.l.b16 %v2949
    %v3270 = vunpack.c.l.b16 %v2950
    %v3271 = vunpack.c.l.b16 %v2951
    %v3272 = vunpack.c.l.b16 %v2952
    %v3273 = vunpack.c.l.b16 %v2953
    %v3274 = vunpack.c.l.b16 %v2954
    %v3275 = vunpack.c.l.b16 %v2955
    %v3276 = vunpack.c.l.b16 %v2956
    %v3277 = vunpack.c.l.b16 %v2957
    %v3278 = vunpack.c.l.b16 %v2958
    %v3279 = vunpack.c.l.b16 %v2959
    %v3280 = vunpack.c.l.b16 %v2960
    %v3281 = vunpack.c.l.b16 %v2961
    %v3282 = vunpack.c.l.b16 %v2962
    %v3283 = vunpack.c.l.b16 %v2963
    %v3284 = vunpack.c.l.b16 %v2964
    %v3285 = vunpack.c.l.b16 %v2965
    %v3286 = vunpack.c.l.b16 %v2966
    %v3287 = vunpack.c.l.b16 %v2967
    %v3288 = vunpack.c.l.b16 %v2968
    %v3289 = vunpack.c.l.b16 %v2969
    %v3290 = vunpack.c.l.b16 %v2970
    %v3291 = vunpack.c.l.b16 %v2971
    %v3292 = vunpack.c.l.b16 %v2972
    %v3293 = vunpack.c.l.b16 %v2973
    %v3294 = vunpack.c.l.b16 %v2974
    %v3295 = vunpack.c.l.b16 %v2975
    %v3296 = vunpack.c.l.b16 %v2976
    %v3297 = vunpack.c.l.b16 %v2977
    %v3298 = vunpack.c.l.b16 %v2978
    %v3299 = vunpack.c.l.b16 %v2979
    %v3300 = vunpack.c.l.b16 %v2980
    %v3301 = vunpack.c.l.b16 %v2981
    %v3302 = vunpack.c.l.b16 %v2982
    %v3303 = vunpack.c.l.b16 %v2983
    %v3304 = vunpack.c.l.b16 %v2984
    %v3305 = vunpack.c.l.b16 %v2985
    %v3306 = vunpack.c.l.b16 %v2986
    %v3307 = vunpack.c.l.b16 %v2987
    %v3308 = vunpack.c.l.b16 %v2988
    %v3309 = vunpack.c.l.b16 %v2989
    %v3310 = vunpack.c.l.b16 %v2990
    %v3311 = vunpack.c.l.b16 %v2991
    %v3312 = vunpack.c.l.b16 %v2992
    %v3313 = vunpack.c.l.b16 %v2993
    %v3314 = vunpack.c.l.b16 %v2994
    %v3315 = vunpack.c.l.b16 %v2995
    %v3316 = vunpack.c.l.b16 %v2996
    %v3317 = vunpack.c.l.b16 %v2997
    %v3318 = vunpack.c.l.b16 %v2998
    %v3319 = vunpack.c.l.b16 %v2999
    %v3320 = vunpack.c.l.b16 %v3000
    %v3321 = vunpack.c.l.b16 %v3001
    %v3322 = vunpack.c.l.b16 %v3002
    %v3323 = vunpack.c.l.b16 %v3003
    %v3324 = vunpack.c.l.b16 %v3004
    %v3325 = vunpack.c.l.b16 %v3005
    %v3326 = vunpack.c.l.b16 %v3006
    %v3327 = vunpack.c.l.b16 %v3007
    %v3328 = vunpack.c.l.b16 %v3008
    %v3329 = vunpack.c.l.b16 %v3009
    %v3330 = vunpack.c.l.b16 %v3010
    %v3331 = vunpack.c.l.b16 %v3011
    %v3332 = vunpack.c.l.b16 %v3012
    %v3333 = vunpack.c.l.b16 %v3013
    %v3334 = vunpack.c.l.b16 %v3014
    %v3335 = vunpack.c.l.b16 %v3015
    %v3336 = vunpack.c.l.b16 %v3016
    %v3337 = vunpack.c.l.b16 %v3017
    %v3338 = vunpack.c.l.b16 %v3018
    %v3339 = vunpack.c.l.b16 %v3019
    %v3340 = vunpack.c.l.b16 %v3020
    %v3341 = vunpack.c.l.b16 %v3021
    %v3342 = vunpack.c.l.b16 %v3022
    %v3343 = vunpack.c.l.b16 %v3023
    %v3344 = vunpack.c.l.b16 %v3024
    %v3345 = vunpack.c.l.b16 %v3025
    %v3346 = vunpack.c.l.b16 %v3026
    %v3347 = vunpack.c.l.b16 %v3027
    %v3348 = vunpack.c.l.b16 %v3028
    %v3349 = vunpack.c.l.b16 %v3029
    %v3350 = vunpack.c.l.b16 %v3030
    %v3351 = vunpack.c.l.b16 %v3031
    %v3352 = vunpack.c.l.b16 %v3032
    %v3353 = vunpack.c.l.b16 %v3033
    %v3354 = vunpack.c.l.b16 %v3034
    %v3355 = vunpack.c.l.b16 %v3035
    %v3356 = vunpack.c.l.b16 %v3036
    %v3357 = vunpack.c.l.b16 %v3037
    %v3358 = vunpack.c.l.b16 %v3038
    %v3359 = vunpack.c.l.b16 %v3039
    %v3360 = vunpack.c.l.b16 %v3040
    %v3361 = vunpack.c.l.b16 %v3041
    %v3362 = vunpack.c.l.b16 %v3042
    %v3363 = vunpack.c.l.b16 %v3043
    %v3364 = vunpack.c.l.b16 %v3044
    %v3365 = vunpack.c.l.b16 %v3045
    %v3366 = vunpack.c.l.b16 %v3046
    %v3367 = vunpack.c.l.b16 %v3047
    %v3368 = vunpack.c.l.b16 %v3048
    %v3369 = vunpack.c.l.b16 %v3049
    %v3370 = vunpack.c.l.b16 %v3050
    %v3371 = vunpack.c.l.b16 %v3051
    %v3372 = vunpack.c.l.b16 %v3052
    %v3373 = vunpack.c.l.b16 %v3053
    %v3374 = vunpack.c.l.b16 %v3054
    %v3375 = vunpack.c.l.b16 %v3055
    %v3376 = vunpack.c.l.b16 %v3056
    %v3377 = vunpack.c.l.b16 %v3057
    %v3378 = vunpack.c.l.b16 %v3058
    %v3379 = vunpack.c.l.b16 %v3059
    %v3380 = vunpack.c.l.b16 %v3060
    %v3381 = vunpack.c.l.b16 %v3061
    %v3382 = vpack.c.b16 %v3223, %v3222
    %v3383 = vpack.c.b16 %v3225, %v3224
    %v3384 = vpack.c.b16 %v3227, %v3226
    %v3385 = vpack.c.b16 %v3229, %v3228
    %v3386 = vpack.c.b16 %v3231, %v3230
    %v3387 = vpack.c.b16 %v3233, %v3232
    %v3388 = vpack.c.b16 %v3235, %v3234
    %v3389 = vpack.c.b16 %v3237, %v3236
    %v3390 = vpack.c.b16 %v3239, %v3238
    %v3391 = vpack.c.b16 %v3241, %v3240
    %v3392 = vpack.c.b16 %v3243, %v3242
    %v3393 = vpack.c.b16 %v3245, %v3244
    %v3394 = vpack.c.b16 %v3247, %v3246
    %v3395 = vpack.c.b16 %v3249, %v3248
    %v3396 = vpack.c.b16 %v3251, %v3250
    %v3397 = vpack.c.b16 %v3253, %v3252
    %v3398 = vpack.c.b16 %v3255, %v3254
    %v3399 = vpack.c.b16 %v3257, %v3256
    %v3400 = vpack.c.b16 %v3259, %v3258
    %v3401 = vpack.c.b16 %v3261, %v3260
    %v3402 = vpack.c.b16 %v3263, %v3262
    %v3403 = vpack.c.b16 %v3265, %v3264
    %v3404 = vpack.c.b16 %v3267, %v3266
    %v3405 = vpack.c.b16 %v3269, %v3268
    %v3406 = vpack.c.b16 %v3271, %v3270
    %v3407 = vpack.c.b16 %v3273, %v3272
    %v3408 = vpack.c.b16 %v3275, %v3274
    %v3409 = vpack.c.b16 %v3277, %v3276
    %v3410 = vpack.c.b16 %v3279, %v3278
    %v3411 = vpack.c.b16 %v3281, %v3280
    %v3412 = vpack.c.b16 %v3283, %v3282
    %v3413 = vpack.c.b16 %v3285, %v3284
    %v3414 = vpack.c.b16 %v3287, %v3286
    %v3415 = vpack.c.b16 %v3289, %v3288
    %v3416 = vpack.c.b16 %v3291, %v3290
    %v3417 = vpack.c.b16 %v3293, %v3292
    %v3418 = vpack.c.b16 %v3295, %v3294
    %v3419 = vpack.c.b16 %v3297, %v3296
    %v3420 = vpack.c.b16 %v3299, %v3298
    %v3421 = vpack.c.b16 %v3301, %v3300
    %v3422 = vpack.c.b16 %v3303, %v3302
    %v3423 = vpack.c.b16 %v3305, %v3304
    %v3424 = vpack.c.b16 %v3307, %v3306
    %v3425 = vpack.c.b16 %v3309, %v3308
    %v3426 = vpack.c.b16 %v3311, %v3310
    %v3427 = vpack.c.b16 %v3313, %v3312
    %v3428 = vpack.c.b16 %v3315, %v3314
    %v3429 = vpack.c.b16 %v3317, %v3316
    %v3430 = vpack.c.b16 %v3319, %v3318
    %v3431 = vpack.c.b16 %v3321, %v3320
    %v3432 = vpack.c.b16 %v3323, %v3322
    %v3433 = vpack.c.b16 %v3325, %v3324
    %v3434 = vpack.c.b16 %v3327, %v3326
    %v3435 = vpack.c.b16 %v3329, %v3328
    %v3436 = vpack.c.b16 %v3331, %v3330
    %v3437 = vpack.c.b16 %v3333, %v3332
    %v3438 = vpack.c.b16 %v3335, %v3334
    %v3439 = vpack.c.b16 %v3337, %v3336
    %v3440 = vpack.c.b16 %v3339, %v3338
    %v3441 = vpack.c.b16 %v3341, %v3340
    %v3442 = vpack.c.b16 %v3343, %v3342
    %v3443 = vpack.c.b16 %v3345, %v3344
    %v3444 = vpack.c.b16 %v3347, %v3346
    %v3445 = vpack.c.b16 %v3349, %v3348
    %v3446 = vpack.c.b16 %v3351, %v3350
    %v3447 = vpack.c.b16 %v3353, %v3352
    %v3448 = vpack.c.b16 %v3355, %v3354
    %v3449 = vpack.c.b16 %v3357, %v3356
    %v3450 = vpack.c.b16 %v3359, %v3358
    %v3451 = vpack.c.b16 %v3361, %v3360
    %v3452 = vpack.c.b16 %v3363, %v3362
    %v3453 = vpack.c.b16 %v3365, %v3364
    %v3454 = vpack.c.b16 %v3367, %v3366
    %v3455 = vpack.c.b16 %v3369, %v3368
    %v3456 = vpack.c.b16 %v3371, %v3370
    %v3457 = vpack.c.b16 %v3373, %v3372
    %v3458 = vpack.c.b16 %v3375, %v3374
    %v3459 = vpack.c.b16 %v3377, %v3376
    %v3460 = vpack.c.b16 %v3379, %v3378
    %v3461 = vpack.c.b16 %v3381, %v3380
    %v3462 = vunpack.c.l.b16 %v3382
    %v3463 = vunpack.c.h.b16 %v3382
    %v3464 = vunpack.c.l.b16 %v3383
    %v3465 = vunpack.c.h.b16 %v3383
    %v3466 = vunpack.c.l.b16 %v3384
    %v3467 = vunpack.c.h.b16 %v3384
    %v3468 = vunpack.c.l.b16 %v3385
    %v3469 = vunpack.c.h.b16 %v3385
    %v3470 = vunpack.c.l.b16 %v3386
    %v3471 = vunpack.c.h.b16 %v3386
    %v3472 = vunpack.c.l.b16 %v3387
    %v3473 = vunpack.c.h.b16 %v3387
    %v3474 = vunpack.c.l.b16 %v3388
    %v3475 = vunpack.c.h.b16 %v3388
    %v3476 = vunpack.c.l.b16 %v3389
    %v3477 = vunpack.c.h.b16 %v3389
    %v3478 = vunpack.c.l.b16 %v3390
    %v3479 = vunpack.c.h.b16 %v3390
    %v3480 = vunpack.c.l.b16 %v3391
    %v3481 = vunpack.c.h.b16 %v3391
    %v3482 = vunpack.c.l.b16 %v3392
    %v3483 = vunpack.c.h.b16 %v3392
    %v3484 = vunpack.c.l.b16 %v3393
    %v3485 = vunpack.c.h.b16 %v3393
    %v3486 = vunpack.c.l.b16 %v3394
    %v3487 = vunpack.c.h.b16 %v3394
    %v3488 = vunpack.c.l.b16 %v3395
    %v3489 = vunpack.c.h.b16 %v3395
    %v3490 = vunpack.c.l.b16 %v3396
    %v3491 = vunpack.c.h.b16 %v3396
    %v3492 = vunpack.c.l.b16 %v3397
    %v3493 = vunpack.c.h.b16 %v3397
    %v3494 = vunpack.c.l.b16 %v3398
    %v3495 = vunpack.c.h.b16 %v3398
    %v3496 = vunpack.c.l.b16 %v3399
    %v3497 = vunpack.c.h.b16 %v3399
    %v3498 = vunpack.c.l.b16 %v3400
    %v3499 = vunpack.c.h.b16 %v3400
    %v3500 = vunpack.c.l.b16 %v3401
    %v3501 = vunpack.c.h.b16 %v3401
    %v3502 = vunpack.c.l.b16 %v3402
    %v3503 = vunpack.c.h.b16 %v3402
    %v3504 = vunpack.c.l.b16 %v3403
    %v3505 = vunpack.c.h.b16 %v3403
    %v3506 = vunpack.c.l.b16 %v3404
    %v3507 = vunpack.c.h.b16 %v3404
    %v3508 = vunpack.c.l.b16 %v3405
    %v3509 = vunpack.c.h.b16 %v3405
    %v3510 = vunpack.c.l.b16 %v3406
    %v3511 = vunpack.c.h.b16 %v3406
    %v3512 = vunpack.c.l.b16 %v3407
    %v3513 = vunpack.c.h.b16 %v3407
    %v3514 = vunpack.c.l.b16 %v3408
    %v3515 = vunpack.c.h.b16 %v3408
    %v3516 = vunpack.c.l.b16 %v3409
    %v3517 = vunpack.c.h.b16 %v3409
    %v3518 = vunpack.c.l.b16 %v3410
    %v3519 = vunpack.c.h.b16 %v3410
    %v3520 = vunpack.c.l.b16 %v3411
    %v3521 = vunpack.c.h.b16 %v3411
    %v3522 = vunpack.c.l.b16 %v3412
    %v3523 = vunpack.c.h.b16 %v3412
    %v3524 = vunpack.c.l.b16 %v3413
    %v3525 = vunpack.c.h.b16 %v3413
    %v3526 = vunpack.c.l.b16 %v3414
    %v3527 = vunpack.c.h.b16 %v3414
    %v3528 = vunpack.c.l.b16 %v3415
    %v3529 = vunpack.c.h.b16 %v3415
    %v3530 = vunpack.c.l.b16 %v3416
    %v3531 = vunpack.c.h.b16 %v3416
    %v3532 = vunpack.c.l.b16 %v3417
    %v3533 = vunpack.c.h.b16 %v3417
    %v3534 = vunpack.c.l.b16 %v3418
    %v3535 = vunpack.c.h.b16 %v3418
    %v3536 = vunpack.c.l.b16 %v3419
    %v3537 = vunpack.c.h.b16 %v3419
    %v3538 = vunpack.c.l.b16 %v3420
    %v3539 = vunpack.c.h.b16 %v3420
    %v3540 = vunpack.c.l.b16 %v3421
    %v3541 = vunpack.c.h.b16 %v3421
    %v3542 = vunpack.c.l.b16 %v3422
    %v3543 = vunpack.c.h.b16 %v3422
    %v3544 = vunpack.c.l.b16 %v3423
    %v3545 = vunpack.c.h.b16 %v3423
    %v3546 = vunpack.c.l.b16 %v3424
    %v3547 = vunpack.c.h.b16 %v3424
    %v3548 = vunpack.c.l.b16 %v3425
    %v3549 = vunpack.c.h.b16 %v3425
    %v3550 = vunpack.c.l.b16 %v3426
    %v3551 = vunpack.c.h.b16 %v3426
    %v3552 = vunpack.c.l.b16 %v3427
    %v3553 = vunpack.c.h.b16 %v3427
    %v3554 = vunpack.c.l.b16 %v3428
    %v3555 = vunpack.c.h.b16 %v3428
    %v3556 = vunpack.c.l.b16 %v3429
    %v3557 = vunpack.c.h.b16 %v3429
    %v3558 = vunpack.c.l.b16 %v3430
    %v3559 = vunpack.c.h.b16 %v3430
    %v3560 = vunpack.c.l.b16 %v3431
    %v3561 = vunpack.c.h.b16 %v3431
    %v3562 = vunpack.c.l.b16 %v3432
    %v3563 = vunpack.c.h.b16 %v3432
    %v3564 = vunpack.c.l.b16 %v3433
    %v3565 = vunpack.c.h.b16 %v3433
    %v3566 = vunpack.c.l.b16 %v3434
    %v3567 = vunpack.c.h.b16 %v3434
    %v3568 = vunpack.c.l.b16 %v3435
    %v3569 = vunpack.c.h.b16 %v3435
    %v3570 = vunpack.c.l.b16 %v3436
    %v3571 = vunpack.c.h.b16 %v3436
    %v3572 = vunpack.c.l.b16 %v3437
    %v3573 = vunpack.c.h.b16 %v3437
    %v3574 = vunpack.c.l.b16 %v3438
    %v3575 = vunpack.c.h.b16 %v3438
    %v3576 = vunpack.c.l.b16 %v3439
    %v3577 = vunpack.c.h.b16 %v3439
    %v3578 = vunpack.c.l.b16 %v3440
    %v3579 = vunpack.c.h.b16 %v3440
    %v3580 = vunpack.c.l.b16 %v3441
    %v3581 = vunpack.c.h.b16 %v3441
    %v3582 = vunpack.c.l.b16 %v3442
    %v3583 = vunpack.c.h.b16 %v3442
    %v3584 = vunpack.c.l.b16 %v3443
    %v3585 = vunpack.c.h.b16 %v3443
    %v3586 = vunpack.c.l.b16 %v3444
    %v3587 = vunpack.c.h.b16 %v3444
    %v3588 = vunpack.c.l.b16 %v3445
    %v3589 = vunpack.c.h.b16 %v3445
    %v3590 = vunpack.c.l.b16 %v3446
    %v3591 = vunpack.c.h.b16 %v3446
    %v3592 = vunpack.c.l.b16 %v3447
    %v3593 = vunpack.c.h.b16 %v3447
    %v3594 = vunpack.c.l.b16 %v3448
    %v3595 = vunpack.c.h.b16 %v3448
    %v3596 = vunpack.c.l.b16 %v3449
    %v3597 = vunpack.c.h.b16 %v3449
    %v3598 = vunpack.c.l.b16 %v3450
    %v3599 = vunpack.c.h.b16 %v3450
    %v3600 = vunpack.c.l.b16 %v3451
    %v3601 = vunpack.c.h.b16 %v3451
    %v3602 = vunpack.c.l.b16 %v3452
    %v3603 = vunpack.c.h.b16 %v3452
    %v3604 = vunpack.c.l.b16 %v3453
    %v3605 = vunpack.c.h.b16 %v3453
    %v3606 = vunpack.c.l.b16 %v3454
    %v3607 = vunpack.c.h.b16 %v3454
    %v3608 = vunpack.c.l.b16 %v3455
    %v3609 = vunpack.c.h.b16 %v3455
    %v3610 = vunpack.c.l.b16 %v3456
    %v3611 = vunpack.c.h.b16 %v3456
    %v3612 = vunpack.c.l.b16 %v3457
    %v3613 = vunpack.c.h.b16 %v3457
    %v3614 = vunpack.c.l.b16 %v3458
    %v3615 = vunpack.c.h.b16 %v3458
    %v3616 = vunpack.c.l.b16 %v3459
    %v3617 = vunpack.c.h.b16 %v3459
    %v3618 = vunpack.c.l.b16 %v3460
    %v3619 = vunpack.c.h.b16 %v3460
    %v3620 = vunpack.c.l.b16 %v3461
    %v3621 = vunpack.c.h.b16 %v3461
    %vm3622 = vcmask 1041409
    %v3623 = vsel %vm3622, %v3464, %v3462
    %vm3624 = vcmask 1042434
    %v3625 = vsel %vm3624, %v3466, %v3623
    %vm3626 = vcmask 1043459
    %v3627 = vsel %vm3626, %v3468, %v3625
    %vm3628 = vcmask 1044484
    %v3629 = vsel %vm3628, %v3470, %v3627
    %vm3630 = vcmask 1045509
    %v3631 = vsel %vm3630, %v3472, %v3629
    %vm3632 = vcmask 1046534
    %v3633 = vsel %vm3632, %v3474, %v3631
    %vm3634 = vcmask 1047559
    %v3635 = vsel %vm3634, %v3476, %v3633
    %v3636 = vsel %vm3622, %v3465, %v3463
    %v3637 = vsel %vm3624, %v3467, %v3636
    %v3638 = vsel %vm3626, %v3469, %v3637
    %v3639 = vsel %vm3628, %v3471, %v3638
    %v3640 = vsel %vm3630, %v3473, %v3639
    %v3641 = vsel %vm3632, %v3475, %v3640
    %v3642 = vsel %vm3634, %v3477, %v3641
    %v3643 = vsel %vm3622, %v3480, %v3478
    %v3644 = vsel %vm3624, %v3482, %v3643
    %v3645 = vsel %vm3626, %v3484, %v3644
    %v3646 = vsel %vm3628, %v3486, %v3645
    %v3647 = vsel %vm3630, %v3488, %v3646
    %v3648 = vsel %vm3632, %v3490, %v3647
    %v3649 = vsel %vm3634, %v3492, %v3648
    %v3650 = vsel %vm3622, %v3481, %v3479
    %v3651 = vsel %vm3624, %v3483, %v3650
    %v3652 = vsel %vm3626, %v3485, %v3651
    %v3653 = vsel %vm3628, %v3487, %v3652
    %v3654 = vsel %vm3630, %v3489, %v3653
    %v3655 = vsel %vm3632, %v3491, %v3654
    %v3656 = vsel %vm3634, %v3493, %v3655
    %v3657 = vsel %vm3622, %v3496, %v3494
    %v3658 = vsel %vm3624, %v3498, %v3657
    %v3659 = vsel %vm3626, %v3500, %v3658
    %v3660 = vsel %vm3628, %v3502, %v3659
    %v3661 = vsel %vm3630, %v3504, %v3660
    %v3662 = vsel %vm3632, %v3506, %v3661
    %v3663 = vsel %vm3634, %v3508, %v3662
    %v3664 = vsel %vm3622, %v3497, %v3495
    %v3665 = vsel %vm3624, %v3499, %v3664
    %v3666 = vsel %vm3626, %v3501, %v3665
    %v3667 = vsel %vm3628, %v3503, %v3666
    %v3668 = vsel %vm3630, %v3505, %v3667
    %v3669 = vsel %vm3632, %v3507, %v3668
    %v3670 = vsel %vm3634, %v3509, %v3669
    %v3671 = vsel %vm3622, %v3512, %v3510
    %v3672 = vsel %vm3624, %v3514, %v3671
    %v3673 = vsel %vm3626, %v3516, %v3672
    %v3674 = vsel %vm3628, %v3518, %v3673
    %v3675 = vsel %vm3630, %v3520, %v3674
    %v3676 = vsel %vm3632, %v3522, %v3675
    %v3677 = vsel %vm3634, %v3524, %v3676
    %v3678 = vsel %vm3622, %v3513, %v3511
    %v3679 = vsel %vm3624, %v3515, %v3678
    %v3680 = vsel %vm3626, %v3517, %v3679
    %v3681 = vsel %vm3628, %v3519, %v3680
    %v3682 = vsel %vm3630, %v3521, %v3681
    %v3683 = vsel %vm3632, %v3523, %v3682
    %v3684 = vsel %vm3634, %v3525, %v3683
    %v3685 = vsel %vm3622, %v3528, %v3526
    %v3686 = vsel %vm3624, %v3530, %v3685
    %v3687 = vsel %vm3626, %v3532, %v3686
    %v3688 = vsel %vm3628, %v3534, %v3687
    %v3689 = vsel %vm3630, %v3536, %v3688
    %v3690 = vsel %vm3632, %v3538, %v3689
    %v3691 = vsel %vm3634, %v3540, %v3690
    %v3692 = vsel %vm3622, %v3529, %v3527
    %v3693 = vsel %vm3624, %v3531, %v3692
    %v3694 = vsel %vm3626, %v3533, %v3693
    %v3695 = vsel %vm3628, %v3535, %v3694
    %v3696 = vsel %vm3630, %v3537, %v3695
    %v3697 = vsel %vm3632, %v3539, %v3696
    %v3698 = vsel %vm3634, %v3541, %v3697
    %v3699 = vsel %vm3622, %v3544, %v3542
    %v3700 = vsel %vm3624, %v3546, %v3699
    %v3701 = vsel %vm3626, %v3548, %v3700
    %v3702 = vsel %vm3628, %v3550, %v3701
    %v3703 = vsel %vm3630, %v3552, %v3702
    %v3704 = vsel %vm3632, %v3554, %v3703
    %v3705 = vsel %vm3634, %v3556, %v3704
    %v3706 = vsel %vm3622, %v3545, %v3543
    %v3707 = vsel %vm3624, %v3547, %v3706
    %v3708 = vsel %vm3626, %v3549, %v3707
    %v3709 = vsel %vm3628, %v3551, %v3708
    %v3710 = vsel %vm3630, %v3553, %v3709
    %v3711 = vsel %vm3632, %v3555, %v3710
    %v3712 = vsel %vm3634, %v3557, %v3711
    %v3713 = vsel %vm3622, %v3560, %v3558
    %v3714 = vsel %vm3624, %v3562, %v3713
    %v3715 = vsel %vm3626, %v3564, %v3714
    %v3716 = vsel %vm3628, %v3566, %v3715
    %v3717 = vsel %vm3630, %v3568, %v3716
    %v3718 = vsel %vm3632, %v3570, %v3717
    %v3719 = vsel %vm3634, %v3572, %v3718
    %v3720 = vsel %vm3622, %v3561, %v3559
    %v3721 = vsel %vm3624, %v3563, %v3720
    %v3722 = vsel %vm3626, %v3565, %v3721
    %v3723 = vsel %vm3628, %v3567, %v3722
    %v3724 = vsel %vm3630, %v3569, %v3723
    %v3725 = vsel %vm3632, %v3571, %v3724
    %v3726 = vsel %vm3634, %v3573, %v3725
    %v3727 = vsel %vm3622, %v3576, %v3574
    %v3728 = vsel %vm3624, %v3578, %v3727
    %v3729 = vsel %vm3626, %v3580, %v3728
    %v3730 = vsel %vm3628, %v3582, %v3729
    %v3731 = vsel %vm3630, %v3584, %v3730
    %v3732 = vsel %vm3632, %v3586, %v3731
    %v3733 = vsel %vm3634, %v3588, %v3732
    %v3734 = vsel %vm3622, %v3577, %v3575
    %v3735 = vsel %vm3624, %v3579, %v3734
    %v3736 = vsel %vm3626, %v3581, %v3735
    %v3737 = vsel %vm3628, %v3583, %v3736
    %v3738 = vsel %vm3630, %v3585, %v3737
    %v3739 = vsel %vm3632, %v3587, %v3738
    %v3740 = vsel %vm3634, %v3589, %v3739
    %v3741 = vsel %vm3622, %v3592, %v3590
    %v3742 = vsel %vm3624, %v3594, %v3741
    %v3743 = vsel %vm3626, %v3596, %v3742
    %v3744 = vsel %vm3628, %v3598, %v3743
    %v3745 = vsel %vm3630, %v3600, %v3744
    %v3746 = vsel %vm3632, %v3602, %v3745
    %v3747 = vsel %vm3634, %v3604, %v3746
    %v3748 = vsel %vm3622, %v3593, %v3591
    %v3749 = vsel %vm3624, %v3595, %v3748
    %v3750 = vsel %vm3626, %v3597, %v3749
    %v3751 = vsel %vm3628, %v3599, %v3750
    %v3752 = vsel %vm3630, %v3601, %v3751
    %v3753 = vsel %vm3632, %v3603, %v3752
    %v3754 = vsel %vm3634, %v3605, %v3753
    %v3755 = vsel %vm3622, %v3608, %v3606
    %v3756 = vsel %vm3624, %v3610, %v3755
    %v3757 = vsel %vm3626, %v3612, %v3756
    %v3758 = vsel %vm3628, %v3614, %v3757
    %v3759 = vsel %vm3630, %v3616, %v3758
    %v3760 = vsel %vm3632, %v3618, %v3759
    %v3761 = vsel %vm3634, %v3620, %v3760
    %v3762 = vsel %vm3622, %v3609, %v3607
    %v3763 = vsel %vm3624, %v3611, %v3762
    %v3764 = vsel %vm3626, %v3613, %v3763
    %v3765 = vsel %vm3628, %v3615, %v3764
    %v3766 = vsel %vm3630, %v3617, %v3765
    %v3767 = vsel %vm3632, %v3619, %v3766
    %v3768 = vsel %vm3634, %v3621, %v3767
    %v3769 = vpack.c.b16 %v3642, %v3635
    %v3770 = vpack.c.b16 %v3656, %v3649
    %v3771 = vpack.c.b16 %v3670, %v3663
    %v3772 = vpack.c.b16 %v3684, %v3677
    %v3773 = vpack.c.b16 %v3698, %v3691
    %v3774 = vpack.c.b16 %v3712, %v3705
    %v3775 = vpack.c.b16 %v3726, %v3719
    %v3776 = vpack.c.b16 %v3740, %v3733
    %v3777 = vpack.c.b16 %v3754, %v3747
    %v3778 = vpack.c.b16 %v3768, %v3761
    %3789 = vst [vmem:[#allocation2] sm:$0xff] %v3769
    %3790 = vst [vmem:[#allocation2 + $0x8] sm:$0xff] %v3770
    %3791 = vst [vmem:[#allocation2 + $0x10] sm:$0xff] %v3771
    %3792 = vst [vmem:[#allocation2 + $0x18] sm:$0xff] %v3772
    %3793 = vst [vmem:[#allocation2 + $0x20] sm:$0xff] %v3773
    %3794 = vst [vmem:[#allocation2 + $0x28] sm:$0xff] %v3774
    %3795 = vst [vmem:[#allocation2 + $0x30] sm:$0xff] %v3775
    %3796 = vst [vmem:[#allocation2 + $0x38] sm:$0xff] %v3776
    %3797 = vst [vmem:[#allocation2 + $0x40] sm:$0xff] %v3777
    %3798 = vst [vmem:[#allocation2 + $0x48] sm:$0xff] %v3778
    %3799 = vst [vmem:[#allocation2 + $0x50] sm:$0xff] 0
    %v3800 = vld [vmem:[#allocation2] sm:$0xff]
    %v3801 = vld [vmem:[#allocation2 + $0x8] sm:$0xff]
    %v3802 = vld [vmem:[#allocation2 + $0x10] sm:$0xff]
    %v3803 = vld [vmem:[#allocation2 + $0x18] sm:$0xff]
    %v3804 = vld [vmem:[#allocation2 + $0x20] sm:$0xff]
    %v3805 = vld [vmem:[#allocation2 + $0x28] sm:$0xff]
    %v3806 = vld [vmem:[#allocation2 + $0x30] sm:$0xff]
    %v3807 = vld [vmem:[#allocation2 + $0x38] sm:$0xff]
    %v3808 = vld [vmem:[#allocation2 + $0x40] sm:$0xff]
    %v3809 = vld [vmem:[#allocation2 + $0x48] sm:$0xff]
    %v3810 = vld [vmem:[#allocation9] sm:$0xf]
    %v3811 = vld [vmem:[#allocation9 + $0x4] sm:$0xf]
    %v3812 = vld [vmem:[#allocation9 + $0x8] sm:$0xf]
    %v3813 = vld [vmem:[#allocation9 + $0xc] sm:$0xf]
    %v3814 = vld [vmem:[#allocation9 + $0x10] sm:$0xf]
    %v3815 = vld [vmem:[#allocation9 + $0x14] sm:$0xf]
    %v3816 = vld [vmem:[#allocation9 + $0x18] sm:$0xf]
    %v3817 = vld [vmem:[#allocation9 + $0x1c] sm:$0xf]
    %v3818 = vld [vmem:[#allocation9 + $0x20] sm:$0xf]
    %v3819 = vld [vmem:[#allocation9 + $0x24] sm:$0xf]
    %v3820 = vld [vmem:[#allocation9 + $0x28] sm:$0xf]
    %v3821 = vld [vmem:[#allocation9 + $0x2c] sm:$0xf]
    %v3822 = vld [vmem:[#allocation9 + $0x30] sm:$0xf]
    %v3823 = vld [vmem:[#allocation9 + $0x34] sm:$0xf]
    %v3824 = vld [vmem:[#allocation9 + $0x38] sm:$0xf]
    %v3825 = vld [vmem:[#allocation9 + $0x3c] sm:$0xf]
    %v3826 = vld [vmem:[#allocation9 + $0x40] sm:$0xf]
    %v3827 = vld [vmem:[#allocation9 + $0x44] sm:$0xf]
    %v3828 = vld [vmem:[#allocation9 + $0x48] sm:$0xf]
    %v3829 = vld [vmem:[#allocation9 + $0x4c] sm:$0xf]
    %v3830 = vld [vmem:[#allocation9 + $0x50] sm:$0xf]
    %v3831 = vld [vmem:[#allocation9 + $0x54] sm:$0xf]
    %v3832 = vld [vmem:[#allocation9 + $0x58] sm:$0xf]
    %v3833 = vld [vmem:[#allocation9 + $0x5c] sm:$0xf]
    %v3834 = vld [vmem:[#allocation9 + $0x60] sm:$0xf]
    %v3835 = vld [vmem:[#allocation9 + $0x64] sm:$0xf]
    %v3836 = vld [vmem:[#allocation9 + $0x68] sm:$0xf]
    %v3837 = vld [vmem:[#allocation9 + $0x6c] sm:$0xf]
    %v3838 = vld [vmem:[#allocation9 + $0x70] sm:$0xf]
    %v3839 = vld [vmem:[#allocation9 + $0x74] sm:$0xf]
    %v3840 = vld [vmem:[#allocation9 + $0x78] sm:$0xf]
    %v3841 = vld [vmem:[#allocation9 + $0x7c] sm:$0xf]
    %v3842 = vld [vmem:[#allocation2] sm:$0xff]
    %v3843 = vld [vmem:[#allocation2 + $0x8] sm:$0xff]
    %v3844 = vld [vmem:[#allocation2 + $0x10] sm:$0xff]
    %v3845 = vld [vmem:[#allocation2 + $0x18] sm:$0xff]
    %v3846 = vld [vmem:[#allocation2 + $0x20] sm:$0xff]
    %v3847 = vld [vmem:[#allocation2 + $0x28] sm:$0xff]
    %v3848 = vld [vmem:[#allocation2 + $0x30] sm:$0xff]
    %v3849 = vld [vmem:[#allocation2 + $0x38] sm:$0xff]
    %v3850 = vld [vmem:[#allocation2 + $0x40] sm:$0xff]
    %v3851 = vld [vmem:[#allocation2 + $0x48] sm:$0xff]
    %v3852 = vld [vmem:[#allocation2 + $0x50] sm:$0x11]
    %s3853 = scalar_lea.vmem [#allocation9], 128
    %v3854 = vld [vmem:[%s3853] sm:$0xf]
    %v3855 = vld [vmem:[%s3853 + $0x4] sm:$0xf]
    %v3856 = vld [vmem:[%s3853 + $0x8] sm:$0xf]
    %v3857 = vld [vmem:[%s3853 + $0xc] sm:$0xf]
    %v3858 = vld [vmem:[%s3853 + $0x10] sm:$0xf]
    %v3859 = vld [vmem:[%s3853 + $0x14] sm:$0xf]
    %v3860 = vld [vmem:[%s3853 + $0x18] sm:$0xf]
    %v3861 = vld [vmem:[%s3853 + $0x1c] sm:$0xf]
    %v3862 = vld [vmem:[%s3853 + $0x20] sm:$0xf]
    %v3863 = vld [vmem:[%s3853 + $0x24] sm:$0xf]
    %v3864 = vld [vmem:[%s3853 + $0x28] sm:$0xf]
    %v3865 = vld [vmem:[%s3853 + $0x2c] sm:$0xf]
    %v3866 = vld [vmem:[%s3853 + $0x30] sm:$0xf]
    %v3867 = vld [vmem:[%s3853 + $0x34] sm:$0xf]
    %v3868 = vld [vmem:[%s3853 + $0x38] sm:$0xf]
    %v3869 = vld [vmem:[%s3853 + $0x3c] sm:$0xf]
    %v3870 = vld [vmem:[%s3853 + $0x40] sm:$0xf]
    %v3871 = vld [vmem:[%s3853 + $0x44] sm:$0xf]
    %v3872 = vld [vmem:[%s3853 + $0x48] sm:$0xf]
    %v3873 = vld [vmem:[%s3853 + $0x4c] sm:$0xf]
    %v3874 = vld [vmem:[%s3853 + $0x50] sm:$0xf]
    %v3875 = vld [vmem:[%s3853 + $0x54] sm:$0xf]
    %v3876 = vld [vmem:[%s3853 + $0x58] sm:$0xf]
    %v3877 = vld [vmem:[%s3853 + $0x5c] sm:$0xf]
    %v3878 = vld [vmem:[%s3853 + $0x60] sm:$0xf]
    %v3879 = vld [vmem:[%s3853 + $0x64] sm:$0xf]
    %v3880 = vld [vmem:[%s3853 + $0x68] sm:$0xf]
    %v3881 = vld [vmem:[%s3853 + $0x6c] sm:$0xf]
    %v3882 = vld [vmem:[%s3853 + $0x70] sm:$0xf]
    %v3883 = vld [vmem:[%s3853 + $0x74] sm:$0xf]
    %v3884 = vld [vmem:[%s3853 + $0x78] sm:$0xf]
    %v3885 = vld [vmem:[%s3853 + $0x7c] sm:$0xf]
    %v3897 = vunpack.c.l.b16 %v3842
    %v3898 = vunpack.c.h.b16 %v3842
    %v3899 = vunpack.c.l.b16 %v3843
    %v3900 = vunpack.c.h.b16 %v3843
    %v3901 = vunpack.c.l.b16 %v3844
    %v3902 = vunpack.c.h.b16 %v3844
    %v3903 = vunpack.c.l.b16 %v3845
    %v3904 = vunpack.c.h.b16 %v3845
    %v3905 = vunpack.c.l.b16 %v3846
    %v3906 = vunpack.c.h.b16 %v3846
    %v3907 = vunpack.c.l.b16 %v3847
    %v3908 = vunpack.c.h.b16 %v3847
    %v3909 = vunpack.c.l.b16 %v3848
    %v3910 = vunpack.c.h.b16 %v3848
    %v3911 = vunpack.c.l.b16 %v3849
    %v3912 = vunpack.c.h.b16 %v3849
    %v3913 = vunpack.c.l.b16 %v3850
    %v3914 = vunpack.c.h.b16 %v3850
    %v3915 = vunpack.c.l.b16 %v3851
    %v3916 = vunpack.c.h.b16 %v3851
    %v3917 = vunpack.c.l.b16 %v3852
    %v3918 = vunpack.c.h.b16 %v3852
    %v3919 = vpack.c.b16 %v3899, %v3897
    %v3920 = vpack.c.b16 %v3900, %v3898
    %v3921 = vpack.c.b16 %v3903, %v3901
    %v3922 = vpack.c.b16 %v3904, %v3902
    %v3923 = vpack.c.b16 %v3907, %v3905
    %v3924 = vpack.c.b16 %v3908, %v3906
    %v3925 = vpack.c.b16 %v3911, %v3909
    %v3926 = vpack.c.b16 %v3912, %v3910
    %v3927 = vpack.c.b16 %v3915, %v3913
    %v3928 = vpack.c.b16 %v3916, %v3914
    %v3929 = vpack.c.b16 %v3917, %v3917
    %v3930 = vpack.c.b16 %v3918, %v3918
    %vm3931 = vsmask.f32 7424
    %v3933 = vshrl.u32 %v3919, 16
    %v3935 = vshll.u32 %v3919, 16
    %v3937 = vrot.slane %v3935, 1
    %v3938 = vor.u32 %v3933, %v3937
    %v3940 = vshll.u32 %v3921, 16
    %v3942 = vrot.slane %v3940, 1
    %v3943 = vsel %vm3931, %v3938, %v3942
    %v3945 = vshrl.u32 %v3920, 16
    %v3947 = vshll.u32 %v3920, 16
    %v3949 = vrot.slane %v3947, 1
    %v3950 = vor.u32 %v3945, %v3949
    %v3952 = vshll.u32 %v3922, 16
    %v3954 = vrot.slane %v3952, 1
    %v3955 = vsel %vm3931, %v3950, %v3954
    %v3956 = vshrl.u32 %v3921, 16
    %v3958 = vor.u32 %v3956, %v3942
    %v3960 = vshll.u32 %v3923, 16
    %v3962 = vrot.slane %v3960, 1
    %v3963 = vsel %vm3931, %v3958, %v3962
    %v3964 = vshrl.u32 %v3922, 16
    %v3966 = vor.u32 %v3964, %v3954
    %v3968 = vshll.u32 %v3924, 16
    %v3970 = vrot.slane %v3968, 1
    %v3971 = vsel %vm3931, %v3966, %v3970
    %v3972 = vshrl.u32 %v3923, 16
    %v3974 = vor.u32 %v3972, %v3962
    %v3976 = vshll.u32 %v3925, 16
    %v3978 = vrot.slane %v3976, 1
    %v3979 = vsel %vm3931, %v3974, %v3978
    %v3980 = vshrl.u32 %v3924, 16
    %v3982 = vor.u32 %v3980, %v3970
    %v3984 = vshll.u32 %v3926, 16
    %v3986 = vrot.slane %v3984, 1
    %v3987 = vsel %vm3931, %v3982, %v3986
    %v3988 = vshrl.u32 %v3925, 16
    %v3990 = vor.u32 %v3988, %v3978
    %v3992 = vshll.u32 %v3927, 16
    %v3994 = vrot.slane %v3992, 1
    %v3995 = vsel %vm3931, %v3990, %v3994
    %v3996 = vshrl.u32 %v3926, 16
    %v3998 = vor.u32 %v3996, %v3986
    %v4000 = vshll.u32 %v3928, 16
    %v4002 = vrot.slane %v4000, 1
    %v4003 = vsel %vm3931, %v3998, %v4002
    %v4004 = vshrl.u32 %v3927, 16
    %v4006 = vor.u32 %v4004, %v3994
    %v4008 = vshll.u32 %v3929, 16
    %v4010 = vrot.slane %v4008, 1
    %v4011 = vsel %vm3931, %v4006, %v4010
    %v4012 = vshrl.u32 %v3928, 16
    %v4014 = vor.u32 %v4012, %v4002
    %v4016 = vshll.u32 %v3930, 16
    %v4018 = vrot.slane %v4016, 1
    %v4019 = vsel %vm3931, %v4014, %v4018
    %v4062 = vunpack.c.l.b16 %v3854
    %v4063 = vunpack.c.l.b16 %v3855
    %v4064 = vunpack.c.l.b16 %v3856
    %v4065 = vunpack.c.l.b16 %v3857
    %v4066 = vunpack.c.l.b16 %v3858
    %v4067 = vunpack.c.l.b16 %v3859
    %v4068 = vunpack.c.l.b16 %v3860
    %v4069 = vunpack.c.l.b16 %v3861
    %v4070 = vunpack.c.l.b16 %v3862
    %v4071 = vunpack.c.l.b16 %v3863
    %v4072 = vunpack.c.l.b16 %v3864
    %v4073 = vunpack.c.l.b16 %v3865
    %v4074 = vunpack.c.l.b16 %v3866
    %v4075 = vunpack.c.l.b16 %v3867
    %v4076 = vunpack.c.l.b16 %v3868
    %v4077 = vunpack.c.l.b16 %v3869
    %v4078 = vunpack.c.l.b16 %v3870
    %v4079 = vunpack.c.l.b16 %v3871
    %v4080 = vunpack.c.l.b16 %v3872
    %v4081 = vunpack.c.l.b16 %v3873
    %v4082 = vunpack.c.l.b16 %v3874
    %v4083 = vunpack.c.l.b16 %v3875
    %v4084 = vunpack.c.l.b16 %v3876
    %v4085 = vunpack.c.l.b16 %v3877
    %v4086 = vunpack.c.l.b16 %v3878
    %v4087 = vunpack.c.l.b16 %v3879
    %v4088 = vunpack.c.l.b16 %v3880
    %v4089 = vunpack.c.l.b16 %v3881
    %v4090 = vunpack.c.l.b16 %v3882
    %v4091 = vunpack.c.l.b16 %v3883
    %v4092 = vunpack.c.l.b16 %v3884
    %v4093 = vunpack.c.l.b16 %v3885
    %v4094 = vpack.c.b16 %v4063, %v4062
    %v4095 = vpack.c.b16 %v4065, %v4064
    %v4096 = vpack.c.b16 %v4067, %v4066
    %v4097 = vpack.c.b16 %v4069, %v4068
    %v4098 = vpack.c.b16 %v4071, %v4070
    %v4099 = vpack.c.b16 %v4073, %v4072
    %v4100 = vpack.c.b16 %v4075, %v4074
    %v4101 = vpack.c.b16 %v4077, %v4076
    %v4102 = vpack.c.b16 %v4079, %v4078
    %v4103 = vpack.c.b16 %v4081, %v4080
    %v4104 = vpack.c.b16 %v4083, %v4082
    %v4105 = vpack.c.b16 %v4085, %v4084
    %v4106 = vpack.c.b16 %v4087, %v4086
    %v4107 = vpack.c.b16 %v4089, %v4088
    %v4108 = vpack.c.b16 %v4091, %v4090
    %v4109 = vpack.c.b16 %v4093, %v4092
    %4126 = vmatprep.subr.bf16.mxu0 0
    %4127 = vmatpush1.bf16.msra.mxu0 %v4094
    %4128 = vmatprep.subr.bf16.mxu0 0
    %4129 = vmatpush1.bf16.msra.mxu0 %v4095
    %4130 = vmatprep.subr.bf16.mxu0 0
    %4131 = vmatpush1.bf16.msra.mxu0 %v4096
    %4132 = vmatprep.subr.bf16.mxu0 0
    %4133 = vmatpush1.bf16.msra.mxu0 %v4097
    %4134 = vmatprep.subr.bf16.mxu0 0
    %4135 = vmatpush1.bf16.msra.mxu0 %v4098
    %4136 = vmatprep.subr.bf16.mxu0 0
    %4137 = vmatpush1.bf16.msra.mxu0 %v4099
    %4138 = vmatprep.subr.bf16.mxu0 0
    %4139 = vmatpush1.bf16.msra.mxu0 %v4100
    %4140 = vmatprep.subr.bf16.mxu0 0
    %4141 = vmatpush1.bf16.msra.mxu0 %v4101
    %4142 = vmatprep.subr.bf16.mxu0 0
    %4143 = vmatpush1.bf16.msra.mxu0 %v4102
    %4144 = vmatprep.subr.bf16.mxu0 0
    %4145 = vmatpush1.bf16.msra.mxu0 %v4103
    %4146 = vmatprep.subr.bf16.mxu0 0
    %4147 = vmatpush1.bf16.msra.mxu0 %v4104
    %4148 = vmatprep.subr.bf16.mxu0 0
    %4149 = vmatpush1.bf16.msra.mxu0 %v4105
    %4150 = vmatprep.subr.bf16.mxu0 0
    %4151 = vmatpush1.bf16.msra.mxu0 %v4106
    %4152 = vmatprep.subr.bf16.mxu0 0
    %4153 = vmatpush1.bf16.msra.mxu0 %v4107
    %4154 = vmatprep.subr.bf16.mxu0 0
    %4155 = vmatpush1.bf16.msra.mxu0 %v4108
    %4156 = vmatprep.subr.bf16.mxu0 0
    %4157 = vmatpush1.bf16.msra.mxu0 %v4109
    %4158 = vmatprep.mubr.bf16.mxu0 %v3955
    %4159 = vmatmul.mubr.bf16.gmra.mrb[0].mxu0 %v3943
    %v4160 = vpop.f32.mrb[0].mxu0
    %v4161 = vadd.f32 0.0, %v4160
    %v4162 = vpop.f32.mrb[0].mxu0
    %v4163 = vpop.f32.mrb[0].mxu0
    %v4164 = vadd.f32 0.0, %v4163
    %v4165 = vpop.f32.mrb[0].mxu0
    %4166 = vmatprep.mubr.bf16.mxu0 %v3971
    %4167 = vmatmul.mubr.bf16.gmra.mrb[0].mxu0 %v3963
    %v4168 = vpop.f32.mrb[0].mxu0
    %v4169 = vadd.f32 0.0, %v4168
    %v4170 = vpop.f32.mrb[0].mxu0
    %v4171 = vpop.f32.mrb[0].mxu0
    %v4172 = vadd.f32 0.0, %v4171
    %v4173 = vpop.f32.mrb[0].mxu0
    %4174 = vmatprep.mubr.bf16.mxu0 %v3987
    %4175 = vmatmul.mubr.bf16.gmra.mrb[0].mxu0 %v3979
    %v4176 = vpop.f32.mrb[0].mxu0
    %v4177 = vadd.f32 0.0, %v4176
    %v4178 = vpop.f32.mrb[0].mxu0
    %v4179 = vpop.f32.mrb[0].mxu0
    %v4180 = vadd.f32 0.0, %v4179
    %v4181 = vpop.f32.mrb[0].mxu0
    %4182 = vmatprep.mubr.bf16.mxu0 %v4003
    %4183 = vmatmul.mubr.bf16.gmra.mrb[0].mxu0 %v3995
    %v4184 = vpop.f32.mrb[0].mxu0
    %v4185 = vadd.f32 0.0, %v4184
    %v4186 = vpop.f32.mrb[0].mxu0
    %v4187 = vpop.f32.mrb[0].mxu0
    %v4188 = vadd.f32 0.0, %v4187
    %v4189 = vpop.f32.mrb[0].mxu0
    %4190 = vmatprep.mubr.bf16.mxu0 %v4019
    %4191 = vmatmul.mubr.bf16.gmra.mrb[0].mxu0 %v4011
    %v4192 = vpop.f32.mrb[0].mxu0
    %v4193 = vadd.f32 0.0, %v4192
    %v4194 = vpop.f32.mrb[0].mxu0
    %v4195 = vpop.f32.mrb[0].mxu0
    %v4196 = vadd.f32 0.0, %v4195
    %v4197 = vpop.f32.mrb[0].mxu0
    %4198 = vdwg.mxu0
    %v4209 = vunpack.c.l.b16 %v3800
    %v4210 = vunpack.c.h.b16 %v3800
    %v4211 = vunpack.c.l.b16 %v3801
    %v4212 = vunpack.c.h.b16 %v3801
    %v4213 = vunpack.c.l.b16 %v3802
    %v4214 = vunpack.c.h.b16 %v3802
    %v4215 = vunpack.c.l.b16 %v3803
    %v4216 = vunpack.c.h.b16 %v3803
    %v4217 = vunpack.c.l.b16 %v3804
    %v4218 = vunpack.c.h.b16 %v3804
    %v4219 = vunpack.c.l.b16 %v3805
    %v4220 = vunpack.c.h.b16 %v3805
    %v4221 = vunpack.c.l.b16 %v3806
    %v4222 = vunpack.c.h.b16 %v3806
    %v4223 = vunpack.c.l.b16 %v3807
    %v4224 = vunpack.c.h.b16 %v3807
    %v4225 = vunpack.c.l.b16 %v3808
    %v4226 = vunpack.c.h.b16 %v3808
    %v4227 = vunpack.c.l.b16 %v3809
    %v4228 = vunpack.c.h.b16 %v3809
    %v4229 = vpack.c.b16 %v4211, %v4209
    %v4230 = vpack.c.b16 %v4212, %v4210
    %v4231 = vpack.c.b16 %v4215, %v4213
    %v4232 = vpack.c.b16 %v4216, %v4214
    %v4233 = vpack.c.b16 %v4219, %v4217
    %v4234 = vpack.c.b16 %v4220, %v4218
    %v4235 = vpack.c.b16 %v4223, %v4221
    %v4236 = vpack.c.b16 %v4224, %v4222
    %v4237 = vpack.c.b16 %v4227, %v4225
    %v4238 = vpack.c.b16 %v4228, %v4226
    %v4281 = vunpack.c.l.b16 %v3810
    %v4282 = vunpack.c.l.b16 %v3811
    %v4283 = vunpack.c.l.b16 %v3812
    %v4284 = vunpack.c.l.b16 %v3813
    %v4285 = vunpack.c.l.b16 %v3814
    %v4286 = vunpack.c.l.b16 %v3815
    %v4287 = vunpack.c.l.b16 %v3816
    %v4288 = vunpack.c.l.b16 %v3817
    %v4289 = vunpack.c.l.b16 %v3818
    %v4290 = vunpack.c.l.b16 %v3819
    %v4291 = vunpack.c.l.b16 %v3820
    %v4292 = vunpack.c.l.b16 %v3821
    %v4293 = vunpack.c.l.b16 %v3822
    %v4294 = vunpack.c.l.b16 %v3823
    %v4295 = vunpack.c.l.b16 %v3824
    %v4296 = vunpack.c.l.b16 %v3825
    %v4297 = vunpack.c.l.b16 %v3826
    %v4298 = vunpack.c.l.b16 %v3827
    %v4299 = vunpack.c.l.b16 %v3828
    %v4300 = vunpack.c.l.b16 %v3829
    %v4301 = vunpack.c.l.b16 %v3830
    %v4302 = vunpack.c.l.b16 %v3831
    %v4303 = vunpack.c.l.b16 %v3832
    %v4304 = vunpack.c.l.b16 %v3833
    %v4305 = vunpack.c.l.b16 %v3834
    %v4306 = vunpack.c.l.b16 %v3835
    %v4307 = vunpack.c.l.b16 %v3836
    %v4308 = vunpack.c.l.b16 %v3837
    %v4309 = vunpack.c.l.b16 %v3838
    %v4310 = vunpack.c.l.b16 %v3839
    %v4311 = vunpack.c.l.b16 %v3840
    %v4312 = vunpack.c.l.b16 %v3841
    %v4313 = vpack.c.b16 %v4282, %v4281
    %v4314 = vpack.c.b16 %v4284, %v4283
    %v4315 = vpack.c.b16 %v4286, %v4285
    %v4316 = vpack.c.b16 %v4288, %v4287
    %v4317 = vpack.c.b16 %v4290, %v4289
    %v4318 = vpack.c.b16 %v4292, %v4291
    %v4319 = vpack.c.b16 %v4294, %v4293
    %v4320 = vpack.c.b16 %v4296, %v4295
    %v4321 = vpack.c.b16 %v4298, %v4297
    %v4322 = vpack.c.b16 %v4300, %v4299
    %v4323 = vpack.c.b16 %v4302, %v4301
    %v4324 = vpack.c.b16 %v4304, %v4303
    %v4325 = vpack.c.b16 %v4306, %v4305
    %v4326 = vpack.c.b16 %v4308, %v4307
    %v4327 = vpack.c.b16 %v4310, %v4309
    %v4328 = vpack.c.b16 %v4312, %v4311
    %4345 = vmatprep.subr.bf16.mxu0 0
    %4346 = vmatpush1.bf16.msra.mxu0 %v4313
    %4347 = vmatprep.subr.bf16.mxu0 0
    %4348 = vmatpush1.bf16.msra.mxu0 %v4314
    %4349 = vmatprep.subr.bf16.mxu0 0
    %4350 = vmatpush1.bf16.msra.mxu0 %v4315
    %4351 = vmatprep.subr.bf16.mxu0 0
    %4352 = vmatpush1.bf16.msra.mxu0 %v4316
    %4353 = vmatprep.subr.bf16.mxu0 0
    %4354 = vmatpush1.bf16.msra.mxu0 %v4317
    %4355 = vmatprep.subr.bf16.mxu0 0
    %4356 = vmatpush1.bf16.msra.mxu0 %v4318
    %4357 = vmatprep.subr.bf16.mxu0 0
    %4358 = vmatpush1.bf16.msra.mxu0 %v4319
    %4359 = vmatprep.subr.bf16.mxu0 0
    %4360 = vmatpush1.bf16.msra.mxu0 %v4320
    %4361 = vmatprep.subr.bf16.mxu0 0
    %4362 = vmatpush1.bf16.msra.mxu0 %v4321
    %4363 = vmatprep.subr.bf16.mxu0 0
    %4364 = vmatpush1.bf16.msra.mxu0 %v4322
    %4365 = vmatprep.subr.bf16.mxu0 0
    %4366 = vmatpush1.bf16.msra.mxu0 %v4323
    %4367 = vmatprep.subr.bf16.mxu0 0
    %4368 = vmatpush1.bf16.msra.mxu0 %v4324
    %4369 = vmatprep.subr.bf16.mxu0 0
    %4370 = vmatpush1.bf16.msra.mxu0 %v4325
    %4371 = vmatprep.subr.bf16.mxu0 0
    %4372 = vmatpush1.bf16.msra.mxu0 %v4326
    %4373 = vmatprep.subr.bf16.mxu0 0
    %4374 = vmatpush1.bf16.msra.mxu0 %v4327
    %4375 = vmatprep.subr.bf16.mxu0 0
    %4376 = vmatpush1.bf16.msra.mxu0 %v4328
    %4377 = vmatprep.mubr.bf16.mxu0 %v4230
    %4378 = vmatmul.mubr.bf16.gmra.mrb[0].mxu0 %v4229
    %v4379 = vpop.f32.mrb[0].mxu0
    %v4380 = vadd.f32 %v4161, %v4379
    %v4381 = vpop.f32.mrb[0].mxu0
    %v4382 = vpop.f32.mrb[0].mxu0
    %v4383 = vadd.f32 %v4164, %v4382
    %v4384 = vpop.f32.mrb[0].mxu0
    %4385 = vmatprep.mubr.bf16.mxu0 %v4232
    %4386 = vmatmul.mubr.bf16.gmra.mrb[0].mxu0 %v4231
    %v4387 = vpop.f32.mrb[0].mxu0
    %v4388 = vadd.f32 %v4169, %v4387
    %v4389 = vpop.f32.mrb[0].mxu0
    %v4390 = vpop.f32.mrb[0].mxu0
    %v4391 = vadd.f32 %v4172, %v4390
    %v4392 = vpop.f32.mrb[0].mxu0
    %4393 = vmatprep.mubr.bf16.mxu0 %v4234
    %4394 = vmatmul.mubr.bf16.gmra.mrb[0].mxu0 %v4233
    %v4395 = vpop.f32.mrb[0].mxu0
    %v4396 = vadd.f32 %v4177, %v4395
    %v4397 = vpop.f32.mrb[0].mxu0
    %v4398 = vpop.f32.mrb[0].mxu0
    %v4399 = vadd.f32 %v4180, %v4398
    %v4400 = vpop.f32.mrb[0].mxu0
    %4401 = vmatprep.mubr.bf16.mxu0 %v4236
    %4402 = vmatmul.mubr.bf16.gmra.mrb[0].mxu0 %v4235
    %v4403 = vpop.f32.mrb[0].mxu0
    %v4404 = vadd.f32 %v4185, %v4403
    %v4405 = vpop.f32.mrb[0].mxu0
    %v4406 = vpop.f32.mrb[0].mxu0
    %v4407 = vadd.f32 %v4188, %v4406
    %v4408 = vpop.f32.mrb[0].mxu0
    %4409 = vmatprep.mubr.bf16.mxu0 %v4238
    %4410 = vmatmul.mubr.bf16.gmra.mrb[0].mxu0 %v4237
    %v4411 = vpop.f32.mrb[0].mxu0
    %v4412 = vadd.f32 %v4193, %v4411
    %v4413 = vpop.f32.mrb[0].mxu0
    %v4414 = vpop.f32.mrb[0].mxu0
    %v4415 = vadd.f32 %v4196, %v4414
    %v4416 = vpop.f32.mrb[0].mxu0
    %4417 = vdwg.mxu0
    %v4418 = vld [vmem:[#allocation2] sm:$0xee]
    %s4419 = scalar_lea.vmem [#allocation9], 256
    %v4420 = vld [vmem:[%s4419] sm:$0xf]
    %v4421 = vld [vmem:[%s4419 + $0x4] sm:$0xf]
    %v4422 = vld [vmem:[%s4419 + $0x8] sm:$0xf]
    %v4423 = vld [vmem:[%s4419 + $0xc] sm:$0xf]
    %v4424 = vld [vmem:[%s4419 + $0x10] sm:$0xf]
    %v4425 = vld [vmem:[%s4419 + $0x14] sm:$0xf]
    %v4426 = vld [vmem:[%s4419 + $0x18] sm:$0xf]
    %v4427 = vld [vmem:[%s4419 + $0x1c] sm:$0xf]
    %v4428 = vld [vmem:[%s4419 + $0x20] sm:$0xf]
    %v4429 = vld [vmem:[%s4419 + $0x24] sm:$0xf]
    %v4430 = vld [vmem:[%s4419 + $0x28] sm:$0xf]
    %v4431 = vld [vmem:[%s4419 + $0x2c] sm:$0xf]
    %v4432 = vld [vmem:[%s4419 + $0x30] sm:$0xf]
    %v4433 = vld [vmem:[%s4419 + $0x34] sm:$0xf]
    %v4434 = vld [vmem:[%s4419 + $0x38] sm:$0xf]
    %v4435 = vld [vmem:[%s4419 + $0x3c] sm:$0xf]
    %v4436 = vld [vmem:[%s4419 + $0x40] sm:$0xf]
    %v4437 = vld [vmem:[%s4419 + $0x44] sm:$0xf]
    %v4438 = vld [vmem:[%s4419 + $0x48] sm:$0xf]
    %v4439 = vld [vmem:[%s4419 + $0x4c] sm:$0xf]
    %v4440 = vld [vmem:[%s4419 + $0x50] sm:$0xf]
    %v4441 = vld [vmem:[%s4419 + $0x54] sm:$0xf]
    %v4442 = vld [vmem:[%s4419 + $0x58] sm:$0xf]
    %v4443 = vld [vmem:[%s4419 + $0x5c] sm:$0xf]
    %v4444 = vld [vmem:[%s4419 + $0x60] sm:$0xf]
    %v4445 = vld [vmem:[%s4419 + $0x64] sm:$0xf]
    %v4446 = vld [vmem:[%s4419 + $0x68] sm:$0xf]
    %v4447 = vld [vmem:[%s4419 + $0x6c] sm:$0xf]
    %v4448 = vld [vmem:[%s4419 + $0x70] sm:$0xf]
    %v4449 = vld [vmem:[%s4419 + $0x74] sm:$0xf]
    %v4450 = vld [vmem:[%s4419 + $0x78] sm:$0xf]
    %v4451 = vld [vmem:[%s4419 + $0x7c] sm:$0xf]
    %v4453 = vunpack.c.l.b16 %v4418
    %v4454 = vunpack.c.h.b16 %v4418
    %v4455 = vpack.c.b16 %v3899, %v4453
    %v4456 = vpack.c.b16 %v3900, %v4454
    %vm4457 = vcmask 1046528
    %v4458 = vrot.slane %v4455, 1
    %v4459 = vrot.slane %v3921, 1
    %v4460 = vsel %vm4457, %v4458, %v4459
    %v4461 = vrot.slane %v4456, 1
    %v4462 = vrot.slane %v3922, 1
    %v4463 = vsel %vm4457, %v4461, %v4462
    %v4464 = vrot.slane %v3923, 1
    %v4465 = vsel %vm4457, %v4459, %v4464
    %v4466 = vrot.slane %v3924, 1
    %v4467 = vsel %vm4457, %v4462, %v4466
    %v4468 = vrot.slane %v3925, 1
    %v4469 = vsel %vm4457, %v4464, %v4468
    %v4470 = vrot.slane %v3926, 1
    %v4471 = vsel %vm4457, %v4466, %v4470
    %v4472 = vrot.slane %v3927, 1
    %v4473 = vsel %vm4457, %v4468, %v4472
    %v4474 = vrot.slane %v3928, 1
    %v4475 = vsel %vm4457, %v4470, %v4474
    %v4476 = vrot.slane %v3929, 1
    %v4477 = vsel %vm4457, %v4472, %v4476
    %v4478 = vrot.slane %v3930, 1
    %v4479 = vsel %vm4457, %v4474, %v4478
    %v4522 = vunpack.c.l.b16 %v4420
    %v4523 = vunpack.c.l.b16 %v4421
    %v4524 = vunpack.c.l.b16 %v4422
    %v4525 = vunpack.c.l.b16 %v4423
    %v4526 = vunpack.c.l.b16 %v4424
    %v4527 = vunpack.c.l.b16 %v4425
    %v4528 = vunpack.c.l.b16 %v4426
    %v4529 = vunpack.c.l.b16 %v4427
    %v4530 = vunpack.c.l.b16 %v4428
    %v4531 = vunpack.c.l.b16 %v4429
    %v4532 = vunpack.c.l.b16 %v4430
    %v4533 = vunpack.c.l.b16 %v4431
    %v4534 = vunpack.c.l.b16 %v4432
    %v4535 = vunpack.c.l.b16 %v4433
    %v4536 = vunpack.c.l.b16 %v4434
    %v4537 = vunpack.c.l.b16 %v4435
    %v4538 = vunpack.c.l.b16 %v4436
    %v4539 = vunpack.c.l.b16 %v4437
    %v4540 = vunpack.c.l.b16 %v4438
    %v4541 = vunpack.c.l.b16 %v4439
    %v4542 = vunpack.c.l.b16 %v4440
    %v4543 = vunpack.c.l.b16 %v4441
    %v4544 = vunpack.c.l.b16 %v4442
    %v4545 = vunpack.c.l.b16 %v4443
    %v4546 = vunpack.c.l.b16 %v4444
    %v4547 = vunpack.c.l.b16 %v4445
    %v4548 = vunpack.c.l.b16 %v4446
    %v4549 = vunpack.c.l.b16 %v4447
    %v4550 = vunpack.c.l.b16 %v4448
    %v4551 = vunpack.c.l.b16 %v4449
    %v4552 = vunpack.c.l.b16 %v4450
    %v4553 = vunpack.c.l.b16 %v4451
    %v4554 = vpack.c.b16 %v4523, %v4522
    %v4555 = vpack.c.b16 %v4525, %v4524
    %v4556 = vpack.c.b16 %v4527, %v4526
    %v4557 = vpack.c.b16 %v4529, %v4528
    %v4558 = vpack.c.b16 %v4531, %v4530
    %v4559 = vpack.c.b16 %v4533, %v4532
    %v4560 = vpack.c.b16 %v4535, %v4534
    %v4561 = vpack.c.b16 %v4537, %v4536
    %v4562 = vpack.c.b16 %v4539, %v4538
    %v4563 = vpack.c.b16 %v4541, %v4540
    %v4564 = vpack.c.b16 %v4543, %v4542
    %v4565 = vpack.c.b16 %v4545, %v4544
    %v4566 = vpack.c.b16 %v4547, %v4546
    %v4567 = vpack.c.b16 %v4549, %v4548
    %v4568 = vpack.c.b16 %v4551, %v4550
    %v4569 = vpack.c.b16 %v4553, %v4552
    %4586 = vmatprep.subr.bf16.mxu0 0
    %4587 = vmatpush1.bf16.msra.mxu0 %v4554
    %4588 = vmatprep.subr.bf16.mxu0 0
    %4589 = vmatpush1.bf16.msra.mxu0 %v4555
    %4590 = vmatprep.subr.bf16.mxu0 0
    %4591 = vmatpush1.bf16.msra.mxu0 %v4556
    %4592 = vmatprep.subr.bf16.mxu0 0
    %4593 = vmatpush1.bf16.msra.mxu0 %v4557
    %4594 = vmatprep.subr.bf16.mxu0 0
    %4595 = vmatpush1.bf16.msra.mxu0 %v4558
    %4596 = vmatprep.subr.bf16.mxu0 0
    %4597 = vmatpush1.bf16.msra.mxu0 %v4559
    %4598 = vmatprep.subr.bf16.mxu0 0
    %4599 = vmatpush1.bf16.msra.mxu0 %v4560
    %4600 = vmatprep.subr.bf16.mxu0 0
    %4601 = vmatpush1.bf16.msra.mxu0 %v4561
    %4602 = vmatprep.subr.bf16.mxu0 0
    %4603 = vmatpush1.bf16.msra.mxu0 %v4562
    %4604 = vmatprep.subr.bf16.mxu0 0
    %4605 = vmatpush1.bf16.msra.mxu0 %v4563
    %4606 = vmatprep.subr.bf16.mxu0 0
    %4607 = vmatpush1.bf16.msra.mxu0 %v4564
    %4608 = vmatprep.subr.bf16.mxu0 0
    %4609 = vmatpush1.bf16.msra.mxu0 %v4565
    %4610 = vmatprep.subr.bf16.mxu0 0
    %4611 = vmatpush1.bf16.msra.mxu0 %v4566
    %4612 = vmatprep.subr.bf16.mxu0 0
    %4613 = vmatpush1.bf16.msra.mxu0 %v4567
    %4614 = vmatprep.subr.bf16.mxu0 0
    %4615 = vmatpush1.bf16.msra.mxu0 %v4568
    %4616 = vmatprep.subr.bf16.mxu0 0
    %4617 = vmatpush1.bf16.msra.mxu0 %v4569
    %4618 = vmatprep.mubr.bf16.mxu0 %v4463
    %4619 = vmatmul.mubr.bf16.gmra.mrb[0].mxu0 %v4460
    %v4620 = vpop.f32.mrb[0].mxu0
    %v4621 = vadd.f32 0.0, %v4620
    %v4622 = vpop.f32.mrb[0].mxu0
    %v4623 = vpop.f32.mrb[0].mxu0
    %v4624 = vadd.f32 0.0, %v4623
    %v4625 = vpop.f32.mrb[0].mxu0
    %4626 = vmatprep.mubr.bf16.mxu0 %v4467
    %4627 = vmatmul.mubr.bf16.gmra.mrb[0].mxu0 %v4465
    %v4628 = vpop.f32.mrb[0].mxu0
    %v4629 = vadd.f32 0.0, %v4628
    %v4630 = vpop.f32.mrb[0].mxu0
    %v4631 = vpop.f32.mrb[0].mxu0
    %v4632 = vadd.f32 0.0, %v4631
    %v4633 = vpop.f32.mrb[0].mxu0
    %4634 = vmatprep.mubr.bf16.mxu0 %v4471
    %4635 = vmatmul.mubr.bf16.gmra.mrb[0].mxu0 %v4469
    %v4636 = vpop.f32.mrb[0].mxu0
    %v4637 = vadd.f32 0.0, %v4636
    %v4638 = vpop.f32.mrb[0].mxu0
    %v4639 = vpop.f32.mrb[0].mxu0
    %v4640 = vadd.f32 0.0, %v4639
    %v4641 = vpop.f32.mrb[0].mxu0
    %4642 = vmatprep.mubr.bf16.mxu0 %v4475
    %4643 = vmatmul.mubr.bf16.gmra.mrb[0].mxu0 %v4473
    %v4644 = vpop.f32.mrb[0].mxu0
    %v4645 = vadd.f32 0.0, %v4644
    %v4646 = vpop.f32.mrb[0].mxu0
    %v4647 = vpop.f32.mrb[0].mxu0
    %v4648 = vadd.f32 0.0, %v4647
    %v4649 = vpop.f32.mrb[0].mxu0
    %4650 = vmatprep.mubr.bf16.mxu0 %v4479
    %4651 = vmatmul.mubr.bf16.gmra.mrb[0].mxu0 %v4477
    %v4652 = vpop.f32.mrb[0].mxu0
    %v4653 = vadd.f32 0.0, %v4652
    %v4654 = vpop.f32.mrb[0].mxu0
    %v4655 = vpop.f32.mrb[0].mxu0
    %v4656 = vadd.f32 0.0, %v4655
    %v4657 = vpop.f32.mrb[0].mxu0
    %4658 = vdwg.mxu0
    %v4659 = vadd.f32 %v4380, %v4621
    %v4660 = vadd.f32 %v4383, %v4624
    %v4661 = vadd.f32 %v4388, %v4629
    %v4662 = vadd.f32 %v4391, %v4632
    %v4663 = vadd.f32 %v4396, %v4637
    %v4664 = vadd.f32 %v4399, %v4640
    %v4665 = vadd.f32 %v4404, %v4645
    %v4666 = vadd.f32 %v4407, %v4648
    %v4667 = vadd.f32 %v4412, %v4653
    %v4668 = vadd.f32 %v4415, %v4656
    %v4669 = vld [vmem:[#allocation2 + $0x50] sm:$0x33]
    %s4670 = scalar_lea.vmem [#allocation9], 384
    %v4671 = vld [vmem:[%s4670] sm:$0xf]
    %v4672 = vld [vmem:[%s4670 + $0x4] sm:$0xf]
    %v4673 = vld [vmem:[%s4670 + $0x8] sm:$0xf]
    %v4674 = vld [vmem:[%s4670 + $0xc] sm:$0xf]
    %v4675 = vld [vmem:[%s4670 + $0x10] sm:$0xf]
    %v4676 = vld [vmem:[%s4670 + $0x14] sm:$0xf]
    %v4677 = vld [vmem:[%s4670 + $0x18] sm:$0xf]
    %v4678 = vld [vmem:[%s4670 + $0x1c] sm:$0xf]
    %v4679 = vld [vmem:[%s4670 + $0x20] sm:$0xf]
    %v4680 = vld [vmem:[%s4670 + $0x24] sm:$0xf]
    %v4681 = vld [vmem:[%s4670 + $0x28] sm:$0xf]
    %v4682 = vld [vmem:[%s4670 + $0x2c] sm:$0xf]
    %v4683 = vld [vmem:[%s4670 + $0x30] sm:$0xf]
    %v4684 = vld [vmem:[%s4670 + $0x34] sm:$0xf]
    %v4685 = vld [vmem:[%s4670 + $0x38] sm:$0xf]
    %v4686 = vld [vmem:[%s4670 + $0x3c] sm:$0xf]
    %v4687 = vld [vmem:[%s4670 + $0x40] sm:$0xf]
    %v4688 = vld [vmem:[%s4670 + $0x44] sm:$0xf]
    %v4689 = vld [vmem:[%s4670 + $0x48] sm:$0xf]
    %v4690 = vld [vmem:[%s4670 + $0x4c] sm:$0xf]
    %v4691 = vld [vmem:[%s4670 + $0x50] sm:$0xf]
    %v4692 = vld [vmem:[%s4670 + $0x54] sm:$0xf]
    %v4693 = vld [vmem:[%s4670 + $0x58] sm:$0xf]
    %v4694 = vld [vmem:[%s4670 + $0x5c] sm:$0xf]
    %v4695 = vld [vmem:[%s4670 + $0x60] sm:$0xf]
    %v4696 = vld [vmem:[%s4670 + $0x64] sm:$0xf]
    %v4697 = vld [vmem:[%s4670 + $0x68] sm:$0xf]
    %v4698 = vld [vmem:[%s4670 + $0x6c] sm:$0xf]
    %v4699 = vld [vmem:[%s4670 + $0x70] sm:$0xf]
    %v4700 = vld [vmem:[%s4670 + $0x74] sm:$0xf]
    %v4701 = vld [vmem:[%s4670 + $0x78] sm:$0xf]
    %v4702 = vld [vmem:[%s4670 + $0x7c] sm:$0xf]
    %v4704 = vunpack.c.l.b16 %v4669
    %v4705 = vunpack.c.h.b16 %v4669
    %v4706 = vpack.c.b16 %v4704, %v4704
    %v4707 = vpack.c.b16 %v4705, %v4705
    %vm4708 = vsmask.f32 6400
    %v4710 = vshrl.u32 %v4455, 16
    %v4712 = vrot.slane %v4710, 1
    %v4713 = vshll.u32 %v4455, 16
    %v4715 = vrot.slane %v4713, 2
    %v4716 = vor.u32 %v4712, %v4715
    %v4717 = vrot.slane %v3956, 1
    %v4718 = vrot.slane %v3940, 2
    %v4719 = vor.u32 %v4717, %v4718
    %v4720 = vsel %vm4708, %v4716, %v4719
    %v4722 = vshrl.u32 %v4456, 16
    %v4724 = vrot.slane %v4722, 1
    %v4725 = vshll.u32 %v4456, 16
    %v4727 = vrot.slane %v4725, 2
    %v4728 = vor.u32 %v4724, %v4727
    %v4729 = vrot.slane %v3964, 1
    %v4730 = vrot.slane %v3952, 2
    %v4731 = vor.u32 %v4729, %v4730
    %v4732 = vsel %vm4708, %v4728, %v4731
    %v4733 = vrot.slane %v3972, 1
    %v4734 = vrot.slane %v3960, 2
    %v4735 = vor.u32 %v4733, %v4734
    %v4736 = vsel %vm4708, %v4719, %v4735
    %v4737 = vrot.slane %v3980, 1
    %v4738 = vrot.slane %v3968, 2
    %v4739 = vor.u32 %v4737, %v4738
    %v4740 = vsel %vm4708, %v4731, %v4739
    %v4741 = vrot.slane %v3988, 1
    %v4742 = vrot.slane %v3976, 2
    %v4743 = vor.u32 %v4741, %v4742
    %v4744 = vsel %vm4708, %v4735, %v4743
    %v4745 = vrot.slane %v3996, 1
    %v4746 = vrot.slane %v3984, 2
    %v4747 = vor.u32 %v4745, %v4746
    %v4748 = vsel %vm4708, %v4739, %v4747
    %v4749 = vrot.slane %v4004, 1
    %v4750 = vrot.slane %v3992, 2
    %v4751 = vor.u32 %v4749, %v4750
    %v4752 = vsel %vm4708, %v4743, %v4751
    %v4753 = vrot.slane %v4012, 1
    %v4754 = vrot.slane %v4000, 2
    %v4755 = vor.u32 %v4753, %v4754
    %v4756 = vsel %vm4708, %v4747, %v4755
    %v4758 = vshrl.u32 %v4706, 16
    %v4760 = vrot.slane %v4758, 1
    %v4761 = vshll.u32 %v4706, 16
    %v4763 = vrot.slane %v4761, 2
    %v4764 = vor.u32 %v4760, %v4763
    %v4765 = vsel %vm4708, %v4751, %v4764
    %v4767 = vshrl.u32 %v4707, 16
    %v4769 = vrot.slane %v4767, 1
    %v4770 = vshll.u32 %v4707, 16
    %v4772 = vrot.slane %v4770, 2
    %v4773 = vor.u32 %v4769, %v4772
    %v4774 = vsel %vm4708, %v4755, %v4773
    %v4817 = vunpack.c.l.b16 %v4671
    %v4818 = vunpack.c.l.b16 %v4672
    %v4819 = vunpack.c.l.b16 %v4673
    %v4820 = vunpack.c.l.b16 %v4674
    %v4821 = vunpack.c.l.b16 %v4675
    %v4822 = vunpack.c.l.b16 %v4676
    %v4823 = vunpack.c.l.b16 %v4677
    %v4824 = vunpack.c.l.b16 %v4678
    %v4825 = vunpack.c.l.b16 %v4679
    %v4826 = vunpack.c.l.b16 %v4680
    %v4827 = vunpack.c.l.b16 %v4681
    %v4828 = vunpack.c.l.b16 %v4682
    %v4829 = vunpack.c.l.b16 %v4683
    %v4830 = vunpack.c.l.b16 %v4684
    %v4831 = vunpack.c.l.b16 %v4685
    %v4832 = vunpack.c.l.b16 %v4686
    %v4833 = vunpack.c.l.b16 %v4687
    %v4834 = vunpack.c.l.b16 %v4688
    %v4835 = vunpack.c.l.b16 %v4689
    %v4836 = vunpack.c.l.b16 %v4690
    %v4837 = vunpack.c.l.b16 %v4691
    %v4838 = vunpack.c.l.b16 %v4692
    %v4839 = vunpack.c.l.b16 %v4693
    %v4840 = vunpack.c.l.b16 %v4694
    %v4841 = vunpack.c.l.b16 %v4695
    %v4842 = vunpack.c.l.b16 %v4696
    %v4843 = vunpack.c.l.b16 %v4697
    %v4844 = vunpack.c.l.b16 %v4698
    %v4845 = vunpack.c.l.b16 %v4699
    %v4846 = vunpack.c.l.b16 %v4700
    %v4847 = vunpack.c.l.b16 %v4701
    %v4848 = vunpack.c.l.b16 %v4702
    %v4849 = vpack.c.b16 %v4818, %v4817
    %v4850 = vpack.c.b16 %v4820, %v4819
    %v4851 = vpack.c.b16 %v4822, %v4821
    %v4852 = vpack.c.b16 %v4824, %v4823
    %v4853 = vpack.c.b16 %v4826, %v4825
    %v4854 = vpack.c.b16 %v4828, %v4827
    %v4855 = vpack.c.b16 %v4830, %v4829
    %v4856 = vpack.c.b16 %v4832, %v4831
    %v4857 = vpack.c.b16 %v4834, %v4833
    %v4858 = vpack.c.b16 %v4836, %v4835
    %v4859 = vpack.c.b16 %v4838, %v4837
    %v4860 = vpack.c.b16 %v4840, %v4839
    %v4861 = vpack.c.b16 %v4842, %v4841
    %v4862 = vpack.c.b16 %v4844, %v4843
    %v4863 = vpack.c.b16 %v4846, %v4845
    %v4864 = vpack.c.b16 %v4848, %v4847
    %4881 = vmatprep.subr.bf16.mxu0 0
    %4882 = vmatpush1.bf16.msra.mxu0 %v4849
    %4883 = vmatprep.subr.bf16.mxu0 0
    %4884 = vmatpush1.bf16.msra.mxu0 %v4850
    %4885 = vmatprep.subr.bf16.mxu0 0
    %4886 = vmatpush1.bf16.msra.mxu0 %v4851
    %4887 = vmatprep.subr.bf16.mxu0 0
    %4888 = vmatpush1.bf16.msra.mxu0 %v4852
    %4889 = vmatprep.subr.bf16.mxu0 0
    %4890 = vmatpush1.bf16.msra.mxu0 %v4853
    %4891 = vmatprep.subr.bf16.mxu0 0
    %4892 = vmatpush1.bf16.msra.mxu0 %v4854
    %4893 = vmatprep.subr.bf16.mxu0 0
    %4894 = vmatpush1.bf16.msra.mxu0 %v4855
    %4895 = vmatprep.subr.bf16.mxu0 0
    %4896 = vmatpush1.bf16.msra.mxu0 %v4856
    %4897 = vmatprep.subr.bf16.mxu0 0
    %4898 = vmatpush1.bf16.msra.mxu0 %v4857
    %4899 = vmatprep.subr.bf16.mxu0 0
    %4900 = vmatpush1.bf16.msra.mxu0 %v4858
    %4901 = vmatprep.subr.bf16.mxu0 0
    %4902 = vmatpush1.bf16.msra.mxu0 %v4859
    %4903 = vmatprep.subr.bf16.mxu0 0
    %4904 = vmatpush1.bf16.msra.mxu0 %v4860
    %4905 = vmatprep.subr.bf16.mxu0 0
    %4906 = vmatpush1.bf16.msra.mxu0 %v4861
    %4907 = vmatprep.subr.bf16.mxu0 0
    %4908 = vmatpush1.bf16.msra.mxu0 %v4862
    %4909 = vmatprep.subr.bf16.mxu0 0
    %4910 = vmatpush1.bf16.msra.mxu0 %v4863
    %4911 = vmatprep.subr.bf16.mxu0 0
    %4912 = vmatpush1.bf16.msra.mxu0 %v4864
    %4913 = vmatprep.mubr.bf16.mxu0 %v4732
    %4914 = vmatmul.mubr.bf16.gmra.mrb[0].mxu0 %v4720
    %v4915 = vpop.f32.mrb[0].mxu0
    %v4916 = vadd.f32 0.0, %v4915
    %v4917 = vpop.f32.mrb[0].mxu0
    %v4918 = vpop.f32.mrb[0].mxu0
    %v4919 = vadd.f32 0.0, %v4918
    %v4920 = vpop.f32.mrb[0].mxu0
    %4921 = vmatprep.mubr.bf16.mxu0 %v4740
    %4922 = vmatmul.mubr.bf16.gmra.mrb[0].mxu0 %v4736
    %v4923 = vpop.f32.mrb[0].mxu0
    %v4924 = vadd.f32 0.0, %v4923
    %v4925 = vpop.f32.mrb[0].mxu0
    %v4926 = vpop.f32.mrb[0].mxu0
    %v4927 = vadd.f32 0.0, %v4926
    %v4928 = vpop.f32.mrb[0].mxu0
    %4929 = vmatprep.mubr.bf16.mxu0 %v4748
    %4930 = vmatmul.mubr.bf16.gmra.mrb[0].mxu0 %v4744
    %v4931 = vpop.f32.mrb[0].mxu0
    %v4932 = vadd.f32 0.0, %v4931
    %v4933 = vpop.f32.mrb[0].mxu0
    %v4934 = vpop.f32.mrb[0].mxu0
    %v4935 = vadd.f32 0.0, %v4934
    %v4936 = vpop.f32.mrb[0].mxu0
    %4937 = vmatprep.mubr.bf16.mxu0 %v4756
    %4938 = vmatmul.mubr.bf16.gmra.mrb[0].mxu0 %v4752
    %v4939 = vpop.f32.mrb[0].mxu0
    %v4940 = vadd.f32 0.0, %v4939
    %v4941 = vpop.f32.mrb[0].mxu0
    %v4942 = vpop.f32.mrb[0].mxu0
    %v4943 = vadd.f32 0.0, %v4942
    %v4944 = vpop.f32.mrb[0].mxu0
    %4945 = vmatprep.mubr.bf16.mxu0 %v4774
    %4946 = vmatmul.mubr.bf16.gmra.mrb[0].mxu0 %v4765
    %v4947 = vpop.f32.mrb[0].mxu0
    %v4948 = vadd.f32 0.0, %v4947
    %v4949 = vpop.f32.mrb[0].mxu0
    %v4950 = vpop.f32.mrb[0].mxu0
    %v4951 = vadd.f32 0.0, %v4950
    %v4952 = vpop.f32.mrb[0].mxu0
    %4953 = vdwg.mxu0
    %v4954 = vadd.f32 %v4659, %v4916
    %v4955 = vadd.f32 %v4660, %v4919
    %v4956 = vadd.f32 %v4661, %v4924
    %v4957 = vadd.f32 %v4662, %v4927
    %v4958 = vadd.f32 %v4663, %v4932
    %v4959 = vadd.f32 %v4664, %v4935
    %v4960 = vadd.f32 %v4665, %v4940
    %v4961 = vadd.f32 %v4666, %v4943
    %v4962 = vadd.f32 %v4667, %v4948
    %v4963 = vadd.f32 %v4668, %v4951
    %v4964 = vld [vmem:[#allocation2] sm:$0xcc]
    %s4965 = scalar_lea.vmem [#allocation9], 512
    %v4966 = vld [vmem:[%s4965] sm:$0xf]
    %v4967 = vld [vmem:[%s4965 + $0x4] sm:$0xf]
    %v4968 = vld [vmem:[%s4965 + $0x8] sm:$0xf]
    %v4969 = vld [vmem:[%s4965 + $0xc] sm:$0xf]
    %v4970 = vld [vmem:[%s4965 + $0x10] sm:$0xf]
    %v4971 = vld [vmem:[%s4965 + $0x14] sm:$0xf]
    %v4972 = vld [vmem:[%s4965 + $0x18] sm:$0xf]
    %v4973 = vld [vmem:[%s4965 + $0x1c] sm:$0xf]
    %v4974 = vld [vmem:[%s4965 + $0x20] sm:$0xf]
    %v4975 = vld [vmem:[%s4965 + $0x24] sm:$0xf]
    %v4976 = vld [vmem:[%s4965 + $0x28] sm:$0xf]
    %v4977 = vld [vmem:[%s4965 + $0x2c] sm:$0xf]
    %v4978 = vld [vmem:[%s4965 + $0x30] sm:$0xf]
    %v4979 = vld [vmem:[%s4965 + $0x34] sm:$0xf]
    %v4980 = vld [vmem:[%s4965 + $0x38] sm:$0xf]
    %v4981 = vld [vmem:[%s4965 + $0x3c] sm:$0xf]
    %v4982 = vld [vmem:[%s4965 + $0x40] sm:$0xf]
    %v4983 = vld [vmem:[%s4965 + $0x44] sm:$0xf]
    %v4984 = vld [vmem:[%s4965 + $0x48] sm:$0xf]
    %v4985 = vld [vmem:[%s4965 + $0x4c] sm:$0xf]
    %v4986 = vld [vmem:[%s4965 + $0x50] sm:$0xf]
    %v4987 = vld [vmem:[%s4965 + $0x54] sm:$0xf]
    %v4988 = vld [vmem:[%s4965 + $0x58] sm:$0xf]
    %v4989 = vld [vmem:[%s4965 + $0x5c] sm:$0xf]
    %v4990 = vld [vmem:[%s4965 + $0x60] sm:$0xf]
    %v4991 = vld [vmem:[%s4965 + $0x64] sm:$0xf]
    %v4992 = vld [vmem:[%s4965 + $0x68] sm:$0xf]
    %v4993 = vld [vmem:[%s4965 + $0x6c] sm:$0xf]
    %v4994 = vld [vmem:[%s4965 + $0x70] sm:$0xf]
    %v4995 = vld [vmem:[%s4965 + $0x74] sm:$0xf]
    %v4996 = vld [vmem:[%s4965 + $0x78] sm:$0xf]
    %v4997 = vld [vmem:[%s4965 + $0x7c] sm:$0xf]
    %v4999 = vunpack.c.l.b16 %v4964
    %v5000 = vunpack.c.h.b16 %v4964
    %v5001 = vpack.c.b16 %v3899, %v4999
    %v5002 = vpack.c.b16 %v3900, %v5000
    %vm5003 = vcmask 1045504
    %v5004 = vrot.slane %v5001, 2
    %v5005 = vrot.slane %v3921, 2
    %v5006 = vsel %vm5003, %v5004, %v5005
    %v5007 = vrot.slane %v5002, 2
    %v5008 = vrot.slane %v3922, 2
    %v5009 = vsel %vm5003, %v5007, %v5008
    %v5010 = vrot.slane %v3923, 2
    %v5011 = vsel %vm5003, %v5005, %v5010
    %v5012 = vrot.slane %v3924, 2
    %v5013 = vsel %vm5003, %v5008, %v5012
    %v5014 = vrot.slane %v3925, 2
    %v5015 = vsel %vm5003, %v5010, %v5014
    %v5016 = vrot.slane %v3926, 2
    %v5017 = vsel %vm5003, %v5012, %v5016
    %v5018 = vrot.slane %v3927, 2
    %v5019 = vsel %vm5003, %v5014, %v5018
    %v5020 = vrot.slane %v3928, 2
    %v5021 = vsel %vm5003, %v5016, %v5020
    %v5022 = vrot.slane %v4706, 2
    %v5023 = vsel %vm5003, %v5018, %v5022
    %v5024 = vrot.slane %v4707, 2
    %v5025 = vsel %vm5003, %v5020, %v5024
    %v5068 = vunpack.c.l.b16 %v4966
    %v5069 = vunpack.c.l.b16 %v4967
    %v5070 = vunpack.c.l.b16 %v4968
    %v5071 = vunpack.c.l.b16 %v4969
    %v5072 = vunpack.c.l.b16 %v4970
    %v5073 = vunpack.c.l.b16 %v4971
    %v5074 = vunpack.c.l.b16 %v4972
    %v5075 = vunpack.c.l.b16 %v4973
    %v5076 = vunpack.c.l.b16 %v4974
    %v5077 = vunpack.c.l.b16 %v4975
    %v5078 = vunpack.c.l.b16 %v4976
    %v5079 = vunpack.c.l.b16 %v4977
    %v5080 = vunpack.c.l.b16 %v4978
    %v5081 = vunpack.c.l.b16 %v4979
    %v5082 = vunpack.c.l.b16 %v4980
    %v5083 = vunpack.c.l.b16 %v4981
    %v5084 = vunpack.c.l.b16 %v4982
    %v5085 = vunpack.c.l.b16 %v4983
    %v5086 = vunpack.c.l.b16 %v4984
    %v5087 = vunpack.c.l.b16 %v4985
    %v5088 = vunpack.c.l.b16 %v4986
    %v5089 = vunpack.c.l.b16 %v4987
    %v5090 = vunpack.c.l.b16 %v4988
    %v5091 = vunpack.c.l.b16 %v4989
    %v5092 = vunpack.c.l.b16 %v4990
    %v5093 = vunpack.c.l.b16 %v4991
    %v5094 = vunpack.c.l.b16 %v4992
    %v5095 = vunpack.c.l.b16 %v4993
    %v5096 = vunpack.c.l.b16 %v4994
    %v5097 = vunpack.c.l.b16 %v4995
    %v5098 = vunpack.c.l.b16 %v4996
    %v5099 = vunpack.c.l.b16 %v4997
    %v5100 = vpack.c.b16 %v5069, %v5068
    %v5101 = vpack.c.b16 %v5071, %v5070
    %v5102 = vpack.c.b16 %v5073, %v5072
    %v5103 = vpack.c.b16 %v5075, %v5074
    %v5104 = vpack.c.b16 %v5077, %v5076
    %v5105 = vpack.c.b16 %v5079, %v5078
    %v5106 = vpack.c.b16 %v5081, %v5080
    %v5107 = vpack.c.b16 %v5083, %v5082
    %v5108 = vpack.c.b16 %v5085, %v5084
    %v5109 = vpack.c.b16 %v5087, %v5086
    %v5110 = vpack.c.b16 %v5089, %v5088
    %v5111 = vpack.c.b16 %v5091, %v5090
    %v5112 = vpack.c.b16 %v5093, %v5092
    %v5113 = vpack.c.b16 %v5095, %v5094
    %v5114 = vpack.c.b16 %v5097, %v5096
    %v5115 = vpack.c.b16 %v5099, %v5098
    %5132 = vmatprep.subr.bf16.mxu0 0
    %5133 = vmatpush1.bf16.msra.mxu0 %v5100
    %5134 = vmatprep.subr.bf16.mxu0 0
    %5135 = vmatpush1.bf16.msra.mxu0 %v5101
    %5136 = vmatprep.subr.bf16.mxu0 0
    %5137 = vmatpush1.bf16.msra.mxu0 %v5102
    %5138 = vmatprep.subr.bf16.mxu0 0
    %5139 = vmatpush1.bf16.msra.mxu0 %v5103
    %5140 = vmatprep.subr.bf16.mxu0 0
    %5141 = vmatpush1.bf16.msra.mxu0 %v5104
    %5142 = vmatprep.subr.bf16.mxu0 0
    %5143 = vmatpush1.bf16.msra.mxu0 %v5105
    %5144 = vmatprep.subr.bf16.mxu0 0
    %5145 = vmatpush1.bf16.msra.mxu0 %v5106
    %5146 = vmatprep.subr.bf16.mxu0 0
    %5147 = vmatpush1.bf16.msra.mxu0 %v5107
    %5148 = vmatprep.subr.bf16.mxu0 0
    %5149 = vmatpush1.bf16.msra.mxu0 %v5108
    %5150 = vmatprep.subr.bf16.mxu0 0
    %5151 = vmatpush1.bf16.msra.mxu0 %v5109
    %5152 = vmatprep.subr.bf16.mxu0 0
    %5153 = vmatpush1.bf16.msra.mxu0 %v5110
    %5154 = vmatprep.subr.bf16.mxu0 0
    %5155 = vmatpush1.bf16.msra.mxu0 %v5111
    %5156 = vmatprep.subr.bf16.mxu0 0
    %5157 = vmatpush1.bf16.msra.mxu0 %v5112
    %5158 = vmatprep.subr.bf16.mxu0 0
    %5159 = vmatpush1.bf16.msra.mxu0 %v5113
    %5160 = vmatprep.subr.bf16.mxu0 0
    %5161 = vmatpush1.bf16.msra.mxu0 %v5114
    %5162 = vmatprep.subr.bf16.mxu0 0
    %5163 = vmatpush1.bf16.msra.mxu0 %v5115
    %5164 = vmatprep.mubr.bf16.mxu0 %v5009
    %5165 = vmatmul.mubr.bf16.gmra.mrb[0].mxu0 %v5006
    %v5166 = vpop.f32.mrb[0].mxu0
    %v5167 = vadd.f32 0.0, %v5166
    %v5168 = vpop.f32.mrb[0].mxu0
    %v5169 = vpop.f32.mrb[0].mxu0
    %v5170 = vadd.f32 0.0, %v5169
    %v5171 = vpop.f32.mrb[0].mxu0
    %5172 = vmatprep.mubr.bf16.mxu0 %v5013
    %5173 = vmatmul.mubr.bf16.gmra.mrb[0].mxu0 %v5011
    %v5174 = vpop.f32.mrb[0].mxu0
    %v5175 = vadd.f32 0.0, %v5174
    %v5176 = vpop.f32.mrb[0].mxu0
    %v5177 = vpop.f32.mrb[0].mxu0
    %v5178 = vadd.f32 0.0, %v5177
    %v5179 = vpop.f32.mrb[0].mxu0
    %5180 = vmatprep.mubr.bf16.mxu0 %v5017
    %5181 = vmatmul.mubr.bf16.gmra.mrb[0].mxu0 %v5015
    %v5182 = vpop.f32.mrb[0].mxu0
    %v5183 = vadd.f32 0.0, %v5182
    %v5184 = vpop.f32.mrb[0].mxu0
    %v5185 = vpop.f32.mrb[0].mxu0
    %v5186 = vadd.f32 0.0, %v5185
    %v5187 = vpop.f32.mrb[0].mxu0
    %5188 = vmatprep.mubr.bf16.mxu0 %v5021
    %5189 = vmatmul.mubr.bf16.gmra.mrb[0].mxu0 %v5019
    %v5190 = vpop.f32.mrb[0].mxu0
    %v5191 = vadd.f32 0.0, %v5190
    %v5192 = vpop.f32.mrb[0].mxu0
    %v5193 = vpop.f32.mrb[0].mxu0
    %v5194 = vadd.f32 0.0, %v5193
    %v5195 = vpop.f32.mrb[0].mxu0
    %5196 = vmatprep.mubr.bf16.mxu0 %v5025
    %5197 = vmatmul.mubr.bf16.gmra.mrb[0].mxu0 %v5023
    %v5198 = vpop.f32.mrb[0].mxu0
    %v5199 = vadd.f32 0.0, %v5198
    %v5200 = vpop.f32.mrb[0].mxu0
    %v5201 = vpop.f32.mrb[0].mxu0
    %v5202 = vadd.f32 0.0, %v5201
    %v5203 = vpop.f32.mrb[0].mxu0
    %5204 = vdwg.mxu0
    %v5205 = vadd.f32 %v4954, %v5167
    %v5206 = vadd.f32 %v4955, %v5170
    %v5207 = vadd.f32 %v4956, %v5175
    %v5208 = vadd.f32 %v4957, %v5178
    %v5209 = vadd.f32 %v4958, %v5183
    %v5210 = vadd.f32 %v4959, %v5186
    %v5211 = vadd.f32 %v4960, %v5191
    %v5212 = vadd.f32 %v4961, %v5194
    %v5213 = vadd.f32 %v4962, %v5199
    %v5214 = vadd.f32 %v4963, %v5202
    %v5215 = vld [vmem:[#allocation10] sm:$0x1]
    %v5217 = vlaneseq
    %v5218 = vshrl.u32 %v5217, 7
    %v5219 = vsub.s32 0, %v5218
    %v5220 = vrot.slane %v5215, %v5219
    %v5222 = vadd.f32 %v5205, %v5220
    %v5223 = vadd.f32 %v5206, %v5220
    %v5224 = vadd.f32 %v5207, %v5220
    %v5225 = vadd.f32 %v5208, %v5220
    %v5226 = vadd.f32 %v5209, %v5220
    %v5227 = vadd.f32 %v5210, %v5220
    %v5228 = vadd.f32 %v5211, %v5220
    %v5229 = vadd.f32 %v5212, %v5220
    %v5230 = vadd.f32 %v5213, %v5220
    %v5231 = vadd.f32 %v5214, %v5220
    %vm5232 = vcmp.gt.f32.partialorder %v5222, 0.0
    %vm5233 = vcmp.gt.f32.partialorder %v5223, 0.0
    %vm5234 = vcmp.gt.f32.partialorder %v5224, 0.0
    %vm5235 = vcmp.gt.f32.partialorder %v5225, 0.0
    %vm5236 = vcmp.gt.f32.partialorder %v5226, 0.0
    %vm5237 = vcmp.gt.f32.partialorder %v5227, 0.0
    %vm5238 = vcmp.gt.f32.partialorder %v5228, 0.0
    %vm5239 = vcmp.gt.f32.partialorder %v5229, 0.0
    %vm5240 = vcmp.gt.f32.partialorder %v5230, 0.0
    %vm5241 = vcmp.gt.f32.partialorder %v5231, 0.0
    %v5242 = vmul.f32 %v5222, 1.442695
    %v5243 = vpow.pop %v5242
    %v5244 = vmul.f32 %v5223, 1.442695
    %v5245 = vpow.pop %v5244
    %v5246 = vmul.f32 %v5224, 1.442695
    %v5247 = vpow.pop %v5246
    %v5248 = vmul.f32 %v5225, 1.442695
    %v5249 = vpow.pop %v5248
    %v5250 = vmul.f32 %v5226, 1.442695
    %v5251 = vpow.pop %v5250
    %v5252 = vmul.f32 %v5227, 1.442695
    %v5253 = vpow.pop %v5252
    %v5254 = vmul.f32 %v5228, 1.442695
    %v5255 = vpow.pop %v5254
    %v5256 = vmul.f32 %v5229, 1.442695
    %v5257 = vpow.pop %v5256
    %v5258 = vmul.f32 %v5230, 1.442695
    %v5259 = vpow.pop %v5258
    %v5260 = vmul.f32 %v5231, 1.442695
    %v5261 = vpow.pop %v5260
    %v5262 = vsub.f32 %v5243, 1.0
    %v5263 = vsub.f32 %v5245, 1.0
    %v5264 = vsub.f32 %v5247, 1.0
    %v5265 = vsub.f32 %v5249, 1.0
    %v5266 = vsub.f32 %v5251, 1.0
    %v5267 = vsub.f32 %v5253, 1.0
    %v5268 = vsub.f32 %v5255, 1.0
    %v5269 = vsub.f32 %v5257, 1.0
    %v5270 = vsub.f32 %v5259, 1.0
    %v5271 = vsub.f32 %v5261, 1.0
    %v5272 = vsel %vm5232, %v5222, %v5262
    %v5273 = vsel %vm5233, %v5223, %v5263
    %v5274 = vsel %vm5234, %v5224, %v5264
    %v5275 = vsel %vm5235, %v5225, %v5265
    %v5276 = vsel %vm5236, %v5226, %v5266
    %v5277 = vsel %vm5237, %v5227, %v5267
    %v5278 = vsel %vm5238, %v5228, %v5268
    %v5279 = vsel %vm5239, %v5229, %v5269
    %v5280 = vsel %vm5240, %v5230, %v5270
    %v5281 = vsel %vm5241, %v5231, %v5271
    %v5292 = vcombine.high %v5272, %v5272
    %v5294 = vunpack.c.l.s4 1983009808
    %v5295 = vunpack.c.0.s8 %v5294
    %v5296 = vlaneseq
    %v5297 = vshrl.u32 %v5296, 7
    %v5298 = vsub.s32 %v5295, %v5297
    %v5299 = vrot.slane %v5272, %v5298
    %v5301 = vunpack.c.l.s4 1983009808
    %v5302 = vunpack.c.0.s8 %v5301
    %v5303 = vlaneseq
    %v5304 = vshrl.u32 %v5303, 7
    %v5305 = vsub.s32 %v5302, %v5304
    %v5306 = vrot.slane %v5292, %v5305
    %v5307 = vcombine.high %v5299, %v5299
    %v5308 = vcombine.high %v5306, %v5306
    %v5309 = vcombine.high %v5273, %v5273
    %v5311 = vunpack.c.l.s4 1983009808
    %v5312 = vunpack.c.0.s8 %v5311
    %v5313 = vlaneseq
    %v5314 = vshrl.u32 %v5313, 7
    %v5315 = vsub.s32 %v5312, %v5314
    %v5316 = vrot.slane %v5273, %v5315
    %v5318 = vunpack.c.l.s4 1983009808
    %v5319 = vunpack.c.0.s8 %v5318
    %v5320 = vlaneseq
    %v5321 = vshrl.u32 %v5320, 7
    %v5322 = vsub.s32 %v5319, %v5321
    %v5323 = vrot.slane %v5309, %v5322
    %v5324 = vcombine.high %v5316, %v5316
    %v5325 = vcombine.high %v5323, %v5323
    %v5326 = vcombine.high %v5274, %v5274
    %v5328 = vunpack.c.l.s4 1983009808
    %v5329 = vunpack.c.0.s8 %v5328
    %v5330 = vlaneseq
    %v5331 = vshrl.u32 %v5330, 7
    %v5332 = vsub.s32 %v5329, %v5331
    %v5333 = vrot.slane %v5274, %v5332
    %v5335 = vunpack.c.l.s4 1983009808
    %v5336 = vunpack.c.0.s8 %v5335
    %v5337 = vlaneseq
    %v5338 = vshrl.u32 %v5337, 7
    %v5339 = vsub.s32 %v5336, %v5338
    %v5340 = vrot.slane %v5326, %v5339
    %v5341 = vcombine.high %v5333, %v5333
    %v5342 = vcombine.high %v5340, %v5340
    %v5343 = vcombine.high %v5275, %v5275
    %v5345 = vunpack.c.l.s4 1983009808
    %v5346 = vunpack.c.0.s8 %v5345
    %v5347 = vlaneseq
    %v5348 = vshrl.u32 %v5347, 7
    %v5349 = vsub.s32 %v5346, %v5348
    %v5350 = vrot.slane %v5275, %v5349
    %v5352 = vunpack.c.l.s4 1983009808
    %v5353 = vunpack.c.0.s8 %v5352
    %v5354 = vlaneseq
    %v5355 = vshrl.u32 %v5354, 7
    %v5356 = vsub.s32 %v5353, %v5355
    %v5357 = vrot.slane %v5343, %v5356
    %v5358 = vcombine.high %v5350, %v5350
    %v5359 = vcombine.high %v5357, %v5357
    %v5360 = vcombine.high %v5276, %v5276
    %v5362 = vunpack.c.l.s4 1983009808
    %v5363 = vunpack.c.0.s8 %v5362
    %v5364 = vlaneseq
    %v5365 = vshrl.u32 %v5364, 7
    %v5366 = vsub.s32 %v5363, %v5365
    %v5367 = vrot.slane %v5276, %v5366
    %v5369 = vunpack.c.l.s4 1983009808
    %v5370 = vunpack.c.0.s8 %v5369
    %v5371 = vlaneseq
    %v5372 = vshrl.u32 %v5371, 7
    %v5373 = vsub.s32 %v5370, %v5372
    %v5374 = vrot.slane %v5360, %v5373
    %v5375 = vcombine.high %v5367, %v5367
    %v5376 = vcombine.high %v5374, %v5374
    %v5377 = vcombine.high %v5277, %v5277
    %v5379 = vunpack.c.l.s4 1983009808
    %v5380 = vunpack.c.0.s8 %v5379
    %v5381 = vlaneseq
    %v5382 = vshrl.u32 %v5381, 7
    %v5383 = vsub.s32 %v5380, %v5382
    %v5384 = vrot.slane %v5277, %v5383
    %v5386 = vunpack.c.l.s4 1983009808
    %v5387 = vunpack.c.0.s8 %v5386
    %v5388 = vlaneseq
    %v5389 = vshrl.u32 %v5388, 7
    %v5390 = vsub.s32 %v5387, %v5389
    %v5391 = vrot.slane %v5377, %v5390
    %v5392 = vcombine.high %v5384, %v5384
    %v5393 = vcombine.high %v5391, %v5391
    %v5394 = vcombine.high %v5278, %v5278
    %v5396 = vunpack.c.l.s4 1983009808
    %v5397 = vunpack.c.0.s8 %v5396
    %v5398 = vlaneseq
    %v5399 = vshrl.u32 %v5398, 7
    %v5400 = vsub.s32 %v5397, %v5399
    %v5401 = vrot.slane %v5278, %v5400
    %v5403 = vunpack.c.l.s4 1983009808
    %v5404 = vunpack.c.0.s8 %v5403
    %v5405 = vlaneseq
    %v5406 = vshrl.u32 %v5405, 7
    %v5407 = vsub.s32 %v5404, %v5406
    %v5408 = vrot.slane %v5394, %v5407
    %v5409 = vcombine.high %v5401, %v5401
    %v5410 = vcombine.high %v5408, %v5408
    %v5411 = vcombine.high %v5279, %v5279
    %v5413 = vunpack.c.l.s4 1983009808
    %v5414 = vunpack.c.0.s8 %v5413
    %v5415 = vlaneseq
    %v5416 = vshrl.u32 %v5415, 7
    %v5417 = vsub.s32 %v5414, %v5416
    %v5418 = vrot.slane %v5279, %v5417
    %v5420 = vunpack.c.l.s4 1983009808
    %v5421 = vunpack.c.0.s8 %v5420
    %v5422 = vlaneseq
    %v5423 = vshrl.u32 %v5422, 7
    %v5424 = vsub.s32 %v5421, %v5423
    %v5425 = vrot.slane %v5411, %v5424
    %v5426 = vcombine.high %v5418, %v5418
    %v5427 = vcombine.high %v5425, %v5425
    %v5428 = vcombine.high %v5280, %v5280
    %v5430 = vunpack.c.l.s4 1983009808
    %v5431 = vunpack.c.0.s8 %v5430
    %v5432 = vlaneseq
    %v5433 = vshrl.u32 %v5432, 7
    %v5434 = vsub.s32 %v5431, %v5433
    %v5435 = vrot.slane %v5280, %v5434
    %v5437 = vunpack.c.l.s4 1983009808
    %v5438 = vunpack.c.0.s8 %v5437
    %v5439 = vlaneseq
    %v5440 = vshrl.u32 %v5439, 7
    %v5441 = vsub.s32 %v5438, %v5440
    %v5442 = vrot.slane %v5428, %v5441
    %v5443 = vcombine.high %v5435, %v5435
    %v5444 = vcombine.high %v5442, %v5442
    %v5445 = vcombine.high %v5281, %v5281
    %v5447 = vunpack.c.l.s4 1983009808
    %v5448 = vunpack.c.0.s8 %v5447
    %v5449 = vlaneseq
    %v5450 = vshrl.u32 %v5449, 7
    %v5451 = vsub.s32 %v5448, %v5450
    %v5452 = vrot.slane %v5281, %v5451
    %v5454 = vunpack.c.l.s4 1983009808
    %v5455 = vunpack.c.0.s8 %v5454
    %v5456 = vlaneseq
    %v5457 = vshrl.u32 %v5456, 7
    %v5458 = vsub.s32 %v5455, %v5457
    %v5459 = vrot.slane %v5445, %v5458
    %v5460 = vcombine.high %v5452, %v5452
    %v5461 = vcombine.high %v5459, %v5459
    %v5502 = vsel %vm1781, %v5299, -inf
    %v5503 = vrot.slane %v5502, 4
    %v5504 = vmax.f32 %v5502, %v5503
    %v5505 = vrot.slane %v5504, 2
    %v5506 = vmax.f32 %v5504, %v5505
    %v5507 = vrot.slane %v5506, 1
    %v5508 = vmax.f32 %v5506, %v5507
    %v5509 = vsel %vm1781, %v5307, -inf
    %v5510 = vrot.slane %v5509, 4
    %v5511 = vmax.f32 %v5509, %v5510
    %v5512 = vrot.slane %v5511, 2
    %v5513 = vmax.f32 %v5511, %v5512
    %v5514 = vrot.slane %v5513, 1
    %v5515 = vmax.f32 %v5513, %v5514
    %v5516 = vsel %vm1781, %v5306, -inf
    %v5517 = vrot.slane %v5516, 4
    %v5518 = vmax.f32 %v5516, %v5517
    %v5519 = vrot.slane %v5518, 2
    %v5520 = vmax.f32 %v5518, %v5519
    %v5521 = vrot.slane %v5520, 1
    %v5522 = vmax.f32 %v5520, %v5521
    %v5523 = vsel %vm1781, %v5308, -inf
    %v5524 = vrot.slane %v5523, 4
    %v5525 = vmax.f32 %v5523, %v5524
    %v5526 = vrot.slane %v5525, 2
    %v5527 = vmax.f32 %v5525, %v5526
    %v5528 = vrot.slane %v5527, 1
    %v5529 = vmax.f32 %v5527, %v5528
    %v5530 = vsel %vm1781, %v5316, -inf
    %v5531 = vrot.slane %v5530, 4
    %v5532 = vmax.f32 %v5530, %v5531
    %v5533 = vrot.slane %v5532, 2
    %v5534 = vmax.f32 %v5532, %v5533
    %v5535 = vrot.slane %v5534, 1
    %v5536 = vmax.f32 %v5534, %v5535
    %v5537 = vsel %vm1781, %v5324, -inf
    %v5538 = vrot.slane %v5537, 4
    %v5539 = vmax.f32 %v5537, %v5538
    %v5540 = vrot.slane %v5539, 2
    %v5541 = vmax.f32 %v5539, %v5540
    %v5542 = vrot.slane %v5541, 1
    %v5543 = vmax.f32 %v5541, %v5542
    %v5544 = vsel %vm1781, %v5323, -inf
    %v5545 = vrot.slane %v5544, 4
    %v5546 = vmax.f32 %v5544, %v5545
    %v5547 = vrot.slane %v5546, 2
    %v5548 = vmax.f32 %v5546, %v5547
    %v5549 = vrot.slane %v5548, 1
    %v5550 = vmax.f32 %v5548, %v5549
    %v5551 = vsel %vm1781, %v5325, -inf
    %v5552 = vrot.slane %v5551, 4
    %v5553 = vmax.f32 %v5551, %v5552
    %v5554 = vrot.slane %v5553, 2
    %v5555 = vmax.f32 %v5553, %v5554
    %v5556 = vrot.slane %v5555, 1
    %v5557 = vmax.f32 %v5555, %v5556
    %v5558 = vsel %vm1781, %v5333, -inf
    %v5559 = vrot.slane %v5558, 4
    %v5560 = vmax.f32 %v5558, %v5559
    %v5561 = vrot.slane %v5560, 2
    %v5562 = vmax.f32 %v5560, %v5561
    %v5563 = vrot.slane %v5562, 1
    %v5564 = vmax.f32 %v5562, %v5563
    %v5565 = vsel %vm1781, %v5341, -inf
    %v5566 = vrot.slane %v5565, 4
    %v5567 = vmax.f32 %v5565, %v5566
    %v5568 = vrot.slane %v5567, 2
    %v5569 = vmax.f32 %v5567, %v5568
    %v5570 = vrot.slane %v5569, 1
    %v5571 = vmax.f32 %v5569, %v5570
    %v5572 = vsel %vm1781, %v5340, -inf
    %v5573 = vrot.slane %v5572, 4
    %v5574 = vmax.f32 %v5572, %v5573
    %v5575 = vrot.slane %v5574, 2
    %v5576 = vmax.f32 %v5574, %v5575
    %v5577 = vrot.slane %v5576, 1
    %v5578 = vmax.f32 %v5576, %v5577
    %v5579 = vsel %vm1781, %v5342, -inf
    %v5580 = vrot.slane %v5579, 4
    %v5581 = vmax.f32 %v5579, %v5580
    %v5582 = vrot.slane %v5581, 2
    %v5583 = vmax.f32 %v5581, %v5582
    %v5584 = vrot.slane %v5583, 1
    %v5585 = vmax.f32 %v5583, %v5584
    %v5586 = vsel %vm1781, %v5350, -inf
    %v5587 = vrot.slane %v5586, 4
    %v5588 = vmax.f32 %v5586, %v5587
    %v5589 = vrot.slane %v5588, 2
    %v5590 = vmax.f32 %v5588, %v5589
    %v5591 = vrot.slane %v5590, 1
    %v5592 = vmax.f32 %v5590, %v5591
    %v5593 = vsel %vm1781, %v5358, -inf
    %v5594 = vrot.slane %v5593, 4
    %v5595 = vmax.f32 %v5593, %v5594
    %v5596 = vrot.slane %v5595, 2
    %v5597 = vmax.f32 %v5595, %v5596
    %v5598 = vrot.slane %v5597, 1
    %v5599 = vmax.f32 %v5597, %v5598
    %v5600 = vsel %vm1781, %v5357, -inf
    %v5601 = vrot.slane %v5600, 4
    %v5602 = vmax.f32 %v5600, %v5601
    %v5603 = vrot.slane %v5602, 2
    %v5604 = vmax.f32 %v5602, %v5603
    %v5605 = vrot.slane %v5604, 1
    %v5606 = vmax.f32 %v5604, %v5605
    %v5607 = vsel %vm1781, %v5359, -inf
    %v5608 = vrot.slane %v5607, 4
    %v5609 = vmax.f32 %v5607, %v5608
    %v5610 = vrot.slane %v5609, 2
    %v5611 = vmax.f32 %v5609, %v5610
    %v5612 = vrot.slane %v5611, 1
    %v5613 = vmax.f32 %v5611, %v5612
    %v5614 = vsel %vm1781, %v5367, -inf
    %v5615 = vrot.slane %v5614, 4
    %v5616 = vmax.f32 %v5614, %v5615
    %v5617 = vrot.slane %v5616, 2
    %v5618 = vmax.f32 %v5616, %v5617
    %v5619 = vrot.slane %v5618, 1
    %v5620 = vmax.f32 %v5618, %v5619
    %v5621 = vsel %vm1781, %v5375, -inf
    %v5622 = vrot.slane %v5621, 4
    %v5623 = vmax.f32 %v5621, %v5622
    %v5624 = vrot.slane %v5623, 2
    %v5625 = vmax.f32 %v5623, %v5624
    %v5626 = vrot.slane %v5625, 1
    %v5627 = vmax.f32 %v5625, %v5626
    %v5628 = vsel %vm1781, %v5374, -inf
    %v5629 = vrot.slane %v5628, 4
    %v5630 = vmax.f32 %v5628, %v5629
    %v5631 = vrot.slane %v5630, 2
    %v5632 = vmax.f32 %v5630, %v5631
    %v5633 = vrot.slane %v5632, 1
    %v5634 = vmax.f32 %v5632, %v5633
    %v5635 = vsel %vm1781, %v5376, -inf
    %v5636 = vrot.slane %v5635, 4
    %v5637 = vmax.f32 %v5635, %v5636
    %v5638 = vrot.slane %v5637, 2
    %v5639 = vmax.f32 %v5637, %v5638
    %v5640 = vrot.slane %v5639, 1
    %v5641 = vmax.f32 %v5639, %v5640
    %v5642 = vsel %vm1781, %v5384, -inf
    %v5643 = vrot.slane %v5642, 4
    %v5644 = vmax.f32 %v5642, %v5643
    %v5645 = vrot.slane %v5644, 2
    %v5646 = vmax.f32 %v5644, %v5645
    %v5647 = vrot.slane %v5646, 1
    %v5648 = vmax.f32 %v5646, %v5647
    %v5649 = vsel %vm1781, %v5392, -inf
    %v5650 = vrot.slane %v5649, 4
    %v5651 = vmax.f32 %v5649, %v5650
    %v5652 = vrot.slane %v5651, 2
    %v5653 = vmax.f32 %v5651, %v5652
    %v5654 = vrot.slane %v5653, 1
    %v5655 = vmax.f32 %v5653, %v5654
    %v5656 = vsel %vm1781, %v5391, -inf
    %v5657 = vrot.slane %v5656, 4
    %v5658 = vmax.f32 %v5656, %v5657
    %v5659 = vrot.slane %v5658, 2
    %v5660 = vmax.f32 %v5658, %v5659
    %v5661 = vrot.slane %v5660, 1
    %v5662 = vmax.f32 %v5660, %v5661
    %v5663 = vsel %vm1781, %v5393, -inf
    %v5664 = vrot.slane %v5663, 4
    %v5665 = vmax.f32 %v5663, %v5664
    %v5666 = vrot.slane %v5665, 2
    %v5667 = vmax.f32 %v5665, %v5666
    %v5668 = vrot.slane %v5667, 1
    %v5669 = vmax.f32 %v5667, %v5668
    %v5670 = vsel %vm1781, %v5401, -inf
    %v5671 = vrot.slane %v5670, 4
    %v5672 = vmax.f32 %v5670, %v5671
    %v5673 = vrot.slane %v5672, 2
    %v5674 = vmax.f32 %v5672, %v5673
    %v5675 = vrot.slane %v5674, 1
    %v5676 = vmax.f32 %v5674, %v5675
    %v5677 = vsel %vm1781, %v5409, -inf
    %v5678 = vrot.slane %v5677, 4
    %v5679 = vmax.f32 %v5677, %v5678
    %v5680 = vrot.slane %v5679, 2
    %v5681 = vmax.f32 %v5679, %v5680
    %v5682 = vrot.slane %v5681, 1
    %v5683 = vmax.f32 %v5681, %v5682
    %v5684 = vsel %vm1781, %v5408, -inf
    %v5685 = vrot.slane %v5684, 4
    %v5686 = vmax.f32 %v5684, %v5685
    %v5687 = vrot.slane %v5686, 2
    %v5688 = vmax.f32 %v5686, %v5687
    %v5689 = vrot.slane %v5688, 1
    %v5690 = vmax.f32 %v5688, %v5689
    %v5691 = vsel %vm1781, %v5410, -inf
    %v5692 = vrot.slane %v5691, 4
    %v5693 = vmax.f32 %v5691, %v5692
    %v5694 = vrot.slane %v5693, 2
    %v5695 = vmax.f32 %v5693, %v5694
    %v5696 = vrot.slane %v5695, 1
    %v5697 = vmax.f32 %v5695, %v5696
    %v5698 = vsel %vm1781, %v5418, -inf
    %v5699 = vrot.slane %v5698, 4
    %v5700 = vmax.f32 %v5698, %v5699
    %v5701 = vrot.slane %v5700, 2
    %v5702 = vmax.f32 %v5700, %v5701
    %v5703 = vrot.slane %v5702, 1
    %v5704 = vmax.f32 %v5702, %v5703
    %v5705 = vsel %vm1781, %v5426, -inf
    %v5706 = vrot.slane %v5705, 4
    %v5707 = vmax.f32 %v5705, %v5706
    %v5708 = vrot.slane %v5707, 2
    %v5709 = vmax.f32 %v5707, %v5708
    %v5710 = vrot.slane %v5709, 1
    %v5711 = vmax.f32 %v5709, %v5710
    %v5712 = vsel %vm1781, %v5425, -inf
    %v5713 = vrot.slane %v5712, 4
    %v5714 = vmax.f32 %v5712, %v5713
    %v5715 = vrot.slane %v5714, 2
    %v5716 = vmax.f32 %v5714, %v5715
    %v5717 = vrot.slane %v5716, 1
    %v5718 = vmax.f32 %v5716, %v5717
    %v5719 = vsel %vm1781, %v5427, -inf
    %v5720 = vrot.slane %v5719, 4
    %v5721 = vmax.f32 %v5719, %v5720
    %v5722 = vrot.slane %v5721, 2
    %v5723 = vmax.f32 %v5721, %v5722
    %v5724 = vrot.slane %v5723, 1
    %v5725 = vmax.f32 %v5723, %v5724
    %v5726 = vsel %vm1781, %v5435, -inf
    %v5727 = vrot.slane %v5726, 4
    %v5728 = vmax.f32 %v5726, %v5727
    %v5729 = vrot.slane %v5728, 2
    %v5730 = vmax.f32 %v5728, %v5729
    %v5731 = vrot.slane %v5730, 1
    %v5732 = vmax.f32 %v5730, %v5731
    %v5733 = vsel %vm1781, %v5443, -inf
    %v5734 = vrot.slane %v5733, 4
    %v5735 = vmax.f32 %v5733, %v5734
    %v5736 = vrot.slane %v5735, 2
    %v5737 = vmax.f32 %v5735, %v5736
    %v5738 = vrot.slane %v5737, 1
    %v5739 = vmax.f32 %v5737, %v5738
    %v5740 = vsel %vm1781, %v5442, -inf
    %v5741 = vrot.slane %v5740, 4
    %v5742 = vmax.f32 %v5740, %v5741
    %v5743 = vrot.slane %v5742, 2
    %v5744 = vmax.f32 %v5742, %v5743
    %v5745 = vrot.slane %v5744, 1
    %v5746 = vmax.f32 %v5744, %v5745
    %v5747 = vsel %vm1781, %v5444, -inf
    %v5748 = vrot.slane %v5747, 4
    %v5749 = vmax.f32 %v5747, %v5748
    %v5750 = vrot.slane %v5749, 2
    %v5751 = vmax.f32 %v5749, %v5750
    %v5752 = vrot.slane %v5751, 1
    %v5753 = vmax.f32 %v5751, %v5752
    %v5754 = vsel %vm1781, %v5452, -inf
    %v5755 = vrot.slane %v5754, 4
    %v5756 = vmax.f32 %v5754, %v5755
    %v5757 = vrot.slane %v5756, 2
    %v5758 = vmax.f32 %v5756, %v5757
    %v5759 = vrot.slane %v5758, 1
    %v5760 = vmax.f32 %v5758, %v5759
    %v5761 = vsel %vm1781, %v5460, -inf
    %v5762 = vrot.slane %v5761, 4
    %v5763 = vmax.f32 %v5761, %v5762
    %v5764 = vrot.slane %v5763, 2
    %v5765 = vmax.f32 %v5763, %v5764
    %v5766 = vrot.slane %v5765, 1
    %v5767 = vmax.f32 %v5765, %v5766
    %v5768 = vsel %vm1781, %v5459, -inf
    %v5769 = vrot.slane %v5768, 4
    %v5770 = vmax.f32 %v5768, %v5769
    %v5771 = vrot.slane %v5770, 2
    %v5772 = vmax.f32 %v5770, %v5771
    %v5773 = vrot.slane %v5772, 1
    %v5774 = vmax.f32 %v5772, %v5773
    %v5775 = vsel %vm1781, %v5461, -inf
    %v5776 = vrot.slane %v5775, 4
    %v5777 = vmax.f32 %v5775, %v5776
    %v5778 = vrot.slane %v5777, 2
    %v5779 = vmax.f32 %v5777, %v5778
    %v5780 = vrot.slane %v5779, 1
    %v5781 = vmax.f32 %v5779, %v5780
    %v5822 = vsel %vm3622, %v5515, %v5508
    %v5823 = vsel %vm3624, %v5522, %v5822
    %v5824 = vsel %vm3626, %v5529, %v5823
    %v5825 = vsel %vm3628, %v5536, %v5824
    %v5826 = vsel %vm3630, %v5543, %v5825
    %v5827 = vsel %vm3632, %v5550, %v5826
    %v5828 = vsel %vm3634, %v5557, %v5827
    %v5829 = vsel %vm3622, %v5571, %v5564
    %v5830 = vsel %vm3624, %v5578, %v5829
    %v5831 = vsel %vm3626, %v5585, %v5830
    %v5832 = vsel %vm3628, %v5592, %v5831
    %v5833 = vsel %vm3630, %v5599, %v5832
    %v5834 = vsel %vm3632, %v5606, %v5833
    %v5835 = vsel %vm3634, %v5613, %v5834
    %v5836 = vsel %vm3622, %v5627, %v5620
    %v5837 = vsel %vm3624, %v5634, %v5836
    %v5838 = vsel %vm3626, %v5641, %v5837
    %v5839 = vsel %vm3628, %v5648, %v5838
    %v5840 = vsel %vm3630, %v5655, %v5839
    %v5841 = vsel %vm3632, %v5662, %v5840
    %v5842 = vsel %vm3634, %v5669, %v5841
    %v5843 = vsel %vm3622, %v5683, %v5676
    %v5844 = vsel %vm3624, %v5690, %v5843
    %v5845 = vsel %vm3626, %v5697, %v5844
    %v5846 = vsel %vm3628, %v5704, %v5845
    %v5847 = vsel %vm3630, %v5711, %v5846
    %v5848 = vsel %vm3632, %v5718, %v5847
    %v5849 = vsel %vm3634, %v5725, %v5848
    %v5850 = vsel %vm3622, %v5739, %v5732
    %v5851 = vsel %vm3624, %v5746, %v5850
    %v5852 = vsel %vm3626, %v5753, %v5851
    %v5853 = vsel %vm3628, %v5760, %v5852
    %v5854 = vsel %vm3630, %v5767, %v5853
    %v5855 = vsel %vm3632, %v5774, %v5854
    %v5856 = vsel %vm3634, %v5781, %v5855
    %5862 = vst [vmem:[#allocation3] sm:$0xff] %v5828
    %5863 = vst [vmem:[#allocation3 + $0x8] sm:$0xff] %v5835
    %5864 = vst [vmem:[#allocation3 + $0x10] sm:$0xff] %v5842
    %5865 = vst [vmem:[#allocation3 + $0x18] sm:$0xff] %v5849
    %5866 = vst [vmem:[#allocation3 + $0x20] sm:$0xff] %v5856
    %v5867 = vld [vmem:[#allocation3] ss:$20 sm:$0x3]
    %v5868 = vpack.c.bf16 %v5867, %v5867
    %v5869 = vld [vmem:[#allocation12] sm:$0xff]
    %v5870 = vld [vmem:[#allocation12 + $0x8] sm:$0xff]
    %v5871 = vld [vmem:[#allocation12 + $0x10] sm:$0xff]
    %v5872 = vld [vmem:[#allocation12 + $0x18] sm:$0xff]
    %v5873 = vld [vmem:[#allocation12 + $0x20] sm:$0xff]
    %v5874 = vld [vmem:[#allocation12 + $0x28] sm:$0xff]
    %v5875 = vld [vmem:[#allocation12 + $0x30] sm:$0xff]
    %v5876 = vld [vmem:[#allocation12 + $0x38] sm:$0xff]
    %v5877 = vld [vmem:[#allocation12 + $0x40] sm:$0xff]
    %v5878 = vld [vmem:[#allocation12 + $0x48] sm:$0xff]
    %v5879 = vld [vmem:[#allocation12 + $0x50] sm:$0xff]
    %v5880 = vld [vmem:[#allocation12 + $0x58] sm:$0xff]
    %v5881 = vld [vmem:[#allocation12 + $0x60] sm:$0xff]
    %v5882 = vld [vmem:[#allocation12 + $0x68] sm:$0xff]
    %v5883 = vld [vmem:[#allocation12 + $0x70] sm:$0xff]
    %v5884 = vld [vmem:[#allocation12 + $0x78] sm:$0xff]
    %s5885 = scalar_lea.vmem [#allocation3], 1
    %v5886 = vld [vmem:[%s5885] ss:$20 sm:$0x3]
    %v5887 = vpack.c.bf16 %v5886, %v5886
    %s5888 = scalar_lea.vmem [#allocation12], 128
    %v5889 = vld [vmem:[%s5888] sm:$0xff]
    %v5890 = vld [vmem:[%s5888 + $0x8] sm:$0xff]
    %v5891 = vld [vmem:[%s5888 + $0x10] sm:$0xff]
    %v5892 = vld [vmem:[%s5888 + $0x18] sm:$0xff]
    %v5893 = vld [vmem:[%s5888 + $0x20] sm:$0xff]
    %v5894 = vld [vmem:[%s5888 + $0x28] sm:$0xff]
    %v5895 = vld [vmem:[%s5888 + $0x30] sm:$0xff]
    %v5896 = vld [vmem:[%s5888 + $0x38] sm:$0xff]
    %v5897 = vld [vmem:[%s5888 + $0x40] sm:$0xff]
    %v5898 = vld [vmem:[%s5888 + $0x48] sm:$0xff]
    %v5899 = vld [vmem:[%s5888 + $0x50] sm:$0xff]
    %v5900 = vld [vmem:[%s5888 + $0x58] sm:$0xff]
    %v5901 = vld [vmem:[%s5888 + $0x60] sm:$0xff]
    %v5902 = vld [vmem:[%s5888 + $0x68] sm:$0xff]
    %v5903 = vld [vmem:[%s5888 + $0x70] sm:$0xff]
    %v5904 = vld [vmem:[%s5888 + $0x78] sm:$0xff]
    %v5921 = vunpack.c.l.b16 %v5889
    %v5922 = vunpack.c.h.b16 %v5889
    %v5923 = vunpack.c.l.b16 %v5890
    %v5924 = vunpack.c.h.b16 %v5890
    %v5925 = vunpack.c.l.b16 %v5891
    %v5926 = vunpack.c.h.b16 %v5891
    %v5927 = vunpack.c.l.b16 %v5892
    %v5928 = vunpack.c.h.b16 %v5892
    %v5929 = vunpack.c.l.b16 %v5893
    %v5930 = vunpack.c.h.b16 %v5893
    %v5931 = vunpack.c.l.b16 %v5894
    %v5932 = vunpack.c.h.b16 %v5894
    %v5933 = vunpack.c.l.b16 %v5895
    %v5934 = vunpack.c.h.b16 %v5895
    %v5935 = vunpack.c.l.b16 %v5896
    %v5936 = vunpack.c.h.b16 %v5896
    %v5937 = vunpack.c.l.b16 %v5897
    %v5938 = vunpack.c.h.b16 %v5897
    %v5939 = vunpack.c.l.b16 %v5898
    %v5940 = vunpack.c.h.b16 %v5898
    %v5941 = vunpack.c.l.b16 %v5899
    %v5942 = vunpack.c.h.b16 %v5899
    %v5943 = vunpack.c.l.b16 %v5900
    %v5944 = vunpack.c.h.b16 %v5900
    %v5945 = vunpack.c.l.b16 %v5901
    %v5946 = vunpack.c.h.b16 %v5901
    %v5947 = vunpack.c.l.b16 %v5902
    %v5948 = vunpack.c.h.b16 %v5902
    %v5949 = vunpack.c.l.b16 %v5903
    %v5950 = vunpack.c.h.b16 %v5903
    %v5951 = vunpack.c.l.b16 %v5904
    %v5952 = vunpack.c.h.b16 %v5904
    %v5953 = vpack.c.b16 %v5923, %v5921
    %v5954 = vpack.c.b16 %v5924, %v5922
    %v5955 = vpack.c.b16 %v5927, %v5925
    %v5956 = vpack.c.b16 %v5928, %v5926
    %v5957 = vpack.c.b16 %v5931, %v5929
    %v5958 = vpack.c.b16 %v5932, %v5930
    %v5959 = vpack.c.b16 %v5935, %v5933
    %v5960 = vpack.c.b16 %v5936, %v5934
    %v5961 = vpack.c.b16 %v5939, %v5937
    %v5962 = vpack.c.b16 %v5940, %v5938
    %v5963 = vpack.c.b16 %v5943, %v5941
    %v5964 = vpack.c.b16 %v5944, %v5942
    %v5965 = vpack.c.b16 %v5947, %v5945
    %v5966 = vpack.c.b16 %v5948, %v5946
    %v5967 = vpack.c.b16 %v5951, %v5949
    %v5968 = vpack.c.b16 %v5952, %v5950
    %5985 = vmatprep.subr.bf16.mxu0 %v5954
    %5986 = vmatpush1.bf16.msra.mxu0 %v5953
    %5987 = vmatprep.subr.bf16.mxu0 %v5956
    %5988 = vmatpush1.bf16.msra.mxu0 %v5955
    %5989 = vmatprep.subr.bf16.mxu0 %v5958
    %5990 = vmatpush1.bf16.msra.mxu0 %v5957
    %5991 = vmatprep.subr.bf16.mxu0 %v5960
    %5992 = vmatpush1.bf16.msra.mxu0 %v5959
    %5993 = vmatprep.subr.bf16.mxu0 %v5962
    %5994 = vmatpush1.bf16.msra.mxu0 %v5961
    %5995 = vmatprep.subr.bf16.mxu0 %v5964
    %5996 = vmatpush1.bf16.msra.mxu0 %v5963
    %5997 = vmatprep.subr.bf16.mxu0 %v5966
    %5998 = vmatpush1.bf16.msra.mxu0 %v5965
    %5999 = vmatprep.subr.bf16.mxu0 %v5968
    %6000 = vmatpush1.bf16.msra.mxu0 %v5967
    %6001 = vmatprep.subr.bf16.mxu0 0
    %6002 = vmatpush1.bf16.msra.mxu0 0
    %6003 = vmatprep.subr.bf16.mxu0 0
    %6004 = vmatpush1.bf16.msra.mxu0 0
    %6005 = vmatprep.subr.bf16.mxu0 0
    %6006 = vmatpush1.bf16.msra.mxu0 0
    %6007 = vmatprep.subr.bf16.mxu0 0
    %6008 = vmatpush1.bf16.msra.mxu0 0
    %6009 = vmatprep.subr.bf16.mxu0 0
    %6010 = vmatpush1.bf16.msra.mxu0 0
    %6011 = vmatprep.subr.bf16.mxu0 0
    %6012 = vmatpush1.bf16.msra.mxu0 0
    %6013 = vmatprep.subr.bf16.mxu0 0
    %6014 = vmatpush1.bf16.msra.mxu0 0
    %6015 = vmatprep.subr.bf16.mxu0 0
    %6016 = vmatpush1.bf16.msra.mxu0 0
    %6017 = vmatprep.mubr.bf16.mxu0 0
    %6018 = vmatmul.mubr.bf16.gmra.mrb[0].mxu0 %v5887
    %v6019 = vpop.f32.mrb[0].mxu0
    %v6020 = vadd.f32 0.0, %v6019
    %v6021 = vpop.f32.mrb[0].mxu0
    %v6022 = vadd.f32 0.0, %v6021
    %v6023 = vpop.f32.mrb[0].mxu0
    %v6024 = vpop.f32.mrb[0].mxu0
    %6025 = vdwg.mxu0
    %v6042 = vunpack.c.l.b16 %v5869
    %v6043 = vunpack.c.h.b16 %v5869
    %v6044 = vunpack.c.l.b16 %v5870
    %v6045 = vunpack.c.h.b16 %v5870
    %v6046 = vunpack.c.l.b16 %v5871
    %v6047 = vunpack.c.h.b16 %v5871
    %v6048 = vunpack.c.l.b16 %v5872
    %v6049 = vunpack.c.h.b16 %v5872
    %v6050 = vunpack.c.l.b16 %v5873
    %v6051 = vunpack.c.h.b16 %v5873
    %v6052 = vunpack.c.l.b16 %v5874
    %v6053 = vunpack.c.h.b16 %v5874
    %v6054 = vunpack.c.l.b16 %v5875
    %v6055 = vunpack.c.h.b16 %v5875
    %v6056 = vunpack.c.l.b16 %v5876
    %v6057 = vunpack.c.h.b16 %v5876
    %v6058 = vunpack.c.l.b16 %v5877
    %v6059 = vunpack.c.h.b16 %v5877
    %v6060 = vunpack.c.l.b16 %v5878
    %v6061 = vunpack.c.h.b16 %v5878
    %v6062 = vunpack.c.l.b16 %v5879
    %v6063 = vunpack.c.h.b16 %v5879
    %v6064 = vunpack.c.l.b16 %v5880
    %v6065 = vunpack.c.h.b16 %v5880
    %v6066 = vunpack.c.l.b16 %v5881
    %v6067 = vunpack.c.h.b16 %v5881
    %v6068 = vunpack.c.l.b16 %v5882
    %v6069 = vunpack.c.h.b16 %v5882
    %v6070 = vunpack.c.l.b16 %v5883
    %v6071 = vunpack.c.h.b16 %v5883
    %v6072 = vunpack.c.l.b16 %v5884
    %v6073 = vunpack.c.h.b16 %v5884
    %v6074 = vpack.c.b16 %v6044, %v6042
    %v6075 = vpack.c.b16 %v6045, %v6043
    %v6076 = vpack.c.b16 %v6048, %v6046
    %v6077 = vpack.c.b16 %v6049, %v6047
    %v6078 = vpack.c.b16 %v6052, %v6050
    %v6079 = vpack.c.b16 %v6053, %v6051
    %v6080 = vpack.c.b16 %v6056, %v6054
    %v6081 = vpack.c.b16 %v6057, %v6055
    %v6082 = vpack.c.b16 %v6060, %v6058
    %v6083 = vpack.c.b16 %v6061, %v6059
    %v6084 = vpack.c.b16 %v6064, %v6062
    %v6085 = vpack.c.b16 %v6065, %v6063
    %v6086 = vpack.c.b16 %v6068, %v6066
    %v6087 = vpack.c.b16 %v6069, %v6067
    %v6088 = vpack.c.b16 %v6072, %v6070
    %v6089 = vpack.c.b16 %v6073, %v6071
    %6106 = vmatprep.subr.bf16.mxu0 %v6075
    %6107 = vmatpush1.bf16.msra.mxu0 %v6074
    %6108 = vmatprep.subr.bf16.mxu0 %v6077
    %6109 = vmatpush1.bf16.msra.mxu0 %v6076
    %6110 = vmatprep.subr.bf16.mxu0 %v6079
    %6111 = vmatpush1.bf16.msra.mxu0 %v6078
    %6112 = vmatprep.subr.bf16.mxu0 %v6081
    %6113 = vmatpush1.bf16.msra.mxu0 %v6080
    %6114 = vmatprep.subr.bf16.mxu0 %v6083
    %6115 = vmatpush1.bf16.msra.mxu0 %v6082
    %6116 = vmatprep.subr.bf16.mxu0 %v6085
    %6117 = vmatpush1.bf16.msra.mxu0 %v6084
    %6118 = vmatprep.subr.bf16.mxu0 %v6087
    %6119 = vmatpush1.bf16.msra.mxu0 %v6086
    %6120 = vmatprep.subr.bf16.mxu0 %v6089
    %6121 = vmatpush1.bf16.msra.mxu0 %v6088
    %6122 = vmatprep.subr.bf16.mxu0 0
    %6123 = vmatpush1.bf16.msra.mxu0 0
    %6124 = vmatprep.subr.bf16.mxu0 0
    %6125 = vmatpush1.bf16.msra.mxu0 0
    %6126 = vmatprep.subr.bf16.mxu0 0
    %6127 = vmatpush1.bf16.msra.mxu0 0
    %6128 = vmatprep.subr.bf16.mxu0 0
    %6129 = vmatpush1.bf16.msra.mxu0 0
    %6130 = vmatprep.subr.bf16.mxu0 0
    %6131 = vmatpush1.bf16.msra.mxu0 0
    %6132 = vmatprep.subr.bf16.mxu0 0
    %6133 = vmatpush1.bf16.msra.mxu0 0
    %6134 = vmatprep.subr.bf16.mxu0 0
    %6135 = vmatpush1.bf16.msra.mxu0 0
    %6136 = vmatprep.subr.bf16.mxu0 0
    %6137 = vmatpush1.bf16.msra.mxu0 0
    %6138 = vmatprep.mubr.bf16.mxu0 0
    %6139 = vmatmul.mubr.bf16.gmra.mrb[0].mxu0 %v5868
    %v6140 = vpop.f32.mrb[0].mxu0
    %v6141 = vadd.f32 %v6020, %v6140
    %v6142 = vpop.f32.mrb[0].mxu0
    %v6143 = vadd.f32 %v6022, %v6142
    %v6144 = vpop.f32.mrb[0].mxu0
    %v6145 = vpop.f32.mrb[0].mxu0
    %6146 = vdwg.mxu0
    %s6147 = scalar_lea.vmem [#allocation3], 2
    %v6148 = vld [vmem:[%s6147] ss:$20 sm:$0x3]
    %v6149 = vpack.c.bf16 %v6148, %v6148
    %s6150 = scalar_lea.vmem [#allocation12], 256
    %v6151 = vld [vmem:[%s6150] sm:$0xff]
    %v6152 = vld [vmem:[%s6150 + $0x8] sm:$0xff]
    %v6153 = vld [vmem:[%s6150 + $0x10] sm:$0xff]
    %v6154 = vld [vmem:[%s6150 + $0x18] sm:$0xff]
    %v6155 = vld [vmem:[%s6150 + $0x20] sm:$0xff]
    %v6156 = vld [vmem:[%s6150 + $0x28] sm:$0xff]
    %v6157 = vld [vmem:[%s6150 + $0x30] sm:$0xff]
    %v6158 = vld [vmem:[%s6150 + $0x38] sm:$0xff]
    %v6159 = vld [vmem:[%s6150 + $0x40] sm:$0xff]
    %v6160 = vld [vmem:[%s6150 + $0x48] sm:$0xff]
    %v6161 = vld [vmem:[%s6150 + $0x50] sm:$0xff]
    %v6162 = vld [vmem:[%s6150 + $0x58] sm:$0xff]
    %v6163 = vld [vmem:[%s6150 + $0x60] sm:$0xff]
    %v6164 = vld [vmem:[%s6150 + $0x68] sm:$0xff]
    %v6165 = vld [vmem:[%s6150 + $0x70] sm:$0xff]
    %v6166 = vld [vmem:[%s6150 + $0x78] sm:$0xff]
    %v6183 = vunpack.c.l.b16 %v6151
    %v6184 = vunpack.c.h.b16 %v6151
    %v6185 = vunpack.c.l.b16 %v6152
    %v6186 = vunpack.c.h.b16 %v6152
    %v6187 = vunpack.c.l.b16 %v6153
    %v6188 = vunpack.c.h.b16 %v6153
    %v6189 = vunpack.c.l.b16 %v6154
    %v6190 = vunpack.c.h.b16 %v6154
    %v6191 = vunpack.c.l.b16 %v6155
    %v6192 = vunpack.c.h.b16 %v6155
    %v6193 = vunpack.c.l.b16 %v6156
    %v6194 = vunpack.c.h.b16 %v6156
    %v6195 = vunpack.c.l.b16 %v6157
    %v6196 = vunpack.c.h.b16 %v6157
    %v6197 = vunpack.c.l.b16 %v6158
    %v6198 = vunpack.c.h.b16 %v6158
    %v6199 = vunpack.c.l.b16 %v6159
    %v6200 = vunpack.c.h.b16 %v6159
    %v6201 = vunpack.c.l.b16 %v6160
    %v6202 = vunpack.c.h.b16 %v6160
    %v6203 = vunpack.c.l.b16 %v6161
    %v6204 = vunpack.c.h.b16 %v6161
    %v6205 = vunpack.c.l.b16 %v6162
    %v6206 = vunpack.c.h.b16 %v6162
    %v6207 = vunpack.c.l.b16 %v6163
    %v6208 = vunpack.c.h.b16 %v6163
    %v6209 = vunpack.c.l.b16 %v6164
    %v6210 = vunpack.c.h.b16 %v6164
    %v6211 = vunpack.c.l.b16 %v6165
    %v6212 = vunpack.c.h.b16 %v6165
    %v6213 = vunpack.c.l.b16 %v6166
    %v6214 = vunpack.c.h.b16 %v6166
    %v6215 = vpack.c.b16 %v6185, %v6183
    %v6216 = vpack.c.b16 %v6186, %v6184
    %v6217 = vpack.c.b16 %v6189, %v6187
    %v6218 = vpack.c.b16 %v6190, %v6188
    %v6219 = vpack.c.b16 %v6193, %v6191
    %v6220 = vpack.c.b16 %v6194, %v6192
    %v6221 = vpack.c.b16 %v6197, %v6195
    %v6222 = vpack.c.b16 %v6198, %v6196
    %v6223 = vpack.c.b16 %v6201, %v6199
    %v6224 = vpack.c.b16 %v6202, %v6200
    %v6225 = vpack.c.b16 %v6205, %v6203
    %v6226 = vpack.c.b16 %v6206, %v6204
    %v6227 = vpack.c.b16 %v6209, %v6207
    %v6228 = vpack.c.b16 %v6210, %v6208
    %v6229 = vpack.c.b16 %v6213, %v6211
    %v6230 = vpack.c.b16 %v6214, %v6212
    %6247 = vmatprep.subr.bf16.mxu0 %v6216
    %6248 = vmatpush1.bf16.msra.mxu0 %v6215
    %6249 = vmatprep.subr.bf16.mxu0 %v6218
    %6250 = vmatpush1.bf16.msra.mxu0 %v6217
    %6251 = vmatprep.subr.bf16.mxu0 %v6220
    %6252 = vmatpush1.bf16.msra.mxu0 %v6219
    %6253 = vmatprep.subr.bf16.mxu0 %v6222
    %6254 = vmatpush1.bf16.msra.mxu0 %v6221
    %6255 = vmatprep.subr.bf16.mxu0 %v6224
    %6256 = vmatpush1.bf16.msra.mxu0 %v6223
    %6257 = vmatprep.subr.bf16.mxu0 %v6226
    %6258 = vmatpush1.bf16.msra.mxu0 %v6225
    %6259 = vmatprep.subr.bf16.mxu0 %v6228
    %6260 = vmatpush1.bf16.msra.mxu0 %v6227
    %6261 = vmatprep.subr.bf16.mxu0 %v6230
    %6262 = vmatpush1.bf16.msra.mxu0 %v6229
    %6263 = vmatprep.subr.bf16.mxu0 0
    %6264 = vmatpush1.bf16.msra.mxu0 0
    %6265 = vmatprep.subr.bf16.mxu0 0
    %6266 = vmatpush1.bf16.msra.mxu0 0
    %6267 = vmatprep.subr.bf16.mxu0 0
    %6268 = vmatpush1.bf16.msra.mxu0 0
    %6269 = vmatprep.subr.bf16.mxu0 0
    %6270 = vmatpush1.bf16.msra.mxu0 0
    %6271 = vmatprep.subr.bf16.mxu0 0
    %6272 = vmatpush1.bf16.msra.mxu0 0
    %6273 = vmatprep.subr.bf16.mxu0 0
    %6274 = vmatpush1.bf16.msra.mxu0 0
    %6275 = vmatprep.subr.bf16.mxu0 0
    %6276 = vmatpush1.bf16.msra.mxu0 0
    %6277 = vmatprep.subr.bf16.mxu0 0
    %6278 = vmatpush1.bf16.msra.mxu0 0
    %6279 = vmatprep.mubr.bf16.mxu0 0
    %6280 = vmatmul.mubr.bf16.gmra.mrb[0].mxu0 %v6149
    %v6281 = vpop.f32.mrb[0].mxu0
    %v6282 = vadd.f32 0.0, %v6281
    %v6283 = vpop.f32.mrb[0].mxu0
    %v6284 = vadd.f32 0.0, %v6283
    %v6285 = vpop.f32.mrb[0].mxu0
    %v6286 = vpop.f32.mrb[0].mxu0
    %6287 = vdwg.mxu0
    %v6288 = vadd.f32 %v6141, %v6282
    %v6289 = vadd.f32 %v6143, %v6284
    %s6290 = scalar_lea.vmem [#allocation3], 3
    %v6291 = vld [vmem:[%s6290] ss:$20 sm:$0x3]
    %v6292 = vpack.c.bf16 %v6291, %v6291
    %s6293 = scalar_lea.vmem [#allocation12], 384
    %v6294 = vld [vmem:[%s6293] sm:$0xff]
    %v6295 = vld [vmem:[%s6293 + $0x8] sm:$0xff]
    %v6296 = vld [vmem:[%s6293 + $0x10] sm:$0xff]
    %v6297 = vld [vmem:[%s6293 + $0x18] sm:$0xff]
    %v6298 = vld [vmem:[%s6293 + $0x20] sm:$0xff]
    %v6299 = vld [vmem:[%s6293 + $0x28] sm:$0xff]
    %v6300 = vld [vmem:[%s6293 + $0x30] sm:$0xff]
    %v6301 = vld [vmem:[%s6293 + $0x38] sm:$0xff]
    %v6302 = vld [vmem:[%s6293 + $0x40] sm:$0xff]
    %v6303 = vld [vmem:[%s6293 + $0x48] sm:$0xff]
    %v6304 = vld [vmem:[%s6293 + $0x50] sm:$0xff]
    %v6305 = vld [vmem:[%s6293 + $0x58] sm:$0xff]
    %v6306 = vld [vmem:[%s6293 + $0x60] sm:$0xff]
    %v6307 = vld [vmem:[%s6293 + $0x68] sm:$0xff]
    %v6308 = vld [vmem:[%s6293 + $0x70] sm:$0xff]
    %v6309 = vld [vmem:[%s6293 + $0x78] sm:$0xff]
    %v6326 = vunpack.c.l.b16 %v6294
    %v6327 = vunpack.c.h.b16 %v6294
    %v6328 = vunpack.c.l.b16 %v6295
    %v6329 = vunpack.c.h.b16 %v6295
    %v6330 = vunpack.c.l.b16 %v6296
    %v6331 = vunpack.c.h.b16 %v6296
    %v6332 = vunpack.c.l.b16 %v6297
    %v6333 = vunpack.c.h.b16 %v6297
    %v6334 = vunpack.c.l.b16 %v6298
    %v6335 = vunpack.c.h.b16 %v6298
    %v6336 = vunpack.c.l.b16 %v6299
    %v6337 = vunpack.c.h.b16 %v6299
    %v6338 = vunpack.c.l.b16 %v6300
    %v6339 = vunpack.c.h.b16 %v6300
    %v6340 = vunpack.c.l.b16 %v6301
    %v6341 = vunpack.c.h.b16 %v6301
    %v6342 = vunpack.c.l.b16 %v6302
    %v6343 = vunpack.c.h.b16 %v6302
    %v6344 = vunpack.c.l.b16 %v6303
    %v6345 = vunpack.c.h.b16 %v6303
    %v6346 = vunpack.c.l.b16 %v6304
    %v6347 = vunpack.c.h.b16 %v6304
    %v6348 = vunpack.c.l.b16 %v6305
    %v6349 = vunpack.c.h.b16 %v6305
    %v6350 = vunpack.c.l.b16 %v6306
    %v6351 = vunpack.c.h.b16 %v6306
    %v6352 = vunpack.c.l.b16 %v6307
    %v6353 = vunpack.c.h.b16 %v6307
    %v6354 = vunpack.c.l.b16 %v6308
    %v6355 = vunpack.c.h.b16 %v6308
    %v6356 = vunpack.c.l.b16 %v6309
    %v6357 = vunpack.c.h.b16 %v6309
    %v6358 = vpack.c.b16 %v6328, %v6326
    %v6359 = vpack.c.b16 %v6329, %v6327
    %v6360 = vpack.c.b16 %v6332, %v6330
    %v6361 = vpack.c.b16 %v6333, %v6331
    %v6362 = vpack.c.b16 %v6336, %v6334
    %v6363 = vpack.c.b16 %v6337, %v6335
    %v6364 = vpack.c.b16 %v6340, %v6338
    %v6365 = vpack.c.b16 %v6341, %v6339
    %v6366 = vpack.c.b16 %v6344, %v6342
    %v6367 = vpack.c.b16 %v6345, %v6343
    %v6368 = vpack.c.b16 %v6348, %v6346
    %v6369 = vpack.c.b16 %v6349, %v6347
    %v6370 = vpack.c.b16 %v6352, %v6350
    %v6371 = vpack.c.b16 %v6353, %v6351
    %v6372 = vpack.c.b16 %v6356, %v6354
    %v6373 = vpack.c.b16 %v6357, %v6355
    %6390 = vmatprep.subr.bf16.mxu0 %v6359
    %6391 = vmatpush1.bf16.msra.mxu0 %v6358
    %6392 = vmatprep.subr.bf16.mxu0 %v6361
    %6393 = vmatpush1.bf16.msra.mxu0 %v6360
    %6394 = vmatprep.subr.bf16.mxu0 %v6363
    %6395 = vmatpush1.bf16.msra.mxu0 %v6362
    %6396 = vmatprep.subr.bf16.mxu0 %v6365
    %6397 = vmatpush1.bf16.msra.mxu0 %v6364
    %6398 = vmatprep.subr.bf16.mxu0 %v6367
    %6399 = vmatpush1.bf16.msra.mxu0 %v6366
    %6400 = vmatprep.subr.bf16.mxu0 %v6369
    %6401 = vmatpush1.bf16.msra.mxu0 %v6368
    %6402 = vmatprep.subr.bf16.mxu0 %v6371
    %6403 = vmatpush1.bf16.msra.mxu0 %v6370
    %6404 = vmatprep.subr.bf16.mxu0 %v6373
    %6405 = vmatpush1.bf16.msra.mxu0 %v6372
    %6406 = vmatprep.subr.bf16.mxu0 0
    %6407 = vmatpush1.bf16.msra.mxu0 0
    %6408 = vmatprep.subr.bf16.mxu0 0
    %6409 = vmatpush1.bf16.msra.mxu0 0
    %6410 = vmatprep.subr.bf16.mxu0 0
    %6411 = vmatpush1.bf16.msra.mxu0 0
    %6412 = vmatprep.subr.bf16.mxu0 0
    %6413 = vmatpush1.bf16.msra.mxu0 0
    %6414 = vmatprep.subr.bf16.mxu0 0
    %6415 = vmatpush1.bf16.msra.mxu0 0
    %6416 = vmatprep.subr.bf16.mxu0 0
    %6417 = vmatpush1.bf16.msra.mxu0 0
    %6418 = vmatprep.subr.bf16.mxu0 0
    %6419 = vmatpush1.bf16.msra.mxu0 0
    %6420 = vmatprep.subr.bf16.mxu0 0
    %6421 = vmatpush1.bf16.msra.mxu0 0
    %6422 = vmatprep.mubr.bf16.mxu0 0
    %6423 = vmatmul.mubr.bf16.gmra.mrb[0].mxu0 %v6292
    %v6424 = vpop.f32.mrb[0].mxu0
    %v6425 = vadd.f32 0.0, %v6424
    %v6426 = vpop.f32.mrb[0].mxu0
    %v6427 = vadd.f32 0.0, %v6426
    %v6428 = vpop.f32.mrb[0].mxu0
    %v6429 = vpop.f32.mrb[0].mxu0
    %6430 = vdwg.mxu0
    %v6431 = vadd.f32 %v6288, %v6425
    %v6432 = vadd.f32 %v6289, %v6427
    %s6433 = scalar_lea.vmem [#allocation3], 4
    %v6434 = vld [vmem:[%s6433] ss:$20 sm:$0x3]
    %v6435 = vpack.c.bf16 %v6434, %v6434
    %s6436 = scalar_lea.vmem [#allocation12], 512
    %v6437 = vld [vmem:[%s6436] sm:$0xff]
    %v6438 = vld [vmem:[%s6436 + $0x8] sm:$0xff]
    %v6439 = vld [vmem:[%s6436 + $0x10] sm:$0xff]
    %v6440 = vld [vmem:[%s6436 + $0x18] sm:$0xff]
    %v6441 = vld [vmem:[%s6436 + $0x20] sm:$0xff]
    %v6442 = vld [vmem:[%s6436 + $0x28] sm:$0xff]
    %v6443 = vld [vmem:[%s6436 + $0x30] sm:$0xff]
    %v6444 = vld [vmem:[%s6436 + $0x38] sm:$0xff]
    %v6445 = vld [vmem:[%s6436 + $0x40] sm:$0xff]
    %v6446 = vld [vmem:[%s6436 + $0x48] sm:$0xff]
    %v6447 = vld [vmem:[%s6436 + $0x50] sm:$0xff]
    %v6448 = vld [vmem:[%s6436 + $0x58] sm:$0xff]
    %v6449 = vld [vmem:[%s6436 + $0x60] sm:$0xff]
    %v6450 = vld [vmem:[%s6436 + $0x68] sm:$0xff]
    %v6451 = vld [vmem:[%s6436 + $0x70] sm:$0xff]
    %v6452 = vld [vmem:[%s6436 + $0x78] sm:$0xff]
    %v6469 = vunpack.c.l.b16 %v6437
    %v6470 = vunpack.c.h.b16 %v6437
    %v6471 = vunpack.c.l.b16 %v6438
    %v6472 = vunpack.c.h.b16 %v6438
    %v6473 = vunpack.c.l.b16 %v6439
    %v6474 = vunpack.c.h.b16 %v6439
    %v6475 = vunpack.c.l.b16 %v6440
    %v6476 = vunpack.c.h.b16 %v6440
    %v6477 = vunpack.c.l.b16 %v6441
    %v6478 = vunpack.c.h.b16 %v6441
    %v6479 = vunpack.c.l.b16 %v6442
    %v6480 = vunpack.c.h.b16 %v6442
    %v6481 = vunpack.c.l.b16 %v6443
    %v6482 = vunpack.c.h.b16 %v6443
    %v6483 = vunpack.c.l.b16 %v6444
    %v6484 = vunpack.c.h.b16 %v6444
    %v6485 = vunpack.c.l.b16 %v6445
    %v6486 = vunpack.c.h.b16 %v6445
    %v6487 = vunpack.c.l.b16 %v6446
    %v6488 = vunpack.c.h.b16 %v6446
    %v6489 = vunpack.c.l.b16 %v6447
    %v6490 = vunpack.c.h.b16 %v6447
    %v6491 = vunpack.c.l.b16 %v6448
    %v6492 = vunpack.c.h.b16 %v6448
    %v6493 = vunpack.c.l.b16 %v6449
    %v6494 = vunpack.c.h.b16 %v6449
    %v6495 = vunpack.c.l.b16 %v6450
    %v6496 = vunpack.c.h.b16 %v6450
    %v6497 = vunpack.c.l.b16 %v6451
    %v6498 = vunpack.c.h.b16 %v6451
    %v6499 = vunpack.c.l.b16 %v6452
    %v6500 = vunpack.c.h.b16 %v6452
    %v6501 = vpack.c.b16 %v6471, %v6469
    %v6502 = vpack.c.b16 %v6472, %v6470
    %v6503 = vpack.c.b16 %v6475, %v6473
    %v6504 = vpack.c.b16 %v6476, %v6474
    %v6505 = vpack.c.b16 %v6479, %v6477
    %v6506 = vpack.c.b16 %v6480, %v6478
    %v6507 = vpack.c.b16 %v6483, %v6481
    %v6508 = vpack.c.b16 %v6484, %v6482
    %v6509 = vpack.c.b16 %v6487, %v6485
    %v6510 = vpack.c.b16 %v6488, %v6486
    %v6511 = vpack.c.b16 %v6491, %v6489
    %v6512 = vpack.c.b16 %v6492, %v6490
    %v6513 = vpack.c.b16 %v6495, %v6493
    %v6514 = vpack.c.b16 %v6496, %v6494
    %v6515 = vpack.c.b16 %v6499, %v6497
    %v6516 = vpack.c.b16 %v6500, %v6498
    %6533 = vmatprep.subr.bf16.mxu0 %v6502
    %6534 = vmatpush1.bf16.msra.mxu0 %v6501
    %6535 = vmatprep.subr.bf16.mxu0 %v6504
    %6536 = vmatpush1.bf16.msra.mxu0 %v6503
    %6537 = vmatprep.subr.bf16.mxu0 %v6506
    %6538 = vmatpush1.bf16.msra.mxu0 %v6505
    %6539 = vmatprep.subr.bf16.mxu0 %v6508
    %6540 = vmatpush1.bf16.msra.mxu0 %v6507
    %6541 = vmatprep.subr.bf16.mxu0 %v6510
    %6542 = vmatpush1.bf16.msra.mxu0 %v6509
    %6543 = vmatprep.subr.bf16.mxu0 %v6512
    %6544 = vmatpush1.bf16.msra.mxu0 %v6511
    %6545 = vmatprep.subr.bf16.mxu0 %v6514
    %6546 = vmatpush1.bf16.msra.mxu0 %v6513
    %6547 = vmatprep.subr.bf16.mxu0 %v6516
    %6548 = vmatpush1.bf16.msra.mxu0 %v6515
    %6549 = vmatprep.subr.bf16.mxu0 0
    %6550 = vmatpush1.bf16.msra.mxu0 0
    %6551 = vmatprep.subr.bf16.mxu0 0
    %6552 = vmatpush1.bf16.msra.mxu0 0
    %6553 = vmatprep.subr.bf16.mxu0 0
    %6554 = vmatpush1.bf16.msra.mxu0 0
    %6555 = vmatprep.subr.bf16.mxu0 0
    %6556 = vmatpush1.bf16.msra.mxu0 0
    %6557 = vmatprep.subr.bf16.mxu0 0
    %6558 = vmatpush1.bf16.msra.mxu0 0
    %6559 = vmatprep.subr.bf16.mxu0 0
    %6560 = vmatpush1.bf16.msra.mxu0 0
    %6561 = vmatprep.subr.bf16.mxu0 0
    %6562 = vmatpush1.bf16.msra.mxu0 0
    %6563 = vmatprep.subr.bf16.mxu0 0
    %6564 = vmatpush1.bf16.msra.mxu0 0
    %6565 = vmatprep.mubr.bf16.mxu0 0
    %6566 = vmatmul.mubr.bf16.gmra.mrb[0].mxu0 %v6435
    %v6567 = vpop.f32.mrb[0].mxu0
    %v6568 = vadd.f32 0.0, %v6567
    %v6569 = vpop.f32.mrb[0].mxu0
    %v6570 = vadd.f32 0.0, %v6569
    %v6571 = vpop.f32.mrb[0].mxu0
    %v6572 = vpop.f32.mrb[0].mxu0
    %6573 = vdwg.mxu0
    %v6574 = vadd.f32 %v6431, %v6568
    %v6575 = vadd.f32 %v6432, %v6570
    %s6576 = scalar_lea.vmem [#allocation3], 5
    %v6577 = vld [vmem:[%s6576] ss:$20 sm:$0x3]
    %v6578 = vpack.c.bf16 %v6577, %v6577
    %s6579 = scalar_lea.vmem [#allocation12], 640
    %v6580 = vld [vmem:[%s6579] sm:$0xff]
    %v6581 = vld [vmem:[%s6579 + $0x8] sm:$0xff]
    %v6582 = vld [vmem:[%s6579 + $0x10] sm:$0xff]
    %v6583 = vld [vmem:[%s6579 + $0x18] sm:$0xff]
    %v6584 = vld [vmem:[%s6579 + $0x20] sm:$0xff]
    %v6585 = vld [vmem:[%s6579 + $0x28] sm:$0xff]
    %v6586 = vld [vmem:[%s6579 + $0x30] sm:$0xff]
    %v6587 = vld [vmem:[%s6579 + $0x38] sm:$0xff]
    %v6588 = vld [vmem:[%s6579 + $0x40] sm:$0xff]
    %v6589 = vld [vmem:[%s6579 + $0x48] sm:$0xff]
    %v6590 = vld [vmem:[%s6579 + $0x50] sm:$0xff]
    %v6591 = vld [vmem:[%s6579 + $0x58] sm:$0xff]
    %v6592 = vld [vmem:[%s6579 + $0x60] sm:$0xff]
    %v6593 = vld [vmem:[%s6579 + $0x68] sm:$0xff]
    %v6594 = vld [vmem:[%s6579 + $0x70] sm:$0xff]
    %v6595 = vld [vmem:[%s6579 + $0x78] sm:$0xff]
    %v6612 = vunpack.c.l.b16 %v6580
    %v6613 = vunpack.c.h.b16 %v6580
    %v6614 = vunpack.c.l.b16 %v6581
    %v6615 = vunpack.c.h.b16 %v6581
    %v6616 = vunpack.c.l.b16 %v6582
    %v6617 = vunpack.c.h.b16 %v6582
    %v6618 = vunpack.c.l.b16 %v6583
    %v6619 = vunpack.c.h.b16 %v6583
    %v6620 = vunpack.c.l.b16 %v6584
    %v6621 = vunpack.c.h.b16 %v6584
    %v6622 = vunpack.c.l.b16 %v6585
    %v6623 = vunpack.c.h.b16 %v6585
    %v6624 = vunpack.c.l.b16 %v6586
    %v6625 = vunpack.c.h.b16 %v6586
    %v6626 = vunpack.c.l.b16 %v6587
    %v6627 = vunpack.c.h.b16 %v6587
    %v6628 = vunpack.c.l.b16 %v6588
    %v6629 = vunpack.c.h.b16 %v6588
    %v6630 = vunpack.c.l.b16 %v6589
    %v6631 = vunpack.c.h.b16 %v6589
    %v6632 = vunpack.c.l.b16 %v6590
    %v6633 = vunpack.c.h.b16 %v6590
    %v6634 = vunpack.c.l.b16 %v6591
    %v6635 = vunpack.c.h.b16 %v6591
    %v6636 = vunpack.c.l.b16 %v6592
    %v6637 = vunpack.c.h.b16 %v6592
    %v6638 = vunpack.c.l.b16 %v6593
    %v6639 = vunpack.c.h.b16 %v6593
    %v6640 = vunpack.c.l.b16 %v6594
    %v6641 = vunpack.c.h.b16 %v6594
    %v6642 = vunpack.c.l.b16 %v6595
    %v6643 = vunpack.c.h.b16 %v6595
    %v6644 = vpack.c.b16 %v6614, %v6612
    %v6645 = vpack.c.b16 %v6615, %v6613
    %v6646 = vpack.c.b16 %v6618, %v6616
    %v6647 = vpack.c.b16 %v6619, %v6617
    %v6648 = vpack.c.b16 %v6622, %v6620
    %v6649 = vpack.c.b16 %v6623, %v6621
    %v6650 = vpack.c.b16 %v6626, %v6624
    %v6651 = vpack.c.b16 %v6627, %v6625
    %v6652 = vpack.c.b16 %v6630, %v6628
    %v6653 = vpack.c.b16 %v6631, %v6629
    %v6654 = vpack.c.b16 %v6634, %v6632
    %v6655 = vpack.c.b16 %v6635, %v6633
    %v6656 = vpack.c.b16 %v6638, %v6636
    %v6657 = vpack.c.b16 %v6639, %v6637
    %v6658 = vpack.c.b16 %v6642, %v6640
    %v6659 = vpack.c.b16 %v6643, %v6641
    %6676 = vmatprep.subr.bf16.mxu0 %v6645
    %6677 = vmatpush1.bf16.msra.mxu0 %v6644
    %6678 = vmatprep.subr.bf16.mxu0 %v6647
    %6679 = vmatpush1.bf16.msra.mxu0 %v6646
    %6680 = vmatprep.subr.bf16.mxu0 %v6649
    %6681 = vmatpush1.bf16.msra.mxu0 %v6648
    %6682 = vmatprep.subr.bf16.mxu0 %v6651
    %6683 = vmatpush1.bf16.msra.mxu0 %v6650
    %6684 = vmatprep.subr.bf16.mxu0 %v6653
    %6685 = vmatpush1.bf16.msra.mxu0 %v6652
    %6686 = vmatprep.subr.bf16.mxu0 %v6655
    %6687 = vmatpush1.bf16.msra.mxu0 %v6654
    %6688 = vmatprep.subr.bf16.mxu0 %v6657
    %6689 = vmatpush1.bf16.msra.mxu0 %v6656
    %6690 = vmatprep.subr.bf16.mxu0 %v6659
    %6691 = vmatpush1.bf16.msra.mxu0 %v6658
    %6692 = vmatprep.subr.bf16.mxu0 0
    %6693 = vmatpush1.bf16.msra.mxu0 0
    %6694 = vmatprep.subr.bf16.mxu0 0
    %6695 = vmatpush1.bf16.msra.mxu0 0
    %6696 = vmatprep.subr.bf16.mxu0 0
    %6697 = vmatpush1.bf16.msra.mxu0 0
    %6698 = vmatprep.subr.bf16.mxu0 0
    %6699 = vmatpush1.bf16.msra.mxu0 0
    %6700 = vmatprep.subr.bf16.mxu0 0
    %6701 = vmatpush1.bf16.msra.mxu0 0
    %6702 = vmatprep.subr.bf16.mxu0 0
    %6703 = vmatpush1.bf16.msra.mxu0 0
    %6704 = vmatprep.subr.bf16.mxu0 0
    %6705 = vmatpush1.bf16.msra.mxu0 0
    %6706 = vmatprep.subr.bf16.mxu0 0
    %6707 = vmatpush1.bf16.msra.mxu0 0
    %6708 = vmatprep.mubr.bf16.mxu0 0
    %6709 = vmatmul.mubr.bf16.gmra.mrb[0].mxu0 %v6578
    %v6710 = vpop.f32.mrb[0].mxu0
    %v6711 = vadd.f32 0.0, %v6710
    %v6712 = vpop.f32.mrb[0].mxu0
    %v6713 = vadd.f32 0.0, %v6712
    %v6714 = vpop.f32.mrb[0].mxu0
    %v6715 = vpop.f32.mrb[0].mxu0
    %6716 = vdwg.mxu0
    %v6717 = vadd.f32 %v6574, %v6711
    %v6718 = vadd.f32 %v6575, %v6713
    %s6719 = scalar_lea.vmem [#allocation3], 6
    %v6720 = vld [vmem:[%s6719] ss:$20 sm:$0x3]
    %v6721 = vpack.c.bf16 %v6720, %v6720
    %s6722 = scalar_lea.vmem [#allocation12], 768
    %v6723 = vld [vmem:[%s6722] sm:$0xff]
    %v6724 = vld [vmem:[%s6722 + $0x8] sm:$0xff]
    %v6725 = vld [vmem:[%s6722 + $0x10] sm:$0xff]
    %v6726 = vld [vmem:[%s6722 + $0x18] sm:$0xff]
    %v6727 = vld [vmem:[%s6722 + $0x20] sm:$0xff]
    %v6728 = vld [vmem:[%s6722 + $0x28] sm:$0xff]
    %v6729 = vld [vmem:[%s6722 + $0x30] sm:$0xff]
    %v6730 = vld [vmem:[%s6722 + $0x38] sm:$0xff]
    %v6731 = vld [vmem:[%s6722 + $0x40] sm:$0xff]
    %v6732 = vld [vmem:[%s6722 + $0x48] sm:$0xff]
    %v6733 = vld [vmem:[%s6722 + $0x50] sm:$0xff]
    %v6734 = vld [vmem:[%s6722 + $0x58] sm:$0xff]
    %v6735 = vld [vmem:[%s6722 + $0x60] sm:$0xff]
    %v6736 = vld [vmem:[%s6722 + $0x68] sm:$0xff]
    %v6737 = vld [vmem:[%s6722 + $0x70] sm:$0xff]
    %v6738 = vld [vmem:[%s6722 + $0x78] sm:$0xff]
    %v6755 = vunpack.c.l.b16 %v6723
    %v6756 = vunpack.c.h.b16 %v6723
    %v6757 = vunpack.c.l.b16 %v6724
    %v6758 = vunpack.c.h.b16 %v6724
    %v6759 = vunpack.c.l.b16 %v6725
    %v6760 = vunpack.c.h.b16 %v6725
    %v6761 = vunpack.c.l.b16 %v6726
    %v6762 = vunpack.c.h.b16 %v6726
    %v6763 = vunpack.c.l.b16 %v6727
    %v6764 = vunpack.c.h.b16 %v6727
    %v6765 = vunpack.c.l.b16 %v6728
    %v6766 = vunpack.c.h.b16 %v6728
    %v6767 = vunpack.c.l.b16 %v6729
    %v6768 = vunpack.c.h.b16 %v6729
    %v6769 = vunpack.c.l.b16 %v6730
    %v6770 = vunpack.c.h.b16 %v6730
    %v6771 = vunpack.c.l.b16 %v6731
    %v6772 = vunpack.c.h.b16 %v6731
    %v6773 = vunpack.c.l.b16 %v6732
    %v6774 = vunpack.c.h.b16 %v6732
    %v6775 = vunpack.c.l.b16 %v6733
    %v6776 = vunpack.c.h.b16 %v6733
    %v6777 = vunpack.c.l.b16 %v6734
    %v6778 = vunpack.c.h.b16 %v6734
    %v6779 = vunpack.c.l.b16 %v6735
    %v6780 = vunpack.c.h.b16 %v6735
    %v6781 = vunpack.c.l.b16 %v6736
    %v6782 = vunpack.c.h.b16 %v6736
    %v6783 = vunpack.c.l.b16 %v6737
    %v6784 = vunpack.c.h.b16 %v6737
    %v6785 = vunpack.c.l.b16 %v6738
    %v6786 = vunpack.c.h.b16 %v6738
    %v6787 = vpack.c.b16 %v6757, %v6755
    %v6788 = vpack.c.b16 %v6758, %v6756
    %v6789 = vpack.c.b16 %v6761, %v6759
    %v6790 = vpack.c.b16 %v6762, %v6760
    %v6791 = vpack.c.b16 %v6765, %v6763
    %v6792 = vpack.c.b16 %v6766, %v6764
    %v6793 = vpack.c.b16 %v6769, %v6767
    %v6794 = vpack.c.b16 %v6770, %v6768
    %v6795 = vpack.c.b16 %v6773, %v6771
    %v6796 = vpack.c.b16 %v6774, %v6772
    %v6797 = vpack.c.b16 %v6777, %v6775
    %v6798 = vpack.c.b16 %v6778, %v6776
    %v6799 = vpack.c.b16 %v6781, %v6779
    %v6800 = vpack.c.b16 %v6782, %v6780
    %v6801 = vpack.c.b16 %v6785, %v6783
    %v6802 = vpack.c.b16 %v6786, %v6784
    %6819 = vmatprep.subr.bf16.mxu0 %v6788
    %6820 = vmatpush1.bf16.msra.mxu0 %v6787
    %6821 = vmatprep.subr.bf16.mxu0 %v6790
    %6822 = vmatpush1.bf16.msra.mxu0 %v6789
    %6823 = vmatprep.subr.bf16.mxu0 %v6792
    %6824 = vmatpush1.bf16.msra.mxu0 %v6791
    %6825 = vmatprep.subr.bf16.mxu0 %v6794
    %6826 = vmatpush1.bf16.msra.mxu0 %v6793
    %6827 = vmatprep.subr.bf16.mxu0 %v6796
    %6828 = vmatpush1.bf16.msra.mxu0 %v6795
    %6829 = vmatprep.subr.bf16.mxu0 %v6798
    %6830 = vmatpush1.bf16.msra.mxu0 %v6797
    %6831 = vmatprep.subr.bf16.mxu0 %v6800
    %6832 = vmatpush1.bf16.msra.mxu0 %v6799
    %6833 = vmatprep.subr.bf16.mxu0 %v6802
    %6834 = vmatpush1.bf16.msra.mxu0 %v6801
    %6835 = vmatprep.subr.bf16.mxu0 0
    %6836 = vmatpush1.bf16.msra.mxu0 0
    %6837 = vmatprep.subr.bf16.mxu0 0
    %6838 = vmatpush1.bf16.msra.mxu0 0
    %6839 = vmatprep.subr.bf16.mxu0 0
    %6840 = vmatpush1.bf16.msra.mxu0 0
    %6841 = vmatprep.subr.bf16.mxu0 0
    %6842 = vmatpush1.bf16.msra.mxu0 0
    %6843 = vmatprep.subr.bf16.mxu0 0
    %6844 = vmatpush1.bf16.msra.mxu0 0
    %6845 = vmatprep.subr.bf16.mxu0 0
    %6846 = vmatpush1.bf16.msra.mxu0 0
    %6847 = vmatprep.subr.bf16.mxu0 0
    %6848 = vmatpush1.bf16.msra.mxu0 0
    %6849 = vmatprep.subr.bf16.mxu0 0
    %6850 = vmatpush1.bf16.msra.mxu0 0
    %6851 = vmatprep.mubr.bf16.mxu0 0
    %6852 = vmatmul.mubr.bf16.gmra.mrb[0].mxu0 %v6721
    %v6853 = vpop.f32.mrb[0].mxu0
    %v6854 = vadd.f32 0.0, %v6853
    %v6855 = vpop.f32.mrb[0].mxu0
    %v6856 = vadd.f32 0.0, %v6855
    %v6857 = vpop.f32.mrb[0].mxu0
    %v6858 = vpop.f32.mrb[0].mxu0
    %6859 = vdwg.mxu0
    %v6860 = vadd.f32 %v6717, %v6854
    %v6861 = vadd.f32 %v6718, %v6856
    %s6862 = scalar_lea.vmem [#allocation3], 7
    %v6863 = vld [vmem:[%s6862] ss:$20 sm:$0x3]
    %v6864 = vpack.c.bf16 %v6863, %v6863
    %s6865 = scalar_lea.vmem [#allocation12], 896
    %v6866 = vld [vmem:[%s6865] sm:$0xff]
    %v6867 = vld [vmem:[%s6865 + $0x8] sm:$0xff]
    %v6868 = vld [vmem:[%s6865 + $0x10] sm:$0xff]
    %v6869 = vld [vmem:[%s6865 + $0x18] sm:$0xff]
    %v6870 = vld [vmem:[%s6865 + $0x20] sm:$0xff]
    %v6871 = vld [vmem:[%s6865 + $0x28] sm:$0xff]
    %v6872 = vld [vmem:[%s6865 + $0x30] sm:$0xff]
    %v6873 = vld [vmem:[%s6865 + $0x38] sm:$0xff]
    %v6874 = vld [vmem:[%s6865 + $0x40] sm:$0xff]
    %v6875 = vld [vmem:[%s6865 + $0x48] sm:$0xff]
    %v6876 = vld [vmem:[%s6865 + $0x50] sm:$0xff]
    %v6877 = vld [vmem:[%s6865 + $0x58] sm:$0xff]
    %v6878 = vld [vmem:[%s6865 + $0x60] sm:$0xff]
    %v6879 = vld [vmem:[%s6865 + $0x68] sm:$0xff]
    %v6880 = vld [vmem:[%s6865 + $0x70] sm:$0xff]
    %v6881 = vld [vmem:[%s6865 + $0x78] sm:$0xff]
    %v6898 = vunpack.c.l.b16 %v6866
    %v6899 = vunpack.c.h.b16 %v6866
    %v6900 = vunpack.c.l.b16 %v6867
    %v6901 = vunpack.c.h.b16 %v6867
    %v6902 = vunpack.c.l.b16 %v6868
    %v6903 = vunpack.c.h.b16 %v6868
    %v6904 = vunpack.c.l.b16 %v6869
    %v6905 = vunpack.c.h.b16 %v6869
    %v6906 = vunpack.c.l.b16 %v6870
    %v6907 = vunpack.c.h.b16 %v6870
    %v6908 = vunpack.c.l.b16 %v6871
    %v6909 = vunpack.c.h.b16 %v6871
    %v6910 = vunpack.c.l.b16 %v6872
    %v6911 = vunpack.c.h.b16 %v6872
    %v6912 = vunpack.c.l.b16 %v6873
    %v6913 = vunpack.c.h.b16 %v6873
    %v6914 = vunpack.c.l.b16 %v6874
    %v6915 = vunpack.c.h.b16 %v6874
    %v6916 = vunpack.c.l.b16 %v6875
    %v6917 = vunpack.c.h.b16 %v6875
    %v6918 = vunpack.c.l.b16 %v6876
    %v6919 = vunpack.c.h.b16 %v6876
    %v6920 = vunpack.c.l.b16 %v6877
    %v6921 = vunpack.c.h.b16 %v6877
    %v6922 = vunpack.c.l.b16 %v6878
    %v6923 = vunpack.c.h.b16 %v6878
    %v6924 = vunpack.c.l.b16 %v6879
    %v6925 = vunpack.c.h.b16 %v6879
    %v6926 = vunpack.c.l.b16 %v6880
    %v6927 = vunpack.c.h.b16 %v6880
    %v6928 = vunpack.c.l.b16 %v6881
    %v6929 = vunpack.c.h.b16 %v6881
    %v6930 = vpack.c.b16 %v6900, %v6898
    %v6931 = vpack.c.b16 %v6901, %v6899
    %v6932 = vpack.c.b16 %v6904, %v6902
    %v6933 = vpack.c.b16 %v6905, %v6903
    %v6934 = vpack.c.b16 %v6908, %v6906
    %v6935 = vpack.c.b16 %v6909, %v6907
    %v6936 = vpack.c.b16 %v6912, %v6910
    %v6937 = vpack.c.b16 %v6913, %v6911
    %v6938 = vpack.c.b16 %v6916, %v6914
    %v6939 = vpack.c.b16 %v6917, %v6915
    %v6940 = vpack.c.b16 %v6920, %v6918
    %v6941 = vpack.c.b16 %v6921, %v6919
    %v6942 = vpack.c.b16 %v6924, %v6922
    %v6943 = vpack.c.b16 %v6925, %v6923
    %v6944 = vpack.c.b16 %v6928, %v6926
    %v6945 = vpack.c.b16 %v6929, %v6927
    %6962 = vmatprep.subr.bf16.mxu0 %v6931
    %6963 = vmatpush1.bf16.msra.mxu0 %v6930
    %6964 = vmatprep.subr.bf16.mxu0 %v6933
    %6965 = vmatpush1.bf16.msra.mxu0 %v6932
    %6966 = vmatprep.subr.bf16.mxu0 %v6935
    %6967 = vmatpush1.bf16.msra.mxu0 %v6934
    %6968 = vmatprep.subr.bf16.mxu0 %v6937
    %6969 = vmatpush1.bf16.msra.mxu0 %v6936
    %6970 = vmatprep.subr.bf16.mxu0 %v6939
    %6971 = vmatpush1.bf16.msra.mxu0 %v6938
    %6972 = vmatprep.subr.bf16.mxu0 %v6941
    %6973 = vmatpush1.bf16.msra.mxu0 %v6940
    %6974 = vmatprep.subr.bf16.mxu0 %v6943
    %6975 = vmatpush1.bf16.msra.mxu0 %v6942
    %6976 = vmatprep.subr.bf16.mxu0 %v6945
    %6977 = vmatpush1.bf16.msra.mxu0 %v6944
    %6978 = vmatprep.subr.bf16.mxu0 0
    %6979 = vmatpush1.bf16.msra.mxu0 0
    %6980 = vmatprep.subr.bf16.mxu0 0
    %6981 = vmatpush1.bf16.msra.mxu0 0
    %6982 = vmatprep.subr.bf16.mxu0 0
    %6983 = vmatpush1.bf16.msra.mxu0 0
    %6984 = vmatprep.subr.bf16.mxu0 0
    %6985 = vmatpush1.bf16.msra.mxu0 0
    %6986 = vmatprep.subr.bf16.mxu0 0
    %6987 = vmatpush1.bf16.msra.mxu0 0
    %6988 = vmatprep.subr.bf16.mxu0 0
    %6989 = vmatpush1.bf16.msra.mxu0 0
    %6990 = vmatprep.subr.bf16.mxu0 0
    %6991 = vmatpush1.bf16.msra.mxu0 0
    %6992 = vmatprep.subr.bf16.mxu0 0
    %6993 = vmatpush1.bf16.msra.mxu0 0
    %6994 = vmatprep.mubr.bf16.mxu0 0
    %6995 = vmatmul.mubr.bf16.gmra.mrb[0].mxu0 %v6864
    %v6996 = vpop.f32.mrb[0].mxu0
    %v6997 = vadd.f32 0.0, %v6996
    %v6998 = vpop.f32.mrb[0].mxu0
    %v6999 = vadd.f32 0.0, %v6998
    %v7000 = vpop.f32.mrb[0].mxu0
    %v7001 = vpop.f32.mrb[0].mxu0
    %7002 = vdwg.mxu0
    %v7003 = vadd.f32 %v6860, %v6997
    %v7004 = vadd.f32 %v6861, %v6999
    %s7005 = scalar_lea.vmem [#allocation3], 8
    %v7006 = vld [vmem:[%s7005] ss:$20 sm:$0x3]
    %v7007 = vpack.c.bf16 %v7006, %v7006
    %s7008 = scalar_lea.vmem [#allocation12], 1024
    %v7009 = vld [vmem:[%s7008] sm:$0xff]
    %v7010 = vld [vmem:[%s7008 + $0x8] sm:$0xff]
    %v7011 = vld [vmem:[%s7008 + $0x10] sm:$0xff]
    %v7012 = vld [vmem:[%s7008 + $0x18] sm:$0xff]
    %v7013 = vld [vmem:[%s7008 + $0x20] sm:$0xff]
    %v7014 = vld [vmem:[%s7008 + $0x28] sm:$0xff]
    %v7015 = vld [vmem:[%s7008 + $0x30] sm:$0xff]
    %v7016 = vld [vmem:[%s7008 + $0x38] sm:$0xff]
    %v7017 = vld [vmem:[%s7008 + $0x40] sm:$0xff]
    %v7018 = vld [vmem:[%s7008 + $0x48] sm:$0xff]
    %v7019 = vld [vmem:[%s7008 + $0x50] sm:$0xff]
    %v7020 = vld [vmem:[%s7008 + $0x58] sm:$0xff]
    %v7021 = vld [vmem:[%s7008 + $0x60] sm:$0xff]
    %v7022 = vld [vmem:[%s7008 + $0x68] sm:$0xff]
    %v7023 = vld [vmem:[%s7008 + $0x70] sm:$0xff]
    %v7024 = vld [vmem:[%s7008 + $0x78] sm:$0xff]
    %v7041 = vunpack.c.l.b16 %v7009
    %v7042 = vunpack.c.h.b16 %v7009
    %v7043 = vunpack.c.l.b16 %v7010
    %v7044 = vunpack.c.h.b16 %v7010
    %v7045 = vunpack.c.l.b16 %v7011
    %v7046 = vunpack.c.h.b16 %v7011
    %v7047 = vunpack.c.l.b16 %v7012
    %v7048 = vunpack.c.h.b16 %v7012
    %v7049 = vunpack.c.l.b16 %v7013
    %v7050 = vunpack.c.h.b16 %v7013
    %v7051 = vunpack.c.l.b16 %v7014
    %v7052 = vunpack.c.h.b16 %v7014
    %v7053 = vunpack.c.l.b16 %v7015
    %v7054 = vunpack.c.h.b16 %v7015
    %v7055 = vunpack.c.l.b16 %v7016
    %v7056 = vunpack.c.h.b16 %v7016
    %v7057 = vunpack.c.l.b16 %v7017
    %v7058 = vunpack.c.h.b16 %v7017
    %v7059 = vunpack.c.l.b16 %v7018
    %v7060 = vunpack.c.h.b16 %v7018
    %v7061 = vunpack.c.l.b16 %v7019
    %v7062 = vunpack.c.h.b16 %v7019
    %v7063 = vunpack.c.l.b16 %v7020
    %v7064 = vunpack.c.h.b16 %v7020
    %v7065 = vunpack.c.l.b16 %v7021
    %v7066 = vunpack.c.h.b16 %v7021
    %v7067 = vunpack.c.l.b16 %v7022
    %v7068 = vunpack.c.h.b16 %v7022
    %v7069 = vunpack.c.l.b16 %v7023
    %v7070 = vunpack.c.h.b16 %v7023
    %v7071 = vunpack.c.l.b16 %v7024
    %v7072 = vunpack.c.h.b16 %v7024
    %v7073 = vpack.c.b16 %v7043, %v7041
    %v7074 = vpack.c.b16 %v7044, %v7042
    %v7075 = vpack.c.b16 %v7047, %v7045
    %v7076 = vpack.c.b16 %v7048, %v7046
    %v7077 = vpack.c.b16 %v7051, %v7049
    %v7078 = vpack.c.b16 %v7052, %v7050
    %v7079 = vpack.c.b16 %v7055, %v7053
    %v7080 = vpack.c.b16 %v7056, %v7054
    %v7081 = vpack.c.b16 %v7059, %v7057
    %v7082 = vpack.c.b16 %v7060, %v7058
    %v7083 = vpack.c.b16 %v7063, %v7061
    %v7084 = vpack.c.b16 %v7064, %v7062
    %v7085 = vpack.c.b16 %v7067, %v7065
    %v7086 = vpack.c.b16 %v7068, %v7066
    %v7087 = vpack.c.b16 %v7071, %v7069
    %v7088 = vpack.c.b16 %v7072, %v7070
    %7105 = vmatprep.subr.bf16.mxu0 %v7074
    %7106 = vmatpush1.bf16.msra.mxu0 %v7073
    %7107 = vmatprep.subr.bf16.mxu0 %v7076
    %7108 = vmatpush1.bf16.msra.mxu0 %v7075
    %7109 = vmatprep.subr.bf16.mxu0 %v7078
    %7110 = vmatpush1.bf16.msra.mxu0 %v7077
    %7111 = vmatprep.subr.bf16.mxu0 %v7080
    %7112 = vmatpush1.bf16.msra.mxu0 %v7079
    %7113 = vmatprep.subr.bf16.mxu0 %v7082
    %7114 = vmatpush1.bf16.msra.mxu0 %v7081
    %7115 = vmatprep.subr.bf16.mxu0 %v7084
    %7116 = vmatpush1.bf16.msra.mxu0 %v7083
    %7117 = vmatprep.subr.bf16.mxu0 %v7086
    %7118 = vmatpush1.bf16.msra.mxu0 %v7085
    %7119 = vmatprep.subr.bf16.mxu0 %v7088
    %7120 = vmatpush1.bf16.msra.mxu0 %v7087
    %7121 = vmatprep.subr.bf16.mxu0 0
    %7122 = vmatpush1.bf16.msra.mxu0 0
    %7123 = vmatprep.subr.bf16.mxu0 0
    %7124 = vmatpush1.bf16.msra.mxu0 0
    %7125 = vmatprep.subr.bf16.mxu0 0
    %7126 = vmatpush1.bf16.msra.mxu0 0
    %7127 = vmatprep.subr.bf16.mxu0 0
    %7128 = vmatpush1.bf16.msra.mxu0 0
    %7129 = vmatprep.subr.bf16.mxu0 0
    %7130 = vmatpush1.bf16.msra.mxu0 0
    %7131 = vmatprep.subr.bf16.mxu0 0
    %7132 = vmatpush1.bf16.msra.mxu0 0
    %7133 = vmatprep.subr.bf16.mxu0 0
    %7134 = vmatpush1.bf16.msra.mxu0 0
    %7135 = vmatprep.subr.bf16.mxu0 0
    %7136 = vmatpush1.bf16.msra.mxu0 0
    %7137 = vmatprep.mubr.bf16.mxu0 0
    %7138 = vmatmul.mubr.bf16.gmra.mrb[0].mxu0 %v7007
    %v7139 = vpop.f32.mrb[0].mxu0
    %v7140 = vadd.f32 0.0, %v7139
    %v7141 = vpop.f32.mrb[0].mxu0
    %v7142 = vadd.f32 0.0, %v7141
    %v7143 = vpop.f32.mrb[0].mxu0
    %v7144 = vpop.f32.mrb[0].mxu0
    %7145 = vdwg.mxu0
    %v7146 = vadd.f32 %v7003, %v7140
    %v7147 = vadd.f32 %v7004, %v7142
    %s7148 = scalar_lea.vmem [#allocation3], 9
    %v7149 = vld [vmem:[%s7148] ss:$20 sm:$0x3]
    %v7150 = vpack.c.bf16 %v7149, %v7149
    %s7151 = scalar_lea.vmem [#allocation12], 1152
    %v7152 = vld [vmem:[%s7151] sm:$0xff]
    %v7153 = vld [vmem:[%s7151 + $0x8] sm:$0xff]
    %v7154 = vld [vmem:[%s7151 + $0x10] sm:$0xff]
    %v7155 = vld [vmem:[%s7151 + $0x18] sm:$0xff]
    %v7156 = vld [vmem:[%s7151 + $0x20] sm:$0xff]
    %v7157 = vld [vmem:[%s7151 + $0x28] sm:$0xff]
    %v7158 = vld [vmem:[%s7151 + $0x30] sm:$0xff]
    %v7159 = vld [vmem:[%s7151 + $0x38] sm:$0xff]
    %v7160 = vld [vmem:[%s7151 + $0x40] sm:$0xff]
    %v7161 = vld [vmem:[%s7151 + $0x48] sm:$0xff]
    %v7162 = vld [vmem:[%s7151 + $0x50] sm:$0xff]
    %v7163 = vld [vmem:[%s7151 + $0x58] sm:$0xff]
    %v7164 = vld [vmem:[%s7151 + $0x60] sm:$0xff]
    %v7165 = vld [vmem:[%s7151 + $0x68] sm:$0xff]
    %v7166 = vld [vmem:[%s7151 + $0x70] sm:$0xff]
    %v7167 = vld [vmem:[%s7151 + $0x78] sm:$0xff]
    %v7184 = vunpack.c.l.b16 %v7152
    %v7185 = vunpack.c.h.b16 %v7152
    %v7186 = vunpack.c.l.b16 %v7153
    %v7187 = vunpack.c.h.b16 %v7153
    %v7188 = vunpack.c.l.b16 %v7154
    %v7189 = vunpack.c.h.b16 %v7154
    %v7190 = vunpack.c.l.b16 %v7155
    %v7191 = vunpack.c.h.b16 %v7155
    %v7192 = vunpack.c.l.b16 %v7156
    %v7193 = vunpack.c.h.b16 %v7156
    %v7194 = vunpack.c.l.b16 %v7157
    %v7195 = vunpack.c.h.b16 %v7157
    %v7196 = vunpack.c.l.b16 %v7158
    %v7197 = vunpack.c.h.b16 %v7158
    %v7198 = vunpack.c.l.b16 %v7159
    %v7199 = vunpack.c.h.b16 %v7159
    %v7200 = vunpack.c.l.b16 %v7160
    %v7201 = vunpack.c.h.b16 %v7160
    %v7202 = vunpack.c.l.b16 %v7161
    %v7203 = vunpack.c.h.b16 %v7161
    %v7204 = vunpack.c.l.b16 %v7162
    %v7205 = vunpack.c.h.b16 %v7162
    %v7206 = vunpack.c.l.b16 %v7163
    %v7207 = vunpack.c.h.b16 %v7163
    %v7208 = vunpack.c.l.b16 %v7164
    %v7209 = vunpack.c.h.b16 %v7164
    %v7210 = vunpack.c.l.b16 %v7165
    %v7211 = vunpack.c.h.b16 %v7165
    %v7212 = vunpack.c.l.b16 %v7166
    %v7213 = vunpack.c.h.b16 %v7166
    %v7214 = vunpack.c.l.b16 %v7167
    %v7215 = vunpack.c.h.b16 %v7167
    %v7216 = vpack.c.b16 %v7186, %v7184
    %v7217 = vpack.c.b16 %v7187, %v7185
    %v7218 = vpack.c.b16 %v7190, %v7188
    %v7219 = vpack.c.b16 %v7191, %v7189
    %v7220 = vpack.c.b16 %v7194, %v7192
    %v7221 = vpack.c.b16 %v7195, %v7193
    %v7222 = vpack.c.b16 %v7198, %v7196
    %v7223 = vpack.c.b16 %v7199, %v7197
    %v7224 = vpack.c.b16 %v7202, %v7200
    %v7225 = vpack.c.b16 %v7203, %v7201
    %v7226 = vpack.c.b16 %v7206, %v7204
    %v7227 = vpack.c.b16 %v7207, %v7205
    %v7228 = vpack.c.b16 %v7210, %v7208
    %v7229 = vpack.c.b16 %v7211, %v7209
    %v7230 = vpack.c.b16 %v7214, %v7212
    %v7231 = vpack.c.b16 %v7215, %v7213
    %7248 = vmatprep.subr.bf16.mxu0 %v7217
    %7249 = vmatpush1.bf16.msra.mxu0 %v7216
    %7250 = vmatprep.subr.bf16.mxu0 %v7219
    %7251 = vmatpush1.bf16.msra.mxu0 %v7218
    %7252 = vmatprep.subr.bf16.mxu0 %v7221
    %7253 = vmatpush1.bf16.msra.mxu0 %v7220
    %7254 = vmatprep.subr.bf16.mxu0 %v7223
    %7255 = vmatpush1.bf16.msra.mxu0 %v7222
    %7256 = vmatprep.subr.bf16.mxu0 %v7225
    %7257 = vmatpush1.bf16.msra.mxu0 %v7224
    %7258 = vmatprep.subr.bf16.mxu0 %v7227
    %7259 = vmatpush1.bf16.msra.mxu0 %v7226
    %7260 = vmatprep.subr.bf16.mxu0 %v7229
    %7261 = vmatpush1.bf16.msra.mxu0 %v7228
    %7262 = vmatprep.subr.bf16.mxu0 %v7231
    %7263 = vmatpush1.bf16.msra.mxu0 %v7230
    %7264 = vmatprep.subr.bf16.mxu0 0
    %7265 = vmatpush1.bf16.msra.mxu0 0
    %7266 = vmatprep.subr.bf16.mxu0 0
    %7267 = vmatpush1.bf16.msra.mxu0 0
    %7268 = vmatprep.subr.bf16.mxu0 0
    %7269 = vmatpush1.bf16.msra.mxu0 0
    %7270 = vmatprep.subr.bf16.mxu0 0
    %7271 = vmatpush1.bf16.msra.mxu0 0
    %7272 = vmatprep.subr.bf16.mxu0 0
    %7273 = vmatpush1.bf16.msra.mxu0 0
    %7274 = vmatprep.subr.bf16.mxu0 0
    %7275 = vmatpush1.bf16.msra.mxu0 0
    %7276 = vmatprep.subr.bf16.mxu0 0
    %7277 = vmatpush1.bf16.msra.mxu0 0
    %7278 = vmatprep.subr.bf16.mxu0 0
    %7279 = vmatpush1.bf16.msra.mxu0 0
    %7280 = vmatprep.mubr.bf16.mxu0 0
    %7281 = vmatmul.mubr.bf16.gmra.mrb[0].mxu0 %v7150
    %v7282 = vpop.f32.mrb[0].mxu0
    %v7283 = vadd.f32 0.0, %v7282
    %v7284 = vpop.f32.mrb[0].mxu0
    %v7285 = vadd.f32 0.0, %v7284
    %v7286 = vpop.f32.mrb[0].mxu0
    %v7287 = vpop.f32.mrb[0].mxu0
    %7288 = vdwg.mxu0
    %v7289 = vadd.f32 %v7146, %v7283
    %v7290 = vadd.f32 %v7147, %v7285
    %s7291 = scalar_lea.vmem [#allocation3], 10
    %v7292 = vld [vmem:[%s7291] ss:$20 sm:$0x3]
    %v7293 = vpack.c.bf16 %v7292, %v7292
    %s7294 = scalar_lea.vmem [#allocation12], 1280
    %v7295 = vld [vmem:[%s7294] sm:$0xff]
    %v7296 = vld [vmem:[%s7294 + $0x8] sm:$0xff]
    %v7297 = vld [vmem:[%s7294 + $0x10] sm:$0xff]
    %v7298 = vld [vmem:[%s7294 + $0x18] sm:$0xff]
    %v7299 = vld [vmem:[%s7294 + $0x20] sm:$0xff]
    %v7300 = vld [vmem:[%s7294 + $0x28] sm:$0xff]
    %v7301 = vld [vmem:[%s7294 + $0x30] sm:$0xff]
    %v7302 = vld [vmem:[%s7294 + $0x38] sm:$0xff]
    %v7303 = vld [vmem:[%s7294 + $0x40] sm:$0xff]
    %v7304 = vld [vmem:[%s7294 + $0x48] sm:$0xff]
    %v7305 = vld [vmem:[%s7294 + $0x50] sm:$0xff]
    %v7306 = vld [vmem:[%s7294 + $0x58] sm:$0xff]
    %v7307 = vld [vmem:[%s7294 + $0x60] sm:$0xff]
    %v7308 = vld [vmem:[%s7294 + $0x68] sm:$0xff]
    %v7309 = vld [vmem:[%s7294 + $0x70] sm:$0xff]
    %v7310 = vld [vmem:[%s7294 + $0x78] sm:$0xff]
    %v7327 = vunpack.c.l.b16 %v7295
    %v7328 = vunpack.c.h.b16 %v7295
    %v7329 = vunpack.c.l.b16 %v7296
    %v7330 = vunpack.c.h.b16 %v7296
    %v7331 = vunpack.c.l.b16 %v7297
    %v7332 = vunpack.c.h.b16 %v7297
    %v7333 = vunpack.c.l.b16 %v7298
    %v7334 = vunpack.c.h.b16 %v7298
    %v7335 = vunpack.c.l.b16 %v7299
    %v7336 = vunpack.c.h.b16 %v7299
    %v7337 = vunpack.c.l.b16 %v7300
    %v7338 = vunpack.c.h.b16 %v7300
    %v7339 = vunpack.c.l.b16 %v7301
    %v7340 = vunpack.c.h.b16 %v7301
    %v7341 = vunpack.c.l.b16 %v7302
    %v7342 = vunpack.c.h.b16 %v7302
    %v7343 = vunpack.c.l.b16 %v7303
    %v7344 = vunpack.c.h.b16 %v7303
    %v7345 = vunpack.c.l.b16 %v7304
    %v7346 = vunpack.c.h.b16 %v7304
    %v7347 = vunpack.c.l.b16 %v7305
    %v7348 = vunpack.c.h.b16 %v7305
    %v7349 = vunpack.c.l.b16 %v7306
    %v7350 = vunpack.c.h.b16 %v7306
    %v7351 = vunpack.c.l.b16 %v7307
    %v7352 = vunpack.c.h.b16 %v7307
    %v7353 = vunpack.c.l.b16 %v7308
    %v7354 = vunpack.c.h.b16 %v7308
    %v7355 = vunpack.c.l.b16 %v7309
    %v7356 = vunpack.c.h.b16 %v7309
    %v7357 = vunpack.c.l.b16 %v7310
    %v7358 = vunpack.c.h.b16 %v7310
    %v7359 = vpack.c.b16 %v7329, %v7327
    %v7360 = vpack.c.b16 %v7330, %v7328
    %v7361 = vpack.c.b16 %v7333, %v7331
    %v7362 = vpack.c.b16 %v7334, %v7332
    %v7363 = vpack.c.b16 %v7337, %v7335
    %v7364 = vpack.c.b16 %v7338, %v7336
    %v7365 = vpack.c.b16 %v7341, %v7339
    %v7366 = vpack.c.b16 %v7342, %v7340
    %v7367 = vpack.c.b16 %v7345, %v7343
    %v7368 = vpack.c.b16 %v7346, %v7344
    %v7369 = vpack.c.b16 %v7349, %v7347
    %v7370 = vpack.c.b16 %v7350, %v7348
    %v7371 = vpack.c.b16 %v7353, %v7351
    %v7372 = vpack.c.b16 %v7354, %v7352
    %v7373 = vpack.c.b16 %v7357, %v7355
    %v7374 = vpack.c.b16 %v7358, %v7356
    %7391 = vmatprep.subr.bf16.mxu0 %v7360
    %7392 = vmatpush1.bf16.msra.mxu0 %v7359
    %7393 = vmatprep.subr.bf16.mxu0 %v7362
    %7394 = vmatpush1.bf16.msra.mxu0 %v7361
    %7395 = vmatprep.subr.bf16.mxu0 %v7364
    %7396 = vmatpush1.bf16.msra.mxu0 %v7363
    %7397 = vmatprep.subr.bf16.mxu0 %v7366
    %7398 = vmatpush1.bf16.msra.mxu0 %v7365
    %7399 = vmatprep.subr.bf16.mxu0 %v7368
    %7400 = vmatpush1.bf16.msra.mxu0 %v7367
    %7401 = vmatprep.subr.bf16.mxu0 %v7370
    %7402 = vmatpush1.bf16.msra.mxu0 %v7369
    %7403 = vmatprep.subr.bf16.mxu0 %v7372
    %7404 = vmatpush1.bf16.msra.mxu0 %v7371
    %7405 = vmatprep.subr.bf16.mxu0 %v7374
    %7406 = vmatpush1.bf16.msra.mxu0 %v7373
    %7407 = vmatprep.subr.bf16.mxu0 0
    %7408 = vmatpush1.bf16.msra.mxu0 0
    %7409 = vmatprep.subr.bf16.mxu0 0
    %7410 = vmatpush1.bf16.msra.mxu0 0
    %7411 = vmatprep.subr.bf16.mxu0 0
    %7412 = vmatpush1.bf16.msra.mxu0 0
    %7413 = vmatprep.subr.bf16.mxu0 0
    %7414 = vmatpush1.bf16.msra.mxu0 0
    %7415 = vmatprep.subr.bf16.mxu0 0
    %7416 = vmatpush1.bf16.msra.mxu0 0
    %7417 = vmatprep.subr.bf16.mxu0 0
    %7418 = vmatpush1.bf16.msra.mxu0 0
    %7419 = vmatprep.subr.bf16.mxu0 0
    %7420 = vmatpush1.bf16.msra.mxu0 0
    %7421 = vmatprep.subr.bf16.mxu0 0
    %7422 = vmatpush1.bf16.msra.mxu0 0
    %7423 = vmatprep.mubr.bf16.mxu0 0
    %7424 = vmatmul.mubr.bf16.gmra.mrb[0].mxu0 %v7293
    %v7425 = vpop.f32.mrb[0].mxu0
    %v7426 = vadd.f32 0.0, %v7425
    %v7427 = vpop.f32.mrb[0].mxu0
    %v7428 = vadd.f32 0.0, %v7427
    %v7429 = vpop.f32.mrb[0].mxu0
    %v7430 = vpop.f32.mrb[0].mxu0
    %7431 = vdwg.mxu0
    %v7432 = vadd.f32 %v7289, %v7426
    %v7433 = vadd.f32 %v7290, %v7428
    %s7434 = scalar_lea.vmem [#allocation3], 11
    %v7435 = vld [vmem:[%s7434] ss:$20 sm:$0x3]
    %v7436 = vpack.c.bf16 %v7435, %v7435
    %s7437 = scalar_lea.vmem [#allocation12], 1408
    %v7438 = vld [vmem:[%s7437] sm:$0xff]
    %v7439 = vld [vmem:[%s7437 + $0x8] sm:$0xff]
    %v7440 = vld [vmem:[%s7437 + $0x10] sm:$0xff]
    %v7441 = vld [vmem:[%s7437 + $0x18] sm:$0xff]
    %v7442 = vld [vmem:[%s7437 + $0x20] sm:$0xff]
    %v7443 = vld [vmem:[%s7437 + $0x28] sm:$0xff]
    %v7444 = vld [vmem:[%s7437 + $0x30] sm:$0xff]
    %v7445 = vld [vmem:[%s7437 + $0x38] sm:$0xff]
    %v7446 = vld [vmem:[%s7437 + $0x40] sm:$0xff]
    %v7447 = vld [vmem:[%s7437 + $0x48] sm:$0xff]
    %v7448 = vld [vmem:[%s7437 + $0x50] sm:$0xff]
    %v7449 = vld [vmem:[%s7437 + $0x58] sm:$0xff]
    %v7450 = vld [vmem:[%s7437 + $0x60] sm:$0xff]
    %v7451 = vld [vmem:[%s7437 + $0x68] sm:$0xff]
    %v7452 = vld [vmem:[%s7437 + $0x70] sm:$0xff]
    %v7453 = vld [vmem:[%s7437 + $0x78] sm:$0xff]
    %v7470 = vunpack.c.l.b16 %v7438
    %v7471 = vunpack.c.h.b16 %v7438
    %v7472 = vunpack.c.l.b16 %v7439
    %v7473 = vunpack.c.h.b16 %v7439
    %v7474 = vunpack.c.l.b16 %v7440
    %v7475 = vunpack.c.h.b16 %v7440
    %v7476 = vunpack.c.l.b16 %v7441
    %v7477 = vunpack.c.h.b16 %v7441
    %v7478 = vunpack.c.l.b16 %v7442
    %v7479 = vunpack.c.h.b16 %v7442
    %v7480 = vunpack.c.l.b16 %v7443
    %v7481 = vunpack.c.h.b16 %v7443
    %v7482 = vunpack.c.l.b16 %v7444
    %v7483 = vunpack.c.h.b16 %v7444
    %v7484 = vunpack.c.l.b16 %v7445
    %v7485 = vunpack.c.h.b16 %v7445
    %v7486 = vunpack.c.l.b16 %v7446
    %v7487 = vunpack.c.h.b16 %v7446
    %v7488 = vunpack.c.l.b16 %v7447
    %v7489 = vunpack.c.h.b16 %v7447
    %v7490 = vunpack.c.l.b16 %v7448
    %v7491 = vunpack.c.h.b16 %v7448
    %v7492 = vunpack.c.l.b16 %v7449
    %v7493 = vunpack.c.h.b16 %v7449
    %v7494 = vunpack.c.l.b16 %v7450
    %v7495 = vunpack.c.h.b16 %v7450
    %v7496 = vunpack.c.l.b16 %v7451
    %v7497 = vunpack.c.h.b16 %v7451
    %v7498 = vunpack.c.l.b16 %v7452
    %v7499 = vunpack.c.h.b16 %v7452
    %v7500 = vunpack.c.l.b16 %v7453
    %v7501 = vunpack.c.h.b16 %v7453
    %v7502 = vpack.c.b16 %v7472, %v7470
    %v7503 = vpack.c.b16 %v7473, %v7471
    %v7504 = vpack.c.b16 %v7476, %v7474
    %v7505 = vpack.c.b16 %v7477, %v7475
    %v7506 = vpack.c.b16 %v7480, %v7478
    %v7507 = vpack.c.b16 %v7481, %v7479
    %v7508 = vpack.c.b16 %v7484, %v7482
    %v7509 = vpack.c.b16 %v7485, %v7483
    %v7510 = vpack.c.b16 %v7488, %v7486
    %v7511 = vpack.c.b16 %v7489, %v7487
    %v7512 = vpack.c.b16 %v7492, %v7490
    %v7513 = vpack.c.b16 %v7493, %v7491
    %v7514 = vpack.c.b16 %v7496, %v7494
    %v7515 = vpack.c.b16 %v7497, %v7495
    %v7516 = vpack.c.b16 %v7500, %v7498
    %v7517 = vpack.c.b16 %v7501, %v7499
    %7534 = vmatprep.subr.bf16.mxu0 %v7503
    %7535 = vmatpush1.bf16.msra.mxu0 %v7502
    %7536 = vmatprep.subr.bf16.mxu0 %v7505
    %7537 = vmatpush1.bf16.msra.mxu0 %v7504
    %7538 = vmatprep.subr.bf16.mxu0 %v7507
    %7539 = vmatpush1.bf16.msra.mxu0 %v7506
    %7540 = vmatprep.subr.bf16.mxu0 %v7509
    %7541 = vmatpush1.bf16.msra.mxu0 %v7508
    %7542 = vmatprep.subr.bf16.mxu0 %v7511
    %7543 = vmatpush1.bf16.msra.mxu0 %v7510
    %7544 = vmatprep.subr.bf16.mxu0 %v7513
    %7545 = vmatpush1.bf16.msra.mxu0 %v7512
    %7546 = vmatprep.subr.bf16.mxu0 %v7515
    %7547 = vmatpush1.bf16.msra.mxu0 %v7514
    %7548 = vmatprep.subr.bf16.mxu0 %v7517
    %7549 = vmatpush1.bf16.msra.mxu0 %v7516
    %7550 = vmatprep.subr.bf16.mxu0 0
    %7551 = vmatpush1.bf16.msra.mxu0 0
    %7552 = vmatprep.subr.bf16.mxu0 0
    %7553 = vmatpush1.bf16.msra.mxu0 0
    %7554 = vmatprep.subr.bf16.mxu0 0
    %7555 = vmatpush1.bf16.msra.mxu0 0
    %7556 = vmatprep.subr.bf16.mxu0 0
    %7557 = vmatpush1.bf16.msra.mxu0 0
    %7558 = vmatprep.subr.bf16.mxu0 0
    %7559 = vmatpush1.bf16.msra.mxu0 0
    %7560 = vmatprep.subr.bf16.mxu0 0
    %7561 = vmatpush1.bf16.msra.mxu0 0
    %7562 = vmatprep.subr.bf16.mxu0 0
    %7563 = vmatpush1.bf16.msra.mxu0 0
    %7564 = vmatprep.subr.bf16.mxu0 0
    %7565 = vmatpush1.bf16.msra.mxu0 0
    %7566 = vmatprep.mubr.bf16.mxu0 0
    %7567 = vmatmul.mubr.bf16.gmra.mrb[0].mxu0 %v7436
    %v7568 = vpop.f32.mrb[0].mxu0
    %v7569 = vadd.f32 0.0, %v7568
    %v7570 = vpop.f32.mrb[0].mxu0
    %v7571 = vadd.f32 0.0, %v7570
    %v7572 = vpop.f32.mrb[0].mxu0
    %v7573 = vpop.f32.mrb[0].mxu0
    %7574 = vdwg.mxu0
    %v7575 = vadd.f32 %v7432, %v7569
    %v7576 = vadd.f32 %v7433, %v7571
    %s7577 = scalar_lea.vmem [#allocation3], 12
    %v7578 = vld [vmem:[%s7577] ss:$20 sm:$0x3]
    %v7579 = vpack.c.bf16 %v7578, %v7578
    %s7580 = scalar_lea.vmem [#allocation12], 1536
    %v7581 = vld [vmem:[%s7580] sm:$0xff]
    %v7582 = vld [vmem:[%s7580 + $0x8] sm:$0xff]
    %v7583 = vld [vmem:[%s7580 + $0x10] sm:$0xff]
    %v7584 = vld [vmem:[%s7580 + $0x18] sm:$0xff]
    %v7585 = vld [vmem:[%s7580 + $0x20] sm:$0xff]
    %v7586 = vld [vmem:[%s7580 + $0x28] sm:$0xff]
    %v7587 = vld [vmem:[%s7580 + $0x30] sm:$0xff]
    %v7588 = vld [vmem:[%s7580 + $0x38] sm:$0xff]
    %v7589 = vld [vmem:[%s7580 + $0x40] sm:$0xff]
    %v7590 = vld [vmem:[%s7580 + $0x48] sm:$0xff]
    %v7591 = vld [vmem:[%s7580 + $0x50] sm:$0xff]
    %v7592 = vld [vmem:[%s7580 + $0x58] sm:$0xff]
    %v7593 = vld [vmem:[%s7580 + $0x60] sm:$0xff]
    %v7594 = vld [vmem:[%s7580 + $0x68] sm:$0xff]
    %v7595 = vld [vmem:[%s7580 + $0x70] sm:$0xff]
    %v7596 = vld [vmem:[%s7580 + $0x78] sm:$0xff]
    %v7613 = vunpack.c.l.b16 %v7581
    %v7614 = vunpack.c.h.b16 %v7581
    %v7615 = vunpack.c.l.b16 %v7582
    %v7616 = vunpack.c.h.b16 %v7582
    %v7617 = vunpack.c.l.b16 %v7583
    %v7618 = vunpack.c.h.b16 %v7583
    %v7619 = vunpack.c.l.b16 %v7584
    %v7620 = vunpack.c.h.b16 %v7584
    %v7621 = vunpack.c.l.b16 %v7585
    %v7622 = vunpack.c.h.b16 %v7585
    %v7623 = vunpack.c.l.b16 %v7586
    %v7624 = vunpack.c.h.b16 %v7586
    %v7625 = vunpack.c.l.b16 %v7587
    %v7626 = vunpack.c.h.b16 %v7587
    %v7627 = vunpack.c.l.b16 %v7588
    %v7628 = vunpack.c.h.b16 %v7588
    %v7629 = vunpack.c.l.b16 %v7589
    %v7630 = vunpack.c.h.b16 %v7589
    %v7631 = vunpack.c.l.b16 %v7590
    %v7632 = vunpack.c.h.b16 %v7590
    %v7633 = vunpack.c.l.b16 %v7591
    %v7634 = vunpack.c.h.b16 %v7591
    %v7635 = vunpack.c.l.b16 %v7592
    %v7636 = vunpack.c.h.b16 %v7592
    %v7637 = vunpack.c.l.b16 %v7593
    %v7638 = vunpack.c.h.b16 %v7593
    %v7639 = vunpack.c.l.b16 %v7594
    %v7640 = vunpack.c.h.b16 %v7594
    %v7641 = vunpack.c.l.b16 %v7595
    %v7642 = vunpack.c.h.b16 %v7595
    %v7643 = vunpack.c.l.b16 %v7596
    %v7644 = vunpack.c.h.b16 %v7596
    %v7645 = vpack.c.b16 %v7615, %v7613
    %v7646 = vpack.c.b16 %v7616, %v7614
    %v7647 = vpack.c.b16 %v7619, %v7617
    %v7648 = vpack.c.b16 %v7620, %v7618
    %v7649 = vpack.c.b16 %v7623, %v7621
    %v7650 = vpack.c.b16 %v7624, %v7622
    %v7651 = vpack.c.b16 %v7627, %v7625
    %v7652 = vpack.c.b16 %v7628, %v7626
    %v7653 = vpack.c.b16 %v7631, %v7629
    %v7654 = vpack.c.b16 %v7632, %v7630
    %v7655 = vpack.c.b16 %v7635, %v7633
    %v7656 = vpack.c.b16 %v7636, %v7634
    %v7657 = vpack.c.b16 %v7639, %v7637
    %v7658 = vpack.c.b16 %v7640, %v7638
    %v7659 = vpack.c.b16 %v7643, %v7641
    %v7660 = vpack.c.b16 %v7644, %v7642
    %7677 = vmatprep.subr.bf16.mxu0 %v7646
    %7678 = vmatpush1.bf16.msra.mxu0 %v7645
    %7679 = vmatprep.subr.bf16.mxu0 %v7648
    %7680 = vmatpush1.bf16.msra.mxu0 %v7647
    %7681 = vmatprep.subr.bf16.mxu0 %v7650
    %7682 = vmatpush1.bf16.msra.mxu0 %v7649
    %7683 = vmatprep.subr.bf16.mxu0 %v7652
    %7684 = vmatpush1.bf16.msra.mxu0 %v7651
    %7685 = vmatprep.subr.bf16.mxu0 %v7654
    %7686 = vmatpush1.bf16.msra.mxu0 %v7653
    %7687 = vmatprep.subr.bf16.mxu0 %v7656
    %7688 = vmatpush1.bf16.msra.mxu0 %v7655
    %7689 = vmatprep.subr.bf16.mxu0 %v7658
    %7690 = vmatpush1.bf16.msra.mxu0 %v7657
    %7691 = vmatprep.subr.bf16.mxu0 %v7660
    %7692 = vmatpush1.bf16.msra.mxu0 %v7659
    %7693 = vmatprep.subr.bf16.mxu0 0
    %7694 = vmatpush1.bf16.msra.mxu0 0
    %7695 = vmatprep.subr.bf16.mxu0 0
    %7696 = vmatpush1.bf16.msra.mxu0 0
    %7697 = vmatprep.subr.bf16.mxu0 0
    %7698 = vmatpush1.bf16.msra.mxu0 0
    %7699 = vmatprep.subr.bf16.mxu0 0
    %7700 = vmatpush1.bf16.msra.mxu0 0
    %7701 = vmatprep.subr.bf16.mxu0 0
    %7702 = vmatpush1.bf16.msra.mxu0 0
    %7703 = vmatprep.subr.bf16.mxu0 0
    %7704 = vmatpush1.bf16.msra.mxu0 0
    %7705 = vmatprep.subr.bf16.mxu0 0
    %7706 = vmatpush1.bf16.msra.mxu0 0
    %7707 = vmatprep.subr.bf16.mxu0 0
    %7708 = vmatpush1.bf16.msra.mxu0 0
    %7709 = vmatprep.mubr.bf16.mxu0 0
    %7710 = vmatmul.mubr.bf16.gmra.mrb[0].mxu0 %v7579
    %v7711 = vpop.f32.mrb[0].mxu0
    %v7712 = vadd.f32 0.0, %v7711
    %v7713 = vpop.f32.mrb[0].mxu0
    %v7714 = vadd.f32 0.0, %v7713
    %v7715 = vpop.f32.mrb[0].mxu0
    %v7716 = vpop.f32.mrb[0].mxu0
    %7717 = vdwg.mxu0
    %v7718 = vadd.f32 %v7575, %v7712
    %v7719 = vadd.f32 %v7576, %v7714
    %s7720 = scalar_lea.vmem [#allocation3], 13
    %v7721 = vld [vmem:[%s7720] ss:$20 sm:$0x3]
    %v7722 = vpack.c.bf16 %v7721, %v7721
    %s7723 = scalar_lea.vmem [#allocation12], 1664
    %v7724 = vld [vmem:[%s7723] sm:$0xff]
    %v7725 = vld [vmem:[%s7723 + $0x8] sm:$0xff]
    %v7726 = vld [vmem:[%s7723 + $0x10] sm:$0xff]
    %v7727 = vld [vmem:[%s7723 + $0x18] sm:$0xff]
    %v7728 = vld [vmem:[%s7723 + $0x20] sm:$0xff]
    %v7729 = vld [vmem:[%s7723 + $0x28] sm:$0xff]
    %v7730 = vld [vmem:[%s7723 + $0x30] sm:$0xff]
    %v7731 = vld [vmem:[%s7723 + $0x38] sm:$0xff]
    %v7732 = vld [vmem:[%s7723 + $0x40] sm:$0xff]
    %v7733 = vld [vmem:[%s7723 + $0x48] sm:$0xff]
    %v7734 = vld [vmem:[%s7723 + $0x50] sm:$0xff]
    %v7735 = vld [vmem:[%s7723 + $0x58] sm:$0xff]
    %v7736 = vld [vmem:[%s7723 + $0x60] sm:$0xff]
    %v7737 = vld [vmem:[%s7723 + $0x68] sm:$0xff]
    %v7738 = vld [vmem:[%s7723 + $0x70] sm:$0xff]
    %v7739 = vld [vmem:[%s7723 + $0x78] sm:$0xff]
    %v7756 = vunpack.c.l.b16 %v7724
    %v7757 = vunpack.c.h.b16 %v7724
    %v7758 = vunpack.c.l.b16 %v7725
    %v7759 = vunpack.c.h.b16 %v7725
    %v7760 = vunpack.c.l.b16 %v7726
    %v7761 = vunpack.c.h.b16 %v7726
    %v7762 = vunpack.c.l.b16 %v7727
    %v7763 = vunpack.c.h.b16 %v7727
    %v7764 = vunpack.c.l.b16 %v7728
    %v7765 = vunpack.c.h.b16 %v7728
    %v7766 = vunpack.c.l.b16 %v7729
    %v7767 = vunpack.c.h.b16 %v7729
    %v7768 = vunpack.c.l.b16 %v7730
    %v7769 = vunpack.c.h.b16 %v7730
    %v7770 = vunpack.c.l.b16 %v7731
    %v7771 = vunpack.c.h.b16 %v7731
    %v7772 = vunpack.c.l.b16 %v7732
    %v7773 = vunpack.c.h.b16 %v7732
    %v7774 = vunpack.c.l.b16 %v7733
    %v7775 = vunpack.c.h.b16 %v7733
    %v7776 = vunpack.c.l.b16 %v7734
    %v7777 = vunpack.c.h.b16 %v7734
    %v7778 = vunpack.c.l.b16 %v7735
    %v7779 = vunpack.c.h.b16 %v7735
    %v7780 = vunpack.c.l.b16 %v7736
    %v7781 = vunpack.c.h.b16 %v7736
    %v7782 = vunpack.c.l.b16 %v7737
    %v7783 = vunpack.c.h.b16 %v7737
    %v7784 = vunpack.c.l.b16 %v7738
    %v7785 = vunpack.c.h.b16 %v7738
    %v7786 = vunpack.c.l.b16 %v7739
    %v7787 = vunpack.c.h.b16 %v7739
    %v7788 = vpack.c.b16 %v7758, %v7756
    %v7789 = vpack.c.b16 %v7759, %v7757
    %v7790 = vpack.c.b16 %v7762, %v7760
    %v7791 = vpack.c.b16 %v7763, %v7761
    %v7792 = vpack.c.b16 %v7766, %v7764
    %v7793 = vpack.c.b16 %v7767, %v7765
    %v7794 = vpack.c.b16 %v7770, %v7768
    %v7795 = vpack.c.b16 %v7771, %v7769
    %v7796 = vpack.c.b16 %v7774, %v7772
    %v7797 = vpack.c.b16 %v7775, %v7773
    %v7798 = vpack.c.b16 %v7778, %v7776
    %v7799 = vpack.c.b16 %v7779, %v7777
    %v7800 = vpack.c.b16 %v7782, %v7780
    %v7801 = vpack.c.b16 %v7783, %v7781
    %v7802 = vpack.c.b16 %v7786, %v7784
    %v7803 = vpack.c.b16 %v7787, %v7785
    %7820 = vmatprep.subr.bf16.mxu0 %v7789
    %7821 = vmatpush1.bf16.msra.mxu0 %v7788
    %7822 = vmatprep.subr.bf16.mxu0 %v7791
    %7823 = vmatpush1.bf16.msra.mxu0 %v7790
    %7824 = vmatprep.subr.bf16.mxu0 %v7793
    %7825 = vmatpush1.bf16.msra.mxu0 %v7792
    %7826 = vmatprep.subr.bf16.mxu0 %v7795
    %7827 = vmatpush1.bf16.msra.mxu0 %v7794
    %7828 = vmatprep.subr.bf16.mxu0 %v7797
    %7829 = vmatpush1.bf16.msra.mxu0 %v7796
    %7830 = vmatprep.subr.bf16.mxu0 %v7799
    %7831 = vmatpush1.bf16.msra.mxu0 %v7798
    %7832 = vmatprep.subr.bf16.mxu0 %v7801
    %7833 = vmatpush1.bf16.msra.mxu0 %v7800
    %7834 = vmatprep.subr.bf16.mxu0 %v7803
    %7835 = vmatpush1.bf16.msra.mxu0 %v7802
    %7836 = vmatprep.subr.bf16.mxu0 0
    %7837 = vmatpush1.bf16.msra.mxu0 0
    %7838 = vmatprep.subr.bf16.mxu0 0
    %7839 = vmatpush1.bf16.msra.mxu0 0
    %7840 = vmatprep.subr.bf16.mxu0 0
    %7841 = vmatpush1.bf16.msra.mxu0 0
    %7842 = vmatprep.subr.bf16.mxu0 0
    %7843 = vmatpush1.bf16.msra.mxu0 0
    %7844 = vmatprep.subr.bf16.mxu0 0
    %7845 = vmatpush1.bf16.msra.mxu0 0
    %7846 = vmatprep.subr.bf16.mxu0 0
    %7847 = vmatpush1.bf16.msra.mxu0 0
    %7848 = vmatprep.subr.bf16.mxu0 0
    %7849 = vmatpush1.bf16.msra.mxu0 0
    %7850 = vmatprep.subr.bf16.mxu0 0
    %7851 = vmatpush1.bf16.msra.mxu0 0
    %7852 = vmatprep.mubr.bf16.mxu0 0
    %7853 = vmatmul.mubr.bf16.gmra.mrb[0].mxu0 %v7722
    %v7854 = vpop.f32.mrb[0].mxu0
    %v7855 = vadd.f32 0.0, %v7854
    %v7856 = vpop.f32.mrb[0].mxu0
    %v7857 = vadd.f32 0.0, %v7856
    %v7858 = vpop.f32.mrb[0].mxu0
    %v7859 = vpop.f32.mrb[0].mxu0
    %7860 = vdwg.mxu0
    %v7861 = vadd.f32 %v7718, %v7855
    %v7862 = vadd.f32 %v7719, %v7857
    %s7863 = scalar_lea.vmem [#allocation3], 14
    %v7864 = vld [vmem:[%s7863] ss:$20 sm:$0x3]
    %v7865 = vpack.c.bf16 %v7864, %v7864
    %s7866 = scalar_lea.vmem [#allocation12], 1792
    %v7867 = vld [vmem:[%s7866] sm:$0xff]
    %v7868 = vld [vmem:[%s7866 + $0x8] sm:$0xff]
    %v7869 = vld [vmem:[%s7866 + $0x10] sm:$0xff]
    %v7870 = vld [vmem:[%s7866 + $0x18] sm:$0xff]
    %v7871 = vld [vmem:[%s7866 + $0x20] sm:$0xff]
    %v7872 = vld [vmem:[%s7866 + $0x28] sm:$0xff]
    %v7873 = vld [vmem:[%s7866 + $0x30] sm:$0xff]
    %v7874 = vld [vmem:[%s7866 + $0x38] sm:$0xff]
    %v7875 = vld [vmem:[%s7866 + $0x40] sm:$0xff]
    %v7876 = vld [vmem:[%s7866 + $0x48] sm:$0xff]
    %v7877 = vld [vmem:[%s7866 + $0x50] sm:$0xff]
    %v7878 = vld [vmem:[%s7866 + $0x58] sm:$0xff]
    %v7879 = vld [vmem:[%s7866 + $0x60] sm:$0xff]
    %v7880 = vld [vmem:[%s7866 + $0x68] sm:$0xff]
    %v7881 = vld [vmem:[%s7866 + $0x70] sm:$0xff]
    %v7882 = vld [vmem:[%s7866 + $0x78] sm:$0xff]
    %v7899 = vunpack.c.l.b16 %v7867
    %v7900 = vunpack.c.h.b16 %v7867
    %v7901 = vunpack.c.l.b16 %v7868
    %v7902 = vunpack.c.h.b16 %v7868
    %v7903 = vunpack.c.l.b16 %v7869
    %v7904 = vunpack.c.h.b16 %v7869
    %v7905 = vunpack.c.l.b16 %v7870
    %v7906 = vunpack.c.h.b16 %v7870
    %v7907 = vunpack.c.l.b16 %v7871
    %v7908 = vunpack.c.h.b16 %v7871
    %v7909 = vunpack.c.l.b16 %v7872
    %v7910 = vunpack.c.h.b16 %v7872
    %v7911 = vunpack.c.l.b16 %v7873
    %v7912 = vunpack.c.h.b16 %v7873
    %v7913 = vunpack.c.l.b16 %v7874
    %v7914 = vunpack.c.h.b16 %v7874
    %v7915 = vunpack.c.l.b16 %v7875
    %v7916 = vunpack.c.h.b16 %v7875
    %v7917 = vunpack.c.l.b16 %v7876
    %v7918 = vunpack.c.h.b16 %v7876
    %v7919 = vunpack.c.l.b16 %v7877
    %v7920 = vunpack.c.h.b16 %v7877
    %v7921 = vunpack.c.l.b16 %v7878
    %v7922 = vunpack.c.h.b16 %v7878
    %v7923 = vunpack.c.l.b16 %v7879
    %v7924 = vunpack.c.h.b16 %v7879
    %v7925 = vunpack.c.l.b16 %v7880
    %v7926 = vunpack.c.h.b16 %v7880
    %v7927 = vunpack.c.l.b16 %v7881
    %v7928 = vunpack.c.h.b16 %v7881
    %v7929 = vunpack.c.l.b16 %v7882
    %v7930 = vunpack.c.h.b16 %v7882
    %v7931 = vpack.c.b16 %v7901, %v7899
    %v7932 = vpack.c.b16 %v7902, %v7900
    %v7933 = vpack.c.b16 %v7905, %v7903
    %v7934 = vpack.c.b16 %v7906, %v7904
    %v7935 = vpack.c.b16 %v7909, %v7907
    %v7936 = vpack.c.b16 %v7910, %v7908
    %v7937 = vpack.c.b16 %v7913, %v7911
    %v7938 = vpack.c.b16 %v7914, %v7912
    %v7939 = vpack.c.b16 %v7917, %v7915
    %v7940 = vpack.c.b16 %v7918, %v7916
    %v7941 = vpack.c.b16 %v7921, %v7919
    %v7942 = vpack.c.b16 %v7922, %v7920
    %v7943 = vpack.c.b16 %v7925, %v7923
    %v7944 = vpack.c.b16 %v7926, %v7924
    %v7945 = vpack.c.b16 %v7929, %v7927
    %v7946 = vpack.c.b16 %v7930, %v7928
    %7963 = vmatprep.subr.bf16.mxu0 %v7932
    %7964 = vmatpush1.bf16.msra.mxu0 %v7931
    %7965 = vmatprep.subr.bf16.mxu0 %v7934
    %7966 = vmatpush1.bf16.msra.mxu0 %v7933
    %7967 = vmatprep.subr.bf16.mxu0 %v7936
    %7968 = vmatpush1.bf16.msra.mxu0 %v7935
    %7969 = vmatprep.subr.bf16.mxu0 %v7938
    %7970 = vmatpush1.bf16.msra.mxu0 %v7937
    %7971 = vmatprep.subr.bf16.mxu0 %v7940
    %7972 = vmatpush1.bf16.msra.mxu0 %v7939
    %7973 = vmatprep.subr.bf16.mxu0 %v7942
    %7974 = vmatpush1.bf16.msra.mxu0 %v7941
    %7975 = vmatprep.subr.bf16.mxu0 %v7944
    %7976 = vmatpush1.bf16.msra.mxu0 %v7943
    %7977 = vmatprep.subr.bf16.mxu0 %v7946
    %7978 = vmatpush1.bf16.msra.mxu0 %v7945
    %7979 = vmatprep.subr.bf16.mxu0 0
    %7980 = vmatpush1.bf16.msra.mxu0 0
    %7981 = vmatprep.subr.bf16.mxu0 0
    %7982 = vmatpush1.bf16.msra.mxu0 0
    %7983 = vmatprep.subr.bf16.mxu0 0
    %7984 = vmatpush1.bf16.msra.mxu0 0
    %7985 = vmatprep.subr.bf16.mxu0 0
    %7986 = vmatpush1.bf16.msra.mxu0 0
    %7987 = vmatprep.subr.bf16.mxu0 0
    %7988 = vmatpush1.bf16.msra.mxu0 0
    %7989 = vmatprep.subr.bf16.mxu0 0
    %7990 = vmatpush1.bf16.msra.mxu0 0
    %7991 = vmatprep.subr.bf16.mxu0 0
    %7992 = vmatpush1.bf16.msra.mxu0 0
    %7993 = vmatprep.subr.bf16.mxu0 0
    %7994 = vmatpush1.bf16.msra.mxu0 0
    %7995 = vmatprep.mubr.bf16.mxu0 0
    %7996 = vmatmul.mubr.bf16.gmra.mrb[0].mxu0 %v7865
    %v7997 = vpop.f32.mrb[0].mxu0
    %v7998 = vadd.f32 0.0, %v7997
    %v7999 = vpop.f32.mrb[0].mxu0
    %v8000 = vadd.f32 0.0, %v7999
    %v8001 = vpop.f32.mrb[0].mxu0
    %v8002 = vpop.f32.mrb[0].mxu0
    %8003 = vdwg.mxu0
    %v8004 = vadd.f32 %v7861, %v7998
    %v8005 = vadd.f32 %v7862, %v8000
    %s8006 = scalar_lea.vmem [#allocation3], 15
    %v8007 = vld [vmem:[%s8006] ss:$20 sm:$0x3]
    %v8008 = vpack.c.bf16 %v8007, %v8007
    %s8009 = scalar_lea.vmem [#allocation12], 1920
    %v8010 = vld [vmem:[%s8009] sm:$0xff]
    %v8011 = vld [vmem:[%s8009 + $0x8] sm:$0xff]
    %v8012 = vld [vmem:[%s8009 + $0x10] sm:$0xff]
    %v8013 = vld [vmem:[%s8009 + $0x18] sm:$0xff]
    %v8014 = vld [vmem:[%s8009 + $0x20] sm:$0xff]
    %v8015 = vld [vmem:[%s8009 + $0x28] sm:$0xff]
    %v8016 = vld [vmem:[%s8009 + $0x30] sm:$0xff]
    %v8017 = vld [vmem:[%s8009 + $0x38] sm:$0xff]
    %v8018 = vld [vmem:[%s8009 + $0x40] sm:$0xff]
    %v8019 = vld [vmem:[%s8009 + $0x48] sm:$0xff]
    %v8020 = vld [vmem:[%s8009 + $0x50] sm:$0xff]
    %v8021 = vld [vmem:[%s8009 + $0x58] sm:$0xff]
    %v8022 = vld [vmem:[%s8009 + $0x60] sm:$0xff]
    %v8023 = vld [vmem:[%s8009 + $0x68] sm:$0xff]
    %v8024 = vld [vmem:[%s8009 + $0x70] sm:$0xff]
    %v8025 = vld [vmem:[%s8009 + $0x78] sm:$0xff]
    %v8042 = vunpack.c.l.b16 %v8010
    %v8043 = vunpack.c.h.b16 %v8010
    %v8044 = vunpack.c.l.b16 %v8011
    %v8045 = vunpack.c.h.b16 %v8011
    %v8046 = vunpack.c.l.b16 %v8012
    %v8047 = vunpack.c.h.b16 %v8012
    %v8048 = vunpack.c.l.b16 %v8013
    %v8049 = vunpack.c.h.b16 %v8013
    %v8050 = vunpack.c.l.b16 %v8014
    %v8051 = vunpack.c.h.b16 %v8014
    %v8052 = vunpack.c.l.b16 %v8015
    %v8053 = vunpack.c.h.b16 %v8015
    %v8054 = vunpack.c.l.b16 %v8016
    %v8055 = vunpack.c.h.b16 %v8016
    %v8056 = vunpack.c.l.b16 %v8017
    %v8057 = vunpack.c.h.b16 %v8017
    %v8058 = vunpack.c.l.b16 %v8018
    %v8059 = vunpack.c.h.b16 %v8018
    %v8060 = vunpack.c.l.b16 %v8019
    %v8061 = vunpack.c.h.b16 %v8019
    %v8062 = vunpack.c.l.b16 %v8020
    %v8063 = vunpack.c.h.b16 %v8020
    %v8064 = vunpack.c.l.b16 %v8021
    %v8065 = vunpack.c.h.b16 %v8021
    %v8066 = vunpack.c.l.b16 %v8022
    %v8067 = vunpack.c.h.b16 %v8022
    %v8068 = vunpack.c.l.b16 %v8023
    %v8069 = vunpack.c.h.b16 %v8023
    %v8070 = vunpack.c.l.b16 %v8024
    %v8071 = vunpack.c.h.b16 %v8024
    %v8072 = vunpack.c.l.b16 %v8025
    %v8073 = vunpack.c.h.b16 %v8025
    %v8074 = vpack.c.b16 %v8044, %v8042
    %v8075 = vpack.c.b16 %v8045, %v8043
    %v8076 = vpack.c.b16 %v8048, %v8046
    %v8077 = vpack.c.b16 %v8049, %v8047
    %v8078 = vpack.c.b16 %v8052, %v8050
    %v8079 = vpack.c.b16 %v8053, %v8051
    %v8080 = vpack.c.b16 %v8056, %v8054
    %v8081 = vpack.c.b16 %v8057, %v8055
    %v8082 = vpack.c.b16 %v8060, %v8058
    %v8083 = vpack.c.b16 %v8061, %v8059
    %v8084 = vpack.c.b16 %v8064, %v8062
    %v8085 = vpack.c.b16 %v8065, %v8063
    %v8086 = vpack.c.b16 %v8068, %v8066
    %v8087 = vpack.c.b16 %v8069, %v8067
    %v8088 = vpack.c.b16 %v8072, %v8070
    %v8089 = vpack.c.b16 %v8073, %v8071
    %8106 = vmatprep.subr.bf16.mxu0 %v8075
    %8107 = vmatpush1.bf16.msra.mxu0 %v8074
    %8108 = vmatprep.subr.bf16.mxu0 %v8077
    %8109 = vmatpush1.bf16.msra.mxu0 %v8076
    %8110 = vmatprep.subr.bf16.mxu0 %v8079
    %8111 = vmatpush1.bf16.msra.mxu0 %v8078
    %8112 = vmatprep.subr.bf16.mxu0 %v8081
    %8113 = vmatpush1.bf16.msra.mxu0 %v8080
    %8114 = vmatprep.subr.bf16.mxu0 %v8083
    %8115 = vmatpush1.bf16.msra.mxu0 %v8082
    %8116 = vmatprep.subr.bf16.mxu0 %v8085
    %8117 = vmatpush1.bf16.msra.mxu0 %v8084
    %8118 = vmatprep.subr.bf16.mxu0 %v8087
    %8119 = vmatpush1.bf16.msra.mxu0 %v8086
    %8120 = vmatprep.subr.bf16.mxu0 %v8089
    %8121 = vmatpush1.bf16.msra.mxu0 %v8088
    %8122 = vmatprep.subr.bf16.mxu0 0
    %8123 = vmatpush1.bf16.msra.mxu0 0
    %8124 = vmatprep.subr.bf16.mxu0 0
    %8125 = vmatpush1.bf16.msra.mxu0 0
    %8126 = vmatprep.subr.bf16.mxu0 0
    %8127 = vmatpush1.bf16.msra.mxu0 0
    %8128 = vmatprep.subr.bf16.mxu0 0
    %8129 = vmatpush1.bf16.msra.mxu0 0
    %8130 = vmatprep.subr.bf16.mxu0 0
    %8131 = vmatpush1.bf16.msra.mxu0 0
    %8132 = vmatprep.subr.bf16.mxu0 0
    %8133 = vmatpush1.bf16.msra.mxu0 0
    %8134 = vmatprep.subr.bf16.mxu0 0
    %8135 = vmatpush1.bf16.msra.mxu0 0
    %8136 = vmatprep.subr.bf16.mxu0 0
    %8137 = vmatpush1.bf16.msra.mxu0 0
    %8138 = vmatprep.mubr.bf16.mxu0 0
    %8139 = vmatmul.mubr.bf16.gmra.mrb[0].mxu0 %v8008
    %v8140 = vpop.f32.mrb[0].mxu0
    %v8141 = vadd.f32 0.0, %v8140
    %v8142 = vpop.f32.mrb[0].mxu0
    %v8143 = vadd.f32 0.0, %v8142
    %v8144 = vpop.f32.mrb[0].mxu0
    %v8145 = vpop.f32.mrb[0].mxu0
    %8146 = vdwg.mxu0
    %v8147 = vadd.f32 %v8004, %v8141
    %v8148 = vadd.f32 %v8005, %v8143
    %s8149 = scalar_lea.vmem [#allocation3], 16
    %v8150 = vld [vmem:[%s8149] ss:$20 sm:$0x3]
    %v8151 = vpack.c.bf16 %v8150, %v8150
    %s8152 = scalar_lea.vmem [#allocation12], 2048
    %v8153 = vld [vmem:[%s8152] sm:$0xff]
    %v8154 = vld [vmem:[%s8152 + $0x8] sm:$0xff]
    %v8155 = vld [vmem:[%s8152 + $0x10] sm:$0xff]
    %v8156 = vld [vmem:[%s8152 + $0x18] sm:$0xff]
    %v8157 = vld [vmem:[%s8152 + $0x20] sm:$0xff]
    %v8158 = vld [vmem:[%s8152 + $0x28] sm:$0xff]
    %v8159 = vld [vmem:[%s8152 + $0x30] sm:$0xff]
    %v8160 = vld [vmem:[%s8152 + $0x38] sm:$0xff]
    %v8161 = vld [vmem:[%s8152 + $0x40] sm:$0xff]
    %v8162 = vld [vmem:[%s8152 + $0x48] sm:$0xff]
    %v8163 = vld [vmem:[%s8152 + $0x50] sm:$0xff]
    %v8164 = vld [vmem:[%s8152 + $0x58] sm:$0xff]
    %v8165 = vld [vmem:[%s8152 + $0x60] sm:$0xff]
    %v8166 = vld [vmem:[%s8152 + $0x68] sm:$0xff]
    %v8167 = vld [vmem:[%s8152 + $0x70] sm:$0xff]
    %v8168 = vld [vmem:[%s8152 + $0x78] sm:$0xff]
    %v8185 = vunpack.c.l.b16 %v8153
    %v8186 = vunpack.c.h.b16 %v8153
    %v8187 = vunpack.c.l.b16 %v8154
    %v8188 = vunpack.c.h.b16 %v8154
    %v8189 = vunpack.c.l.b16 %v8155
    %v8190 = vunpack.c.h.b16 %v8155
    %v8191 = vunpack.c.l.b16 %v8156
    %v8192 = vunpack.c.h.b16 %v8156
    %v8193 = vunpack.c.l.b16 %v8157
    %v8194 = vunpack.c.h.b16 %v8157
    %v8195 = vunpack.c.l.b16 %v8158
    %v8196 = vunpack.c.h.b16 %v8158
    %v8197 = vunpack.c.l.b16 %v8159
    %v8198 = vunpack.c.h.b16 %v8159
    %v8199 = vunpack.c.l.b16 %v8160
    %v8200 = vunpack.c.h.b16 %v8160
    %v8201 = vunpack.c.l.b16 %v8161
    %v8202 = vunpack.c.h.b16 %v8161
    %v8203 = vunpack.c.l.b16 %v8162
    %v8204 = vunpack.c.h.b16 %v8162
    %v8205 = vunpack.c.l.b16 %v8163
    %v8206 = vunpack.c.h.b16 %v8163
    %v8207 = vunpack.c.l.b16 %v8164
    %v8208 = vunpack.c.h.b16 %v8164
    %v8209 = vunpack.c.l.b16 %v8165
    %v8210 = vunpack.c.h.b16 %v8165
    %v8211 = vunpack.c.l.b16 %v8166
    %v8212 = vunpack.c.h.b16 %v8166
    %v8213 = vunpack.c.l.b16 %v8167
    %v8214 = vunpack.c.h.b16 %v8167
    %v8215 = vunpack.c.l.b16 %v8168
    %v8216 = vunpack.c.h.b16 %v8168
    %v8217 = vpack.c.b16 %v8187, %v8185
    %v8218 = vpack.c.b16 %v8188, %v8186
    %v8219 = vpack.c.b16 %v8191, %v8189
    %v8220 = vpack.c.b16 %v8192, %v8190
    %v8221 = vpack.c.b16 %v8195, %v8193
    %v8222 = vpack.c.b16 %v8196, %v8194
    %v8223 = vpack.c.b16 %v8199, %v8197
    %v8224 = vpack.c.b16 %v8200, %v8198
    %v8225 = vpack.c.b16 %v8203, %v8201
    %v8226 = vpack.c.b16 %v8204, %v8202
    %v8227 = vpack.c.b16 %v8207, %v8205
    %v8228 = vpack.c.b16 %v8208, %v8206
    %v8229 = vpack.c.b16 %v8211, %v8209
    %v8230 = vpack.c.b16 %v8212, %v8210
    %v8231 = vpack.c.b16 %v8215, %v8213
    %v8232 = vpack.c.b16 %v8216, %v8214
    %8249 = vmatprep.subr.bf16.mxu0 %v8218
    %8250 = vmatpush1.bf16.msra.mxu0 %v8217
    %8251 = vmatprep.subr.bf16.mxu0 %v8220
    %8252 = vmatpush1.bf16.msra.mxu0 %v8219
    %8253 = vmatprep.subr.bf16.mxu0 %v8222
    %8254 = vmatpush1.bf16.msra.mxu0 %v8221
    %8255 = vmatprep.subr.bf16.mxu0 %v8224
    %8256 = vmatpush1.bf16.msra.mxu0 %v8223
    %8257 = vmatprep.subr.bf16.mxu0 %v8226
    %8258 = vmatpush1.bf16.msra.mxu0 %v8225
    %8259 = vmatprep.subr.bf16.mxu0 %v8228
    %8260 = vmatpush1.bf16.msra.mxu0 %v8227
    %8261 = vmatprep.subr.bf16.mxu0 %v8230
    %8262 = vmatpush1.bf16.msra.mxu0 %v8229
    %8263 = vmatprep.subr.bf16.mxu0 %v8232
    %8264 = vmatpush1.bf16.msra.mxu0 %v8231
    %8265 = vmatprep.subr.bf16.mxu0 0
    %8266 = vmatpush1.bf16.msra.mxu0 0
    %8267 = vmatprep.subr.bf16.mxu0 0
    %8268 = vmatpush1.bf16.msra.mxu0 0
    %8269 = vmatprep.subr.bf16.mxu0 0
    %8270 = vmatpush1.bf16.msra.mxu0 0
    %8271 = vmatprep.subr.bf16.mxu0 0
    %8272 = vmatpush1.bf16.msra.mxu0 0
    %8273 = vmatprep.subr.bf16.mxu0 0
    %8274 = vmatpush1.bf16.msra.mxu0 0
    %8275 = vmatprep.subr.bf16.mxu0 0
    %8276 = vmatpush1.bf16.msra.mxu0 0
    %8277 = vmatprep.subr.bf16.mxu0 0
    %8278 = vmatpush1.bf16.msra.mxu0 0
    %8279 = vmatprep.subr.bf16.mxu0 0
    %8280 = vmatpush1.bf16.msra.mxu0 0
    %8281 = vmatprep.mubr.bf16.mxu0 0
    %8282 = vmatmul.mubr.bf16.gmra.mrb[0].mxu0 %v8151
    %v8283 = vpop.f32.mrb[0].mxu0
    %v8284 = vadd.f32 0.0, %v8283
    %v8285 = vpop.f32.mrb[0].mxu0
    %v8286 = vadd.f32 0.0, %v8285
    %v8287 = vpop.f32.mrb[0].mxu0
    %v8288 = vpop.f32.mrb[0].mxu0
    %8289 = vdwg.mxu0
    %v8290 = vadd.f32 %v8147, %v8284
    %v8291 = vadd.f32 %v8148, %v8286
    %v8292 = vld [vmem:[#allocation13] sm:$0x3]
    %v8294 = vlaneseq
    %v8295 = vshrl.u32 %v8294, 7
    %v8296 = vsub.s32 0, %v8295
    %v8297 = vrot.slane %v8292, %v8296
    %v8298 = vlaneseq
    %v8299 = vshrl.u32 %v8298, 7
    %v8300 = vsub.s32 1, %v8299
    %v8301 = vrot.slane %v8292, %v8300
    %v8304 = vadd.f32 %v8290, %v8297
    %v8305 = vadd.f32 %v8291, %v8301
    %vm8306 = vcmp.gt.f32.partialorder %v8304, 0.0
    %vm8307 = vcmp.gt.f32.partialorder %v8305, 0.0
    %v8308 = vmul.f32 %v8304, 1.442695
    %v8309 = vpow.pop %v8308
    %v8310 = vmul.f32 %v8305, 1.442695
    %v8311 = vpow.pop %v8310
    %v8312 = vsub.f32 %v8309, 1.0
    %v8313 = vsub.f32 %v8311, 1.0
    %v8314 = vsel %vm8306, %v8304, %v8312
    %v8315 = vsel %vm8307, %v8305, %v8313
    %v8316 = vpack.c.bf16 %v8314, %v8314
    %v8317 = vpack.c.bf16 %v8315, %v8315
    %v8318 = vld [vmem:[%s7] sm:$0xf]
    %v8319 = vld [vmem:[%s7 + $0x4] sm:$0xf]
    %v8320 = vld [vmem:[%s7 + $0x8] sm:$0xf]
    %v8321 = vld [vmem:[%s7 + $0xc] sm:$0xf]
    %v8322 = vld [vmem:[%s7 + $0x10] sm:$0xf]
    %v8323 = vld [vmem:[%s7 + $0x14] sm:$0xf]
    %v8324 = vld [vmem:[%s7 + $0x18] sm:$0xf]
    %v8325 = vld [vmem:[%s7 + $0x1c] sm:$0xf]
    %v8326 = vld [vmem:[%s7 + $0x20] sm:$0xf]
    %v8327 = vld [vmem:[%s7 + $0x24] sm:$0xf]
    %v8328 = vld [vmem:[%s7 + $0x28] sm:$0xf]
    %v8329 = vld [vmem:[%s7 + $0x2c] sm:$0xf]
    %v8330 = vld [vmem:[%s7 + $0x30] sm:$0xf]
    %v8331 = vld [vmem:[%s7 + $0x34] sm:$0xf]
    %v8332 = vld [vmem:[%s7 + $0x38] sm:$0xf]
    %v8333 = vld [vmem:[%s7 + $0x3c] sm:$0xf]
    %v8334 = vld [vmem:[%s7 + $0x40] sm:$0xf]
    %v8335 = vld [vmem:[%s7 + $0x44] sm:$0xf]
    %v8336 = vld [vmem:[%s7 + $0x48] sm:$0xf]
    %v8337 = vld [vmem:[%s7 + $0x4c] sm:$0xf]
    %v8338 = vld [vmem:[%s7 + $0x50] sm:$0xf]
    %v8339 = vld [vmem:[%s7 + $0x54] sm:$0xf]
    %v8340 = vld [vmem:[%s7 + $0x58] sm:$0xf]
    %v8341 = vld [vmem:[%s7 + $0x5c] sm:$0xf]
    %v8342 = vld [vmem:[%s7 + $0x60] sm:$0xf]
    %v8343 = vld [vmem:[%s7 + $0x64] sm:$0xf]
    %v8344 = vld [vmem:[%s7 + $0x68] sm:$0xf]
    %v8345 = vld [vmem:[%s7 + $0x6c] sm:$0xf]
    %v8346 = vld [vmem:[%s7 + $0x70] sm:$0xf]
    %v8347 = vld [vmem:[%s7 + $0x74] sm:$0xf]
    %v8348 = vld [vmem:[%s7 + $0x78] sm:$0xf]
    %v8349 = vld [vmem:[%s7 + $0x7c] sm:$0xf]
    %v8350 = vld [vmem:[#allocation15] sm:$0x1]
    %v8352 = vlaneseq
    %v8353 = vshrl.u32 %v8352, 7
    %v8354 = vsub.s32 0, %v8353
    %v8355 = vrot.slane %v8350, %v8354
    %v8389 = vunpack.c.l.b16 %v8318
    %v8390 = vunpack.c.l.b16 %v8319
    %v8391 = vunpack.c.l.b16 %v8320
    %v8392 = vunpack.c.l.b16 %v8321
    %v8393 = vunpack.c.l.b16 %v8322
    %v8394 = vunpack.c.l.b16 %v8323
    %v8395 = vunpack.c.l.b16 %v8324
    %v8396 = vunpack.c.l.b16 %v8325
    %v8397 = vunpack.c.l.b16 %v8326
    %v8398 = vunpack.c.l.b16 %v8327
    %v8399 = vunpack.c.l.b16 %v8328
    %v8400 = vunpack.c.l.b16 %v8329
    %v8401 = vunpack.c.l.b16 %v8330
    %v8402 = vunpack.c.l.b16 %v8331
    %v8403 = vunpack.c.l.b16 %v8332
    %v8404 = vunpack.c.l.b16 %v8333
    %v8405 = vunpack.c.l.b16 %v8334
    %v8406 = vunpack.c.l.b16 %v8335
    %v8407 = vunpack.c.l.b16 %v8336
    %v8408 = vunpack.c.l.b16 %v8337
    %v8409 = vunpack.c.l.b16 %v8338
    %v8410 = vunpack.c.l.b16 %v8339
    %v8411 = vunpack.c.l.b16 %v8340
    %v8412 = vunpack.c.l.b16 %v8341
    %v8413 = vunpack.c.l.b16 %v8342
    %v8414 = vunpack.c.l.b16 %v8343
    %v8415 = vunpack.c.l.b16 %v8344
    %v8416 = vunpack.c.l.b16 %v8345
    %v8417 = vunpack.c.l.b16 %v8346
    %v8418 = vunpack.c.l.b16 %v8347
    %v8419 = vunpack.c.l.b16 %v8348
    %v8420 = vunpack.c.l.b16 %v8349
    %v8421 = vpack.c.b16 %v8390, %v8389
    %v8422 = vpack.c.b16 %v8392, %v8391
    %v8423 = vpack.c.b16 %v8394, %v8393
    %v8424 = vpack.c.b16 %v8396, %v8395
    %v8425 = vpack.c.b16 %v8398, %v8397
    %v8426 = vpack.c.b16 %v8400, %v8399
    %v8427 = vpack.c.b16 %v8402, %v8401
    %v8428 = vpack.c.b16 %v8404, %v8403
    %v8429 = vpack.c.b16 %v8406, %v8405
    %v8430 = vpack.c.b16 %v8408, %v8407
    %v8431 = vpack.c.b16 %v8410, %v8409
    %v8432 = vpack.c.b16 %v8412, %v8411
    %v8433 = vpack.c.b16 %v8414, %v8413
    %v8434 = vpack.c.b16 %v8416, %v8415
    %v8435 = vpack.c.b16 %v8418, %v8417
    %v8436 = vpack.c.b16 %v8420, %v8419
    %8453 = vmatprep.subr.bf16.mxu0 0
    %8454 = vmatpush1.bf16.msra.mxu0 %v8421
    %8455 = vmatprep.subr.bf16.mxu0 0
    %8456 = vmatpush1.bf16.msra.mxu0 %v8422
    %8457 = vmatprep.subr.bf16.mxu0 0
    %8458 = vmatpush1.bf16.msra.mxu0 %v8423
    %8459 = vmatprep.subr.bf16.mxu0 0
    %8460 = vmatpush1.bf16.msra.mxu0 %v8424
    %8461 = vmatprep.subr.bf16.mxu0 0
    %8462 = vmatpush1.bf16.msra.mxu0 %v8425
    %8463 = vmatprep.subr.bf16.mxu0 0
    %8464 = vmatpush1.bf16.msra.mxu0 %v8426
    %8465 = vmatprep.subr.bf16.mxu0 0
    %8466 = vmatpush1.bf16.msra.mxu0 %v8427
    %8467 = vmatprep.subr.bf16.mxu0 0
    %8468 = vmatpush1.bf16.msra.mxu0 %v8428
    %8469 = vmatprep.subr.bf16.mxu0 0
    %8470 = vmatpush1.bf16.msra.mxu0 %v8429
    %8471 = vmatprep.subr.bf16.mxu0 0
    %8472 = vmatpush1.bf16.msra.mxu0 %v8430
    %8473 = vmatprep.subr.bf16.mxu0 0
    %8474 = vmatpush1.bf16.msra.mxu0 %v8431
    %8475 = vmatprep.subr.bf16.mxu0 0
    %8476 = vmatpush1.bf16.msra.mxu0 %v8432
    %8477 = vmatprep.subr.bf16.mxu0 0
    %8478 = vmatpush1.bf16.msra.mxu0 %v8433
    %8479 = vmatprep.subr.bf16.mxu0 0
    %8480 = vmatpush1.bf16.msra.mxu0 %v8434
    %8481 = vmatprep.subr.bf16.mxu0 0
    %8482 = vmatpush1.bf16.msra.mxu0 %v8435
    %8483 = vmatprep.subr.bf16.mxu0 0
    %8484 = vmatpush1.bf16.msra.mxu0 %v8436
    %8485 = vmatprep.mubr.bf16.mxu0 %v8317
    %8486 = vmatmul.mubr.bf16.gmra.mrb[0].mxu0 %v8316
    %v8487 = vpop.f32.mrb[0].mxu0
    %v8488 = vadd.f32 %v8355, %v8487
    %v8489 = vpop.f32.mrb[0].mxu0
    %v8490 = vpop.f32.mrb[0].mxu0
    %v8491 = vpop.f32.mrb[0].mxu0
    %8492 = vdwg.mxu0
    %vm8493 = vcmask 25600
    %8494 = vst.msk [vmem:[#allocation16] sm:$0x3] %vm8493, %v8488
    // Predicated region
    $region66: #{tpu_custom_call.1} parent=1 // pred_check
      _
    $region67: #{tpu_custom_call.1} parent=1 // pred_check_branch
      %8496 = sbr.rel (0) target = $region69
    $region68: #{tpu_custom_call.1} parent=1 // pred_region
      %s8498 = ssub.s32 32, 32
      %8499 = vsyncadd [#allocation6], %s8498
      %s8501 = sshll.u32 [#allocation16], 4
      %s8502 = int_to_ptr.vmem [resolvable:$true] %s8501
      %8504 = dma.vmem_to_hbm [thread:$0]  %s8502, 32, %s9, [#allocation6]
    $region69: #{tpu_custom_call.1} parent=1 // pred_fallthru
      _
    // Predicated region
    $region70: #{tpu_custom_call.1} parent=1 // pred_check
      _
    $region71: #{tpu_custom_call.1} parent=1 // pred_check_branch
      %8506 = sbr.rel (0) target = $region73
    $region72: #{tpu_custom_call.1} parent=1 // pred_region
      %8507 = dma.done [#allocation6], 32
    $region73: #{tpu_custom_call.1} parent=1 // pred_fallthru
      _
    %8508 = vsyncpa [#allocation5], 1
    %8509 = vsyncpa [#allocation8], 1
    %8510 = vsyncpa [#allocation11], 1
    %8511 = vsyncpa [#allocation14], 1
    %8512 = vsyncpa [#allocation6], 1

</llo_original>
